<compile_context>
chip_gen: v7x
topology: tpu7x:2x2x1
jax: 0.10.0
libtpu: 0.0.40
codegen_flags: <defaults>
</compile_context>

<pallas_src>
import math
from functools import partial

import numpy as np
import jax
import jax.numpy as jnp
from jax import lax
from jax.experimental import pallas as pl
from jax.experimental.pallas import tpu as pltpu


# -------------------- helpers --------------------

def _gelu_exact(x):
    # exact (erf) GELU to match torch.nn.GELU default
    return 0.5 * x * (1.0 + lax.erf(x * (1.0 / math.sqrt(2.0))))


def make_dft_mats(H, W):
    """Real matrices implementing rfft2/irfft2 (norm='ortho') on an HxW grid.

    forward:  X_re = dft_re @ x ; X_im = dft_im @ x   (x flattened (H*W, C))
    inverse:  y    = idft_re @ X_re + idft_im @ X_im  (y flattened (H*W, C))
    Returned as float64 numpy arrays (converted/blocked later).
    """
    L = H * W
    F = W // 2 + 1
    G = H * F
    eye = np.eye(L, dtype=np.float64).reshape(L, H, W)
    fwd = np.fft.rfft2(eye, axes=(1, 2), norm='ortho').reshape(L, G)   # (L, G) complex
    dft_re = np.ascontiguousarray(fwd.real.T)                          # (G, L)
    dft_im = np.ascontiguousarray(fwd.imag.T)                          # (G, L)
    eye_g = np.eye(G, dtype=np.float64).reshape(G, H, F)
    inv_r = np.fft.irfft2(eye_g.astype(np.complex128), s=(H, W),
                          axes=(1, 2), norm='ortho').reshape(G, L)
    inv_i = np.fft.irfft2(1j * eye_g, s=(H, W),
                          axes=(1, 2), norm='ortho').reshape(G, L)
    idft_re = np.ascontiguousarray(inv_r.T)                            # (L, G)
    idft_im = np.ascontiguousarray(inv_i.T)                            # (L, G)
    return dft_re, dft_im, idft_re, idft_im


# -------------------- the fused, batch-blocked Pallas kernel --------------------

def _vit_kernel(patches_ref, conv_w_ref, posb_ref,
                dftcat_ref, idftre_ref, idftim_ref, mask_ref,
                lnp_ref, qkw_ref, qkb_ref, vw_ref, vb_ref,
                w1_ref, b1_ref, w2_ref, b2_ref,
                encp_ref, tcblk_ref, tcb_ref, ccw_ref, ccb_ref,
                hw_ref, hb_ref, out_ref,
                *, num_layers, num_heads, eps, TB, L, C, G, R, rd, NC, mlp):
    TBL = TB * L
    TBG = TB * G
    C2 = 2 * C

    # ---- patch embedding (Conv2d k=p,s=p as a linear) + (pos + conv bias)
    x = jnp.dot(patches_ref[...], conv_w_ref[...],
                preferred_element_type=jnp.float32) + posb_ref[...]      # (TBL, C)

    def layernorm(v, g, b):
        m = jnp.mean(v, axis=-1, keepdims=True)
        c = v - m
        var = jnp.mean(c * c, axis=-1, keepdims=True)
        return c * lax.rsqrt(var + eps) * g + b

    for l in range(num_layers):
        ln_base = l * 4
        # ---- Fourier attention sub-block --------------------------------
        h = layernorm(x, lnp_ref[ln_base:ln_base + 1, :],
                      lnp_ref[ln_base + 1:ln_base + 2, :])                # (TBL, C)

        # forward DFT for all TB samples with one block-diagonal matmul
        spec2 = jnp.dot(dftcat_ref[...], h,
                        preferred_element_type=jnp.float32)              # (2*TBG, C)
        spec = jnp.concatenate([spec2[:TBG, :], spec2[TBG:, :]], axis=1)  # (TBG, 2C)

        ore = jnp.zeros((TBG, C), jnp.float32)
        oim = jnp.zeros((TBG, C), jnp.float32)
        for hd in range(num_heads):
            w0 = (l * num_heads + hd) * 2 * C2
            b0 = (l * num_heads + hd) * 2 * TBG
            # zero-padded per-head weights: no lane slicing needed
            q = jnp.dot(spec, qkw_ref[w0:w0 + C2, :],
                        preferred_element_type=jnp.float32) + qkb_ref[b0:b0 + TBG, :]
            k = jnp.dot(spec, qkw_ref[w0 + C2:w0 + 2 * C2, :],
                        preferred_element_type=jnp.float32) + qkb_ref[b0 + TBG:b0 + 2 * TBG, :]
            vre = jnp.dot(spec, vw_ref[w0:w0 + C2, :],
                          preferred_element_type=jnp.float32) + vb_ref[b0:b0 + TBG, :]
            vim = jnp.dot(spec, vw_ref[w0 + C2:w0 + 2 * C2, :],
                          preferred_element_type=jnp.float32) + vb_ref[b0 + TBG:b0 + 2 * TBG, :]

            # batched scores: block-diagonal mask keeps samples independent
            # (attention scale is folded into the Q weights/biases)
            s = lax.dot_general(q, k, (((1,), (1,)), ((), ())),
                                preferred_element_type=jnp.float32) + mask_ref[...]
            s = s - jnp.max(s, axis=-1, keepdims=True)
            e = jnp.exp(s)
            p = e / jnp.sum(e, axis=-1, keepdims=True)
            ore = ore + jnp.dot(p, vre, preferred_element_type=jnp.float32)
            oim = oim + jnp.dot(p, vim, preferred_element_type=jnp.float32)

        # inverse DFT (block-diagonal over the batch tile)
        xs = (jnp.dot(idftre_ref[...], ore, preferred_element_type=jnp.float32)
              + jnp.dot(idftim_ref[...], oim, preferred_element_type=jnp.float32))
        x = x + xs                                                        # dropout p = 0.0

        # ---- MLP sub-block -----------------------------------------------
        y = layernorm(x, lnp_ref[ln_base + 2:ln_base + 3, :],
                      lnp_ref[ln_base + 3:ln_base + 4, :])
        y = jnp.dot(y, w1_ref[l * C:(l + 1) * C, :],
                    preferred_element_type=jnp.float32) + b1_ref[l:l + 1, :]
        y = _gelu_exact(y)
        y = jnp.dot(y, w2_ref[l * mlp:(l + 1) * mlp, :],
                    preferred_element_type=jnp.float32) + b2_ref[l:l + 1, :]
        x = x + y

    # ---- final encoder LN
    x = layernorm(x, encp_ref[0:1, :], encp_ref[1:2, :])                  # (TBL, C)

    # ---- token_control (Conv1d L->R, k=1), batched & r-major output rows
    t = jnp.dot(tcblk_ref[...], x,
                preferred_element_type=jnp.float32) + tcb_ref[...]       # (R*TB, C)

    # ---- channel_control: single Linear (last MLP layer => no activation)
    cc = jnp.dot(t, ccw_ref[...],
                 preferred_element_type=jnp.float32) + ccb_ref[...]      # (R*TB, rd)

    # ---- classifier head: R batched matmuls on contiguous (TB, rd) row blocks
    logits = hb_ref[...] + jnp.dot(cc[0:TB, :], hw_ref[0:rd, :],
                                   preferred_element_type=jnp.float32)   # (TB, NC)
    for r in range(1, R):
        logits = logits + jnp.dot(cc[r * TB:(r + 1) * TB, :],
                                  hw_ref[r * rd:(r + 1) * rd, :],
                                  preferred_element_type=jnp.float32)
    out_ref[...] = logits


# -------------------- model config / params --------------------

class Config:
    image_size = 16
    patch_size = 4
    num_layers = 2
    num_heads = 2
    hidden_dim = 16
    mlp_dim = 32
    num_classes = 10


def init_params(key, cfg):
    """Synthetic parameters in the PyTorch layouts."""
    L = (cfg.image_size // cfg.patch_size) ** 2
    Hs = Ws = int(math.sqrt(L))
    F = Ws // 2 + 1
    G = Hs * F
    C = cfg.hidden_dim
    heads = cfg.num_heads
    d = C // heads * 2
    R = int(math.sqrt(L))
    rd = int(math.sqrt(C))
    p = cfg.patch_size

    keys = iter(jax.random.split(key, 64))

    def nrm(shape, std=0.02):
        return std * jax.random.normal(next(keys), shape, dtype=jnp.float32)

    params = {}
    fan_in = 3 * p * p
    params['conv_w'] = nrm((fan_in, C), std=math.sqrt(1.0 / fan_in))
    params['conv_b'] = jnp.zeros((C,), jnp.float32)
    params['pos_embedding'] = nrm((1, L, C))

    layers = []
    for _ in range(cfg.num_layers):
        lp = {}
        lp['ln1_g'] = jnp.ones((C,), jnp.float32)
        lp['ln1_b'] = jnp.zeros((C,), jnp.float32)
        lp['q_w'] = nrm((d, heads, d))          # torch layout (d_out, heads, d_in)
        lp['k_w'] = nrm((d, heads, d))
        lp['v_w'] = nrm((d, heads, d))
        lp['q_b'] = nrm((G, heads, 1))          # per spectral-token & head bias
        lp['k_b'] = nrm((G, heads, 1))
        lp['v_b'] = nrm((G, heads, 1))
        lp['ln2_g'] = jnp.ones((C,), jnp.float32)
        lp['ln2_b'] = jnp.zeros((C,), jnp.float32)
        lp['mlp_w1'] = nrm((C, cfg.mlp_dim))
        lp['mlp_b1'] = jnp.zeros((cfg.mlp_dim,), jnp.float32)
        lp['mlp_w2'] = nrm((cfg.mlp_dim, C))
        lp['mlp_b2'] = jnp.zeros((C,), jnp.float32)
        layers.append(lp)
    params['layers'] = layers

    params['enc_ln_g'] = jnp.ones((C,), jnp.float32)
    params['enc_ln_b'] = jnp.zeros((C,), jnp.float32)
    params['tc_w'] = nrm((R, L), std=math.sqrt(1.0 / L))    # Conv1d(L->R, k=1)
    params['tc_b'] = jnp.zeros((R,), jnp.float32)
    params['cc_w'] = nrm((C, rd), std=math.sqrt(1.0 / C))   # channel_control Linear
    params['cc_b'] = jnp.zeros((rd,), jnp.float32)
    # NOTE: PyTorch zero-initializes the head (output would be all zeros);
    # nonzero synthetic weights are used here to actually exercise the kernel.
    params['head_w'] = nrm((rd * R, cfg.num_classes))
    params['head_b'] = jnp.zeros((cfg.num_classes,), jnp.float32)
    return params


def prepare_params(params, cfg, TB):
    """Convert torch-layout params to the fused batch-blocked kernel layout."""
    C = cfg.hidden_dim
    heads = cfg.num_heads
    Ch = C // heads
    d = 2 * Ch
    C2 = 2 * C
    L = (cfg.image_size // cfg.patch_size) ** 2
    Hs = Ws = int(math.sqrt(L))
    G = Hs * (Ws // 2 + 1)
    R = int(math.sqrt(L))
    rd = int(math.sqrt(C))
    mlp = cfg.mlp_dim
    NC = cfg.num_classes
    scale = 1.0 / math.sqrt(d)
    TBL, TBG = TB * L, TB * G

    f64 = lambda a: np.asarray(a, dtype=np.float64)
    j32 = lambda a: jnp.asarray(np.asarray(a), dtype=jnp.float32)

    def blockdiag(m, n):
        a, b = m.shape
        out = np.zeros((n * a, n * b), np.float64)
        for i in range(n):
            out[i * a:(i + 1) * a, i * b:(i + 1) * b] = m
        return out

    dft_re, dft_im, idft_re, idft_im = make_dft_mats(Hs, Ws)
    dftcat = np.concatenate([blockdiag(dft_re, TB), blockdiag(dft_im, TB)], axis=0)
    idftre = blockdiag(idft_re, TB)
    idftim = blockdiag(idft_im, TB)

    # pos embedding + conv bias, tiled over the batch tile
    posb = np.tile(f64(params['pos_embedding']).reshape(L, C)
                   + f64(params['conv_b']).reshape(1, C), (TB, 1))

    # per-sample block-diagonal attention mask
    blk = np.kron(np.eye(TB), np.ones((G, G)))
    attn_mask = np.where(blk > 0.5, 0.0, -1e30)

    lnp_rows, qkw_rows, qkb_rows, vw_rows, vb_rows = [], [], [], [], []
    w1_rows, b1_rows, w2_rows, b2_rows = [], [], [], []
    for lp in params['layers']:
        lnp_rows += [f64(lp['ln1_g']).reshape(1, C), f64(lp['ln1_b']).reshape(1, C),
                     f64(lp['ln2_g']).reshape(1, C), f64(lp['ln2_b']).reshape(1, C)]
        qw, kw, vwt = f64(lp['q_w']), f64(lp['k_w']), f64(lp['v_w'])
        qb, kb, vbt = f64(lp['q_b']), f64(lp['k_b']), f64(lp['v_b'])
        for h in range(heads):
            Wq = np.zeros((C2, d))
            Wk = np.zeros((C2, d))
            Wvre = np.zeros((C2, C))
            Wvim = np.zeros((C2, C))
            for j in range(d):                    # torch interleaved input feature
                c_in = h * Ch + j // 2
                row = c_in if j % 2 == 0 else C + c_in   # [re_all | im_all] layout
                Wq[row, :] = qw[:, h, j] * scale         # fold attention scale into Q
                Wk[row, :] = kw[:, h, j]
                for xo in range(d):               # torch interleaved output feature
                    c_out = h * Ch + xo // 2
                    if xo % 2 == 0:
                        Wvre[row, c_out] = vwt[xo, h, j]
                    else:
                        Wvim[row, c_out] = vwt[xo, h, j]
            qkw_rows += [Wq, Wk]
            vw_rows += [Wvre, Wvim]

            qb_h = np.tile(qb[:, h, :] * scale, (TB, d))     # (TBG, d)
            kb_h = np.tile(kb[:, h, :], (TB, d))             # (TBG, d)
            colmask = np.zeros((1, C))
            colmask[0, h * Ch:(h + 1) * Ch] = 1.0
            vb_full = np.tile(vbt[:, h, :], (TB, C)) * colmask   # (TBG, C), only head-h cols
            qkb_rows += [qb_h, kb_h]
            vb_rows += [vb_full, vb_full.copy()]
        w1_rows.append(f64(lp['mlp_w1']))
        b1_rows.append(f64(lp['mlp_b1']).reshape(1, mlp))
        w2_rows.append(f64(lp['mlp_w2']))
        b2_rows.append(f64(lp['mlp_b2']).reshape(1, C))

    # token_control: block over batch, r-major output rows
    tcw = f64(params['tc_w'])
    tcblk = np.zeros((R * TB, TBL))
    for r in range(R):
        for b in range(TB):
            tcblk[r * TB + b, b * L:(b + 1) * L] = tcw[r]
    tcb = np.tile(f64(params['tc_b']).reshape(R, 1, 1), (1, TB, C)).reshape(R * TB, C)

    kp = dict(
        conv_w=j32(params['conv_w']),
        posb=j32(posb),
        dftcat=j32(dftcat), idftre=j32(idftre), idftim=j32(idftim),
        attn_mask=j32(attn_mask),
        lnp=j32(np.concatenate(lnp_rows, axis=0)),          # (nl*4, C)
        qkw=j32(np.concatenate(qkw_rows, axis=0)),           # (nl*heads*2*2C, d)
        qkb=j32(np.concatenate(qkb_rows, axis=0)),           # (nl*heads*2*TBG, d)
        vw=j32(np.concatenate(vw_rows, axis=0)),             # (nl*heads*2*2C, C)
        vb=j32(np.concatenate(vb_rows, axis=0)),              # (nl*heads*2*TBG, C)
        w1=j32(np.concatenate(w1_rows, axis=0)),              # (nl*C, mlp)
        b1=j32(np.concatenate(b1_rows, axis=0)),               # (nl, mlp)
        w2=j32(np.concatenate(w2_rows, axis=0)),               # (nl*mlp, C)
        b2=j32(np.concatenate(b2_rows, axis=0)),                # (nl, C)
        encp=j32(np.concatenate([f64(params['enc_ln_g']).reshape(1, C),
                                 f64(params['enc_ln_b']).reshape(1, C)], axis=0)),
        tcblk=j32(tcblk), tcb=j32(tcb),
        ccw=j32(params['cc_w']),
        ccb=j32(f64(params['cc_b']).reshape(1, rd)),
        hw=j32(params['head_w']),                              # (R*rd, NC)
        hb=j32(f64(params['head_b']).reshape(1, NC)),
    )
    return kp


# -------------------- forward (one fused pallas_call, TB samples / step) --------------------

def vit_forward(kp, x, cfg, TB):
    # x: (N, 3, image_size, image_size) NCHW
    N = x.shape[0]
    p = cfg.patch_size
    n_hw = cfg.image_size // p
    L = n_hw * n_hw
    C = cfg.hidden_dim
    heads = cfg.num_heads
    G = n_hw * (n_hw // 2 + 1)
    R = int(math.sqrt(L))
    rd = int(math.sqrt(C))
    NC = cfg.num_classes
    PK = 3 * p * p
    nl = cfg.num_layers
    mlp = cfg.mlp_dim
    TBL = TB * L

    n_steps = -(-N // TB)
    N_pad = n_steps * TB

    # patch extraction (tiny, one-time layout op on the raw input)
    patches = (x.reshape(N, 3, n_hw, p, n_hw, p)
                .transpose(0, 2, 4, 1, 3, 5)
                .reshape(N, L, PK))
    if N_pad != N:
        patches = jnp.pad(patches, ((0, N_pad - N), (0, 0), (0, 0)))
    patches2 = patches.reshape(N_pad * L, PK)

    def cspec(arr):
        return pl.BlockSpec(arr.shape, lambda n: (0, 0))

    kernel = partial(_vit_kernel, num_layers=nl, num_heads=heads, eps=1e-6,
                     TB=TB, L=L, C=C, G=G, R=R, rd=rd, NC=NC, mlp=mlp)

    out = pl.pallas_call(
        kernel,
        out_shape=jax.ShapeDtypeStruct((N_pad, NC), jnp.float32),
        grid=(n_steps,),
        in_specs=[
            pl.BlockSpec((TBL, PK), lambda n: (n, 0)),        # batch tile of patches
            cspec(kp['conv_w']), cspec(kp['posb']),
            cspec(kp['dftcat']), cspec(kp['idftre']), cspec(kp['idftim']),
            cspec(kp['attn_mask']),
            cspec(kp['lnp']), cspec(kp['qkw']), cspec(kp['qkb']),
            cspec(kp['vw']), cspec(kp['vb']),
            cspec(kp['w1']), cspec(kp['b1']), cspec(kp['w2']), cspec(kp['b2']),
            cspec(kp['encp']), cspec(kp['tcblk']), cspec(kp['tcb']),
            cspec(kp['ccw']), cspec(kp['ccb']),
            cspec(kp['hw']), cspec(kp['hb']),
        ],
        out_specs=pl.BlockSpec((TB, NC), lambda n: (n, 0)),
        compiler_params=pltpu.CompilerParams(
            dimension_semantics=("parallel",)),
    )(patches2, kp['conv_w'], kp['posb'],
      kp['dftcat'], kp['idftre'], kp['idftim'], kp['attn_mask'],
      kp['lnp'], kp['qkw'], kp['qkb'], kp['vw'], kp['vb'],
      kp['w1'], kp['b1'], kp['w2'], kp['b2'],
      kp['encp'], kp['tcblk'], kp['tcb'], kp['ccw'], kp['ccb'],
      kp['hw'], kp['hb'])
    return out[:N]


# -------------------- pure-JAX reference (mirrors the PyTorch spec) --------------------

def _ln_ref(v, g, b, eps=1e-6):
    m = jnp.mean(v, axis=-1, keepdims=True)
    c = v - m
    var = jnp.mean(c * c, axis=-1, keepdims=True)
    return c / jnp.sqrt(var + eps) * g + b


def _block_ref(x, lp, cfg):
    N, L, C = x.shape
    Hs = Ws = int(math.sqrt(L))
    F = Ws // 2 + 1
    G = Hs * F
    heads = cfg.num_heads
    d = C // heads * 2
    h = _ln_ref(x, lp['ln1_g'], lp['ln1_b'])
    xf = jnp.fft.rfft2(h.reshape(N, Hs, Ws, C), axes=(1, 2), norm='ortho')
    xr = jnp.stack([xf.real, xf.imag], axis=-1).reshape(N, G, 2 * C)
    qin = xr.reshape(N, G, heads, d)
    Q = jnp.einsum('nqhd,xhd->nqhx', qin, lp['q_w']) + lp['q_b']
    K = jnp.einsum('nkhd,xhd->nkhx', qin, lp['k_w']) + lp['k_b']
    V = jnp.einsum('nvhd,xhd->nvhx', qin, lp['v_w']) + lp['v_b']
    A = jnp.einsum('nqhd,nkhd->nhqk', Q, K) / math.sqrt(d)
    A = jax.nn.softmax(A, axis=3)
    o = jnp.einsum('nhqk,nkhd->nqhd', A, V)
    xr = o.reshape(N, G, 2 * C).reshape(N, Hs, F, C, 2)
    xc = lax.complex(xr[..., 0], xr[..., 1])
    xs = jnp.fft.irfft2(xc, s=(Hs, Ws), axes=(1, 2), norm='ortho').reshape(N, L, C)
    x = x + xs
    y = _ln_ref(x, lp['ln2_g'], lp['ln2_b'])
    y = _gelu_exact(y @ lp['mlp_w1'] + lp['mlp_b1']) @ lp['mlp_w2'] + lp['mlp_b2']
    return x + y


def vit_reference(params, x, cfg):
    N = x.shape[0]
    p = cfg.patch_size
    n_hw = cfg.image_size // p
    L = n_hw * n_hw
    patches = (x.reshape(N, 3, n_hw, p, n_hw, p)
                .transpose(0, 2, 4, 1, 3, 5)
                .reshape(N, L, 3 * p * p))
    h = patches @ params['conv_w'] + params['conv_b'] + params['pos_embedding']
    for lp in params['layers']:
        h = _block_ref(h, lp, cfg)
    h = _ln_ref(h, params['enc_ln_g'], params['enc_ln_b'])
    h = jnp.einsum('rl,nlc->nrc', params['tc_w'], h) + params['tc_b'][None, :, None]
    h = h @ params['cc_w'] + params['cc_b']
    h = h.reshape(N, -1)
    return h @ params['head_w'] + params['head_b']


# -------------------- main --------------------

if __name__ == "__main__":
    cfg = Config()
    key = jax.random.PRNGKey(0)
    pkey, xkey = jax.random.split(key)
    params = init_params(pkey, cfg)

    N = 16        # batch
    TB = 8        # samples per grid step (2 steps -> both v7x TensorCores busy)
    kparams = prepare_params(params, cfg, TB)
    x = jax.random.normal(xkey, (N, 3, cfg.image_size, cfg.image_size),
                          dtype=jnp.float32)

    fwd = jax.jit(partial(vit_forward, cfg=cfg, TB=TB))
    out = jax.block_until_ready(fwd(kparams, x))
    assert out.shape == (N, cfg.num_classes), out.shape
    assert bool(jnp.all(jnp.isfinite(out)))

    # correctness check against a pure-JAX transcription of the PyTorch module
    ref = jax.block_until_ready(vit_reference(params, x, cfg))
    np.testing.assert_allclose(np.asarray(out), np.asarray(ref),
                               rtol=5e-2, atol=5e-3)

    print("KERNEL_OK")
</pallas_src>

<mosaic_0001>
module attributes {stable_mosaic.version = 11 : i64} {
  func.func @_vit_kernel(%arg0: i32, %arg1: memref<128x48xf32, #tpu.memory_space<vmem>>, %arg2: memref<48x16xf32, #tpu.memory_space<vmem>>, %arg3: memref<128x16xf32, #tpu.memory_space<vmem>>, %arg4: memref<192x128xf32, #tpu.memory_space<vmem>>, %arg5: memref<128x96xf32, #tpu.memory_space<vmem>>, %arg6: memref<128x96xf32, #tpu.memory_space<vmem>>, %arg7: memref<96x96xf32, #tpu.memory_space<vmem>>, %arg8: memref<8x16xf32, #tpu.memory_space<vmem>>, %arg9: memref<256x16xf32, #tpu.memory_space<vmem>>, %arg10: memref<768x16xf32, #tpu.memory_space<vmem>>, %arg11: memref<256x16xf32, #tpu.memory_space<vmem>>, %arg12: memref<768x16xf32, #tpu.memory_space<vmem>>, %arg13: memref<32x32xf32, #tpu.memory_space<vmem>>, %arg14: memref<2x32xf32, #tpu.memory_space<vmem>>, %arg15: memref<64x16xf32, #tpu.memory_space<vmem>>, %arg16: memref<2x16xf32, #tpu.memory_space<vmem>>, %arg17: memref<2x16xf32, #tpu.memory_space<vmem>>, %arg18: memref<32x128xf32, #tpu.memory_space<vmem>>, %arg19: memref<32x16xf32, #tpu.memory_space<vmem>>, %arg20: memref<16x4xf32, #tpu.memory_space<vmem>>, %arg21: memref<1x4xf32, #tpu.memory_space<vmem>>, %arg22: memref<16x10xf32, #tpu.memory_space<vmem>>, %arg23: memref<1x10xf32, #tpu.memory_space<vmem>>, %arg24: memref<8x10xf32, #tpu.memory_space<vmem>>) attributes {dimension_semantics = [#tpu.dimension_semantics<parallel>], iteration_bounds = array<i64: 2>, scalar_prefetch = 0 : i64, scratch_operands = 0 : i64, tpu.core_type = #tpu.core_type<tc>, window_params = [{transform_indices = @transform_0, window_bounds = array<i64: 128, 48>}, {pipeline_mode = #tpu.pipeline_mode<synchronous>, transform_indices = @transform_1, window_bounds = array<i64: 48, 16>}, {pipeline_mode = #tpu.pipeline_mode<synchronous>, transform_indices = @transform_2, window_bounds = array<i64: 128, 16>}, {pipeline_mode = #tpu.pipeline_mode<synchronous>, transform_indices = @transform_3, window_bounds = array<i64: 192, 128>}, {pipeline_mode = #tpu.pipeline_mode<synchronous>, transform_indices = @transform_4, window_bounds = array<i64: 128, 96>}, {pipeline_mode = #tpu.pipeline_mode<synchronous>, transform_indices = @transform_5, window_bounds = array<i64: 128, 96>}, {pipeline_mode = #tpu.pipeline_mode<synchronous>, transform_indices = @transform_6, window_bounds = array<i64: 96, 96>}, {pipeline_mode = #tpu.pipeline_mode<synchronous>, transform_indices = @transform_7, window_bounds = array<i64: 8, 16>}, {pipeline_mode = #tpu.pipeline_mode<synchronous>, transform_indices = @transform_8, window_bounds = array<i64: 256, 16>}, {pipeline_mode = #tpu.pipeline_mode<synchronous>, transform_indices = @transform_9, window_bounds = array<i64: 768, 16>}, {pipeline_mode = #tpu.pipeline_mode<synchronous>, transform_indices = @transform_10, window_bounds = array<i64: 256, 16>}, {pipeline_mode = #tpu.pipeline_mode<synchronous>, transform_indices = @transform_11, window_bounds = array<i64: 768, 16>}, {pipeline_mode = #tpu.pipeline_mode<synchronous>, transform_indices = @transform_12, window_bounds = array<i64: 32, 32>}, {pipeline_mode = #tpu.pipeline_mode<synchronous>, transform_indices = @transform_13, window_bounds = array<i64: 2, 32>}, {pipeline_mode = #tpu.pipeline_mode<synchronous>, transform_indices = @transform_14, window_bounds = array<i64: 64, 16>}, {pipeline_mode = #tpu.pipeline_mode<synchronous>, transform_indices = @transform_15, window_bounds = array<i64: 2, 16>}, {pipeline_mode = #tpu.pipeline_mode<synchronous>, transform_indices = @transform_16, window_bounds = array<i64: 2, 16>}, {pipeline_mode = #tpu.pipeline_mode<synchronous>, transform_indices = @transform_17, window_bounds = array<i64: 32, 128>}, {pipeline_mode = #tpu.pipeline_mode<synchronous>, transform_indices = @transform_18, window_bounds = array<i64: 32, 16>}, {pipeline_mode = #tpu.pipeline_mode<synchronous>, transform_indices = @transform_19, window_bounds = array<i64: 16, 4>}, {pipeline_mode = #tpu.pipeline_mode<synchronous>, transform_indices = @transform_20, window_bounds = array<i64: 1, 4>}, {pipeline_mode = #tpu.pipeline_mode<synchronous>, transform_indices = @transform_21, window_bounds = array<i64: 16, 10>}, {pipeline_mode = #tpu.pipeline_mode<synchronous>, transform_indices = @transform_22, window_bounds = array<i64: 1, 10>}, {transform_indices = @transform_23, window_bounds = array<i64: 8, 10>}]} {
    %c0 = arith.constant 0 : index
    %c0_0 = arith.constant 0 : index
    %0 = vector.load %arg1[%c0, %c0_0] : memref<128x48xf32, #tpu.memory_space<vmem>>, vector<128x48xf32>
    %c0_1 = arith.constant 0 : index
    %c0_2 = arith.constant 0 : index
    %1 = vector.load %arg2[%c0_1, %c0_2] : memref<48x16xf32, #tpu.memory_space<vmem>>, vector<48x16xf32>
    %cst = arith.constant dense<0.000000e+00> : vector<128x16xf32>
    %2 = tpu.matmul %0, %1, %cst {dimension_numbers = #tpu.dot_dimension_numbers<[1], [0], [0], [1], [0, 0, 1, 1], [], []>} : vector<128x48xf32>, vector<48x16xf32>, vector<128x16xf32> -> vector<128x16xf32>
    %c0_3 = arith.constant 0 : index
    %c0_4 = arith.constant 0 : index
    %3 = vector.load %arg3[%c0_3, %c0_4] : memref<128x16xf32, #tpu.memory_space<vmem>>, vector<128x16xf32>
    %4 = arith.addf %2, %3 : vector<128x16xf32>
    %c0_5 = arith.constant 0 : index
    %c0_6 = arith.constant 0 : index
    %5 = vector.load %arg8[%c0_5, %c0_6] : memref<8x16xf32, #tpu.memory_space<vmem>>, vector<1x16xf32>
    %c1 = arith.constant 1 : index
    %c0_7 = arith.constant 0 : index
    %6 = vector.load %arg8[%c1, %c0_7] : memref<8x16xf32, #tpu.memory_space<vmem>>, vector<1x16xf32>
    %cst_8 = arith.constant dense<0.000000e+00> : vector<128xf32>
    %7 = vector.multi_reduction <add>, %4, %cst_8 [1] : vector<128x16xf32> to vector<128xf32>
    %8 = vector.shape_cast %7 : vector<128xf32> to vector<128x1xf32>
    %cst_9 = arith.constant 1.600000e+01 : f32
    %9 = vector.broadcast %cst_9 : f32 to vector<128x1xf32>
    %10 = arith.divf %8, %9 : vector<128x1xf32>
    %11 = vector.broadcast %10 : vector<128x1xf32> to vector<128x16xf32>
    %12 = arith.subf %4, %11 : vector<128x16xf32>
    %13 = arith.mulf %12, %12 : vector<128x16xf32>
    %cst_10 = arith.constant dense<0.000000e+00> : vector<128xf32>
    %14 = vector.multi_reduction <add>, %13, %cst_10 [1] : vector<128x16xf32> to vector<128xf32>
    %15 = vector.shape_cast %14 : vector<128xf32> to vector<128x1xf32>
    %cst_11 = arith.constant 1.600000e+01 : f32
    %16 = vector.broadcast %cst_11 : f32 to vector<128x1xf32>
    %17 = arith.divf %15, %16 : vector<128x1xf32>
    %cst_12 = arith.constant 9.99999997E-7 : f32
    %18 = vector.broadcast %cst_12 : f32 to vector<128x1xf32>
    %19 = arith.addf %17, %18 : vector<128x1xf32>
    %20 = math.rsqrt %19 : vector<128x1xf32>
    %21 = vector.broadcast %20 : vector<128x1xf32> to vector<128x16xf32>
    %22 = arith.mulf %12, %21 : vector<128x16xf32>
    %23 = vector.broadcast %5 : vector<1x16xf32> to vector<128x16xf32>
    %24 = arith.mulf %22, %23 : vector<128x16xf32>
    %25 = vector.broadcast %6 : vector<1x16xf32> to vector<128x16xf32>
    %26 = arith.addf %24, %25 : vector<128x16xf32>
    %c0_13 = arith.constant 0 : index
    %c0_14 = arith.constant 0 : index
    %27 = vector.load %arg4[%c0_13, %c0_14] : memref<192x128xf32, #tpu.memory_space<vmem>>, vector<192x128xf32>
    %cst_15 = arith.constant dense<0.000000e+00> : vector<192x16xf32>
    %28 = tpu.matmul %27, %26, %cst_15 {dimension_numbers = #tpu.dot_dimension_numbers<[1], [0], [0], [1], [0, 0, 1, 1], [], []>} : vector<192x128xf32>, vector<128x16xf32>, vector<192x16xf32> -> vector<192x16xf32>
    %29 = vector.extract_strided_slice %28 {offsets = [0, 0], sizes = [96, 16], strides = [1, 1]} : vector<192x16xf32> to vector<96x16xf32>
    %30 = vector.extract_strided_slice %28 {offsets = [96, 0], sizes = [96, 16], strides = [1, 1]} : vector<192x16xf32> to vector<96x16xf32>
    %31 = tpu.concatenate %29, %30 in 1 : vector<96x16xf32>, vector<96x16xf32> -> vector<96x32xf32>
    %cst_16 = arith.constant 0.000000e+00 : f32
    %32 = vector.broadcast %cst_16 : f32 to vector<96x16xf32>
    %cst_17 = arith.constant 0.000000e+00 : f32
    %33 = vector.broadcast %cst_17 : f32 to vector<96x16xf32>
    %c0_18 = arith.constant 0 : index
    %c0_19 = arith.constant 0 : index
    %34 = vector.load %arg9[%c0_18, %c0_19] : memref<256x16xf32, #tpu.memory_space<vmem>>, vector<32x16xf32>
    %cst_20 = arith.constant dense<0.000000e+00> : vector<96x16xf32>
    %35 = tpu.matmul %31, %34, %cst_20 {dimension_numbers = #tpu.dot_dimension_numbers<[1], [0], [0], [1], [0, 0, 1, 1], [], []>} : vector<96x32xf32>, vector<32x16xf32>, vector<96x16xf32> -> vector<96x16xf32>
    %c0_21 = arith.constant 0 : index
    %c0_22 = arith.constant 0 : index
    %36 = vector.load %arg10[%c0_21, %c0_22] : memref<768x16xf32, #tpu.memory_space<vmem>>, vector<96x16xf32>
    %37 = arith.addf %35, %36 : vector<96x16xf32>
    %c32 = arith.constant 32 : index
    %c0_23 = arith.constant 0 : index
    %38 = vector.load %arg9[%c32, %c0_23] : memref<256x16xf32, #tpu.memory_space<vmem>>, vector<32x16xf32>
    %cst_24 = arith.constant dense<0.000000e+00> : vector<96x16xf32>
    %39 = tpu.matmul %31, %38, %cst_24 {dimension_numbers = #tpu.dot_dimension_numbers<[1], [0], [0], [1], [0, 0, 1, 1], [], []>} : vector<96x32xf32>, vector<32x16xf32>, vector<96x16xf32> -> vector<96x16xf32>
    %c96 = arith.constant 96 : index
    %c0_25 = arith.constant 0 : index
    %40 = vector.load %arg10[%c96, %c0_25] : memref<768x16xf32, #tpu.memory_space<vmem>>, vector<96x16xf32>
    %41 = arith.addf %39, %40 : vector<96x16xf32>
    %c0_26 = arith.constant 0 : index
    %c0_27 = arith.constant 0 : index
    %42 = vector.load %arg11[%c0_26, %c0_27] : memref<256x16xf32, #tpu.memory_space<vmem>>, vector<32x16xf32>
    %cst_28 = arith.constant dense<0.000000e+00> : vector<96x16xf32>
    %43 = tpu.matmul %31, %42, %cst_28 {dimension_numbers = #tpu.dot_dimension_numbers<[1], [0], [0], [1], [0, 0, 1, 1], [], []>} : vector<96x32xf32>, vector<32x16xf32>, vector<96x16xf32> -> vector<96x16xf32>
    %c0_29 = arith.constant 0 : index
    %c0_30 = arith.constant 0 : index
    %44 = vector.load %arg12[%c0_29, %c0_30] : memref<768x16xf32, #tpu.memory_space<vmem>>, vector<96x16xf32>
    %45 = arith.addf %43, %44 : vector<96x16xf32>
    %c32_31 = arith.constant 32 : index
    %c0_32 = arith.constant 0 : index
    %46 = vector.load %arg11[%c32_31, %c0_32] : memref<256x16xf32, #tpu.memory_space<vmem>>, vector<32x16xf32>
    %cst_33 = arith.constant dense<0.000000e+00> : vector<96x16xf32>
    %47 = tpu.matmul %31, %46, %cst_33 {dimension_numbers = #tpu.dot_dimension_numbers<[1], [0], [0], [1], [0, 0, 1, 1], [], []>} : vector<96x32xf32>, vector<32x16xf32>, vector<96x16xf32> -> vector<96x16xf32>
    %c96_34 = arith.constant 96 : index
    %c0_35 = arith.constant 0 : index
    %48 = vector.load %arg12[%c96_34, %c0_35] : memref<768x16xf32, #tpu.memory_space<vmem>>, vector<96x16xf32>
    %49 = arith.addf %47, %48 : vector<96x16xf32>
    %cst_36 = arith.constant dense<0.000000e+00> : vector<96x96xf32>
    %50 = tpu.matmul %37, %41, %cst_36 {dimension_numbers = #tpu.dot_dimension_numbers<[1], [1], [0], [0], [0, 0, 1, 0], [], []>} : vector<96x16xf32>, vector<96x16xf32>, vector<96x96xf32> -> vector<96x96xf32>
    %c0_37 = arith.constant 0 : index
    %c0_38 = arith.constant 0 : index
    %51 = vector.load %arg7[%c0_37, %c0_38] : memref<96x96xf32, #tpu.memory_space<vmem>>, vector<96x96xf32>
    %52 = arith.addf %50, %51 : vector<96x96xf32>
    %cst_39 = arith.constant dense<0xFF800000> : vector<96xf32>
    %53 = vector.multi_reduction <maximumf>, %52, %cst_39 [1] : vector<96x96xf32> to vector<96xf32>
    %54 = vector.shape_cast %53 : vector<96xf32> to vector<96x1xf32>
    %55 = vector.broadcast %54 : vector<96x1xf32> to vector<96x96xf32>
    %56 = arith.subf %52, %55 : vector<96x96xf32>
    %57 = math.exp %56 : vector<96x96xf32>
    %cst_40 = arith.constant dense<0.000000e+00> : vector<96xf32>
    %58 = vector.multi_reduction <add>, %57, %cst_40 [1] : vector<96x96xf32> to vector<96xf32>
    %59 = vector.shape_cast %58 : vector<96xf32> to vector<96x1xf32>
    %60 = vector.broadcast %59 : vector<96x1xf32> to vector<96x96xf32>
    %61 = arith.divf %57, %60 : vector<96x96xf32>
    %cst_41 = arith.constant dense<0.000000e+00> : vector<96x16xf32>
    %62 = tpu.matmul %61, %45, %cst_41 {dimension_numbers = #tpu.dot_dimension_numbers<[1], [0], [0], [1], [0, 0, 1, 1], [], []>} : vector<96x96xf32>, vector<96x16xf32>, vector<96x16xf32> -> vector<96x16xf32>
    %63 = arith.addf %32, %62 : vector<96x16xf32>
    %cst_42 = arith.constant dense<0.000000e+00> : vector<96x16xf32>
    %64 = tpu.matmul %61, %49, %cst_42 {dimension_numbers = #tpu.dot_dimension_numbers<[1], [0], [0], [1], [0, 0, 1, 1], [], []>} : vector<96x96xf32>, vector<96x16xf32>, vector<96x16xf32> -> vector<96x16xf32>
    %65 = arith.addf %33, %64 : vector<96x16xf32>
    %c64 = arith.constant 64 : index
    %c0_43 = arith.constant 0 : index
    %66 = vector.load %arg9[%c64, %c0_43] : memref<256x16xf32, #tpu.memory_space<vmem>>, vector<32x16xf32>
    %cst_44 = arith.constant dense<0.000000e+00> : vector<96x16xf32>
    %67 = tpu.matmul %31, %66, %cst_44 {dimension_numbers = #tpu.dot_dimension_numbers<[1], [0], [0], [1], [0, 0, 1, 1], [], []>} : vector<96x32xf32>, vector<32x16xf32>, vector<96x16xf32> -> vector<96x16xf32>
    %c192 = arith.constant 192 : index
    %c0_45 = arith.constant 0 : index
    %68 = vector.load %arg10[%c192, %c0_45] : memref<768x16xf32, #tpu.memory_space<vmem>>, vector<96x16xf32>
    %69 = arith.addf %67, %68 : vector<96x16xf32>
    %c96_46 = arith.constant 96 : index
    %c0_47 = arith.constant 0 : index
    %70 = vector.load %arg9[%c96_46, %c0_47] : memref<256x16xf32, #tpu.memory_space<vmem>>, vector<32x16xf32>
    %cst_48 = arith.constant dense<0.000000e+00> : vector<96x16xf32>
    %71 = tpu.matmul %31, %70, %cst_48 {dimension_numbers = #tpu.dot_dimension_numbers<[1], [0], [0], [1], [0, 0, 1, 1], [], []>} : vector<96x32xf32>, vector<32x16xf32>, vector<96x16xf32> -> vector<96x16xf32>
    %c288 = arith.constant 288 : index
    %c0_49 = arith.constant 0 : index
    %72 = vector.load %arg10[%c288, %c0_49] : memref<768x16xf32, #tpu.memory_space<vmem>>, vector<96x16xf32>
    %73 = arith.addf %71, %72 : vector<96x16xf32>
    %c64_50 = arith.constant 64 : index
    %c0_51 = arith.constant 0 : index
    %74 = vector.load %arg11[%c64_50, %c0_51] : memref<256x16xf32, #tpu.memory_space<vmem>>, vector<32x16xf32>
    %cst_52 = arith.constant dense<0.000000e+00> : vector<96x16xf32>
    %75 = tpu.matmul %31, %74, %cst_52 {dimension_numbers = #tpu.dot_dimension_numbers<[1], [0], [0], [1], [0, 0, 1, 1], [], []>} : vector<96x32xf32>, vector<32x16xf32>, vector<96x16xf32> -> vector<96x16xf32>
    %c192_53 = arith.constant 192 : index
    %c0_54 = arith.constant 0 : index
    %76 = vector.load %arg12[%c192_53, %c0_54] : memref<768x16xf32, #tpu.memory_space<vmem>>, vector<96x16xf32>
    %77 = arith.addf %75, %76 : vector<96x16xf32>
    %c96_55 = arith.constant 96 : index
    %c0_56 = arith.constant 0 : index
    %78 = vector.load %arg11[%c96_55, %c0_56] : memref<256x16xf32, #tpu.memory_space<vmem>>, vector<32x16xf32>
    %cst_57 = arith.constant dense<0.000000e+00> : vector<96x16xf32>
    %79 = tpu.matmul %31, %78, %cst_57 {dimension_numbers = #tpu.dot_dimension_numbers<[1], [0], [0], [1], [0, 0, 1, 1], [], []>} : vector<96x32xf32>, vector<32x16xf32>, vector<96x16xf32> -> vector<96x16xf32>
    %c288_58 = arith.constant 288 : index
    %c0_59 = arith.constant 0 : index
    %80 = vector.load %arg12[%c288_58, %c0_59] : memref<768x16xf32, #tpu.memory_space<vmem>>, vector<96x16xf32>
    %81 = arith.addf %79, %80 : vector<96x16xf32>
    %cst_60 = arith.constant dense<0.000000e+00> : vector<96x96xf32>
    %82 = tpu.matmul %69, %73, %cst_60 {dimension_numbers = #tpu.dot_dimension_numbers<[1], [1], [0], [0], [0, 0, 1, 0], [], []>} : vector<96x16xf32>, vector<96x16xf32>, vector<96x96xf32> -> vector<96x96xf32>
    %c0_61 = arith.constant 0 : index
    %c0_62 = arith.constant 0 : index
    %83 = vector.load %arg7[%c0_61, %c0_62] : memref<96x96xf32, #tpu.memory_space<vmem>>, vector<96x96xf32>
    %84 = arith.addf %82, %83 : vector<96x96xf32>
    %cst_63 = arith.constant dense<0xFF800000> : vector<96xf32>
    %85 = vector.multi_reduction <maximumf>, %84, %cst_63 [1] : vector<96x96xf32> to vector<96xf32>
    %86 = vector.shape_cast %85 : vector<96xf32> to vector<96x1xf32>
    %87 = vector.broadcast %86 : vector<96x1xf32> to vector<96x96xf32>
    %88 = arith.subf %84, %87 : vector<96x96xf32>
    %89 = math.exp %88 : vector<96x96xf32>
    %cst_64 = arith.constant dense<0.000000e+00> : vector<96xf32>
    %90 = vector.multi_reduction <add>, %89, %cst_64 [1] : vector<96x96xf32> to vector<96xf32>
    %91 = vector.shape_cast %90 : vector<96xf32> to vector<96x1xf32>
    %92 = vector.broadcast %91 : vector<96x1xf32> to vector<96x96xf32>
    %93 = arith.divf %89, %92 : vector<96x96xf32>
    %cst_65 = arith.constant dense<0.000000e+00> : vector<96x16xf32>
    %94 = tpu.matmul %93, %77, %cst_65 {dimension_numbers = #tpu.dot_dimension_numbers<[1], [0], [0], [1], [0, 0, 1, 1], [], []>} : vector<96x96xf32>, vector<96x16xf32>, vector<96x16xf32> -> vector<96x16xf32>
    %95 = arith.addf %63, %94 : vector<96x16xf32>
    %cst_66 = arith.constant dense<0.000000e+00> : vector<96x16xf32>
    %96 = tpu.matmul %93, %81, %cst_66 {dimension_numbers = #tpu.dot_dimension_numbers<[1], [0], [0], [1], [0, 0, 1, 1], [], []>} : vector<96x96xf32>, vector<96x16xf32>, vector<96x16xf32> -> vector<96x16xf32>
    %97 = arith.addf %65, %96 : vector<96x16xf32>
    %c0_67 = arith.constant 0 : index
    %c0_68 = arith.constant 0 : index
    %98 = vector.load %arg5[%c0_67, %c0_68] : memref<128x96xf32, #tpu.memory_space<vmem>>, vector<128x96xf32>
    %cst_69 = arith.constant dense<0.000000e+00> : vector<128x16xf32>
    %99 = tpu.matmul %98, %95, %cst_69 {dimension_numbers = #tpu.dot_dimension_numbers<[1], [0], [0], [1], [0, 0, 1, 1], [], []>} : vector<128x96xf32>, vector<96x16xf32>, vector<128x16xf32> -> vector<128x16xf32>
    %c0_70 = arith.constant 0 : index
    %c0_71 = arith.constant 0 : index
    %100 = vector.load %arg6[%c0_70, %c0_71] : memref<128x96xf32, #tpu.memory_space<vmem>>, vector<128x96xf32>
    %cst_72 = arith.constant dense<0.000000e+00> : vector<128x16xf32>
    %101 = tpu.matmul %100, %97, %cst_72 {dimension_numbers = #tpu.dot_dimension_numbers<[1], [0], [0], [1], [0, 0, 1, 1], [], []>} : vector<128x96xf32>, vector<96x16xf32>, vector<128x16xf32> -> vector<128x16xf32>
    %102 = arith.addf %99, %101 : vector<128x16xf32>
    %103 = arith.addf %4, %102 : vector<128x16xf32>
    %c2 = arith.constant 2 : index
    %c0_73 = arith.constant 0 : index
    %104 = vector.load %arg8[%c2, %c0_73] : memref<8x16xf32, #tpu.memory_space<vmem>>, vector<1x16xf32>
    %c3 = arith.constant 3 : index
    %c0_74 = arith.constant 0 : index
    %105 = vector.load %arg8[%c3, %c0_74] : memref<8x16xf32, #tpu.memory_space<vmem>>, vector<1x16xf32>
    %cst_75 = arith.constant dense<0.000000e+00> : vector<128xf32>
    %106 = vector.multi_reduction <add>, %103, %cst_75 [1] : vector<128x16xf32> to vector<128xf32>
    %107 = vector.shape_cast %106 : vector<128xf32> to vector<128x1xf32>
    %cst_76 = arith.constant 1.600000e+01 : f32
    %108 = vector.broadcast %cst_76 : f32 to vector<128x1xf32>
    %109 = arith.divf %107, %108 : vector<128x1xf32>
    %110 = vector.broadcast %109 : vector<128x1xf32> to vector<128x16xf32>
    %111 = arith.subf %103, %110 : vector<128x16xf32>
    %112 = arith.mulf %111, %111 : vector<128x16xf32>
    %cst_77 = arith.constant dense<0.000000e+00> : vector<128xf32>
    %113 = vector.multi_reduction <add>, %112, %cst_77 [1] : vector<128x16xf32> to vector<128xf32>
    %114 = vector.shape_cast %113 : vector<128xf32> to vector<128x1xf32>
    %cst_78 = arith.constant 1.600000e+01 : f32
    %115 = vector.broadcast %cst_78 : f32 to vector<128x1xf32>
    %116 = arith.divf %114, %115 : vector<128x1xf32>
    %cst_79 = arith.constant 9.99999997E-7 : f32
    %117 = vector.broadcast %cst_79 : f32 to vector<128x1xf32>
    %118 = arith.addf %116, %117 : vector<128x1xf32>
    %119 = math.rsqrt %118 : vector<128x1xf32>
    %120 = vector.broadcast %119 : vector<128x1xf32> to vector<128x16xf32>
    %121 = arith.mulf %111, %120 : vector<128x16xf32>
    %122 = vector.broadcast %104 : vector<1x16xf32> to vector<128x16xf32>
    %123 = arith.mulf %121, %122 : vector<128x16xf32>
    %124 = vector.broadcast %105 : vector<1x16xf32> to vector<128x16xf32>
    %125 = arith.addf %123, %124 : vector<128x16xf32>
    %c0_80 = arith.constant 0 : index
    %c0_81 = arith.constant 0 : index
    %126 = vector.load %arg13[%c0_80, %c0_81] : memref<32x32xf32, #tpu.memory_space<vmem>>, vector<16x32xf32>
    %cst_82 = arith.constant dense<0.000000e+00> : vector<128x32xf32>
    %127 = tpu.matmul %125, %126, %cst_82 {dimension_numbers = #tpu.dot_dimension_numbers<[1], [0], [0], [1], [0, 0, 1, 1], [], []>} : vector<128x16xf32>, vector<16x32xf32>, vector<128x32xf32> -> vector<128x32xf32>
    %c0_83 = arith.constant 0 : index
    %c0_84 = arith.constant 0 : index
    %128 = vector.load %arg14[%c0_83, %c0_84] : memref<2x32xf32, #tpu.memory_space<vmem>>, vector<1x32xf32>
    %129 = vector.broadcast %128 : vector<1x32xf32> to vector<128x32xf32>
    %130 = arith.addf %127, %129 : vector<128x32xf32>
    %cst_85 = arith.constant 5.000000e-01 : f32
    %131 = vector.broadcast %cst_85 : f32 to vector<128x32xf32>
    %132 = arith.mulf %131, %130 : vector<128x32xf32>
    %cst_86 = arith.constant 0.707106769 : f32
    %133 = vector.broadcast %cst_86 : f32 to vector<128x32xf32>
    %134 = arith.mulf %130, %133 : vector<128x32xf32>
    %135 = math.erf %134 : vector<128x32xf32>
    %cst_87 = arith.constant 1.000000e+00 : f32
    %136 = vector.broadcast %cst_87 : f32 to vector<128x32xf32>
    %137 = arith.addf %136, %135 : vector<128x32xf32>
    %138 = arith.mulf %132, %137 : vector<128x32xf32>
    %c0_88 = arith.constant 0 : index
    %c0_89 = arith.constant 0 : index
    %139 = vector.load %arg15[%c0_88, %c0_89] : memref<64x16xf32, #tpu.memory_space<vmem>>, vector<32x16xf32>
    %cst_90 = arith.constant dense<0.000000e+00> : vector<128x16xf32>
    %140 = tpu.matmul %138, %139, %cst_90 {dimension_numbers = #tpu.dot_dimension_numbers<[1], [0], [0], [1], [0, 0, 1, 1], [], []>} : vector<128x32xf32>, vector<32x16xf32>, vector<128x16xf32> -> vector<128x16xf32>
    %c0_91 = arith.constant 0 : index
    %c0_92 = arith.constant 0 : index
    %141 = vector.load %arg16[%c0_91, %c0_92] : memref<2x16xf32, #tpu.memory_space<vmem>>, vector<1x16xf32>
    %142 = vector.broadcast %141 : vector<1x16xf32> to vector<128x16xf32>
    %143 = arith.addf %140, %142 : vector<128x16xf32>
    %144 = arith.addf %103, %143 : vector<128x16xf32>
    %c4 = arith.constant 4 : index
    %c0_93 = arith.constant 0 : index
    %145 = vector.load %arg8[%c4, %c0_93] : memref<8x16xf32, #tpu.memory_space<vmem>>, vector<1x16xf32>
    %c5 = arith.constant 5 : index
    %c0_94 = arith.constant 0 : index
    %146 = vector.load %arg8[%c5, %c0_94] : memref<8x16xf32, #tpu.memory_space<vmem>>, vector<1x16xf32>
    %cst_95 = arith.constant dense<0.000000e+00> : vector<128xf32>
    %147 = vector.multi_reduction <add>, %144, %cst_95 [1] : vector<128x16xf32> to vector<128xf32>
    %148 = vector.shape_cast %147 : vector<128xf32> to vector<128x1xf32>
    %cst_96 = arith.constant 1.600000e+01 : f32
    %149 = vector.broadcast %cst_96 : f32 to vector<128x1xf32>
    %150 = arith.divf %148, %149 : vector<128x1xf32>
    %151 = vector.broadcast %150 : vector<128x1xf32> to vector<128x16xf32>
    %152 = arith.subf %144, %151 : vector<128x16xf32>
    %153 = arith.mulf %152, %152 : vector<128x16xf32>
    %cst_97 = arith.constant dense<0.000000e+00> : vector<128xf32>
    %154 = vector.multi_reduction <add>, %153, %cst_97 [1] : vector<128x16xf32> to vector<128xf32>
    %155 = vector.shape_cast %154 : vector<128xf32> to vector<128x1xf32>
    %cst_98 = arith.constant 1.600000e+01 : f32
    %156 = vector.broadcast %cst_98 : f32 to vector<128x1xf32>
    %157 = arith.divf %155, %156 : vector<128x1xf32>
    %cst_99 = arith.constant 9.99999997E-7 : f32
    %158 = vector.broadcast %cst_99 : f32 to vector<128x1xf32>
    %159 = arith.addf %157, %158 : vector<128x1xf32>
    %160 = math.rsqrt %159 : vector<128x1xf32>
    %161 = vector.broadcast %160 : vector<128x1xf32> to vector<128x16xf32>
    %162 = arith.mulf %152, %161 : vector<128x16xf32>
    %163 = vector.broadcast %145 : vector<1x16xf32> to vector<128x16xf32>
    %164 = arith.mulf %162, %163 : vector<128x16xf32>
    %165 = vector.broadcast %146 : vector<1x16xf32> to vector<128x16xf32>
    %166 = arith.addf %164, %165 : vector<128x16xf32>
    %c0_100 = arith.constant 0 : index
    %c0_101 = arith.constant 0 : index
    %167 = vector.load %arg4[%c0_100, %c0_101] : memref<192x128xf32, #tpu.memory_space<vmem>>, vector<192x128xf32>
    %cst_102 = arith.constant dense<0.000000e+00> : vector<192x16xf32>
    %168 = tpu.matmul %167, %166, %cst_102 {dimension_numbers = #tpu.dot_dimension_numbers<[1], [0], [0], [1], [0, 0, 1, 1], [], []>} : vector<192x128xf32>, vector<128x16xf32>, vector<192x16xf32> -> vector<192x16xf32>
    %169 = vector.extract_strided_slice %168 {offsets = [0, 0], sizes = [96, 16], strides = [1, 1]} : vector<192x16xf32> to vector<96x16xf32>
    %170 = vector.extract_strided_slice %168 {offsets = [96, 0], sizes = [96, 16], strides = [1, 1]} : vector<192x16xf32> to vector<96x16xf32>
    %171 = tpu.concatenate %169, %170 in 1 : vector<96x16xf32>, vector<96x16xf32> -> vector<96x32xf32>
    %cst_103 = arith.constant 0.000000e+00 : f32
    %172 = vector.broadcast %cst_103 : f32 to vector<96x16xf32>
    %cst_104 = arith.constant 0.000000e+00 : f32
    %173 = vector.broadcast %cst_104 : f32 to vector<96x16xf32>
    %c128 = arith.constant 128 : index
    %c0_105 = arith.constant 0 : index
    %174 = vector.load %arg9[%c128, %c0_105] : memref<256x16xf32, #tpu.memory_space<vmem>>, vector<32x16xf32>
    %cst_106 = arith.constant dense<0.000000e+00> : vector<96x16xf32>
    %175 = tpu.matmul %171, %174, %cst_106 {dimension_numbers = #tpu.dot_dimension_numbers<[1], [0], [0], [1], [0, 0, 1, 1], [], []>} : vector<96x32xf32>, vector<32x16xf32>, vector<96x16xf32> -> vector<96x16xf32>
    %c384 = arith.constant 384 : index
    %c0_107 = arith.constant 0 : index
    %176 = vector.load %arg10[%c384, %c0_107] : memref<768x16xf32, #tpu.memory_space<vmem>>, vector<96x16xf32>
    %177 = arith.addf %175, %176 : vector<96x16xf32>
    %c160 = arith.constant 160 : index
    %c0_108 = arith.constant 0 : index
    %178 = vector.load %arg9[%c160, %c0_108] : memref<256x16xf32, #tpu.memory_space<vmem>>, vector<32x16xf32>
    %cst_109 = arith.constant dense<0.000000e+00> : vector<96x16xf32>
    %179 = tpu.matmul %171, %178, %cst_109 {dimension_numbers = #tpu.dot_dimension_numbers<[1], [0], [0], [1], [0, 0, 1, 1], [], []>} : vector<96x32xf32>, vector<32x16xf32>, vector<96x16xf32> -> vector<96x16xf32>
    %c480 = arith.constant 480 : index
    %c0_110 = arith.constant 0 : index
    %180 = vector.load %arg10[%c480, %c0_110] : memref<768x16xf32, #tpu.memory_space<vmem>>, vector<96x16xf32>
    %181 = arith.addf %179, %180 : vector<96x16xf32>
    %c128_111 = arith.constant 128 : index
    %c0_112 = arith.constant 0 : index
    %182 = vector.load %arg11[%c128_111, %c0_112] : memref<256x16xf32, #tpu.memory_space<vmem>>, vector<32x16xf32>
    %cst_113 = arith.constant dense<0.000000e+00> : vector<96x16xf32>
    %183 = tpu.matmul %171, %182, %cst_113 {dimension_numbers = #tpu.dot_dimension_numbers<[1], [0], [0], [1], [0, 0, 1, 1], [], []>} : vector<96x32xf32>, vector<32x16xf32>, vector<96x16xf32> -> vector<96x16xf32>
    %c384_114 = arith.constant 384 : index
    %c0_115 = arith.constant 0 : index
    %184 = vector.load %arg12[%c384_114, %c0_115] : memref<768x16xf32, #tpu.memory_space<vmem>>, vector<96x16xf32>
    %185 = arith.addf %183, %184 : vector<96x16xf32>
    %c160_116 = arith.constant 160 : index
    %c0_117 = arith.constant 0 : index
    %186 = vector.load %arg11[%c160_116, %c0_117] : memref<256x16xf32, #tpu.memory_space<vmem>>, vector<32x16xf32>
    %cst_118 = arith.constant dense<0.000000e+00> : vector<96x16xf32>
    %187 = tpu.matmul %171, %186, %cst_118 {dimension_numbers = #tpu.dot_dimension_numbers<[1], [0], [0], [1], [0, 0, 1, 1], [], []>} : vector<96x32xf32>, vector<32x16xf32>, vector<96x16xf32> -> vector<96x16xf32>
    %c480_119 = arith.constant 480 : index
    %c0_120 = arith.constant 0 : index
    %188 = vector.load %arg12[%c480_119, %c0_120] : memref<768x16xf32, #tpu.memory_space<vmem>>, vector<96x16xf32>
    %189 = arith.addf %187, %188 : vector<96x16xf32>
    %cst_121 = arith.constant dense<0.000000e+00> : vector<96x96xf32>
    %190 = tpu.matmul %177, %181, %cst_121 {dimension_numbers = #tpu.dot_dimension_numbers<[1], [1], [0], [0], [0, 0, 1, 0], [], []>} : vector<96x16xf32>, vector<96x16xf32>, vector<96x96xf32> -> vector<96x96xf32>
    %c0_122 = arith.constant 0 : index
    %c0_123 = arith.constant 0 : index
    %191 = vector.load %arg7[%c0_122, %c0_123] : memref<96x96xf32, #tpu.memory_space<vmem>>, vector<96x96xf32>
    %192 = arith.addf %190, %191 : vector<96x96xf32>
    %cst_124 = arith.constant dense<0xFF800000> : vector<96xf32>
    %193 = vector.multi_reduction <maximumf>, %192, %cst_124 [1] : vector<96x96xf32> to vector<96xf32>
    %194 = vector.shape_cast %193 : vector<96xf32> to vector<96x1xf32>
    %195 = vector.broadcast %194 : vector<96x1xf32> to vector<96x96xf32>
    %196 = arith.subf %192, %195 : vector<96x96xf32>
    %197 = math.exp %196 : vector<96x96xf32>
    %cst_125 = arith.constant dense<0.000000e+00> : vector<96xf32>
    %198 = vector.multi_reduction <add>, %197, %cst_125 [1] : vector<96x96xf32> to vector<96xf32>
    %199 = vector.shape_cast %198 : vector<96xf32> to vector<96x1xf32>
    %200 = vector.broadcast %199 : vector<96x1xf32> to vector<96x96xf32>
    %201 = arith.divf %197, %200 : vector<96x96xf32>
    %cst_126 = arith.constant dense<0.000000e+00> : vector<96x16xf32>
    %202 = tpu.matmul %201, %185, %cst_126 {dimension_numbers = #tpu.dot_dimension_numbers<[1], [0], [0], [1], [0, 0, 1, 1], [], []>} : vector<96x96xf32>, vector<96x16xf32>, vector<96x16xf32> -> vector<96x16xf32>
    %203 = arith.addf %172, %202 : vector<96x16xf32>
    %cst_127 = arith.constant dense<0.000000e+00> : vector<96x16xf32>
    %204 = tpu.matmul %201, %189, %cst_127 {dimension_numbers = #tpu.dot_dimension_numbers<[1], [0], [0], [1], [0, 0, 1, 1], [], []>} : vector<96x96xf32>, vector<96x16xf32>, vector<96x16xf32> -> vector<96x16xf32>
    %205 = arith.addf %173, %204 : vector<96x16xf32>
    %c192_128 = arith.constant 192 : index
    %c0_129 = arith.constant 0 : index
    %206 = vector.load %arg9[%c192_128, %c0_129] : memref<256x16xf32, #tpu.memory_space<vmem>>, vector<32x16xf32>
    %cst_130 = arith.constant dense<0.000000e+00> : vector<96x16xf32>
    %207 = tpu.matmul %171, %206, %cst_130 {dimension_numbers = #tpu.dot_dimension_numbers<[1], [0], [0], [1], [0, 0, 1, 1], [], []>} : vector<96x32xf32>, vector<32x16xf32>, vector<96x16xf32> -> vector<96x16xf32>
    %c576 = arith.constant 576 : index
    %c0_131 = arith.constant 0 : index
    %208 = vector.load %arg10[%c576, %c0_131] : memref<768x16xf32, #tpu.memory_space<vmem>>, vector<96x16xf32>
    %209 = arith.addf %207, %208 : vector<96x16xf32>
    %c224 = arith.constant 224 : index
    %c0_132 = arith.constant 0 : index
    %210 = vector.load %arg9[%c224, %c0_132] : memref<256x16xf32, #tpu.memory_space<vmem>>, vector<32x16xf32>
    %cst_133 = arith.constant dense<0.000000e+00> : vector<96x16xf32>
    %211 = tpu.matmul %171, %210, %cst_133 {dimension_numbers = #tpu.dot_dimension_numbers<[1], [0], [0], [1], [0, 0, 1, 1], [], []>} : vector<96x32xf32>, vector<32x16xf32>, vector<96x16xf32> -> vector<96x16xf32>
    %c672 = arith.constant 672 : index
    %c0_134 = arith.constant 0 : index
    %212 = vector.load %arg10[%c672, %c0_134] : memref<768x16xf32, #tpu.memory_space<vmem>>, vector<96x16xf32>
    %213 = arith.addf %211, %212 : vector<96x16xf32>
    %c192_135 = arith.constant 192 : index
    %c0_136 = arith.constant 0 : index
    %214 = vector.load %arg11[%c192_135, %c0_136] : memref<256x16xf32, #tpu.memory_space<vmem>>, vector<32x16xf32>
    %cst_137 = arith.constant dense<0.000000e+00> : vector<96x16xf32>
    %215 = tpu.matmul %171, %214, %cst_137 {dimension_numbers = #tpu.dot_dimension_numbers<[1], [0], [0], [1], [0, 0, 1, 1], [], []>} : vector<96x32xf32>, vector<32x16xf32>, vector<96x16xf32> -> vector<96x16xf32>
    %c576_138 = arith.constant 576 : index
    %c0_139 = arith.constant 0 : index
    %216 = vector.load %arg12[%c576_138, %c0_139] : memref<768x16xf32, #tpu.memory_space<vmem>>, vector<96x16xf32>
    %217 = arith.addf %215, %216 : vector<96x16xf32>
    %c224_140 = arith.constant 224 : index
    %c0_141 = arith.constant 0 : index
    %218 = vector.load %arg11[%c224_140, %c0_141] : memref<256x16xf32, #tpu.memory_space<vmem>>, vector<32x16xf32>
    %cst_142 = arith.constant dense<0.000000e+00> : vector<96x16xf32>
    %219 = tpu.matmul %171, %218, %cst_142 {dimension_numbers = #tpu.dot_dimension_numbers<[1], [0], [0], [1], [0, 0, 1, 1], [], []>} : vector<96x32xf32>, vector<32x16xf32>, vector<96x16xf32> -> vector<96x16xf32>
    %c672_143 = arith.constant 672 : index
    %c0_144 = arith.constant 0 : index
    %220 = vector.load %arg12[%c672_143, %c0_144] : memref<768x16xf32, #tpu.memory_space<vmem>>, vector<96x16xf32>
    %221 = arith.addf %219, %220 : vector<96x16xf32>
    %cst_145 = arith.constant dense<0.000000e+00> : vector<96x96xf32>
    %222 = tpu.matmul %209, %213, %cst_145 {dimension_numbers = #tpu.dot_dimension_numbers<[1], [1], [0], [0], [0, 0, 1, 0], [], []>} : vector<96x16xf32>, vector<96x16xf32>, vector<96x96xf32> -> vector<96x96xf32>
    %c0_146 = arith.constant 0 : index
    %c0_147 = arith.constant 0 : index
    %223 = vector.load %arg7[%c0_146, %c0_147] : memref<96x96xf32, #tpu.memory_space<vmem>>, vector<96x96xf32>
    %224 = arith.addf %222, %223 : vector<96x96xf32>
    %cst_148 = arith.constant dense<0xFF800000> : vector<96xf32>
    %225 = vector.multi_reduction <maximumf>, %224, %cst_148 [1] : vector<96x96xf32> to vector<96xf32>
    %226 = vector.shape_cast %225 : vector<96xf32> to vector<96x1xf32>
    %227 = vector.broadcast %226 : vector<96x1xf32> to vector<96x96xf32>
    %228 = arith.subf %224, %227 : vector<96x96xf32>
    %229 = math.exp %228 : vector<96x96xf32>
    %cst_149 = arith.constant dense<0.000000e+00> : vector<96xf32>
    %230 = vector.multi_reduction <add>, %229, %cst_149 [1] : vector<96x96xf32> to vector<96xf32>
    %231 = vector.shape_cast %230 : vector<96xf32> to vector<96x1xf32>
    %232 = vector.broadcast %231 : vector<96x1xf32> to vector<96x96xf32>
    %233 = arith.divf %229, %232 : vector<96x96xf32>
    %cst_150 = arith.constant dense<0.000000e+00> : vector<96x16xf32>
    %234 = tpu.matmul %233, %217, %cst_150 {dimension_numbers = #tpu.dot_dimension_numbers<[1], [0], [0], [1], [0, 0, 1, 1], [], []>} : vector<96x96xf32>, vector<96x16xf32>, vector<96x16xf32> -> vector<96x16xf32>
    %235 = arith.addf %203, %234 : vector<96x16xf32>
    %cst_151 = arith.constant dense<0.000000e+00> : vector<96x16xf32>
    %236 = tpu.matmul %233, %221, %cst_151 {dimension_numbers = #tpu.dot_dimension_numbers<[1], [0], [0], [1], [0, 0, 1, 1], [], []>} : vector<96x96xf32>, vector<96x16xf32>, vector<96x16xf32> -> vector<96x16xf32>
    %237 = arith.addf %205, %236 : vector<96x16xf32>
    %c0_152 = arith.constant 0 : index
    %c0_153 = arith.constant 0 : index
    %238 = vector.load %arg5[%c0_152, %c0_153] : memref<128x96xf32, #tpu.memory_space<vmem>>, vector<128x96xf32>
    %cst_154 = arith.constant dense<0.000000e+00> : vector<128x16xf32>
    %239 = tpu.matmul %238, %235, %cst_154 {dimension_numbers = #tpu.dot_dimension_numbers<[1], [0], [0], [1], [0, 0, 1, 1], [], []>} : vector<128x96xf32>, vector<96x16xf32>, vector<128x16xf32> -> vector<128x16xf32>
    %c0_155 = arith.constant 0 : index
    %c0_156 = arith.constant 0 : index
    %240 = vector.load %arg6[%c0_155, %c0_156] : memref<128x96xf32, #tpu.memory_space<vmem>>, vector<128x96xf32>
    %cst_157 = arith.constant dense<0.000000e+00> : vector<128x16xf32>
    %241 = tpu.matmul %240, %237, %cst_157 {dimension_numbers = #tpu.dot_dimension_numbers<[1], [0], [0], [1], [0, 0, 1, 1], [], []>} : vector<128x96xf32>, vector<96x16xf32>, vector<128x16xf32> -> vector<128x16xf32>
    %242 = arith.addf %239, %241 : vector<128x16xf32>
    %243 = arith.addf %144, %242 : vector<128x16xf32>
    %c6 = arith.constant 6 : index
    %c0_158 = arith.constant 0 : index
    %244 = vector.load %arg8[%c6, %c0_158] : memref<8x16xf32, #tpu.memory_space<vmem>>, vector<1x16xf32>
    %c7 = arith.constant 7 : index
    %c0_159 = arith.constant 0 : index
    %245 = vector.load %arg8[%c7, %c0_159] : memref<8x16xf32, #tpu.memory_space<vmem>>, vector<1x16xf32>
    %cst_160 = arith.constant dense<0.000000e+00> : vector<128xf32>
    %246 = vector.multi_reduction <add>, %243, %cst_160 [1] : vector<128x16xf32> to vector<128xf32>
    %247 = vector.shape_cast %246 : vector<128xf32> to vector<128x1xf32>
    %cst_161 = arith.constant 1.600000e+01 : f32
    %248 = vector.broadcast %cst_161 : f32 to vector<128x1xf32>
    %249 = arith.divf %247, %248 : vector<128x1xf32>
    %250 = vector.broadcast %249 : vector<128x1xf32> to vector<128x16xf32>
    %251 = arith.subf %243, %250 : vector<128x16xf32>
    %252 = arith.mulf %251, %251 : vector<128x16xf32>
    %cst_162 = arith.constant dense<0.000000e+00> : vector<128xf32>
    %253 = vector.multi_reduction <add>, %252, %cst_162 [1] : vector<128x16xf32> to vector<128xf32>
    %254 = vector.shape_cast %253 : vector<128xf32> to vector<128x1xf32>
    %cst_163 = arith.constant 1.600000e+01 : f32
    %255 = vector.broadcast %cst_163 : f32 to vector<128x1xf32>
    %256 = arith.divf %254, %255 : vector<128x1xf32>
    %cst_164 = arith.constant 9.99999997E-7 : f32
    %257 = vector.broadcast %cst_164 : f32 to vector<128x1xf32>
    %258 = arith.addf %256, %257 : vector<128x1xf32>
    %259 = math.rsqrt %258 : vector<128x1xf32>
    %260 = vector.broadcast %259 : vector<128x1xf32> to vector<128x16xf32>
    %261 = arith.mulf %251, %260 : vector<128x16xf32>
    %262 = vector.broadcast %244 : vector<1x16xf32> to vector<128x16xf32>
    %263 = arith.mulf %261, %262 : vector<128x16xf32>
    %264 = vector.broadcast %245 : vector<1x16xf32> to vector<128x16xf32>
    %265 = arith.addf %263, %264 : vector<128x16xf32>
    %c16 = arith.constant 16 : index
    %c0_165 = arith.constant 0 : index
    %266 = vector.load %arg13[%c16, %c0_165] : memref<32x32xf32, #tpu.memory_space<vmem>>, vector<16x32xf32>
    %cst_166 = arith.constant dense<0.000000e+00> : vector<128x32xf32>
    %267 = tpu.matmul %265, %266, %cst_166 {dimension_numbers = #tpu.dot_dimension_numbers<[1], [0], [0], [1], [0, 0, 1, 1], [], []>} : vector<128x16xf32>, vector<16x32xf32>, vector<128x32xf32> -> vector<128x32xf32>
    %c1_167 = arith.constant 1 : index
    %c0_168 = arith.constant 0 : index
    %268 = vector.load %arg14[%c1_167, %c0_168] : memref<2x32xf32, #tpu.memory_space<vmem>>, vector<1x32xf32>
    %269 = vector.broadcast %268 : vector<1x32xf32> to vector<128x32xf32>
    %270 = arith.addf %267, %269 : vector<128x32xf32>
    %cst_169 = arith.constant 5.000000e-01 : f32
    %271 = vector.broadcast %cst_169 : f32 to vector<128x32xf32>
    %272 = arith.mulf %271, %270 : vector<128x32xf32>
    %cst_170 = arith.constant 0.707106769 : f32
    %273 = vector.broadcast %cst_170 : f32 to vector<128x32xf32>
    %274 = arith.mulf %270, %273 : vector<128x32xf32>
    %275 = math.erf %274 : vector<128x32xf32>
    %cst_171 = arith.constant 1.000000e+00 : f32
    %276 = vector.broadcast %cst_171 : f32 to vector<128x32xf32>
    %277 = arith.addf %276, %275 : vector<128x32xf32>
    %278 = arith.mulf %272, %277 : vector<128x32xf32>
    %c32_172 = arith.constant 32 : index
    %c0_173 = arith.constant 0 : index
    %279 = vector.load %arg15[%c32_172, %c0_173] : memref<64x16xf32, #tpu.memory_space<vmem>>, vector<32x16xf32>
    %cst_174 = arith.constant dense<0.000000e+00> : vector<128x16xf32>
    %280 = tpu.matmul %278, %279, %cst_174 {dimension_numbers = #tpu.dot_dimension_numbers<[1], [0], [0], [1], [0, 0, 1, 1], [], []>} : vector<128x32xf32>, vector<32x16xf32>, vector<128x16xf32> -> vector<128x16xf32>
    %c1_175 = arith.constant 1 : index
    %c0_176 = arith.constant 0 : index
    %281 = vector.load %arg16[%c1_175, %c0_176] : memref<2x16xf32, #tpu.memory_space<vmem>>, vector<1x16xf32>
    %282 = vector.broadcast %281 : vector<1x16xf32> to vector<128x16xf32>
    %283 = arith.addf %280, %282 : vector<128x16xf32>
    %284 = arith.addf %243, %283 : vector<128x16xf32>
    %c0_177 = arith.constant 0 : index
    %c0_178 = arith.constant 0 : index
    %285 = vector.load %arg17[%c0_177, %c0_178] : memref<2x16xf32, #tpu.memory_space<vmem>>, vector<1x16xf32>
    %c1_179 = arith.constant 1 : index
    %c0_180 = arith.constant 0 : index
    %286 = vector.load %arg17[%c1_179, %c0_180] : memref<2x16xf32, #tpu.memory_space<vmem>>, vector<1x16xf32>
    %cst_181 = arith.constant dense<0.000000e+00> : vector<128xf32>
    %287 = vector.multi_reduction <add>, %284, %cst_181 [1] : vector<128x16xf32> to vector<128xf32>
    %288 = vector.shape_cast %287 : vector<128xf32> to vector<128x1xf32>
    %cst_182 = arith.constant 1.600000e+01 : f32
    %289 = vector.broadcast %cst_182 : f32 to vector<128x1xf32>
    %290 = arith.divf %288, %289 : vector<128x1xf32>
    %291 = vector.broadcast %290 : vector<128x1xf32> to vector<128x16xf32>
    %292 = arith.subf %284, %291 : vector<128x16xf32>
    %293 = arith.mulf %292, %292 : vector<128x16xf32>
    %cst_183 = arith.constant dense<0.000000e+00> : vector<128xf32>
    %294 = vector.multi_reduction <add>, %293, %cst_183 [1] : vector<128x16xf32> to vector<128xf32>
    %295 = vector.shape_cast %294 : vector<128xf32> to vector<128x1xf32>
    %cst_184 = arith.constant 1.600000e+01 : f32
    %296 = vector.broadcast %cst_184 : f32 to vector<128x1xf32>
    %297 = arith.divf %295, %296 : vector<128x1xf32>
    %cst_185 = arith.constant 9.99999997E-7 : f32
    %298 = vector.broadcast %cst_185 : f32 to vector<128x1xf32>
    %299 = arith.addf %297, %298 : vector<128x1xf32>
    %300 = math.rsqrt %299 : vector<128x1xf32>
    %301 = vector.broadcast %300 : vector<128x1xf32> to vector<128x16xf32>
    %302 = arith.mulf %292, %301 : vector<128x16xf32>
    %303 = vector.broadcast %285 : vector<1x16xf32> to vector<128x16xf32>
    %304 = arith.mulf %302, %303 : vector<128x16xf32>
    %305 = vector.broadcast %286 : vector<1x16xf32> to vector<128x16xf32>
    %306 = arith.addf %304, %305 : vector<128x16xf32>
    %c0_186 = arith.constant 0 : index
    %c0_187 = arith.constant 0 : index
    %307 = vector.load %arg18[%c0_186, %c0_187] : memref<32x128xf32, #tpu.memory_space<vmem>>, vector<32x128xf32>
    %cst_188 = arith.constant dense<0.000000e+00> : vector<32x16xf32>
    %308 = tpu.matmul %307, %306, %cst_188 {dimension_numbers = #tpu.dot_dimension_numbers<[1], [0], [0], [1], [0, 0, 1, 1], [], []>} : vector<32x128xf32>, vector<128x16xf32>, vector<32x16xf32> -> vector<32x16xf32>
    %c0_189 = arith.constant 0 : index
    %c0_190 = arith.constant 0 : index
    %309 = vector.load %arg19[%c0_189, %c0_190] : memref<32x16xf32, #tpu.memory_space<vmem>>, vector<32x16xf32>
    %310 = arith.addf %308, %309 : vector<32x16xf32>
    %c0_191 = arith.constant 0 : index
    %c0_192 = arith.constant 0 : index
    %311 = vector.load %arg20[%c0_191, %c0_192] : memref<16x4xf32, #tpu.memory_space<vmem>>, vector<16x4xf32>
    %cst_193 = arith.constant dense<0.000000e+00> : vector<32x4xf32>
    %312 = tpu.matmul %310, %311, %cst_193 {dimension_numbers = #tpu.dot_dimension_numbers<[1], [0], [0], [1], [0, 0, 1, 1], [], []>} : vector<32x16xf32>, vector<16x4xf32>, vector<32x4xf32> -> vector<32x4xf32>
    %c0_194 = arith.constant 0 : index
    %c0_195 = arith.constant 0 : index
    %313 = vector.load %arg21[%c0_194, %c0_195] : memref<1x4xf32, #tpu.memory_space<vmem>>, vector<1x4xf32>
    %314 = vector.broadcast %313 : vector<1x4xf32> to vector<32x4xf32>
    %315 = arith.addf %312, %314 : vector<32x4xf32>
    %c0_196 = arith.constant 0 : index
    %c0_197 = arith.constant 0 : index
    %316 = vector.load %arg23[%c0_196, %c0_197] : memref<1x10xf32, #tpu.memory_space<vmem>>, vector<1x10xf32>
    %317 = vector.extract_strided_slice %315 {offsets = [0, 0], sizes = [8, 4], strides = [1, 1]} : vector<32x4xf32> to vector<8x4xf32>
    %c0_198 = arith.constant 0 : index
    %c0_199 = arith.constant 0 : index
    %318 = vector.load %arg22[%c0_198, %c0_199] : memref<16x10xf32, #tpu.memory_space<vmem>>, vector<4x10xf32>
    %cst_200 = arith.constant dense<0.000000e+00> : vector<8x10xf32>
    %319 = tpu.matmul %317, %318, %cst_200 {dimension_numbers = #tpu.dot_dimension_numbers<[1], [0], [0], [1], [0, 0, 1, 1], [], []>} : vector<8x4xf32>, vector<4x10xf32>, vector<8x10xf32> -> vector<8x10xf32>
    %320 = vector.broadcast %316 : vector<1x10xf32> to vector<8x10xf32>
    %321 = arith.addf %320, %319 : vector<8x10xf32>
    %322 = vector.extract_strided_slice %315 {offsets = [8, 0], sizes = [8, 4], strides = [1, 1]} : vector<32x4xf32> to vector<8x4xf32>
    %c4_201 = arith.constant 4 : index
    %c0_202 = arith.constant 0 : index
    %323 = vector.load %arg22[%c4_201, %c0_202] : memref<16x10xf32, #tpu.memory_space<vmem>>, vector<4x10xf32>
    %cst_203 = arith.constant dense<0.000000e+00> : vector<8x10xf32>
    %324 = tpu.matmul %322, %323, %cst_203 {dimension_numbers = #tpu.dot_dimension_numbers<[1], [0], [0], [1], [0, 0, 1, 1], [], []>} : vector<8x4xf32>, vector<4x10xf32>, vector<8x10xf32> -> vector<8x10xf32>
    %325 = arith.addf %321, %324 : vector<8x10xf32>
    %326 = vector.extract_strided_slice %315 {offsets = [16, 0], sizes = [8, 4], strides = [1, 1]} : vector<32x4xf32> to vector<8x4xf32>
    %c8 = arith.constant 8 : index
    %c0_204 = arith.constant 0 : index
    %327 = vector.load %arg22[%c8, %c0_204] : memref<16x10xf32, #tpu.memory_space<vmem>>, vector<4x10xf32>
    %cst_205 = arith.constant dense<0.000000e+00> : vector<8x10xf32>
    %328 = tpu.matmul %326, %327, %cst_205 {dimension_numbers = #tpu.dot_dimension_numbers<[1], [0], [0], [1], [0, 0, 1, 1], [], []>} : vector<8x4xf32>, vector<4x10xf32>, vector<8x10xf32> -> vector<8x10xf32>
    %329 = arith.addf %325, %328 : vector<8x10xf32>
    %330 = vector.extract_strided_slice %315 {offsets = [24, 0], sizes = [8, 4], strides = [1, 1]} : vector<32x4xf32> to vector<8x4xf32>
    %c12 = arith.constant 12 : index
    %c0_206 = arith.constant 0 : index
    %331 = vector.load %arg22[%c12, %c0_206] : memref<16x10xf32, #tpu.memory_space<vmem>>, vector<4x10xf32>
    %cst_207 = arith.constant dense<0.000000e+00> : vector<8x10xf32>
    %332 = tpu.matmul %330, %331, %cst_207 {dimension_numbers = #tpu.dot_dimension_numbers<[1], [0], [0], [1], [0, 0, 1, 1], [], []>} : vector<8x4xf32>, vector<4x10xf32>, vector<8x10xf32> -> vector<8x10xf32>
    %333 = arith.addf %329, %332 : vector<8x10xf32>
    %c0_208 = arith.constant 0 : index
    %c0_209 = arith.constant 0 : index
    %334 = vector.load %arg24[%c0_208, %c0_209] : memref<8x10xf32, #tpu.memory_space<vmem>>, vector<8x10xf32>
    tpu.vector_store %arg24[%c0_208, %c0_209], %333 {strides = array<i32>} : memref<8x10xf32, #tpu.memory_space<vmem>>, vector<8x10xf32>,
    return
  }
  func.func @transform_0(%arg0: i32) -> (i32, i32) {
    %c0_i32 = arith.constant 0 : i32
    %c0_i32_0 = arith.constant 0 : i32
    return %arg0, %c0_i32 : i32, i32
  }
  func.func @transform_1(%arg0: i32) -> (i32, i32) {
    %c0_i32 = arith.constant 0 : i32
    %c0_i32_0 = arith.constant 0 : i32
    %c0_i32_1 = arith.constant 0 : i32
    return %c0_i32, %c0_i32_0 : i32, i32
  }
  func.func @transform_2(%arg0: i32) -> (i32, i32) {
    %c0_i32 = arith.constant 0 : i32
    %c0_i32_0 = arith.constant 0 : i32
    %c0_i32_1 = arith.constant 0 : i32
    return %c0_i32, %c0_i32_0 : i32, i32
  }
  func.func @transform_3(%arg0: i32) -> (i32, i32) {
    %c0_i32 = arith.constant 0 : i32
    %c0_i32_0 = arith.constant 0 : i32
    %c0_i32_1 = arith.constant 0 : i32
    return %c0_i32, %c0_i32_0 : i32, i32
  }
  func.func @transform_4(%arg0: i32) -> (i32, i32) {
    %c0_i32 = arith.constant 0 : i32
    %c0_i32_0 = arith.constant 0 : i32
    %c0_i32_1 = arith.constant 0 : i32
    return %c0_i32, %c0_i32_0 : i32, i32
  }
  func.func @transform_5(%arg0: i32) -> (i32, i32) {
    %c0_i32 = arith.constant 0 : i32
    %c0_i32_0 = arith.constant 0 : i32
    %c0_i32_1 = arith.constant 0 : i32
    return %c0_i32, %c0_i32_0 : i32, i32
  }
  func.func @transform_6(%arg0: i32) -> (i32, i32) {
    %c0_i32 = arith.constant 0 : i32
    %c0_i32_0 = arith.constant 0 : i32
    %c0_i32_1 = arith.constant 0 : i32
    return %c0_i32, %c0_i32_0 : i32, i32
  }
  func.func @transform_7(%arg0: i32) -> (i32, i32) {
    %c0_i32 = arith.constant 0 : i32
    %c0_i32_0 = arith.constant 0 : i32
    %c0_i32_1 = arith.constant 0 : i32
    return %c0_i32, %c0_i32_0 : i32, i32
  }
  func.func @transform_8(%arg0: i32) -> (i32, i32) {
    %c0_i32 = arith.constant 0 : i32
    %c0_i32_0 = arith.constant 0 : i32
    %c0_i32_1 = arith.constant 0 : i32
    return %c0_i32, %c0_i32_0 : i32, i32
  }
  func.func @transform_9(%arg0: i32) -> (i32, i32) {
    %c0_i32 = arith.constant 0 : i32
    %c0_i32_0 = arith.constant 0 : i32
    %c0_i32_1 = arith.constant 0 : i32
    return %c0_i32, %c0_i32_0 : i32, i32
  }
  func.func @transform_10(%arg0: i32) -> (i32, i32) {
    %c0_i32 = arith.constant 0 : i32
    %c0_i32_0 = arith.constant 0 : i32
    %c0_i32_1 = arith.constant 0 : i32
    return %c0_i32, %c0_i32_0 : i32, i32
  }
  func.func @transform_11(%arg0: i32) -> (i32, i32) {
    %c0_i32 = arith.constant 0 : i32
    %c0_i32_0 = arith.constant 0 : i32
    %c0_i32_1 = arith.constant 0 : i32
    return %c0_i32, %c0_i32_0 : i32, i32
  }
  func.func @transform_12(%arg0: i32) -> (i32, i32) {
    %c0_i32 = arith.constant 0 : i32
    %c0_i32_0 = arith.constant 0 : i32
    %c0_i32_1 = arith.constant 0 : i32
    return %c0_i32, %c0_i32_0 : i32, i32
  }
  func.func @transform_13(%arg0: i32) -> (i32, i32) {
    %c0_i32 = arith.constant 0 : i32
    %c0_i32_0 = arith.constant 0 : i32
    %c0_i32_1 = arith.constant 0 : i32
    return %c0_i32, %c0_i32_0 : i32, i32
  }
  func.func @transform_14(%arg0: i32) -> (i32, i32) {
    %c0_i32 = arith.constant 0 : i32
    %c0_i32_0 = arith.constant 0 : i32
    %c0_i32_1 = arith.constant 0 : i32
    return %c0_i32, %c0_i32_0 : i32, i32
  }
  func.func @transform_15(%arg0: i32) -> (i32, i32) {
    %c0_i32 = arith.constant 0 : i32
    %c0_i32_0 = arith.constant 0 : i32
    %c0_i32_1 = arith.constant 0 : i32
    return %c0_i32, %c0_i32_0 : i32, i32
  }
  func.func @transform_16(%arg0: i32) -> (i32, i32) {
    %c0_i32 = arith.constant 0 : i32
    %c0_i32_0 = arith.constant 0 : i32
    %c0_i32_1 = arith.constant 0 : i32
    return %c0_i32, %c0_i32_0 : i32, i32
  }
  func.func @transform_17(%arg0: i32) -> (i32, i32) {
    %c0_i32 = arith.constant 0 : i32
    %c0_i32_0 = arith.constant 0 : i32
    %c0_i32_1 = arith.constant 0 : i32
    return %c0_i32, %c0_i32_0 : i32, i32
  }
  func.func @transform_18(%arg0: i32) -> (i32, i32) {
    %c0_i32 = arith.constant 0 : i32
    %c0_i32_0 = arith.constant 0 : i32
    %c0_i32_1 = arith.constant 0 : i32
    return %c0_i32, %c0_i32_0 : i32, i32
  }
  func.func @transform_19(%arg0: i32) -> (i32, i32) {
    %c0_i32 = arith.constant 0 : i32
    %c0_i32_0 = arith.constant 0 : i32
    %c0_i32_1 = arith.constant 0 : i32
    return %c0_i32, %c0_i32_0 : i32, i32
  }
  func.func @transform_20(%arg0: i32) -> (i32, i32) {
    %c0_i32 = arith.constant 0 : i32
    %c0_i32_0 = arith.constant 0 : i32
    %c0_i32_1 = arith.constant 0 : i32
    return %c0_i32, %c0_i32_0 : i32, i32
  }
  func.func @transform_21(%arg0: i32) -> (i32, i32) {
    %c0_i32 = arith.constant 0 : i32
    %c0_i32_0 = arith.constant 0 : i32
    %c0_i32_1 = arith.constant 0 : i32
    return %c0_i32, %c0_i32_0 : i32, i32
  }
  func.func @transform_22(%arg0: i32) -> (i32, i32) {
    %c0_i32 = arith.constant 0 : i32
    %c0_i32_0 = arith.constant 0 : i32
    %c0_i32_1 = arith.constant 0 : i32
    return %c0_i32, %c0_i32_0 : i32, i32
  }
  func.func @transform_23(%arg0: i32) -> (i32, i32) {
    %c0_i32 = arith.constant 0 : i32
    %c0_i32_0 = arith.constant 0 : i32
    return %arg0, %c0_i32 : i32, i32
  }
}

</mosaic_0001>

<llo_original>
// kernel: vit_forward.1
$region0: #{vit_forward.1}
  #allocation0 [shape = 'u32[]', space=smem, size = 0x4, offset = 0x4, fixed_abs, tag = 'smem constant byte address 0x4 - core index']
  #allocation1 [shape = 'u32[144,128]{1,0:T(1,128)}', space=vmem, size = 0x12000, scoped, tag = 'internal scratch']
  %s0 = inlined_call_operand.vmem [shape: f32[256,48], index: 0, kind: input, shape index: {}]
  %s1 = inlined_call_operand.vmem [shape: f32[48,16], index: 1, kind: input, shape index: {}]
  %s2 = inlined_call_operand.vmem [shape: f32[128,16], index: 2, kind: input, shape index: {}]
  %s3 = inlined_call_operand.vmem [shape: f32[192,128], index: 3, kind: input, shape index: {}]
  %s4 = inlined_call_operand.vmem [shape: f32[128,96], index: 4, kind: input, shape index: {}]
  %s5 = inlined_call_operand.vmem [shape: f32[128,96], index: 5, kind: input, shape index: {}]
  %s6 = inlined_call_operand.vmem [shape: f32[96,96], index: 6, kind: input, shape index: {}]
  %s7 = inlined_call_operand.vmem [shape: f32[8,16], index: 7, kind: input, shape index: {}]
  %s8 = inlined_call_operand.vmem [shape: f32[256,16], index: 8, kind: input, shape index: {}]
  %s9 = inlined_call_operand.vmem [shape: f32[768,16], index: 9, kind: input, shape index: {}]
  %s10 = inlined_call_operand.vmem [shape: f32[256,16], index: 10, kind: input, shape index: {}]
  %s11 = inlined_call_operand.vmem [shape: f32[768,16], index: 11, kind: input, shape index: {}]
  %s12 = inlined_call_operand.vmem [shape: f32[32,32], index: 12, kind: input, shape index: {}]
  %s13 = inlined_call_operand.vmem [shape: f32[2,32], index: 13, kind: input, shape index: {}]
  %s14 = inlined_call_operand.vmem [shape: f32[64,16], index: 14, kind: input, shape index: {}]
  %s15 = inlined_call_operand.vmem [shape: f32[2,16], index: 15, kind: input, shape index: {}]
  %s16 = inlined_call_operand.vmem [shape: f32[2,16], index: 16, kind: input, shape index: {}]
  %s17 = inlined_call_operand.vmem [shape: f32[32,128], index: 17, kind: input, shape index: {}]
  %s18 = inlined_call_operand.vmem [shape: f32[32,16], index: 18, kind: input, shape index: {}]
  %s19 = inlined_call_operand.vmem [shape: f32[16,4], index: 19, kind: input, shape index: {}]
  %s20 = inlined_call_operand.vmem [shape: f32[1,4], index: 20, kind: input, shape index: {}]
  %s21 = inlined_call_operand.vmem [shape: f32[16,10], index: 21, kind: input, shape index: {}]
  %s22 = inlined_call_operand.vmem [shape: f32[1,10], index: 22, kind: input, shape index: {}]
  %s23 = inlined_call_operand.hbm [shape: f32[16,10], index: 23, kind: output, shape index: {}]
  %s24 = sld [smem:[#allocation0]]
  $region125: #{vit_forward.1} parent=0
    _
  %s26 = ssub.s32 1, %s24
  %s27 = scalar_select 0, %s26, %s24
  $region1: #{vit_forward.1} parent=0
    #allocation2 [shape = 'u8[8192]{0}', space=vmem, size = 0x2000, scoped, tag = 'output window, operand 0']
    #allocation3 [shape = 's32[2]{0}', space=sflag, size = 0x8, scoped, tag = 'scoped memory for vit_forward.1']
    %28 = vsyncpa [#allocation3], 0
    %s29 = scalar_lea.sflag [#allocation3], 1
    %30 = vsyncpa %s29, 0
    loop: start=0, step=1, limit=4
    $region2: #{vit_forward.1} parent=1 // loop_pre_header
      _
    $region3: #{vit_forward.1} parent=1 // loop_header
      %s32 = sphi 0, %s36
      %p33 = scmp.ge.s32.totalorder %s32, 4
      %s42 = sphi 0, %s44
      %s45 = sphi 0, %s42
      %s46 = sphi 0, %s45
      %s62 = sphi 0, %s46
      %s66 = sphi 0, %s66
      %s68 = sphi 0, %s66
      %s69 = sphi 0, %s68
      %s83 = sphi 0, %s69
      %s87 = sphi 0, %s87
      %s89 = sphi 0, %s87
      %s90 = sphi 0, %s89
      %s104 = sphi 0, %s90
      %s108 = sphi 0, %s108
      %s110 = sphi 0, %s108
      %s111 = sphi 0, %s110
      %s125 = sphi 0, %s111
      %s129 = sphi 0, %s129
      %s131 = sphi 0, %s129
      %s132 = sphi 0, %s131
      %s146 = sphi 0, %s132
      %s150 = sphi 0, %s150
      %s152 = sphi 0, %s150
      %s153 = sphi 0, %s152
      %s167 = sphi 0, %s153
      %s171 = sphi 0, %s171
      %s173 = sphi 0, %s171
      %s174 = sphi 0, %s173
      %s188 = sphi 0, %s174
      %s192 = sphi 0, %s192
      %s194 = sphi 0, %s192
      %s195 = sphi 0, %s194
      %s209 = sphi 0, %s195
      %s213 = sphi 0, %s213
      %s215 = sphi 0, %s213
      %s216 = sphi 0, %s215
      %s230 = sphi 0, %s216
      %s234 = sphi 0, %s234
      %s236 = sphi 0, %s234
      %s237 = sphi 0, %s236
      %s251 = sphi 0, %s237
      %s255 = sphi 0, %s255
      %s257 = sphi 0, %s255
      %s258 = sphi 0, %s257
      %s272 = sphi 0, %s258
      %s276 = sphi 0, %s276
      %s278 = sphi 0, %s276
      %s279 = sphi 0, %s278
      %s293 = sphi 0, %s279
      %s297 = sphi 0, %s297
      %s299 = sphi 0, %s297
      %s300 = sphi 0, %s299
      %s314 = sphi 0, %s300
      %s318 = sphi 0, %s318
      %s320 = sphi 0, %s318
      %s321 = sphi 0, %s320
      %s335 = sphi 0, %s321
      %s339 = sphi 0, %s339
      %s341 = sphi 0, %s339
      %s342 = sphi 0, %s341
      %s356 = sphi 0, %s342
      %s360 = sphi 0, %s360
      %s362 = sphi 0, %s360
      %s363 = sphi 0, %s362
      %s377 = sphi 0, %s363
      %s381 = sphi 0, %s381
      %s383 = sphi 0, %s381
      %s384 = sphi 0, %s383
      %s398 = sphi 0, %s384
      %s402 = sphi 0, %s402
      %s404 = sphi 0, %s402
      %s405 = sphi 0, %s404
      %s419 = sphi 0, %s405
      %s423 = sphi 0, %s423
      %s425 = sphi 0, %s423
      %s426 = sphi 0, %s425
      %s440 = sphi 0, %s426
      %s444 = sphi 0, %s444
      %s446 = sphi 0, %s444
      %s447 = sphi 0, %s446
      %s461 = sphi 0, %s447
      %s465 = sphi 0, %s465
      %s467 = sphi 0, %s465
      %s468 = sphi 0, %s467
      %s482 = sphi 0, %s468
      %s486 = sphi 0, %s486
      %s488 = sphi 0, %s486
      %s489 = sphi 0, %s488
      %s503 = sphi 0, %s489
      %s507 = sphi 0, %s507
      %s509 = sphi 0, %s507
      %s510 = sphi 0, %s509
      %s524 = sphi 0, %s510
      %s530 = sphi 0, %s532
      %s533 = sphi 0, %s530
      %s534 = sphi 0, %s533
      %s550 = sphi 0, %s534
    $region4: #{vit_forward.1} parent=1 // loop_header_branch
      %35 = sbr.rel (%p33) target = $region8
    $region5: #{vit_forward.1} parent=1 // loop_body
      %s37 = ssub.s32 %s32, 1
      %s38 = ssub.s32 %s32, 2
      %s39 = sadd.s32 %s32, 1
      %s40 = ssub.s32 %s32, %s39
      %p41 = scmp.eq.s32.totalorder %s40, 0
      %s43 = sadd.s32 %s42, 1
      %s44 = scalar_select %p41, %s42, %s43
      %p47 = pneg %p41
      %p48 = scmp.eq.s32.totalorder %s32, 1
      %p49 = por %p47, %p48
      %p50 = scmp.ne.s32.totalorder %s42, %s45
      %p51 = scmp.eq.s32.totalorder %s32, 0
      %p52 = por %p50, %p51
      %p53 = scmp.ne.s32.totalorder %s42, %s45
      %p54 = scmp.eq.s32.totalorder %s37, 1
      %p55 = por %p53, %p54
      %p56 = scmp.ne.s32.totalorder %s45, %s46
      %p57 = scmp.eq.s32.totalorder %s37, 0
      %p58 = por %p56, %p57
      %p59 = scmp.ne.s32.totalorder %s45, %s46
      %p60 = scmp.eq.s32.totalorder %s38, 1
      %p61 = por %p59, %p60
      %p63 = scmp.ne.s32.totalorder %s46, %s62
      %p64 = scmp.eq.s32.totalorder %s38, 0
      %p65 = por %p63, %p64
      %s67 = sadd.s32 %s66, 1
      %p70 = scmp.eq.s32.totalorder %s32, 1
      %p71 = scmp.ne.s32.totalorder %s66, %s68
      %p72 = scmp.eq.s32.totalorder %s32, 0
      %p73 = por %p71, %p72
      %p74 = scmp.ne.s32.totalorder %s66, %s68
      %p75 = scmp.eq.s32.totalorder %s37, 1
      %p76 = por %p74, %p75
      %p77 = scmp.ne.s32.totalorder %s68, %s69
      %p78 = scmp.eq.s32.totalorder %s37, 0
      %p79 = por %p77, %p78
      %p80 = scmp.ne.s32.totalorder %s68, %s69
      %p81 = scmp.eq.s32.totalorder %s38, 1
      %p82 = por %p80, %p81
      %p84 = scmp.ne.s32.totalorder %s69, %s83
      %p85 = scmp.eq.s32.totalorder %s38, 0
      %p86 = por %p84, %p85
      %s88 = sadd.s32 %s87, 1
      %p91 = scmp.eq.s32.totalorder %s32, 1
      %p92 = scmp.ne.s32.totalorder %s87, %s89
      %p93 = scmp.eq.s32.totalorder %s32, 0
      %p94 = por %p92, %p93
      %p95 = scmp.ne.s32.totalorder %s87, %s89
      %p96 = scmp.eq.s32.totalorder %s37, 1
      %p97 = por %p95, %p96
      %p98 = scmp.ne.s32.totalorder %s89, %s90
      %p99 = scmp.eq.s32.totalorder %s37, 0
      %p100 = por %p98, %p99
      %p101 = scmp.ne.s32.totalorder %s89, %s90
      %p102 = scmp.eq.s32.totalorder %s38, 1
      %p103 = por %p101, %p102
      %p105 = scmp.ne.s32.totalorder %s90, %s104
      %p106 = scmp.eq.s32.totalorder %s38, 0
      %p107 = por %p105, %p106
      %s109 = sadd.s32 %s108, 1
      %p112 = scmp.eq.s32.totalorder %s32, 1
      %p113 = scmp.ne.s32.totalorder %s108, %s110
      %p114 = scmp.eq.s32.totalorder %s32, 0
      %p115 = por %p113, %p114
      %p116 = scmp.ne.s32.totalorder %s108, %s110
      %p117 = scmp.eq.s32.totalorder %s37, 1
      %p118 = por %p116, %p117
      %p119 = scmp.ne.s32.totalorder %s110, %s111
      %p120 = scmp.eq.s32.totalorder %s37, 0
      %p121 = por %p119, %p120
      %p122 = scmp.ne.s32.totalorder %s110, %s111
      %p123 = scmp.eq.s32.totalorder %s38, 1
      %p124 = por %p122, %p123
      %p126 = scmp.ne.s32.totalorder %s111, %s125
      %p127 = scmp.eq.s32.totalorder %s38, 0
      %p128 = por %p126, %p127
      %s130 = sadd.s32 %s129, 1
      %p133 = scmp.eq.s32.totalorder %s32, 1
      %p134 = scmp.ne.s32.totalorder %s129, %s131
      %p135 = scmp.eq.s32.totalorder %s32, 0
      %p136 = por %p134, %p135
      %p137 = scmp.ne.s32.totalorder %s129, %s131
      %p138 = scmp.eq.s32.totalorder %s37, 1
      %p139 = por %p137, %p138
      %p140 = scmp.ne.s32.totalorder %s131, %s132
      %p141 = scmp.eq.s32.totalorder %s37, 0
      %p142 = por %p140, %p141
      %p143 = scmp.ne.s32.totalorder %s131, %s132
      %p144 = scmp.eq.s32.totalorder %s38, 1
      %p145 = por %p143, %p144
      %p147 = scmp.ne.s32.totalorder %s132, %s146
      %p148 = scmp.eq.s32.totalorder %s38, 0
      %p149 = por %p147, %p148
      %s151 = sadd.s32 %s150, 1
      %p154 = scmp.eq.s32.totalorder %s32, 1
      %p155 = scmp.ne.s32.totalorder %s150, %s152
      %p156 = scmp.eq.s32.totalorder %s32, 0
      %p157 = por %p155, %p156
      %p158 = scmp.ne.s32.totalorder %s150, %s152
      %p159 = scmp.eq.s32.totalorder %s37, 1
      %p160 = por %p158, %p159
      %p161 = scmp.ne.s32.totalorder %s152, %s153
      %p162 = scmp.eq.s32.totalorder %s37, 0
      %p163 = por %p161, %p162
      %p164 = scmp.ne.s32.totalorder %s152, %s153
      %p165 = scmp.eq.s32.totalorder %s38, 1
      %p166 = por %p164, %p165
      %p168 = scmp.ne.s32.totalorder %s153, %s167
      %p169 = scmp.eq.s32.totalorder %s38, 0
      %p170 = por %p168, %p169
      %s172 = sadd.s32 %s171, 1
      %p175 = scmp.eq.s32.totalorder %s32, 1
      %p176 = scmp.ne.s32.totalorder %s171, %s173
      %p177 = scmp.eq.s32.totalorder %s32, 0
      %p178 = por %p176, %p177
      %p179 = scmp.ne.s32.totalorder %s171, %s173
      %p180 = scmp.eq.s32.totalorder %s37, 1
      %p181 = por %p179, %p180
      %p182 = scmp.ne.s32.totalorder %s173, %s174
      %p183 = scmp.eq.s32.totalorder %s37, 0
      %p184 = por %p182, %p183
      %p185 = scmp.ne.s32.totalorder %s173, %s174
      %p186 = scmp.eq.s32.totalorder %s38, 1
      %p187 = por %p185, %p186
      %p189 = scmp.ne.s32.totalorder %s174, %s188
      %p190 = scmp.eq.s32.totalorder %s38, 0
      %p191 = por %p189, %p190
      %s193 = sadd.s32 %s192, 1
      %p196 = scmp.eq.s32.totalorder %s32, 1
      %p197 = scmp.ne.s32.totalorder %s192, %s194
      %p198 = scmp.eq.s32.totalorder %s32, 0
      %p199 = por %p197, %p198
      %p200 = scmp.ne.s32.totalorder %s192, %s194
      %p201 = scmp.eq.s32.totalorder %s37, 1
      %p202 = por %p200, %p201
      %p203 = scmp.ne.s32.totalorder %s194, %s195
      %p204 = scmp.eq.s32.totalorder %s37, 0
      %p205 = por %p203, %p204
      %p206 = scmp.ne.s32.totalorder %s194, %s195
      %p207 = scmp.eq.s32.totalorder %s38, 1
      %p208 = por %p206, %p207
      %p210 = scmp.ne.s32.totalorder %s195, %s209
      %p211 = scmp.eq.s32.totalorder %s38, 0
      %p212 = por %p210, %p211
      %s214 = sadd.s32 %s213, 1
      %p217 = scmp.eq.s32.totalorder %s32, 1
      %p218 = scmp.ne.s32.totalorder %s213, %s215
      %p219 = scmp.eq.s32.totalorder %s32, 0
      %p220 = por %p218, %p219
      %p221 = scmp.ne.s32.totalorder %s213, %s215
      %p222 = scmp.eq.s32.totalorder %s37, 1
      %p223 = por %p221, %p222
      %p224 = scmp.ne.s32.totalorder %s215, %s216
      %p225 = scmp.eq.s32.totalorder %s37, 0
      %p226 = por %p224, %p225
      %p227 = scmp.ne.s32.totalorder %s215, %s216
      %p228 = scmp.eq.s32.totalorder %s38, 1
      %p229 = por %p227, %p228
      %p231 = scmp.ne.s32.totalorder %s216, %s230
      %p232 = scmp.eq.s32.totalorder %s38, 0
      %p233 = por %p231, %p232
      %s235 = sadd.s32 %s234, 1
      %p238 = scmp.eq.s32.totalorder %s32, 1
      %p239 = scmp.ne.s32.totalorder %s234, %s236
      %p240 = scmp.eq.s32.totalorder %s32, 0
      %p241 = por %p239, %p240
      %p242 = scmp.ne.s32.totalorder %s234, %s236
      %p243 = scmp.eq.s32.totalorder %s37, 1
      %p244 = por %p242, %p243
      %p245 = scmp.ne.s32.totalorder %s236, %s237
      %p246 = scmp.eq.s32.totalorder %s37, 0
      %p247 = por %p245, %p246
      %p248 = scmp.ne.s32.totalorder %s236, %s237
      %p249 = scmp.eq.s32.totalorder %s38, 1
      %p250 = por %p248, %p249
      %p252 = scmp.ne.s32.totalorder %s237, %s251
      %p253 = scmp.eq.s32.totalorder %s38, 0
      %p254 = por %p252, %p253
      %s256 = sadd.s32 %s255, 1
      %p259 = scmp.eq.s32.totalorder %s32, 1
      %p260 = scmp.ne.s32.totalorder %s255, %s257
      %p261 = scmp.eq.s32.totalorder %s32, 0
      %p262 = por %p260, %p261
      %p263 = scmp.ne.s32.totalorder %s255, %s257
      %p264 = scmp.eq.s32.totalorder %s37, 1
      %p265 = por %p263, %p264
      %p266 = scmp.ne.s32.totalorder %s257, %s258
      %p267 = scmp.eq.s32.totalorder %s37, 0
      %p268 = por %p266, %p267
      %p269 = scmp.ne.s32.totalorder %s257, %s258
      %p270 = scmp.eq.s32.totalorder %s38, 1
      %p271 = por %p269, %p270
      %p273 = scmp.ne.s32.totalorder %s258, %s272
      %p274 = scmp.eq.s32.totalorder %s38, 0
      %p275 = por %p273, %p274
      %s277 = sadd.s32 %s276, 1
      %p280 = scmp.eq.s32.totalorder %s32, 1
      %p281 = scmp.ne.s32.totalorder %s276, %s278
      %p282 = scmp.eq.s32.totalorder %s32, 0
      %p283 = por %p281, %p282
      %p284 = scmp.ne.s32.totalorder %s276, %s278
      %p285 = scmp.eq.s32.totalorder %s37, 1
      %p286 = por %p284, %p285
      %p287 = scmp.ne.s32.totalorder %s278, %s279
      %p288 = scmp.eq.s32.totalorder %s37, 0
      %p289 = por %p287, %p288
      %p290 = scmp.ne.s32.totalorder %s278, %s279
      %p291 = scmp.eq.s32.totalorder %s38, 1
      %p292 = por %p290, %p291
      %p294 = scmp.ne.s32.totalorder %s279, %s293
      %p295 = scmp.eq.s32.totalorder %s38, 0
      %p296 = por %p294, %p295
      %s298 = sadd.s32 %s297, 1
      %p301 = scmp.eq.s32.totalorder %s32, 1
      %p302 = scmp.ne.s32.totalorder %s297, %s299
      %p303 = scmp.eq.s32.totalorder %s32, 0
      %p304 = por %p302, %p303
      %p305 = scmp.ne.s32.totalorder %s297, %s299
      %p306 = scmp.eq.s32.totalorder %s37, 1
      %p307 = por %p305, %p306
      %p308 = scmp.ne.s32.totalorder %s299, %s300
      %p309 = scmp.eq.s32.totalorder %s37, 0
      %p310 = por %p308, %p309
      %p311 = scmp.ne.s32.totalorder %s299, %s300
      %p312 = scmp.eq.s32.totalorder %s38, 1
      %p313 = por %p311, %p312
      %p315 = scmp.ne.s32.totalorder %s300, %s314
      %p316 = scmp.eq.s32.totalorder %s38, 0
      %p317 = por %p315, %p316
      %s319 = sadd.s32 %s318, 1
      %p322 = scmp.eq.s32.totalorder %s32, 1
      %p323 = scmp.ne.s32.totalorder %s318, %s320
      %p324 = scmp.eq.s32.totalorder %s32, 0
      %p325 = por %p323, %p324
      %p326 = scmp.ne.s32.totalorder %s318, %s320
      %p327 = scmp.eq.s32.totalorder %s37, 1
      %p328 = por %p326, %p327
      %p329 = scmp.ne.s32.totalorder %s320, %s321
      %p330 = scmp.eq.s32.totalorder %s37, 0
      %p331 = por %p329, %p330
      %p332 = scmp.ne.s32.totalorder %s320, %s321
      %p333 = scmp.eq.s32.totalorder %s38, 1
      %p334 = por %p332, %p333
      %p336 = scmp.ne.s32.totalorder %s321, %s335
      %p337 = scmp.eq.s32.totalorder %s38, 0
      %p338 = por %p336, %p337
      %s340 = sadd.s32 %s339, 1
      %p343 = scmp.eq.s32.totalorder %s32, 1
      %p344 = scmp.ne.s32.totalorder %s339, %s341
      %p345 = scmp.eq.s32.totalorder %s32, 0
      %p346 = por %p344, %p345
      %p347 = scmp.ne.s32.totalorder %s339, %s341
      %p348 = scmp.eq.s32.totalorder %s37, 1
      %p349 = por %p347, %p348
      %p350 = scmp.ne.s32.totalorder %s341, %s342
      %p351 = scmp.eq.s32.totalorder %s37, 0
      %p352 = por %p350, %p351
      %p353 = scmp.ne.s32.totalorder %s341, %s342
      %p354 = scmp.eq.s32.totalorder %s38, 1
      %p355 = por %p353, %p354
      %p357 = scmp.ne.s32.totalorder %s342, %s356
      %p358 = scmp.eq.s32.totalorder %s38, 0
      %p359 = por %p357, %p358
      %s361 = sadd.s32 %s360, 1
      %p364 = scmp.eq.s32.totalorder %s32, 1
      %p365 = scmp.ne.s32.totalorder %s360, %s362
      %p366 = scmp.eq.s32.totalorder %s32, 0
      %p367 = por %p365, %p366
      %p368 = scmp.ne.s32.totalorder %s360, %s362
      %p369 = scmp.eq.s32.totalorder %s37, 1
      %p370 = por %p368, %p369
      %p371 = scmp.ne.s32.totalorder %s362, %s363
      %p372 = scmp.eq.s32.totalorder %s37, 0
      %p373 = por %p371, %p372
      %p374 = scmp.ne.s32.totalorder %s362, %s363
      %p375 = scmp.eq.s32.totalorder %s38, 1
      %p376 = por %p374, %p375
      %p378 = scmp.ne.s32.totalorder %s363, %s377
      %p379 = scmp.eq.s32.totalorder %s38, 0
      %p380 = por %p378, %p379
      %s382 = sadd.s32 %s381, 1
      %p385 = scmp.eq.s32.totalorder %s32, 1
      %p386 = scmp.ne.s32.totalorder %s381, %s383
      %p387 = scmp.eq.s32.totalorder %s32, 0
      %p388 = por %p386, %p387
      %p389 = scmp.ne.s32.totalorder %s381, %s383
      %p390 = scmp.eq.s32.totalorder %s37, 1
      %p391 = por %p389, %p390
      %p392 = scmp.ne.s32.totalorder %s383, %s384
      %p393 = scmp.eq.s32.totalorder %s37, 0
      %p394 = por %p392, %p393
      %p395 = scmp.ne.s32.totalorder %s383, %s384
      %p396 = scmp.eq.s32.totalorder %s38, 1
      %p397 = por %p395, %p396
      %p399 = scmp.ne.s32.totalorder %s384, %s398
      %p400 = scmp.eq.s32.totalorder %s38, 0
      %p401 = por %p399, %p400
      %s403 = sadd.s32 %s402, 1
      %p406 = scmp.eq.s32.totalorder %s32, 1
      %p407 = scmp.ne.s32.totalorder %s402, %s404
      %p408 = scmp.eq.s32.totalorder %s32, 0
      %p409 = por %p407, %p408
      %p410 = scmp.ne.s32.totalorder %s402, %s404
      %p411 = scmp.eq.s32.totalorder %s37, 1
      %p412 = por %p410, %p411
      %p413 = scmp.ne.s32.totalorder %s404, %s405
      %p414 = scmp.eq.s32.totalorder %s37, 0
      %p415 = por %p413, %p414
      %p416 = scmp.ne.s32.totalorder %s404, %s405
      %p417 = scmp.eq.s32.totalorder %s38, 1
      %p418 = por %p416, %p417
      %p420 = scmp.ne.s32.totalorder %s405, %s419
      %p421 = scmp.eq.s32.totalorder %s38, 0
      %p422 = por %p420, %p421
      %s424 = sadd.s32 %s423, 1
      %p427 = scmp.eq.s32.totalorder %s32, 1
      %p428 = scmp.ne.s32.totalorder %s423, %s425
      %p429 = scmp.eq.s32.totalorder %s32, 0
      %p430 = por %p428, %p429
      %p431 = scmp.ne.s32.totalorder %s423, %s425
      %p432 = scmp.eq.s32.totalorder %s37, 1
      %p433 = por %p431, %p432
      %p434 = scmp.ne.s32.totalorder %s425, %s426
      %p435 = scmp.eq.s32.totalorder %s37, 0
      %p436 = por %p434, %p435
      %p437 = scmp.ne.s32.totalorder %s425, %s426
      %p438 = scmp.eq.s32.totalorder %s38, 1
      %p439 = por %p437, %p438
      %p441 = scmp.ne.s32.totalorder %s426, %s440
      %p442 = scmp.eq.s32.totalorder %s38, 0
      %p443 = por %p441, %p442
      %s445 = sadd.s32 %s444, 1
      %p448 = scmp.eq.s32.totalorder %s32, 1
      %p449 = scmp.ne.s32.totalorder %s444, %s446
      %p450 = scmp.eq.s32.totalorder %s32, 0
      %p451 = por %p449, %p450
      %p452 = scmp.ne.s32.totalorder %s444, %s446
      %p453 = scmp.eq.s32.totalorder %s37, 1
      %p454 = por %p452, %p453
      %p455 = scmp.ne.s32.totalorder %s446, %s447
      %p456 = scmp.eq.s32.totalorder %s37, 0
      %p457 = por %p455, %p456
      %p458 = scmp.ne.s32.totalorder %s446, %s447
      %p459 = scmp.eq.s32.totalorder %s38, 1
      %p460 = por %p458, %p459
      %p462 = scmp.ne.s32.totalorder %s447, %s461
      %p463 = scmp.eq.s32.totalorder %s38, 0
      %p464 = por %p462, %p463
      %s466 = sadd.s32 %s465, 1
      %p469 = scmp.eq.s32.totalorder %s32, 1
      %p470 = scmp.ne.s32.totalorder %s465, %s467
      %p471 = scmp.eq.s32.totalorder %s32, 0
      %p472 = por %p470, %p471
      %p473 = scmp.ne.s32.totalorder %s465, %s467
      %p474 = scmp.eq.s32.totalorder %s37, 1
      %p475 = por %p473, %p474
      %p476 = scmp.ne.s32.totalorder %s467, %s468
      %p477 = scmp.eq.s32.totalorder %s37, 0
      %p478 = por %p476, %p477
      %p479 = scmp.ne.s32.totalorder %s467, %s468
      %p480 = scmp.eq.s32.totalorder %s38, 1
      %p481 = por %p479, %p480
      %p483 = scmp.ne.s32.totalorder %s468, %s482
      %p484 = scmp.eq.s32.totalorder %s38, 0
      %p485 = por %p483, %p484
      %s487 = sadd.s32 %s486, 1
      %p490 = scmp.eq.s32.totalorder %s32, 1
      %p491 = scmp.ne.s32.totalorder %s486, %s488
      %p492 = scmp.eq.s32.totalorder %s32, 0
      %p493 = por %p491, %p492
      %p494 = scmp.ne.s32.totalorder %s486, %s488
      %p495 = scmp.eq.s32.totalorder %s37, 1
      %p496 = por %p494, %p495
      %p497 = scmp.ne.s32.totalorder %s488, %s489
      %p498 = scmp.eq.s32.totalorder %s37, 0
      %p499 = por %p497, %p498
      %p500 = scmp.ne.s32.totalorder %s488, %s489
      %p501 = scmp.eq.s32.totalorder %s38, 1
      %p502 = por %p500, %p501
      %p504 = scmp.ne.s32.totalorder %s489, %s503
      %p505 = scmp.eq.s32.totalorder %s38, 0
      %p506 = por %p504, %p505
      %s508 = sadd.s32 %s507, 1
      %p511 = scmp.eq.s32.totalorder %s32, 1
      %p512 = scmp.ne.s32.totalorder %s507, %s509
      %p513 = scmp.eq.s32.totalorder %s32, 0
      %p514 = por %p512, %p513
      %p515 = scmp.ne.s32.totalorder %s507, %s509
      %p516 = scmp.eq.s32.totalorder %s37, 1
      %p517 = por %p515, %p516
      %p518 = scmp.ne.s32.totalorder %s509, %s510
      %p519 = scmp.eq.s32.totalorder %s37, 0
      %p520 = por %p518, %p519
      %p521 = scmp.ne.s32.totalorder %s509, %s510
      %p522 = scmp.eq.s32.totalorder %s38, 1
      %p523 = por %p521, %p522
      %p525 = scmp.ne.s32.totalorder %s510, %s524
      %p526 = scmp.eq.s32.totalorder %s38, 0
      %p527 = por %p525, %p526
      %s528 = ssub.s32 %s32, %s39
      %p529 = scmp.eq.s32.totalorder %s528, 0
      %s531 = sadd.s32 %s530, 1
      %s532 = scalar_select %p529, %s530, %s531
      %p535 = pneg %p529
      %p536 = scmp.eq.s32.totalorder %s32, 1
      %p537 = por %p535, %p536
      %p538 = scmp.ne.s32.totalorder %s530, %s533
      %p539 = scmp.eq.s32.totalorder %s32, 0
      %p540 = por %p538, %p539
      %p541 = scmp.ne.s32.totalorder %s530, %s533
      %p542 = scmp.eq.s32.totalorder %s37, 1
      %p543 = por %p541, %p542
      %p544 = scmp.ne.s32.totalorder %s533, %s534
      %p545 = scmp.eq.s32.totalorder %s37, 0
      %p546 = por %p544, %p545
      %p547 = scmp.ne.s32.totalorder %s533, %s534
      %p548 = scmp.eq.s32.totalorder %s38, 1
      %p549 = por %p547, %p548
      %p551 = scmp.ne.s32.totalorder %s534, %s550
      %p552 = scmp.eq.s32.totalorder %s38, 0
      %p553 = por %p551, %p552
      %p554 = scmp.le.s32.totalorder 1, %s32
      %p555 = scmp.lt.s32.totalorder %s32, 3
      %p556 = pnand %p554, %p555
      %p557 = pneg %p556
      // Predicated region
      $region9: #{vit_forward.1} parent=5 // pred_check
        _
      $region10: #{vit_forward.1} parent=5 // pred_check_branch
        %559 = sbr.rel (%p556) target = $region12
      $region11: #{vit_forward.1} parent=5 // pred_region
        %s560 = ssub.s32 %s32, 1
        // Predicated region
        $region13: #{vit_forward.1} parent=11 // pred_check
          %p561 = pneg %p79
        $region14: #{vit_forward.1} parent=11 // pred_check_branch
          %563 = sbr.rel (%p561) target = $region16
        $region15: #{vit_forward.1} parent=11 // pred_region
          _
        $region16: #{vit_forward.1} parent=11 // pred_fallthru
          _
        // Predicated region
        $region17: #{vit_forward.1} parent=11 // pred_check
          %p564 = pneg %p100
        $region18: #{vit_forward.1} parent=11 // pred_check_branch
          %566 = sbr.rel (%p564) target = $region20
        $region19: #{vit_forward.1} parent=11 // pred_region
          _
        $region20: #{vit_forward.1} parent=11 // pred_fallthru
          _
        // Predicated region
        $region21: #{vit_forward.1} parent=11 // pred_check
          %p567 = pneg %p121
        $region22: #{vit_forward.1} parent=11 // pred_check_branch
          %569 = sbr.rel (%p567) target = $region24
        $region23: #{vit_forward.1} parent=11 // pred_region
          _
        $region24: #{vit_forward.1} parent=11 // pred_fallthru
          _
        // Predicated region
        $region25: #{vit_forward.1} parent=11 // pred_check
          %p570 = pneg %p142
        $region26: #{vit_forward.1} parent=11 // pred_check_branch
          %572 = sbr.rel (%p570) target = $region28
        $region27: #{vit_forward.1} parent=11 // pred_region
          _
        $region28: #{vit_forward.1} parent=11 // pred_fallthru
          _
        // Predicated region
        $region29: #{vit_forward.1} parent=11 // pred_check
          %p573 = pneg %p163
        $region30: #{vit_forward.1} parent=11 // pred_check_branch
          %575 = sbr.rel (%p573) target = $region32
        $region31: #{vit_forward.1} parent=11 // pred_region
          _
        $region32: #{vit_forward.1} parent=11 // pred_fallthru
          _
        // Predicated region
        $region33: #{vit_forward.1} parent=11 // pred_check
          %p576 = pneg %p184
        $region34: #{vit_forward.1} parent=11 // pred_check_branch
          %578 = sbr.rel (%p576) target = $region36
        $region35: #{vit_forward.1} parent=11 // pred_region
          _
        $region36: #{vit_forward.1} parent=11 // pred_fallthru
          _
        // Predicated region
        $region37: #{vit_forward.1} parent=11 // pred_check
          %p579 = pneg %p205
        $region38: #{vit_forward.1} parent=11 // pred_check_branch
          %581 = sbr.rel (%p579) target = $region40
        $region39: #{vit_forward.1} parent=11 // pred_region
          _
        $region40: #{vit_forward.1} parent=11 // pred_fallthru
          _
        // Predicated region
        $region41: #{vit_forward.1} parent=11 // pred_check
          %p582 = pneg %p226
        $region42: #{vit_forward.1} parent=11 // pred_check_branch
          %584 = sbr.rel (%p582) target = $region44
        $region43: #{vit_forward.1} parent=11 // pred_region
          _
        $region44: #{vit_forward.1} parent=11 // pred_fallthru
          _
        // Predicated region
        $region45: #{vit_forward.1} parent=11 // pred_check
          %p585 = pneg %p247
        $region46: #{vit_forward.1} parent=11 // pred_check_branch
          %587 = sbr.rel (%p585) target = $region48
        $region47: #{vit_forward.1} parent=11 // pred_region
          _
        $region48: #{vit_forward.1} parent=11 // pred_fallthru
          _
        // Predicated region
        $region49: #{vit_forward.1} parent=11 // pred_check
          %p588 = pneg %p268
        $region50: #{vit_forward.1} parent=11 // pred_check_branch
          %590 = sbr.rel (%p588) target = $region52
        $region51: #{vit_forward.1} parent=11 // pred_region
          _
        $region52: #{vit_forward.1} parent=11 // pred_fallthru
          _
        // Predicated region
        $region53: #{vit_forward.1} parent=11 // pred_check
          %p591 = pneg %p289
        $region54: #{vit_forward.1} parent=11 // pred_check_branch
          %593 = sbr.rel (%p591) target = $region56
        $region55: #{vit_forward.1} parent=11 // pred_region
          _
        $region56: #{vit_forward.1} parent=11 // pred_fallthru
          _
        // Predicated region
        $region57: #{vit_forward.1} parent=11 // pred_check
          %p594 = pneg %p310
        $region58: #{vit_forward.1} parent=11 // pred_check_branch
          %596 = sbr.rel (%p594) target = $region60
        $region59: #{vit_forward.1} parent=11 // pred_region
          _
        $region60: #{vit_forward.1} parent=11 // pred_fallthru
          _
        // Predicated region
        $region61: #{vit_forward.1} parent=11 // pred_check
          %p597 = pneg %p331
        $region62: #{vit_forward.1} parent=11 // pred_check_branch
          %599 = sbr.rel (%p597) target = $region64
        $region63: #{vit_forward.1} parent=11 // pred_region
          _
        $region64: #{vit_forward.1} parent=11 // pred_fallthru
          _
        // Predicated region
        $region65: #{vit_forward.1} parent=11 // pred_check
          %p600 = pneg %p352
        $region66: #{vit_forward.1} parent=11 // pred_check_branch
          %602 = sbr.rel (%p600) target = $region68
        $region67: #{vit_forward.1} parent=11 // pred_region
          _
        $region68: #{vit_forward.1} parent=11 // pred_fallthru
          _
        // Predicated region
        $region69: #{vit_forward.1} parent=11 // pred_check
          %p603 = pneg %p373
        $region70: #{vit_forward.1} parent=11 // pred_check_branch
          %605 = sbr.rel (%p603) target = $region72
        $region71: #{vit_forward.1} parent=11 // pred_region
          _
        $region72: #{vit_forward.1} parent=11 // pred_fallthru
          _
        // Predicated region
        $region73: #{vit_forward.1} parent=11 // pred_check
          %p606 = pneg %p394
        $region74: #{vit_forward.1} parent=11 // pred_check_branch
          %608 = sbr.rel (%p606) target = $region76
        $region75: #{vit_forward.1} parent=11 // pred_region
          _
        $region76: #{vit_forward.1} parent=11 // pred_fallthru
          _
        // Predicated region
        $region77: #{vit_forward.1} parent=11 // pred_check
          %p609 = pneg %p415
        $region78: #{vit_forward.1} parent=11 // pred_check_branch
          %611 = sbr.rel (%p609) target = $region80
        $region79: #{vit_forward.1} parent=11 // pred_region
          _
        $region80: #{vit_forward.1} parent=11 // pred_fallthru
          _
        // Predicated region
        $region81: #{vit_forward.1} parent=11 // pred_check
          %p612 = pneg %p436
        $region82: #{vit_forward.1} parent=11 // pred_check_branch
          %614 = sbr.rel (%p612) target = $region84
        $region83: #{vit_forward.1} parent=11 // pred_region
          _
        $region84: #{vit_forward.1} parent=11 // pred_fallthru
          _
        // Predicated region
        $region85: #{vit_forward.1} parent=11 // pred_check
          %p615 = pneg %p457
        $region86: #{vit_forward.1} parent=11 // pred_check_branch
          %617 = sbr.rel (%p615) target = $region88
        $region87: #{vit_forward.1} parent=11 // pred_region
          _
        $region88: #{vit_forward.1} parent=11 // pred_fallthru
          _
        // Predicated region
        $region89: #{vit_forward.1} parent=11 // pred_check
          %p618 = pneg %p478
        $region90: #{vit_forward.1} parent=11 // pred_check_branch
          %620 = sbr.rel (%p618) target = $region92
        $region91: #{vit_forward.1} parent=11 // pred_region
          _
        $region92: #{vit_forward.1} parent=11 // pred_fallthru
          _
        // Predicated region
        $region93: #{vit_forward.1} parent=11 // pred_check
          %p621 = pneg %p499
        $region94: #{vit_forward.1} parent=11 // pred_check_branch
          %623 = sbr.rel (%p621) target = $region96
        $region95: #{vit_forward.1} parent=11 // pred_region
          _
        $region96: #{vit_forward.1} parent=11 // pred_fallthru
          _
        // Predicated region
        $region97: #{vit_forward.1} parent=11 // pred_check
          %p624 = pneg %p520
        $region98: #{vit_forward.1} parent=11 // pred_check_branch
          %626 = sbr.rel (%p624) target = $region100
        $region99: #{vit_forward.1} parent=11 // pred_region
          _
        $region100: #{vit_forward.1} parent=11 // pred_fallthru
          _
      $region12: #{vit_forward.1} parent=5 // pred_fallthru
        _
      %p627 = scmp.lt.s32.totalorder %s32, 2
      // Predicated region
      $region101: #{vit_forward.1} parent=5 // pred_check
        %p628 = pneg %p627
      $region102: #{vit_forward.1} parent=5 // pred_check_branch
        %630 = sbr.rel (%p628) target = $region104
      $region103: #{vit_forward.1} parent=5 // pred_region
        // Predicated region
        $region105: #{vit_forward.1} parent=103 // pred_check
          %p631 = pneg %p52
        $region106: #{vit_forward.1} parent=103 // pred_check_branch
          %633 = sbr.rel (%p631) target = $region108
        $region107: #{vit_forward.1} parent=103 // pred_region
          %s634 = smul.u32 16, %s32
          %p635 = scmp.lt.s32.totalorder %s634, 31
          %s636 = scalar_select %p635, %s634, 31
          %s637 = smul.addr %s636, 8
          %s638 = scalar_lea.vmem %s0, %s637
          %s639 = smul.u32 16, %s32
        $region108: #{vit_forward.1} parent=103 // pred_fallthru
          _
      $region104: #{vit_forward.1} parent=5 // pred_fallthru
        _
      %p640 = scmp.le.s32.totalorder 1, %s32
      %p641 = scmp.lt.s32.totalorder %s32, 3
      %p642 = pnand %p640, %p641
      %p643 = pneg %p642
      // Predicated region
      $region109: #{vit_forward.1} parent=5 // pred_check
        _
      $region110: #{vit_forward.1} parent=5 // pred_check_branch
        %645 = sbr.rel (%p642) target = $region112
      $region111: #{vit_forward.1} parent=5 // pred_region
        %s646 = ssub.s32 %s32, 1
        %s647 = smul.u32 16, %s37
        %p648 = scmp.lt.s32.totalorder %s647, 31
        %s649 = scalar_select %p648, %s647, 31
        %s650 = smul.addr %s649, 8
        %s651 = scalar_lea.vmem %s0, %s650
        %p652 = pneg %p58
        %p653 = pneg %p55
        %p654 = pneg %p79
        %p655 = pneg %p76
        %p656 = pneg %p100
        %p657 = pneg %p97
        %p658 = pneg %p121
        %p659 = pneg %p118
        %p660 = pneg %p142
        %p661 = pneg %p139
        %p662 = pneg %p163
        %p663 = pneg %p160
        %p664 = pneg %p184
        %p665 = pneg %p181
        %p666 = pneg %p205
        %p667 = pneg %p202
        %p668 = pneg %p226
        %p669 = pneg %p223
        %p670 = pneg %p247
        %p671 = pneg %p244
        %p672 = pneg %p268
        %p673 = pneg %p265
        %p674 = pneg %p289
        %p675 = pneg %p286
        %p676 = pneg %p310
        %p677 = pneg %p307
        %p678 = pneg %p331
        %p679 = pneg %p328
        %p680 = pneg %p352
        %p681 = pneg %p349
        %p682 = pneg %p373
        %p683 = pneg %p370
        %p684 = pneg %p394
        %p685 = pneg %p391
        %p686 = pneg %p415
        %p687 = pneg %p412
        %p688 = pneg %p436
        %p689 = pneg %p433
        %p690 = pneg %p457
        %p691 = pneg %p454
        %p692 = pneg %p478
        %p693 = pneg %p475
        %p694 = pneg %p499
        %p695 = pneg %p496
        %p696 = pneg %p520
        %p697 = pneg %p517
        %p698 = pneg %p546
        %p699 = pneg %p543
        %s700 = sand.u32 %s533, 1
        %s701 = scalar_lea.sflag [#allocation3], %s700
        %s702 = sand.u32 %s533, 1
        %s703 = smul.addr %s702, 8
        %s704 = scalar_lea.vmem [#allocation2], %s703
        %s705 = smul.u32 16, %s37
        %p706 = scmp.lt.s32.totalorder %s705, 31
        %s707 = scalar_select %p706, %s705, 31
        %s708 = smul.addr %s707, 8
        %s709 = scalar_lea.vmem %s0, %s708
        %s710 = smul.u32 16, %s37
        %v711 = vld [vmem:[%s709] sm:$0xff]
        %v712 = vld [vmem:[%s709 + $0x8] sm:$0xff]
        %v713 = vld [vmem:[%s709 + $0x10] sm:$0xff]
        %v714 = vld [vmem:[%s709 + $0x18] sm:$0xff]
        %v715 = vld [vmem:[%s709 + $0x20] sm:$0xff]
        %v716 = vld [vmem:[%s709 + $0x28] sm:$0xff]
        %v717 = vld [vmem:[%s709 + $0x30] sm:$0xff]
        %v718 = vld [vmem:[%s709 + $0x38] sm:$0xff]
        %v719 = vld [vmem:[%s709 + $0x40] sm:$0xff]
        %v720 = vld [vmem:[%s709 + $0x48] sm:$0xff]
        %v721 = vld [vmem:[%s709 + $0x50] sm:$0xff]
        %v722 = vld [vmem:[%s709 + $0x58] sm:$0xff]
        %v723 = vld [vmem:[%s709 + $0x60] sm:$0xff]
        %v724 = vld [vmem:[%s709 + $0x68] sm:$0xff]
        %v725 = vld [vmem:[%s709 + $0x70] sm:$0xff]
        %v726 = vld [vmem:[%s709 + $0x78] sm:$0xff]
        %v727 = vld [vmem:[%s1] sm:$0xff]
        %v728 = vld [vmem:[%s1 + $0x8] sm:$0xff]
        %v729 = vld [vmem:[%s1 + $0x10] sm:$0xff]
        %v730 = vld [vmem:[%s1 + $0x18] sm:$0xff]
        %v731 = vld [vmem:[%s1 + $0x20] sm:$0xff]
        %v732 = vld [vmem:[%s1 + $0x28] sm:$0xff]
        %v733 = vld [vmem:[%s2] sm:$0xff]
        %v734 = vld [vmem:[%s2 + $0x8] sm:$0xff]
        %v735 = vld [vmem:[%s2 + $0x10] sm:$0xff]
        %v736 = vld [vmem:[%s2 + $0x18] sm:$0xff]
        %v737 = vld [vmem:[%s2 + $0x20] sm:$0xff]
        %v738 = vld [vmem:[%s2 + $0x28] sm:$0xff]
        %v739 = vld [vmem:[%s2 + $0x30] sm:$0xff]
        %v740 = vld [vmem:[%s2 + $0x38] sm:$0xff]
        %v741 = vld [vmem:[%s2 + $0x40] sm:$0xff]
        %v742 = vld [vmem:[%s2 + $0x48] sm:$0xff]
        %v743 = vld [vmem:[%s2 + $0x50] sm:$0xff]
        %v744 = vld [vmem:[%s2 + $0x58] sm:$0xff]
        %v745 = vld [vmem:[%s2 + $0x60] sm:$0xff]
        %v746 = vld [vmem:[%s2 + $0x68] sm:$0xff]
        %v747 = vld [vmem:[%s2 + $0x70] sm:$0xff]
        %v748 = vld [vmem:[%s2 + $0x78] sm:$0xff]
        %vm749 = vcmask 392192
        %v751 = vsel %vm749, %v711, 0
        %v754 = vsel %vm749, %v712, 0
        %v757 = vsel %vm749, %v713, 0
        %v760 = vsel %vm749, %v714, 0
        %v763 = vsel %vm749, %v715, 0
        %v766 = vsel %vm749, %v716, 0
        %v769 = vsel %vm749, %v717, 0
        %v772 = vsel %vm749, %v718, 0
        %v775 = vsel %vm749, %v719, 0
        %v778 = vsel %vm749, %v720, 0
        %v781 = vsel %vm749, %v721, 0
        %v784 = vsel %vm749, %v722, 0
        %v787 = vsel %vm749, %v723, 0
        %v790 = vsel %vm749, %v724, 0
        %v793 = vsel %vm749, %v725, 0
        %v796 = vsel %vm749, %v726, 0
        %798 = vmatprep.subr.mxu0 0.0
        %799 = vmatpush1.msra.mxu0 %v727
        %800 = vmatprep.subr.mxu0 0.0
        %801 = vmatpush1.msra.mxu0 %v728
        %802 = vmatprep.subr.mxu0 0.0
        %803 = vmatpush1.msra.mxu0 %v729
        %804 = vmatprep.subr.mxu0 0.0
        %805 = vmatpush1.msra.mxu0 %v730
        %806 = vmatprep.subr.mxu0 0.0
        %807 = vmatpush1.msra.mxu0 %v731
        %808 = vmatprep.subr.mxu0 0.0
        %809 = vmatpush1.msra.mxu0 %v732
        %810 = vmatprep.subr.mxu0 0.0
        %811 = vmatpush1.msra.mxu0 0.0
        %812 = vmatprep.subr.mxu0 0.0
        %813 = vmatpush1.msra.mxu0 0.0
        %814 = vmatprep.subr.mxu0 0.0
        %815 = vmatpush1.msra.mxu0 0.0
        %816 = vmatprep.subr.mxu0 0.0
        %817 = vmatpush1.msra.mxu0 0.0
        %818 = vmatprep.subr.mxu0 0.0
        %819 = vmatpush1.msra.mxu0 0.0
        %820 = vmatprep.subr.mxu0 0.0
        %821 = vmatpush1.msra.mxu0 0.0
        %822 = vmatprep.subr.mxu0 0.0
        %823 = vmatpush1.msra.mxu0 0.0
        %824 = vmatprep.subr.mxu0 0.0
        %825 = vmatpush1.msra.mxu0 0.0
        %826 = vmatprep.subr.mxu0 0.0
        %827 = vmatpush1.msra.mxu0 0.0
        %828 = vmatprep.subr.mxu0 0.0
        %829 = vmatpush1.msra.mxu0 0.0
        %830 = vmatprep.subr.mxu0 0.0
        %831 = vmatpush1.msra.mxu0 0.0
        %832 = vmatprep.subr.mxu0 0.0
        %833 = vmatpush1.msra.mxu0 0.0
        %834 = vmatprep.subr.mxu0 0.0
        %835 = vmatpush1.msra.mxu0 0.0
        %836 = vmatprep.subr.mxu0 0.0
        %837 = vmatpush1.msra.mxu0 0.0
        %838 = vmatprep.subr.mxu0 0.0
        %839 = vmatpush1.msra.mxu0 0.0
        %840 = vmatprep.subr.mxu0 0.0
        %841 = vmatpush1.msra.mxu0 0.0
        %842 = vmatprep.subr.mxu0 0.0
        %843 = vmatpush1.msra.mxu0 0.0
        %844 = vmatprep.subr.mxu0 0.0
        %845 = vmatpush1.msra.mxu0 0.0
        %846 = vmatprep.subr.mxu0 0.0
        %847 = vmatpush1.msra.mxu0 0.0
        %848 = vmatprep.subr.mxu0 0.0
        %849 = vmatpush1.msra.mxu0 0.0
        %850 = vmatprep.subr.mxu0 0.0
        %851 = vmatpush1.msra.mxu0 0.0
        %852 = vmatprep.subr.mxu0 0.0
        %853 = vmatpush1.msra.mxu0 0.0
        %854 = vmatprep.subr.mxu0 0.0
        %855 = vmatpush1.msra.mxu0 0.0
        %856 = vmatprep.subr.mxu0 0.0
        %857 = vmatpush1.msra.mxu0 0.0
        %858 = vmatprep.subr.mxu0 0.0
        %859 = vmatpush1.msra.mxu0 0.0
        %860 = vmatprep.subr.mxu0 0.0
        %861 = vmatpush1.msra.mxu0 0.0
        %862 = vmatprep.mubr.f32.mxu0 0.0
        %863 = vmatmul.mubr.f32.gmra.mrb[0].mxu0 %v751
        %v864 = vpop.f32.mrb[0].mxu0
        %v865 = vadd.f32 %v733, %v864
        %v866 = vpop.f32.mrb[0].mxu0
        %867 = vmatprep.mubr.f32.mxu0 0.0
        %868 = vmatmul.mubr.f32.gmra.mrb[0].mxu0 %v754
        %v869 = vpop.f32.mrb[0].mxu0
        %v870 = vadd.f32 %v734, %v869
        %v871 = vpop.f32.mrb[0].mxu0
        %872 = vmatprep.mubr.f32.mxu0 0.0
        %873 = vmatmul.mubr.f32.gmra.mrb[0].mxu0 %v757
        %v874 = vpop.f32.mrb[0].mxu0
        %v875 = vadd.f32 %v735, %v874
        %v876 = vpop.f32.mrb[0].mxu0
        %877 = vmatprep.mubr.f32.mxu0 0.0
        %878 = vmatmul.mubr.f32.gmra.mrb[0].mxu0 %v760
        %v879 = vpop.f32.mrb[0].mxu0
        %v880 = vadd.f32 %v736, %v879
        %v881 = vpop.f32.mrb[0].mxu0
        %882 = vmatprep.mubr.f32.mxu0 0.0
        %883 = vmatmul.mubr.f32.gmra.mrb[0].mxu0 %v763
        %v884 = vpop.f32.mrb[0].mxu0
        %v885 = vadd.f32 %v737, %v884
        %v886 = vpop.f32.mrb[0].mxu0
        %887 = vmatprep.mubr.f32.mxu0 0.0
        %888 = vmatmul.mubr.f32.gmra.mrb[0].mxu0 %v766
        %v889 = vpop.f32.mrb[0].mxu0
        %v890 = vadd.f32 %v738, %v889
        %v891 = vpop.f32.mrb[0].mxu0
        %892 = vmatprep.mubr.f32.mxu0 0.0
        %893 = vmatmul.mubr.f32.gmra.mrb[0].mxu0 %v769
        %v894 = vpop.f32.mrb[0].mxu0
        %v895 = vadd.f32 %v739, %v894
        %v896 = vpop.f32.mrb[0].mxu0
        %897 = vmatprep.mubr.f32.mxu0 0.0
        %898 = vmatmul.mubr.f32.gmra.mrb[0].mxu0 %v772
        %v899 = vpop.f32.mrb[0].mxu0
        %v900 = vadd.f32 %v740, %v899
        %v901 = vpop.f32.mrb[0].mxu0
        %902 = vmatprep.mubr.f32.mxu0 0.0
        %903 = vmatmul.mubr.f32.gmra.mrb[0].mxu0 %v775
        %v904 = vpop.f32.mrb[0].mxu0
        %v905 = vadd.f32 %v741, %v904
        %v906 = vpop.f32.mrb[0].mxu0
        %907 = vmatprep.mubr.f32.mxu0 0.0
        %908 = vmatmul.mubr.f32.gmra.mrb[0].mxu0 %v778
        %v909 = vpop.f32.mrb[0].mxu0
        %v910 = vadd.f32 %v742, %v909
        %v911 = vpop.f32.mrb[0].mxu0
        %912 = vmatprep.mubr.f32.mxu0 0.0
        %913 = vmatmul.mubr.f32.gmra.mrb[0].mxu0 %v781
        %v914 = vpop.f32.mrb[0].mxu0
        %v915 = vadd.f32 %v743, %v914
        %v916 = vpop.f32.mrb[0].mxu0
        %917 = vmatprep.mubr.f32.mxu0 0.0
        %918 = vmatmul.mubr.f32.gmra.mrb[0].mxu0 %v784
        %v919 = vpop.f32.mrb[0].mxu0
        %v920 = vadd.f32 %v744, %v919
        %v921 = vpop.f32.mrb[0].mxu0
        %922 = vmatprep.mubr.f32.mxu0 0.0
        %923 = vmatmul.mubr.f32.gmra.mrb[0].mxu0 %v787
        %v924 = vpop.f32.mrb[0].mxu0
        %v925 = vadd.f32 %v745, %v924
        %v926 = vpop.f32.mrb[0].mxu0
        %927 = vmatprep.mubr.f32.mxu0 0.0
        %928 = vmatmul.mubr.f32.gmra.mrb[0].mxu0 %v790
        %v929 = vpop.f32.mrb[0].mxu0
        %v930 = vadd.f32 %v746, %v929
        %v931 = vpop.f32.mrb[0].mxu0
        %932 = vmatprep.mubr.f32.mxu0 0.0
        %933 = vmatmul.mubr.f32.gmra.mrb[0].mxu0 %v793
        %v934 = vpop.f32.mrb[0].mxu0
        %v935 = vadd.f32 %v747, %v934
        %v936 = vpop.f32.mrb[0].mxu0
        %937 = vmatprep.mubr.f32.mxu0 0.0
        %938 = vmatmul.mubr.f32.gmra.mrb[0].mxu0 %v796
        %v939 = vpop.f32.mrb[0].mxu0
        %v940 = vadd.f32 %v748, %v939
        %v941 = vpop.f32.mrb[0].mxu0
        %942 = vdwg.mxu0
        %v943 = vld [vmem:[%s7] sm:$0x1]
        %v944 = vld [vmem:[%s7 + $0x1] sm:$0x1]
        %vm945 = vcmask 130048
        %v946 = vsel %vm945, %v865, 0.0
        %947 = vadd.xlane.f32.xlu0 %v946
        %v948 = vpop.xlane.xlu0 %947
        %v949 = vsel %vm945, %v870, 0.0
        %950 = vadd.xlane.f32.xlu0 %v949
        %v951 = vpop.xlane.xlu0 %950
        %v952 = vsel %vm945, %v875, 0.0
        %953 = vadd.xlane.f32.xlu0 %v952
        %v954 = vpop.xlane.xlu0 %953
        %v955 = vsel %vm945, %v880, 0.0
        %956 = vadd.xlane.f32.xlu0 %v955
        %v957 = vpop.xlane.xlu0 %956
        %v958 = vsel %vm945, %v885, 0.0
        %959 = vadd.xlane.f32.xlu0 %v958
        %v960 = vpop.xlane.xlu0 %959
        %v961 = vsel %vm945, %v890, 0.0
        %962 = vadd.xlane.f32.xlu0 %v961
        %v963 = vpop.xlane.xlu0 %962
        %v964 = vsel %vm945, %v895, 0.0
        %965 = vadd.xlane.f32.xlu0 %v964
        %v966 = vpop.xlane.xlu0 %965
        %v967 = vsel %vm945, %v900, 0.0
        %968 = vadd.xlane.f32.xlu0 %v967
        %v969 = vpop.xlane.xlu0 %968
        %v970 = vsel %vm945, %v905, 0.0
        %971 = vadd.xlane.f32.xlu0 %v970
        %v972 = vpop.xlane.xlu0 %971
        %v973 = vsel %vm945, %v910, 0.0
        %974 = vadd.xlane.f32.xlu0 %v973
        %v975 = vpop.xlane.xlu0 %974
        %v976 = vsel %vm945, %v915, 0.0
        %977 = vadd.xlane.f32.xlu0 %v976
        %v978 = vpop.xlane.xlu0 %977
        %v979 = vsel %vm945, %v920, 0.0
        %980 = vadd.xlane.f32.xlu0 %v979
        %v981 = vpop.xlane.xlu0 %980
        %v982 = vsel %vm945, %v925, 0.0
        %983 = vadd.xlane.f32.xlu0 %v982
        %v984 = vpop.xlane.xlu0 %983
        %v985 = vsel %vm945, %v930, 0.0
        %986 = vadd.xlane.f32.xlu0 %v985
        %v987 = vpop.xlane.xlu0 %986
        %v988 = vsel %vm945, %v935, 0.0
        %989 = vadd.xlane.f32.xlu0 %v988
        %v990 = vpop.xlane.xlu0 %989
        %v991 = vsel %vm945, %v940, 0.0
        %992 = vadd.xlane.f32.xlu0 %v991
        %v993 = vpop.xlane.xlu0 %992
        %v994 = vrcp.pop 16.0
        %v995 = vmul.f32 %v948, %v994
        %v996 = vmul.f32 %v951, %v994
        %v997 = vmul.f32 %v954, %v994
        %v998 = vmul.f32 %v957, %v994
        %v999 = vmul.f32 %v960, %v994
        %v1000 = vmul.f32 %v963, %v994
        %v1001 = vmul.f32 %v966, %v994
        %v1002 = vmul.f32 %v969, %v994
        %v1003 = vmul.f32 %v972, %v994
        %v1004 = vmul.f32 %v975, %v994
        %v1005 = vmul.f32 %v978, %v994
        %v1006 = vmul.f32 %v981, %v994
        %v1007 = vmul.f32 %v984, %v994
        %v1008 = vmul.f32 %v987, %v994
        %v1009 = vmul.f32 %v990, %v994
        %v1010 = vmul.f32 %v993, %v994
        %v1011 = vsub.f32 %v865, %v995
        %v1012 = vsub.f32 %v870, %v996
        %v1013 = vsub.f32 %v875, %v997
        %v1014 = vsub.f32 %v880, %v998
        %v1015 = vsub.f32 %v885, %v999
        %v1016 = vsub.f32 %v890, %v1000
        %v1017 = vsub.f32 %v895, %v1001
        %v1018 = vsub.f32 %v900, %v1002
        %v1019 = vsub.f32 %v905, %v1003
        %v1020 = vsub.f32 %v910, %v1004
        %v1021 = vsub.f32 %v915, %v1005
        %v1022 = vsub.f32 %v920, %v1006
        %v1023 = vsub.f32 %v925, %v1007
        %v1024 = vsub.f32 %v930, %v1008
        %v1025 = vsub.f32 %v935, %v1009
        %v1026 = vsub.f32 %v940, %v1010
        %v1027 = vmul.f32 %v1011, %v1011
        %v1028 = vmul.f32 %v1012, %v1012
        %v1029 = vmul.f32 %v1013, %v1013
        %v1030 = vmul.f32 %v1014, %v1014
        %v1031 = vmul.f32 %v1015, %v1015
        %v1032 = vmul.f32 %v1016, %v1016
        %v1033 = vmul.f32 %v1017, %v1017
        %v1034 = vmul.f32 %v1018, %v1018
        %v1035 = vmul.f32 %v1019, %v1019
        %v1036 = vmul.f32 %v1020, %v1020
        %v1037 = vmul.f32 %v1021, %v1021
        %v1038 = vmul.f32 %v1022, %v1022
        %v1039 = vmul.f32 %v1023, %v1023
        %v1040 = vmul.f32 %v1024, %v1024
        %v1041 = vmul.f32 %v1025, %v1025
        %v1042 = vmul.f32 %v1026, %v1026
        %v1043 = vsel %vm945, %v1027, 0.0
        %1044 = vadd.xlane.f32.xlu0 %v1043
        %v1045 = vpop.xlane.xlu0 %1044
        %v1046 = vsel %vm945, %v1028, 0.0
        %1047 = vadd.xlane.f32.xlu0 %v1046
        %v1048 = vpop.xlane.xlu0 %1047
        %v1049 = vsel %vm945, %v1029, 0.0
        %1050 = vadd.xlane.f32.xlu0 %v1049
        %v1051 = vpop.xlane.xlu0 %1050
        %v1052 = vsel %vm945, %v1030, 0.0
        %1053 = vadd.xlane.f32.xlu0 %v1052
        %v1054 = vpop.xlane.xlu0 %1053
        %v1055 = vsel %vm945, %v1031, 0.0
        %1056 = vadd.xlane.f32.xlu0 %v1055
        %v1057 = vpop.xlane.xlu0 %1056
        %v1058 = vsel %vm945, %v1032, 0.0
        %1059 = vadd.xlane.f32.xlu0 %v1058
        %v1060 = vpop.xlane.xlu0 %1059
        %v1061 = vsel %vm945, %v1033, 0.0
        %1062 = vadd.xlane.f32.xlu0 %v1061
        %v1063 = vpop.xlane.xlu0 %1062
        %v1064 = vsel %vm945, %v1034, 0.0
        %1065 = vadd.xlane.f32.xlu0 %v1064
        %v1066 = vpop.xlane.xlu0 %1065
        %v1067 = vsel %vm945, %v1035, 0.0
        %1068 = vadd.xlane.f32.xlu0 %v1067
        %v1069 = vpop.xlane.xlu0 %1068
        %v1070 = vsel %vm945, %v1036, 0.0
        %1071 = vadd.xlane.f32.xlu0 %v1070
        %v1072 = vpop.xlane.xlu0 %1071
        %v1073 = vsel %vm945, %v1037, 0.0
        %1074 = vadd.xlane.f32.xlu0 %v1073
        %v1075 = vpop.xlane.xlu0 %1074
        %v1076 = vsel %vm945, %v1038, 0.0
        %1077 = vadd.xlane.f32.xlu0 %v1076
        %v1078 = vpop.xlane.xlu0 %1077
        %v1079 = vsel %vm945, %v1039, 0.0
        %1080 = vadd.xlane.f32.xlu0 %v1079
        %v1081 = vpop.xlane.xlu0 %1080
        %v1082 = vsel %vm945, %v1040, 0.0
        %1083 = vadd.xlane.f32.xlu0 %v1082
        %v1084 = vpop.xlane.xlu0 %1083
        %v1085 = vsel %vm945, %v1041, 0.0
        %1086 = vadd.xlane.f32.xlu0 %v1085
        %v1087 = vpop.xlane.xlu0 %1086
        %v1088 = vsel %vm945, %v1042, 0.0
        %1089 = vadd.xlane.f32.xlu0 %v1088
        %v1090 = vpop.xlane.xlu0 %1089
        %v1091 = vmul.f32 %v1045, %v994
        %v1092 = vmul.f32 %v1048, %v994
        %v1093 = vmul.f32 %v1051, %v994
        %v1094 = vmul.f32 %v1054, %v994
        %v1095 = vmul.f32 %v1057, %v994
        %v1096 = vmul.f32 %v1060, %v994
        %v1097 = vmul.f32 %v1063, %v994
        %v1098 = vmul.f32 %v1066, %v994
        %v1099 = vmul.f32 %v1069, %v994
        %v1100 = vmul.f32 %v1072, %v994
        %v1101 = vmul.f32 %v1075, %v994
        %v1102 = vmul.f32 %v1078, %v994
        %v1103 = vmul.f32 %v1081, %v994
        %v1104 = vmul.f32 %v1084, %v994
        %v1105 = vmul.f32 %v1087, %v994
        %v1106 = vmul.f32 %v1090, %v994
        %v1107 = vadd.f32 %v1091, 1e-06
        %v1108 = vadd.f32 %v1092, 1e-06
        %v1109 = vadd.f32 %v1093, 1e-06
        %v1110 = vadd.f32 %v1094, 1e-06
        %v1111 = vadd.f32 %v1095, 1e-06
        %v1112 = vadd.f32 %v1096, 1e-06
        %v1113 = vadd.f32 %v1097, 1e-06
        %v1114 = vadd.f32 %v1098, 1e-06
        %v1115 = vadd.f32 %v1099, 1e-06
        %v1116 = vadd.f32 %v1100, 1e-06
        %v1117 = vadd.f32 %v1101, 1e-06
        %v1118 = vadd.f32 %v1102, 1e-06
        %v1119 = vadd.f32 %v1103, 1e-06
        %v1120 = vadd.f32 %v1104, 1e-06
        %v1121 = vadd.f32 %v1105, 1e-06
        %v1122 = vadd.f32 %v1106, 1e-06
        %v1123 = vrsqrt.pop %v1107
        %v1124 = vrsqrt.pop %v1108
        %v1125 = vrsqrt.pop %v1109
        %v1126 = vrsqrt.pop %v1110
        %v1127 = vrsqrt.pop %v1111
        %v1128 = vrsqrt.pop %v1112
        %v1129 = vrsqrt.pop %v1113
        %v1130 = vrsqrt.pop %v1114
        %v1131 = vrsqrt.pop %v1115
        %v1132 = vrsqrt.pop %v1116
        %v1133 = vrsqrt.pop %v1117
        %v1134 = vrsqrt.pop %v1118
        %v1135 = vrsqrt.pop %v1119
        %v1136 = vrsqrt.pop %v1120
        %v1137 = vrsqrt.pop %v1121
        %v1138 = vrsqrt.pop %v1122
        %v1139 = vmul.f32 %v1011, %v1123
        %v1140 = vmul.f32 %v1012, %v1124
        %v1141 = vmul.f32 %v1013, %v1125
        %v1142 = vmul.f32 %v1014, %v1126
        %v1143 = vmul.f32 %v1015, %v1127
        %v1144 = vmul.f32 %v1016, %v1128
        %v1145 = vmul.f32 %v1017, %v1129
        %v1146 = vmul.f32 %v1018, %v1130
        %v1147 = vmul.f32 %v1019, %v1131
        %v1148 = vmul.f32 %v1020, %v1132
        %v1149 = vmul.f32 %v1021, %v1133
        %v1150 = vmul.f32 %v1022, %v1134
        %v1151 = vmul.f32 %v1023, %v1135
        %v1152 = vmul.f32 %v1024, %v1136
        %v1153 = vmul.f32 %v1025, %v1137
        %v1154 = vmul.f32 %v1026, %v1138
        %v1155 = vlaneseq
        %v1156 = vshrl.u32 %v1155, 7
        %v1157 = vsub.s32 0, %v1156
        %v1158 = vrot.slane %v943, %v1157
        %v1159 = vmul.f32 %v1139, %v1158
        %v1160 = vmul.f32 %v1140, %v1158
        %v1161 = vmul.f32 %v1141, %v1158
        %v1162 = vmul.f32 %v1142, %v1158
        %v1163 = vmul.f32 %v1143, %v1158
        %v1164 = vmul.f32 %v1144, %v1158
        %v1165 = vmul.f32 %v1145, %v1158
        %v1166 = vmul.f32 %v1146, %v1158
        %v1167 = vmul.f32 %v1147, %v1158
        %v1168 = vmul.f32 %v1148, %v1158
        %v1169 = vmul.f32 %v1149, %v1158
        %v1170 = vmul.f32 %v1150, %v1158
        %v1171 = vmul.f32 %v1151, %v1158
        %v1172 = vmul.f32 %v1152, %v1158
        %v1173 = vmul.f32 %v1153, %v1158
        %v1174 = vmul.f32 %v1154, %v1158
        %v1175 = vlaneseq
        %v1176 = vshrl.u32 %v1175, 7
        %v1177 = vsub.s32 0, %v1176
        %v1178 = vrot.slane %v944, %v1177
        %v1179 = vadd.f32 %v1159, %v1178
        %v1180 = vadd.f32 %v1160, %v1178
        %v1181 = vadd.f32 %v1161, %v1178
        %v1182 = vadd.f32 %v1162, %v1178
        %v1183 = vadd.f32 %v1163, %v1178
        %v1184 = vadd.f32 %v1164, %v1178
        %v1185 = vadd.f32 %v1165, %v1178
        %v1186 = vadd.f32 %v1166, %v1178
        %v1187 = vadd.f32 %v1167, %v1178
        %v1188 = vadd.f32 %v1168, %v1178
        %v1189 = vadd.f32 %v1169, %v1178
        %v1190 = vadd.f32 %v1170, %v1178
        %v1191 = vadd.f32 %v1171, %v1178
        %v1192 = vadd.f32 %v1172, %v1178
        %v1193 = vadd.f32 %v1173, %v1178
        %v1194 = vadd.f32 %v1174, %v1178
        %v1195 = vld [vmem:[%s3] sm:$0xff]
        %v1196 = vld [vmem:[%s3 + $0x8] sm:$0xff]
        %v1197 = vld [vmem:[%s3 + $0x10] sm:$0xff]
        %v1198 = vld [vmem:[%s3 + $0x18] sm:$0xff]
        %v1199 = vld [vmem:[%s3 + $0x20] sm:$0xff]
        %v1200 = vld [vmem:[%s3 + $0x28] sm:$0xff]
        %v1201 = vld [vmem:[%s3 + $0x30] sm:$0xff]
        %v1202 = vld [vmem:[%s3 + $0x38] sm:$0xff]
        %v1203 = vld [vmem:[%s3 + $0x40] sm:$0xff]
        %v1204 = vld [vmem:[%s3 + $0x48] sm:$0xff]
        %v1205 = vld [vmem:[%s3 + $0x50] sm:$0xff]
        %v1206 = vld [vmem:[%s3 + $0x58] sm:$0xff]
        %v1207 = vld [vmem:[%s3 + $0x60] sm:$0xff]
        %v1208 = vld [vmem:[%s3 + $0x68] sm:$0xff]
        %v1209 = vld [vmem:[%s3 + $0x70] sm:$0xff]
        %v1210 = vld [vmem:[%s3 + $0x78] sm:$0xff]
        %v1211 = vld [vmem:[%s3 + $0x80] sm:$0xff]
        %v1212 = vld [vmem:[%s3 + $0x88] sm:$0xff]
        %v1213 = vld [vmem:[%s3 + $0x90] sm:$0xff]
        %v1214 = vld [vmem:[%s3 + $0x98] sm:$0xff]
        %v1215 = vld [vmem:[%s3 + $0xa0] sm:$0xff]
        %v1216 = vld [vmem:[%s3 + $0xa8] sm:$0xff]
        %v1217 = vld [vmem:[%s3 + $0xb0] sm:$0xff]
        %v1218 = vld [vmem:[%s3 + $0xb8] sm:$0xff]
        %1219 = vmatprep.subr.mxu0 0.0
        %1220 = vmatpush1.msra.mxu0 %v1179
        %1221 = vmatprep.subr.mxu0 0.0
        %1222 = vmatpush1.msra.mxu0 %v1180
        %1223 = vmatprep.subr.mxu0 0.0
        %1224 = vmatpush1.msra.mxu0 %v1181
        %1225 = vmatprep.subr.mxu0 0.0
        %1226 = vmatpush1.msra.mxu0 %v1182
        %1227 = vmatprep.subr.mxu0 0.0
        %1228 = vmatpush1.msra.mxu0 %v1183
        %1229 = vmatprep.subr.mxu0 0.0
        %1230 = vmatpush1.msra.mxu0 %v1184
        %1231 = vmatprep.subr.mxu0 0.0
        %1232 = vmatpush1.msra.mxu0 %v1185
        %1233 = vmatprep.subr.mxu0 0.0
        %1234 = vmatpush1.msra.mxu0 %v1186
        %1235 = vmatprep.subr.mxu0 0.0
        %1236 = vmatpush1.msra.mxu0 %v1187
        %1237 = vmatprep.subr.mxu0 0.0
        %1238 = vmatpush1.msra.mxu0 %v1188
        %1239 = vmatprep.subr.mxu0 0.0
        %1240 = vmatpush1.msra.mxu0 %v1189
        %1241 = vmatprep.subr.mxu0 0.0
        %1242 = vmatpush1.msra.mxu0 %v1190
        %1243 = vmatprep.subr.mxu0 0.0
        %1244 = vmatpush1.msra.mxu0 %v1191
        %1245 = vmatprep.subr.mxu0 0.0
        %1246 = vmatpush1.msra.mxu0 %v1192
        %1247 = vmatprep.subr.mxu0 0.0
        %1248 = vmatpush1.msra.mxu0 %v1193
        %1249 = vmatprep.subr.mxu0 0.0
        %1250 = vmatpush1.msra.mxu0 %v1194
        %1251 = vmatprep.subr.mxu0 0.0
        %1252 = vmatpush1.msra.mxu0 0.0
        %1253 = vmatprep.subr.mxu0 0.0
        %1254 = vmatpush1.msra.mxu0 0.0
        %1255 = vmatprep.subr.mxu0 0.0
        %1256 = vmatpush1.msra.mxu0 0.0
        %1257 = vmatprep.subr.mxu0 0.0
        %1258 = vmatpush1.msra.mxu0 0.0
        %1259 = vmatprep.subr.mxu0 0.0
        %1260 = vmatpush1.msra.mxu0 0.0
        %1261 = vmatprep.subr.mxu0 0.0
        %1262 = vmatpush1.msra.mxu0 0.0
        %1263 = vmatprep.subr.mxu0 0.0
        %1264 = vmatpush1.msra.mxu0 0.0
        %1265 = vmatprep.subr.mxu0 0.0
        %1266 = vmatpush1.msra.mxu0 0.0
        %1267 = vmatprep.subr.mxu0 0.0
        %1268 = vmatpush1.msra.mxu0 0.0
        %1269 = vmatprep.subr.mxu0 0.0
        %1270 = vmatpush1.msra.mxu0 0.0
        %1271 = vmatprep.subr.mxu0 0.0
        %1272 = vmatpush1.msra.mxu0 0.0
        %1273 = vmatprep.subr.mxu0 0.0
        %1274 = vmatpush1.msra.mxu0 0.0
        %1275 = vmatprep.subr.mxu0 0.0
        %1276 = vmatpush1.msra.mxu0 0.0
        %1277 = vmatprep.subr.mxu0 0.0
        %1278 = vmatpush1.msra.mxu0 0.0
        %1279 = vmatprep.subr.mxu0 0.0
        %1280 = vmatpush1.msra.mxu0 0.0
        %1281 = vmatprep.subr.mxu0 0.0
        %1282 = vmatpush1.msra.mxu0 0.0
        %1283 = vmatprep.mubr.f32.mxu0 0.0
        %1284 = vmatmul.mubr.f32.gmra.mrb[0].mxu0 %v1195
        %v1285 = vpop.f32.mrb[0].mxu0
        %v1286 = vadd.f32 0.0, %v1285
        %v1287 = vpop.f32.mrb[0].mxu0
        %1288 = vmatprep.mubr.f32.mxu0 0.0
        %1289 = vmatmul.mubr.f32.gmra.mrb[0].mxu0 %v1196
        %v1290 = vpop.f32.mrb[0].mxu0
        %v1291 = vadd.f32 0.0, %v1290
        %v1292 = vpop.f32.mrb[0].mxu0
        %1293 = vmatprep.mubr.f32.mxu0 0.0
        %1294 = vmatmul.mubr.f32.gmra.mrb[0].mxu0 %v1197
        %v1295 = vpop.f32.mrb[0].mxu0
        %v1296 = vadd.f32 0.0, %v1295
        %v1297 = vpop.f32.mrb[0].mxu0
        %1298 = vmatprep.mubr.f32.mxu0 0.0
        %1299 = vmatmul.mubr.f32.gmra.mrb[0].mxu0 %v1198
        %v1300 = vpop.f32.mrb[0].mxu0
        %v1301 = vadd.f32 0.0, %v1300
        %v1302 = vpop.f32.mrb[0].mxu0
        %1303 = vmatprep.mubr.f32.mxu0 0.0
        %1304 = vmatmul.mubr.f32.gmra.mrb[0].mxu0 %v1199
        %v1305 = vpop.f32.mrb[0].mxu0
        %v1306 = vadd.f32 0.0, %v1305
        %v1307 = vpop.f32.mrb[0].mxu0
        %1308 = vmatprep.mubr.f32.mxu0 0.0
        %1309 = vmatmul.mubr.f32.gmra.mrb[0].mxu0 %v1200
        %v1310 = vpop.f32.mrb[0].mxu0
        %v1311 = vadd.f32 0.0, %v1310
        %v1312 = vpop.f32.mrb[0].mxu0
        %1313 = vmatprep.mubr.f32.mxu0 0.0
        %1314 = vmatmul.mubr.f32.gmra.mrb[0].mxu0 %v1201
        %v1315 = vpop.f32.mrb[0].mxu0
        %v1316 = vadd.f32 0.0, %v1315
        %v1317 = vpop.f32.mrb[0].mxu0
        %1318 = vmatprep.mubr.f32.mxu0 0.0
        %1319 = vmatmul.mubr.f32.gmra.mrb[0].mxu0 %v1202
        %v1320 = vpop.f32.mrb[0].mxu0
        %v1321 = vadd.f32 0.0, %v1320
        %v1322 = vpop.f32.mrb[0].mxu0
        %1323 = vmatprep.mubr.f32.mxu0 0.0
        %1324 = vmatmul.mubr.f32.gmra.mrb[0].mxu0 %v1203
        %v1325 = vpop.f32.mrb[0].mxu0
        %v1326 = vadd.f32 0.0, %v1325
        %v1327 = vpop.f32.mrb[0].mxu0
        %1328 = vmatprep.mubr.f32.mxu0 0.0
        %1329 = vmatmul.mubr.f32.gmra.mrb[0].mxu0 %v1204
        %v1330 = vpop.f32.mrb[0].mxu0
        %v1331 = vadd.f32 0.0, %v1330
        %v1332 = vpop.f32.mrb[0].mxu0
        %1333 = vmatprep.mubr.f32.mxu0 0.0
        %1334 = vmatmul.mubr.f32.gmra.mrb[0].mxu0 %v1205
        %v1335 = vpop.f32.mrb[0].mxu0
        %v1336 = vadd.f32 0.0, %v1335
        %v1337 = vpop.f32.mrb[0].mxu0
        %1338 = vmatprep.mubr.f32.mxu0 0.0
        %1339 = vmatmul.mubr.f32.gmra.mrb[0].mxu0 %v1206
        %v1340 = vpop.f32.mrb[0].mxu0
        %v1341 = vadd.f32 0.0, %v1340
        %v1342 = vpop.f32.mrb[0].mxu0
        %1343 = vmatprep.mubr.f32.mxu0 0.0
        %1344 = vmatmul.mubr.f32.gmra.mrb[0].mxu0 %v1207
        %v1345 = vpop.f32.mrb[0].mxu0
        %v1346 = vadd.f32 0.0, %v1345
        %v1347 = vpop.f32.mrb[0].mxu0
        %1348 = vmatprep.mubr.f32.mxu0 0.0
        %1349 = vmatmul.mubr.f32.gmra.mrb[0].mxu0 %v1208
        %v1350 = vpop.f32.mrb[0].mxu0
        %v1351 = vadd.f32 0.0, %v1350
        %v1352 = vpop.f32.mrb[0].mxu0
        %1353 = vmatprep.mubr.f32.mxu0 0.0
        %1354 = vmatmul.mubr.f32.gmra.mrb[0].mxu0 %v1209
        %v1355 = vpop.f32.mrb[0].mxu0
        %v1356 = vadd.f32 0.0, %v1355
        %v1357 = vpop.f32.mrb[0].mxu0
        %1358 = vmatprep.mubr.f32.mxu0 0.0
        %1359 = vmatmul.mubr.f32.gmra.mrb[0].mxu0 %v1210
        %v1360 = vpop.f32.mrb[0].mxu0
        %v1361 = vadd.f32 0.0, %v1360
        %v1362 = vpop.f32.mrb[0].mxu0
        %1363 = vmatprep.mubr.f32.mxu0 0.0
        %1364 = vmatmul.mubr.f32.gmra.mrb[0].mxu0 %v1211
        %v1365 = vpop.f32.mrb[0].mxu0
        %v1366 = vadd.f32 0.0, %v1365
        %v1367 = vpop.f32.mrb[0].mxu0
        %1368 = vmatprep.mubr.f32.mxu0 0.0
        %1369 = vmatmul.mubr.f32.gmra.mrb[0].mxu0 %v1212
        %v1370 = vpop.f32.mrb[0].mxu0
        %v1371 = vadd.f32 0.0, %v1370
        %v1372 = vpop.f32.mrb[0].mxu0
        %1373 = vmatprep.mubr.f32.mxu0 0.0
        %1374 = vmatmul.mubr.f32.gmra.mrb[0].mxu0 %v1213
        %v1375 = vpop.f32.mrb[0].mxu0
        %v1376 = vadd.f32 0.0, %v1375
        %v1377 = vpop.f32.mrb[0].mxu0
        %1378 = vmatprep.mubr.f32.mxu0 0.0
        %1379 = vmatmul.mubr.f32.gmra.mrb[0].mxu0 %v1214
        %v1380 = vpop.f32.mrb[0].mxu0
        %v1381 = vadd.f32 0.0, %v1380
        %v1382 = vpop.f32.mrb[0].mxu0
        %1383 = vmatprep.mubr.f32.mxu0 0.0
        %1384 = vmatmul.mubr.f32.gmra.mrb[0].mxu0 %v1215
        %v1385 = vpop.f32.mrb[0].mxu0
        %v1386 = vadd.f32 0.0, %v1385
        %v1387 = vpop.f32.mrb[0].mxu0
        %1388 = vmatprep.mubr.f32.mxu0 0.0
        %1389 = vmatmul.mubr.f32.gmra.mrb[0].mxu0 %v1216
        %v1390 = vpop.f32.mrb[0].mxu0
        %v1391 = vadd.f32 0.0, %v1390
        %v1392 = vpop.f32.mrb[0].mxu0
        %1393 = vmatprep.mubr.f32.mxu0 0.0
        %1394 = vmatmul.mubr.f32.gmra.mrb[0].mxu0 %v1217
        %v1395 = vpop.f32.mrb[0].mxu0
        %v1396 = vadd.f32 0.0, %v1395
        %v1397 = vpop.f32.mrb[0].mxu0
        %1398 = vmatprep.mubr.f32.mxu0 0.0
        %1399 = vmatmul.mubr.f32.gmra.mrb[0].mxu0 %v1218
        %v1400 = vpop.f32.mrb[0].mxu0
        %v1401 = vadd.f32 0.0, %v1400
        %v1402 = vpop.f32.mrb[0].mxu0
        %1403 = vdwg.mxu0
        %1416 = vrot.lane.b32.xlu0 %v1346, 16
        %v1417 = vpop.permute.xlu0 %1416
        %1418 = vrot.lane.b32.xlu0 %v1351, 16
        %v1419 = vpop.permute.xlu0 %1418
        %1420 = vrot.lane.b32.xlu0 %v1356, 16
        %v1421 = vpop.permute.xlu0 %1420
        %1422 = vrot.lane.b32.xlu0 %v1361, 16
        %v1423 = vpop.permute.xlu0 %1422
        %1424 = vrot.lane.b32.xlu0 %v1366, 16
        %v1425 = vpop.permute.xlu0 %1424
        %1426 = vrot.lane.b32.xlu0 %v1371, 16
        %v1427 = vpop.permute.xlu0 %1426
        %1428 = vrot.lane.b32.xlu0 %v1376, 16
        %v1429 = vpop.permute.xlu0 %1428
        %1430 = vrot.lane.b32.xlu0 %v1381, 16
        %v1431 = vpop.permute.xlu0 %1430
        %1432 = vrot.lane.b32.xlu0 %v1386, 16
        %v1433 = vpop.permute.xlu0 %1432
        %1434 = vrot.lane.b32.xlu0 %v1391, 16
        %v1435 = vpop.permute.xlu0 %1434
        %1436 = vrot.lane.b32.xlu0 %v1396, 16
        %v1437 = vpop.permute.xlu0 %1436
        %1438 = vrot.lane.b32.xlu0 %v1401, 16
        %v1439 = vpop.permute.xlu0 %1438
        %v1452 = vsel %vm945, %v1286, %v1417
        %v1453 = vsel %vm945, %v1291, %v1419
        %v1454 = vsel %vm945, %v1296, %v1421
        %v1455 = vsel %vm945, %v1301, %v1423
        %v1456 = vsel %vm945, %v1306, %v1425
        %v1457 = vsel %vm945, %v1311, %v1427
        %v1458 = vsel %vm945, %v1316, %v1429
        %v1459 = vsel %vm945, %v1321, %v1431
        %v1460 = vsel %vm945, %v1326, %v1433
        %v1461 = vsel %vm945, %v1331, %v1435
        %v1462 = vsel %vm945, %v1336, %v1437
        %v1463 = vsel %vm945, %v1341, %v1439
        %v1464 = vld [vmem:[%s8] sm:$0xff]
        %v1465 = vld [vmem:[%s8 + $0x8] sm:$0xff]
        %v1466 = vld [vmem:[%s8 + $0x10] sm:$0xff]
        %v1467 = vld [vmem:[%s8 + $0x18] sm:$0xff]
        %v1468 = vld [vmem:[%s9] sm:$0xff]
        %v1469 = vld [vmem:[%s9 + $0x8] sm:$0xff]
        %v1470 = vld [vmem:[%s9 + $0x10] sm:$0xff]
        %v1471 = vld [vmem:[%s9 + $0x18] sm:$0xff]
        %v1472 = vld [vmem:[%s9 + $0x20] sm:$0xff]
        %v1473 = vld [vmem:[%s9 + $0x28] sm:$0xff]
        %v1474 = vld [vmem:[%s9 + $0x30] sm:$0xff]
        %v1475 = vld [vmem:[%s9 + $0x38] sm:$0xff]
        %v1476 = vld [vmem:[%s9 + $0x40] sm:$0xff]
        %v1477 = vld [vmem:[%s9 + $0x48] sm:$0xff]
        %v1478 = vld [vmem:[%s9 + $0x50] sm:$0xff]
        %v1479 = vld [vmem:[%s9 + $0x58] sm:$0xff]
        %vm1480 = vcmask 261120
        %v1482 = vsel %vm1480, %v1452, 0
        %v1485 = vsel %vm1480, %v1453, 0
        %v1488 = vsel %vm1480, %v1454, 0
        %v1491 = vsel %vm1480, %v1455, 0
        %v1494 = vsel %vm1480, %v1456, 0
        %v1497 = vsel %vm1480, %v1457, 0
        %v1500 = vsel %vm1480, %v1458, 0
        %v1503 = vsel %vm1480, %v1459, 0
        %v1506 = vsel %vm1480, %v1460, 0
        %v1509 = vsel %vm1480, %v1461, 0
        %v1512 = vsel %vm1480, %v1462, 0
        %v1515 = vsel %vm1480, %v1463, 0
        %1517 = vmatprep.subr.mxu0 0.0
        %1518 = vmatpush1.msra.mxu0 %v1464
        %1519 = vmatprep.subr.mxu0 0.0
        %1520 = vmatpush1.msra.mxu0 %v1465
        %1521 = vmatprep.subr.mxu0 0.0
        %1522 = vmatpush1.msra.mxu0 %v1466
        %1523 = vmatprep.subr.mxu0 0.0
        %1524 = vmatpush1.msra.mxu0 %v1467
        %1525 = vmatprep.subr.mxu0 0.0
        %1526 = vmatpush1.msra.mxu0 0.0
        %1527 = vmatprep.subr.mxu0 0.0
        %1528 = vmatpush1.msra.mxu0 0.0
        %1529 = vmatprep.subr.mxu0 0.0
        %1530 = vmatpush1.msra.mxu0 0.0
        %1531 = vmatprep.subr.mxu0 0.0
        %1532 = vmatpush1.msra.mxu0 0.0
        %1533 = vmatprep.subr.mxu0 0.0
        %1534 = vmatpush1.msra.mxu0 0.0
        %1535 = vmatprep.subr.mxu0 0.0
        %1536 = vmatpush1.msra.mxu0 0.0
        %1537 = vmatprep.subr.mxu0 0.0
        %1538 = vmatpush1.msra.mxu0 0.0
        %1539 = vmatprep.subr.mxu0 0.0
        %1540 = vmatpush1.msra.mxu0 0.0
        %1541 = vmatprep.subr.mxu0 0.0
        %1542 = vmatpush1.msra.mxu0 0.0
        %1543 = vmatprep.subr.mxu0 0.0
        %1544 = vmatpush1.msra.mxu0 0.0
        %1545 = vmatprep.subr.mxu0 0.0
        %1546 = vmatpush1.msra.mxu0 0.0
        %1547 = vmatprep.subr.mxu0 0.0
        %1548 = vmatpush1.msra.mxu0 0.0
        %1549 = vmatprep.subr.mxu0 0.0
        %1550 = vmatpush1.msra.mxu0 0.0
        %1551 = vmatprep.subr.mxu0 0.0
        %1552 = vmatpush1.msra.mxu0 0.0
        %1553 = vmatprep.subr.mxu0 0.0
        %1554 = vmatpush1.msra.mxu0 0.0
        %1555 = vmatprep.subr.mxu0 0.0
        %1556 = vmatpush1.msra.mxu0 0.0
        %1557 = vmatprep.subr.mxu0 0.0
        %1558 = vmatpush1.msra.mxu0 0.0
        %1559 = vmatprep.subr.mxu0 0.0
        %1560 = vmatpush1.msra.mxu0 0.0
        %1561 = vmatprep.subr.mxu0 0.0
        %1562 = vmatpush1.msra.mxu0 0.0
        %1563 = vmatprep.subr.mxu0 0.0
        %1564 = vmatpush1.msra.mxu0 0.0
        %1565 = vmatprep.subr.mxu0 0.0
        %1566 = vmatpush1.msra.mxu0 0.0
        %1567 = vmatprep.subr.mxu0 0.0
        %1568 = vmatpush1.msra.mxu0 0.0
        %1569 = vmatprep.subr.mxu0 0.0
        %1570 = vmatpush1.msra.mxu0 0.0
        %1571 = vmatprep.subr.mxu0 0.0
        %1572 = vmatpush1.msra.mxu0 0.0
        %1573 = vmatprep.subr.mxu0 0.0
        %1574 = vmatpush1.msra.mxu0 0.0
        %1575 = vmatprep.subr.mxu0 0.0
        %1576 = vmatpush1.msra.mxu0 0.0
        %1577 = vmatprep.subr.mxu0 0.0
        %1578 = vmatpush1.msra.mxu0 0.0
        %1579 = vmatprep.subr.mxu0 0.0
        %1580 = vmatpush1.msra.mxu0 0.0
        %1581 = vmatprep.mubr.f32.mxu0 0.0
        %1582 = vmatmul.mubr.f32.gmra.mrb[0].mxu0 %v1482
        %v1583 = vpop.f32.mrb[0].mxu0
        %v1584 = vadd.f32 %v1468, %v1583
        %v1585 = vpop.f32.mrb[0].mxu0
        %1586 = vmatprep.mubr.f32.mxu0 0.0
        %1587 = vmatmul.mubr.f32.gmra.mrb[0].mxu0 %v1485
        %v1588 = vpop.f32.mrb[0].mxu0
        %v1589 = vadd.f32 %v1469, %v1588
        %v1590 = vpop.f32.mrb[0].mxu0
        %1591 = vmatprep.mubr.f32.mxu0 0.0
        %1592 = vmatmul.mubr.f32.gmra.mrb[0].mxu0 %v1488
        %v1593 = vpop.f32.mrb[0].mxu0
        %v1594 = vadd.f32 %v1470, %v1593
        %v1595 = vpop.f32.mrb[0].mxu0
        %1596 = vmatprep.mubr.f32.mxu0 0.0
        %1597 = vmatmul.mubr.f32.gmra.mrb[0].mxu0 %v1491
        %v1598 = vpop.f32.mrb[0].mxu0
        %v1599 = vadd.f32 %v1471, %v1598
        %v1600 = vpop.f32.mrb[0].mxu0
        %1601 = vmatprep.mubr.f32.mxu0 0.0
        %1602 = vmatmul.mubr.f32.gmra.mrb[0].mxu0 %v1494
        %v1603 = vpop.f32.mrb[0].mxu0
        %v1604 = vadd.f32 %v1472, %v1603
        %v1605 = vpop.f32.mrb[0].mxu0
        %1606 = vmatprep.mubr.f32.mxu0 0.0
        %1607 = vmatmul.mubr.f32.gmra.mrb[0].mxu0 %v1497
        %v1608 = vpop.f32.mrb[0].mxu0
        %v1609 = vadd.f32 %v1473, %v1608
        %v1610 = vpop.f32.mrb[0].mxu0
        %1611 = vmatprep.mubr.f32.mxu0 0.0
        %1612 = vmatmul.mubr.f32.gmra.mrb[0].mxu0 %v1500
        %v1613 = vpop.f32.mrb[0].mxu0
        %v1614 = vadd.f32 %v1474, %v1613
        %v1615 = vpop.f32.mrb[0].mxu0
        %1616 = vmatprep.mubr.f32.mxu0 0.0
        %1617 = vmatmul.mubr.f32.gmra.mrb[0].mxu0 %v1503
        %v1618 = vpop.f32.mrb[0].mxu0
        %v1619 = vadd.f32 %v1475, %v1618
        %v1620 = vpop.f32.mrb[0].mxu0
        %1621 = vmatprep.mubr.f32.mxu0 0.0
        %1622 = vmatmul.mubr.f32.gmra.mrb[0].mxu0 %v1506
        %v1623 = vpop.f32.mrb[0].mxu0
        %v1624 = vadd.f32 %v1476, %v1623
        %v1625 = vpop.f32.mrb[0].mxu0
        %1626 = vmatprep.mubr.f32.mxu0 0.0
        %1627 = vmatmul.mubr.f32.gmra.mrb[0].mxu0 %v1509
        %v1628 = vpop.f32.mrb[0].mxu0
        %v1629 = vadd.f32 %v1477, %v1628
        %v1630 = vpop.f32.mrb[0].mxu0
        %1631 = vmatprep.mubr.f32.mxu0 0.0
        %1632 = vmatmul.mubr.f32.gmra.mrb[0].mxu0 %v1512
        %v1633 = vpop.f32.mrb[0].mxu0
        %v1634 = vadd.f32 %v1478, %v1633
        %v1635 = vpop.f32.mrb[0].mxu0
        %1636 = vmatprep.mubr.f32.mxu0 0.0
        %1637 = vmatmul.mubr.f32.gmra.mrb[0].mxu0 %v1515
        %v1638 = vpop.f32.mrb[0].mxu0
        %v1639 = vadd.f32 %v1479, %v1638
        %v1640 = vpop.f32.mrb[0].mxu0
        %1641 = vdwg.mxu0
        %v1642 = vld [vmem:[%s8 + $0x20] sm:$0xff]
        %v1643 = vld [vmem:[%s8 + $0x28] sm:$0xff]
        %v1644 = vld [vmem:[%s8 + $0x30] sm:$0xff]
        %v1645 = vld [vmem:[%s8 + $0x38] sm:$0xff]
        %v1646 = vld [vmem:[%s9 + $0x60] sm:$0xff]
        %v1647 = vld [vmem:[%s9 + $0x68] sm:$0xff]
        %v1648 = vld [vmem:[%s9 + $0x70] sm:$0xff]
        %v1649 = vld [vmem:[%s9 + $0x78] sm:$0xff]
        %v1650 = vld [vmem:[%s9 + $0x80] sm:$0xff]
        %v1651 = vld [vmem:[%s9 + $0x88] sm:$0xff]
        %v1652 = vld [vmem:[%s9 + $0x90] sm:$0xff]
        %v1653 = vld [vmem:[%s9 + $0x98] sm:$0xff]
        %v1654 = vld [vmem:[%s9 + $0xa0] sm:$0xff]
        %v1655 = vld [vmem:[%s9 + $0xa8] sm:$0xff]
        %v1656 = vld [vmem:[%s9 + $0xb0] sm:$0xff]
        %v1657 = vld [vmem:[%s9 + $0xb8] sm:$0xff]
        %1658 = vmatprep.subr.mxu0 0.0
        %1659 = vmatpush1.msra.mxu0 %v1642
        %1660 = vmatprep.subr.mxu0 0.0
        %1661 = vmatpush1.msra.mxu0 %v1643
        %1662 = vmatprep.subr.mxu0 0.0
        %1663 = vmatpush1.msra.mxu0 %v1644
        %1664 = vmatprep.subr.mxu0 0.0
        %1665 = vmatpush1.msra.mxu0 %v1645
        %1666 = vmatprep.subr.mxu0 0.0
        %1667 = vmatpush1.msra.mxu0 0.0
        %1668 = vmatprep.subr.mxu0 0.0
        %1669 = vmatpush1.msra.mxu0 0.0
        %1670 = vmatprep.subr.mxu0 0.0
        %1671 = vmatpush1.msra.mxu0 0.0
        %1672 = vmatprep.subr.mxu0 0.0
        %1673 = vmatpush1.msra.mxu0 0.0
        %1674 = vmatprep.subr.mxu0 0.0
        %1675 = vmatpush1.msra.mxu0 0.0
        %1676 = vmatprep.subr.mxu0 0.0
        %1677 = vmatpush1.msra.mxu0 0.0
        %1678 = vmatprep.subr.mxu0 0.0
        %1679 = vmatpush1.msra.mxu0 0.0
        %1680 = vmatprep.subr.mxu0 0.0
        %1681 = vmatpush1.msra.mxu0 0.0
        %1682 = vmatprep.subr.mxu0 0.0
        %1683 = vmatpush1.msra.mxu0 0.0
        %1684 = vmatprep.subr.mxu0 0.0
        %1685 = vmatpush1.msra.mxu0 0.0
        %1686 = vmatprep.subr.mxu0 0.0
        %1687 = vmatpush1.msra.mxu0 0.0
        %1688 = vmatprep.subr.mxu0 0.0
        %1689 = vmatpush1.msra.mxu0 0.0
        %1690 = vmatprep.subr.mxu0 0.0
        %1691 = vmatpush1.msra.mxu0 0.0
        %1692 = vmatprep.subr.mxu0 0.0
        %1693 = vmatpush1.msra.mxu0 0.0
        %1694 = vmatprep.subr.mxu0 0.0
        %1695 = vmatpush1.msra.mxu0 0.0
        %1696 = vmatprep.subr.mxu0 0.0
        %1697 = vmatpush1.msra.mxu0 0.0
        %1698 = vmatprep.subr.mxu0 0.0
        %1699 = vmatpush1.msra.mxu0 0.0
        %1700 = vmatprep.subr.mxu0 0.0
        %1701 = vmatpush1.msra.mxu0 0.0
        %1702 = vmatprep.subr.mxu0 0.0
        %1703 = vmatpush1.msra.mxu0 0.0
        %1704 = vmatprep.subr.mxu0 0.0
        %1705 = vmatpush1.msra.mxu0 0.0
        %1706 = vmatprep.subr.mxu0 0.0
        %1707 = vmatpush1.msra.mxu0 0.0
        %1708 = vmatprep.subr.mxu0 0.0
        %1709 = vmatpush1.msra.mxu0 0.0
        %1710 = vmatprep.subr.mxu0 0.0
        %1711 = vmatpush1.msra.mxu0 0.0
        %1712 = vmatprep.subr.mxu0 0.0
        %1713 = vmatpush1.msra.mxu0 0.0
        %1714 = vmatprep.subr.mxu0 0.0
        %1715 = vmatpush1.msra.mxu0 0.0
        %1716 = vmatprep.subr.mxu0 0.0
        %1717 = vmatpush1.msra.mxu0 0.0
        %1718 = vmatprep.subr.mxu0 0.0
        %1719 = vmatpush1.msra.mxu0 0.0
        %1720 = vmatprep.subr.mxu0 0.0
        %1721 = vmatpush1.msra.mxu0 0.0
        %1722 = vmatprep.mubr.f32.mxu0 0.0
        %1723 = vmatmul.mubr.f32.gmra.mrb[0].mxu0 %v1482
        %v1724 = vpop.f32.mrb[0].mxu0
        %v1725 = vadd.f32 %v1646, %v1724
        %v1726 = vpop.f32.mrb[0].mxu0
        %1727 = vmatprep.mubr.f32.mxu0 0.0
        %1728 = vmatmul.mubr.f32.gmra.mrb[0].mxu0 %v1485
        %v1729 = vpop.f32.mrb[0].mxu0
        %v1730 = vadd.f32 %v1647, %v1729
        %v1731 = vpop.f32.mrb[0].mxu0
        %1732 = vmatprep.mubr.f32.mxu0 0.0
        %1733 = vmatmul.mubr.f32.gmra.mrb[0].mxu0 %v1488
        %v1734 = vpop.f32.mrb[0].mxu0
        %v1735 = vadd.f32 %v1648, %v1734
        %v1736 = vpop.f32.mrb[0].mxu0
        %1737 = vmatprep.mubr.f32.mxu0 0.0
        %1738 = vmatmul.mubr.f32.gmra.mrb[0].mxu0 %v1491
        %v1739 = vpop.f32.mrb[0].mxu0
        %v1740 = vadd.f32 %v1649, %v1739
        %v1741 = vpop.f32.mrb[0].mxu0
        %1742 = vmatprep.mubr.f32.mxu0 0.0
        %1743 = vmatmul.mubr.f32.gmra.mrb[0].mxu0 %v1494
        %v1744 = vpop.f32.mrb[0].mxu0
        %v1745 = vadd.f32 %v1650, %v1744
        %v1746 = vpop.f32.mrb[0].mxu0
        %1747 = vmatprep.mubr.f32.mxu0 0.0
        %1748 = vmatmul.mubr.f32.gmra.mrb[0].mxu0 %v1497
        %v1749 = vpop.f32.mrb[0].mxu0
        %v1750 = vadd.f32 %v1651, %v1749
        %v1751 = vpop.f32.mrb[0].mxu0
        %1752 = vmatprep.mubr.f32.mxu0 0.0
        %1753 = vmatmul.mubr.f32.gmra.mrb[0].mxu0 %v1500
        %v1754 = vpop.f32.mrb[0].mxu0
        %v1755 = vadd.f32 %v1652, %v1754
        %v1756 = vpop.f32.mrb[0].mxu0
        %1757 = vmatprep.mubr.f32.mxu0 0.0
        %1758 = vmatmul.mubr.f32.gmra.mrb[0].mxu0 %v1503
        %v1759 = vpop.f32.mrb[0].mxu0
        %v1760 = vadd.f32 %v1653, %v1759
        %v1761 = vpop.f32.mrb[0].mxu0
        %1762 = vmatprep.mubr.f32.mxu0 0.0
        %1763 = vmatmul.mubr.f32.gmra.mrb[0].mxu0 %v1506
        %v1764 = vpop.f32.mrb[0].mxu0
        %v1765 = vadd.f32 %v1654, %v1764
        %v1766 = vpop.f32.mrb[0].mxu0
        %1767 = vmatprep.mubr.f32.mxu0 0.0
        %1768 = vmatmul.mubr.f32.gmra.mrb[0].mxu0 %v1509
        %v1769 = vpop.f32.mrb[0].mxu0
        %v1770 = vadd.f32 %v1655, %v1769
        %v1771 = vpop.f32.mrb[0].mxu0
        %1772 = vmatprep.mubr.f32.mxu0 0.0
        %1773 = vmatmul.mubr.f32.gmra.mrb[0].mxu0 %v1512
        %v1774 = vpop.f32.mrb[0].mxu0
        %v1775 = vadd.f32 %v1656, %v1774
        %v1776 = vpop.f32.mrb[0].mxu0
        %1777 = vmatprep.mubr.f32.mxu0 0.0
        %1778 = vmatmul.mubr.f32.gmra.mrb[0].mxu0 %v1515
        %v1779 = vpop.f32.mrb[0].mxu0
        %v1780 = vadd.f32 %v1657, %v1779
        %v1781 = vpop.f32.mrb[0].mxu0
        %1782 = vdwg.mxu0
        %v1783 = vld [vmem:[%s10] sm:$0xff]
        %v1784 = vld [vmem:[%s10 + $0x8] sm:$0xff]
        %v1785 = vld [vmem:[%s10 + $0x10] sm:$0xff]
        %v1786 = vld [vmem:[%s10 + $0x18] sm:$0xff]
        %v1787 = vld [vmem:[%s11] sm:$0xff]
        %v1788 = vld [vmem:[%s11 + $0x8] sm:$0xff]
        %v1789 = vld [vmem:[%s11 + $0x10] sm:$0xff]
        %v1790 = vld [vmem:[%s11 + $0x18] sm:$0xff]
        %v1791 = vld [vmem:[%s11 + $0x20] sm:$0xff]
        %v1792 = vld [vmem:[%s11 + $0x28] sm:$0xff]
        %v1793 = vld [vmem:[%s11 + $0x30] sm:$0xff]
        %v1794 = vld [vmem:[%s11 + $0x38] sm:$0xff]
        %v1795 = vld [vmem:[%s11 + $0x40] sm:$0xff]
        %v1796 = vld [vmem:[%s11 + $0x48] sm:$0xff]
        %v1797 = vld [vmem:[%s11 + $0x50] sm:$0xff]
        %v1798 = vld [vmem:[%s11 + $0x58] sm:$0xff]
        %1799 = vmatprep.subr.mxu0 0.0
        %1800 = vmatpush1.msra.mxu0 %v1783
        %1801 = vmatprep.subr.mxu0 0.0
        %1802 = vmatpush1.msra.mxu0 %v1784
        %1803 = vmatprep.subr.mxu0 0.0
        %1804 = vmatpush1.msra.mxu0 %v1785
        %1805 = vmatprep.subr.mxu0 0.0
        %1806 = vmatpush1.msra.mxu0 %v1786
        %1807 = vmatprep.subr.mxu0 0.0
        %1808 = vmatpush1.msra.mxu0 0.0
        %1809 = vmatprep.subr.mxu0 0.0
        %1810 = vmatpush1.msra.mxu0 0.0
        %1811 = vmatprep.subr.mxu0 0.0
        %1812 = vmatpush1.msra.mxu0 0.0
        %1813 = vmatprep.subr.mxu0 0.0
        %1814 = vmatpush1.msra.mxu0 0.0
        %1815 = vmatprep.subr.mxu0 0.0
        %1816 = vmatpush1.msra.mxu0 0.0
        %1817 = vmatprep.subr.mxu0 0.0
        %1818 = vmatpush1.msra.mxu0 0.0
        %1819 = vmatprep.subr.mxu0 0.0
        %1820 = vmatpush1.msra.mxu0 0.0
        %1821 = vmatprep.subr.mxu0 0.0
        %1822 = vmatpush1.msra.mxu0 0.0
        %1823 = vmatprep.subr.mxu0 0.0
        %1824 = vmatpush1.msra.mxu0 0.0
        %1825 = vmatprep.subr.mxu0 0.0
        %1826 = vmatpush1.msra.mxu0 0.0
        %1827 = vmatprep.subr.mxu0 0.0
        %1828 = vmatpush1.msra.mxu0 0.0
        %1829 = vmatprep.subr.mxu0 0.0
        %1830 = vmatpush1.msra.mxu0 0.0
        %1831 = vmatprep.subr.mxu0 0.0
        %1832 = vmatpush1.msra.mxu0 0.0
        %1833 = vmatprep.subr.mxu0 0.0
        %1834 = vmatpush1.msra.mxu0 0.0
        %1835 = vmatprep.subr.mxu0 0.0
        %1836 = vmatpush1.msra.mxu0 0.0
        %1837 = vmatprep.subr.mxu0 0.0
        %1838 = vmatpush1.msra.mxu0 0.0
        %1839 = vmatprep.subr.mxu0 0.0
        %1840 = vmatpush1.msra.mxu0 0.0
        %1841 = vmatprep.subr.mxu0 0.0
        %1842 = vmatpush1.msra.mxu0 0.0
        %1843 = vmatprep.subr.mxu0 0.0
        %1844 = vmatpush1.msra.mxu0 0.0
        %1845 = vmatprep.subr.mxu0 0.0
        %1846 = vmatpush1.msra.mxu0 0.0
        %1847 = vmatprep.subr.mxu0 0.0
        %1848 = vmatpush1.msra.mxu0 0.0
        %1849 = vmatprep.subr.mxu0 0.0
        %1850 = vmatpush1.msra.mxu0 0.0
        %1851 = vmatprep.subr.mxu0 0.0
        %1852 = vmatpush1.msra.mxu0 0.0
        %1853 = vmatprep.subr.mxu0 0.0
        %1854 = vmatpush1.msra.mxu0 0.0
        %1855 = vmatprep.subr.mxu0 0.0
        %1856 = vmatpush1.msra.mxu0 0.0
        %1857 = vmatprep.subr.mxu0 0.0
        %1858 = vmatpush1.msra.mxu0 0.0
        %1859 = vmatprep.subr.mxu0 0.0
        %1860 = vmatpush1.msra.mxu0 0.0
        %1861 = vmatprep.subr.mxu0 0.0
        %1862 = vmatpush1.msra.mxu0 0.0
        %1863 = vmatprep.mubr.f32.mxu0 0.0
        %1864 = vmatmul.mubr.f32.gmra.mrb[0].mxu0 %v1482
        %v1865 = vpop.f32.mrb[0].mxu0
        %v1866 = vadd.f32 %v1787, %v1865
        %v1867 = vpop.f32.mrb[0].mxu0
        %1868 = vmatprep.mubr.f32.mxu0 0.0
        %1869 = vmatmul.mubr.f32.gmra.mrb[0].mxu0 %v1485
        %v1870 = vpop.f32.mrb[0].mxu0
        %v1871 = vadd.f32 %v1788, %v1870
        %v1872 = vpop.f32.mrb[0].mxu0
        %1873 = vmatprep.mubr.f32.mxu0 0.0
        %1874 = vmatmul.mubr.f32.gmra.mrb[0].mxu0 %v1488
        %v1875 = vpop.f32.mrb[0].mxu0
        %v1876 = vadd.f32 %v1789, %v1875
        %v1877 = vpop.f32.mrb[0].mxu0
        %1878 = vmatprep.mubr.f32.mxu0 0.0
        %1879 = vmatmul.mubr.f32.gmra.mrb[0].mxu0 %v1491
        %v1880 = vpop.f32.mrb[0].mxu0
        %v1881 = vadd.f32 %v1790, %v1880
        %v1882 = vpop.f32.mrb[0].mxu0
        %1883 = vmatprep.mubr.f32.mxu0 0.0
        %1884 = vmatmul.mubr.f32.gmra.mrb[0].mxu0 %v1494
        %v1885 = vpop.f32.mrb[0].mxu0
        %v1886 = vadd.f32 %v1791, %v1885
        %v1887 = vpop.f32.mrb[0].mxu0
        %1888 = vmatprep.mubr.f32.mxu0 0.0
        %1889 = vmatmul.mubr.f32.gmra.mrb[0].mxu0 %v1497
        %v1890 = vpop.f32.mrb[0].mxu0
        %v1891 = vadd.f32 %v1792, %v1890
        %v1892 = vpop.f32.mrb[0].mxu0
        %1893 = vmatprep.mubr.f32.mxu0 0.0
        %1894 = vmatmul.mubr.f32.gmra.mrb[0].mxu0 %v1500
        %v1895 = vpop.f32.mrb[0].mxu0
        %v1896 = vadd.f32 %v1793, %v1895
        %v1897 = vpop.f32.mrb[0].mxu0
        %1898 = vmatprep.mubr.f32.mxu0 0.0
        %1899 = vmatmul.mubr.f32.gmra.mrb[0].mxu0 %v1503
        %v1900 = vpop.f32.mrb[0].mxu0
        %v1901 = vadd.f32 %v1794, %v1900
        %v1902 = vpop.f32.mrb[0].mxu0
        %1903 = vmatprep.mubr.f32.mxu0 0.0
        %1904 = vmatmul.mubr.f32.gmra.mrb[0].mxu0 %v1506
        %v1905 = vpop.f32.mrb[0].mxu0
        %v1906 = vadd.f32 %v1795, %v1905
        %v1907 = vpop.f32.mrb[0].mxu0
        %1908 = vmatprep.mubr.f32.mxu0 0.0
        %1909 = vmatmul.mubr.f32.gmra.mrb[0].mxu0 %v1509
        %v1910 = vpop.f32.mrb[0].mxu0
        %v1911 = vadd.f32 %v1796, %v1910
        %v1912 = vpop.f32.mrb[0].mxu0
        %1913 = vmatprep.mubr.f32.mxu0 0.0
        %1914 = vmatmul.mubr.f32.gmra.mrb[0].mxu0 %v1512
        %v1915 = vpop.f32.mrb[0].mxu0
        %v1916 = vadd.f32 %v1797, %v1915
        %v1917 = vpop.f32.mrb[0].mxu0
        %1918 = vmatprep.mubr.f32.mxu0 0.0
        %1919 = vmatmul.mubr.f32.gmra.mrb[0].mxu0 %v1515
        %v1920 = vpop.f32.mrb[0].mxu0
        %v1921 = vadd.f32 %v1798, %v1920
        %v1922 = vpop.f32.mrb[0].mxu0
        %1923 = vdwg.mxu0
        %v1924 = vld [vmem:[%s10 + $0x20] sm:$0xff]
        %v1925 = vld [vmem:[%s10 + $0x28] sm:$0xff]
        %v1926 = vld [vmem:[%s10 + $0x30] sm:$0xff]
        %v1927 = vld [vmem:[%s10 + $0x38] sm:$0xff]
        %v1928 = vld [vmem:[%s11 + $0x60] sm:$0xff]
        %v1929 = vld [vmem:[%s11 + $0x68] sm:$0xff]
        %v1930 = vld [vmem:[%s11 + $0x70] sm:$0xff]
        %v1931 = vld [vmem:[%s11 + $0x78] sm:$0xff]
        %v1932 = vld [vmem:[%s11 + $0x80] sm:$0xff]
        %v1933 = vld [vmem:[%s11 + $0x88] sm:$0xff]
        %v1934 = vld [vmem:[%s11 + $0x90] sm:$0xff]
        %v1935 = vld [vmem:[%s11 + $0x98] sm:$0xff]
        %v1936 = vld [vmem:[%s11 + $0xa0] sm:$0xff]
        %v1937 = vld [vmem:[%s11 + $0xa8] sm:$0xff]
        %v1938 = vld [vmem:[%s11 + $0xb0] sm:$0xff]
        %v1939 = vld [vmem:[%s11 + $0xb8] sm:$0xff]
        %1940 = vmatprep.subr.mxu0 0.0
        %1941 = vmatpush1.msra.mxu0 %v1924
        %1942 = vmatprep.subr.mxu0 0.0
        %1943 = vmatpush1.msra.mxu0 %v1925
        %1944 = vmatprep.subr.mxu0 0.0
        %1945 = vmatpush1.msra.mxu0 %v1926
        %1946 = vmatprep.subr.mxu0 0.0
        %1947 = vmatpush1.msra.mxu0 %v1927
        %1948 = vmatprep.subr.mxu0 0.0
        %1949 = vmatpush1.msra.mxu0 0.0
        %1950 = vmatprep.subr.mxu0 0.0
        %1951 = vmatpush1.msra.mxu0 0.0
        %1952 = vmatprep.subr.mxu0 0.0
        %1953 = vmatpush1.msra.mxu0 0.0
        %1954 = vmatprep.subr.mxu0 0.0
        %1955 = vmatpush1.msra.mxu0 0.0
        %1956 = vmatprep.subr.mxu0 0.0
        %1957 = vmatpush1.msra.mxu0 0.0
        %1958 = vmatprep.subr.mxu0 0.0
        %1959 = vmatpush1.msra.mxu0 0.0
        %1960 = vmatprep.subr.mxu0 0.0
        %1961 = vmatpush1.msra.mxu0 0.0
        %1962 = vmatprep.subr.mxu0 0.0
        %1963 = vmatpush1.msra.mxu0 0.0
        %1964 = vmatprep.subr.mxu0 0.0
        %1965 = vmatpush1.msra.mxu0 0.0
        %1966 = vmatprep.subr.mxu0 0.0
        %1967 = vmatpush1.msra.mxu0 0.0
        %1968 = vmatprep.subr.mxu0 0.0
        %1969 = vmatpush1.msra.mxu0 0.0
        %1970 = vmatprep.subr.mxu0 0.0
        %1971 = vmatpush1.msra.mxu0 0.0
        %1972 = vmatprep.subr.mxu0 0.0
        %1973 = vmatpush1.msra.mxu0 0.0
        %1974 = vmatprep.subr.mxu0 0.0
        %1975 = vmatpush1.msra.mxu0 0.0
        %1976 = vmatprep.subr.mxu0 0.0
        %1977 = vmatpush1.msra.mxu0 0.0
        %1978 = vmatprep.subr.mxu0 0.0
        %1979 = vmatpush1.msra.mxu0 0.0
        %1980 = vmatprep.subr.mxu0 0.0
        %1981 = vmatpush1.msra.mxu0 0.0
        %1982 = vmatprep.subr.mxu0 0.0
        %1983 = vmatpush1.msra.mxu0 0.0
        %1984 = vmatprep.subr.mxu0 0.0
        %1985 = vmatpush1.msra.mxu0 0.0
        %1986 = vmatprep.subr.mxu0 0.0
        %1987 = vmatpush1.msra.mxu0 0.0
        %1988 = vmatprep.subr.mxu0 0.0
        %1989 = vmatpush1.msra.mxu0 0.0
        %1990 = vmatprep.subr.mxu0 0.0
        %1991 = vmatpush1.msra.mxu0 0.0
        %1992 = vmatprep.subr.mxu0 0.0
        %1993 = vmatpush1.msra.mxu0 0.0
        %1994 = vmatprep.subr.mxu0 0.0
        %1995 = vmatpush1.msra.mxu0 0.0
        %1996 = vmatprep.subr.mxu0 0.0
        %1997 = vmatpush1.msra.mxu0 0.0
        %1998 = vmatprep.subr.mxu0 0.0
        %1999 = vmatpush1.msra.mxu0 0.0
        %2000 = vmatprep.subr.mxu0 0.0
        %2001 = vmatpush1.msra.mxu0 0.0
        %2002 = vmatprep.subr.mxu0 0.0
        %2003 = vmatpush1.msra.mxu0 0.0
        %2004 = vmatprep.mubr.f32.mxu0 0.0
        %2005 = vmatmul.mubr.f32.gmra.mrb[0].mxu0 %v1482
        %v2006 = vpop.f32.mrb[0].mxu0
        %v2007 = vadd.f32 %v1928, %v2006
        %v2008 = vpop.f32.mrb[0].mxu0
        %2009 = vmatprep.mubr.f32.mxu0 0.0
        %2010 = vmatmul.mubr.f32.gmra.mrb[0].mxu0 %v1485
        %v2011 = vpop.f32.mrb[0].mxu0
        %v2012 = vadd.f32 %v1929, %v2011
        %v2013 = vpop.f32.mrb[0].mxu0
        %2014 = vmatprep.mubr.f32.mxu0 0.0
        %2015 = vmatmul.mubr.f32.gmra.mrb[0].mxu0 %v1488
        %v2016 = vpop.f32.mrb[0].mxu0
        %v2017 = vadd.f32 %v1930, %v2016
        %v2018 = vpop.f32.mrb[0].mxu0
        %2019 = vmatprep.mubr.f32.mxu0 0.0
        %2020 = vmatmul.mubr.f32.gmra.mrb[0].mxu0 %v1491
        %v2021 = vpop.f32.mrb[0].mxu0
        %v2022 = vadd.f32 %v1931, %v2021
        %v2023 = vpop.f32.mrb[0].mxu0
        %2024 = vmatprep.mubr.f32.mxu0 0.0
        %2025 = vmatmul.mubr.f32.gmra.mrb[0].mxu0 %v1494
        %v2026 = vpop.f32.mrb[0].mxu0
        %v2027 = vadd.f32 %v1932, %v2026
        %v2028 = vpop.f32.mrb[0].mxu0
        %2029 = vmatprep.mubr.f32.mxu0 0.0
        %2030 = vmatmul.mubr.f32.gmra.mrb[0].mxu0 %v1497
        %v2031 = vpop.f32.mrb[0].mxu0
        %v2032 = vadd.f32 %v1933, %v2031
        %v2033 = vpop.f32.mrb[0].mxu0
        %2034 = vmatprep.mubr.f32.mxu0 0.0
        %2035 = vmatmul.mubr.f32.gmra.mrb[0].mxu0 %v1500
        %v2036 = vpop.f32.mrb[0].mxu0
        %v2037 = vadd.f32 %v1934, %v2036
        %v2038 = vpop.f32.mrb[0].mxu0
        %2039 = vmatprep.mubr.f32.mxu0 0.0
        %2040 = vmatmul.mubr.f32.gmra.mrb[0].mxu0 %v1503
        %v2041 = vpop.f32.mrb[0].mxu0
        %v2042 = vadd.f32 %v1935, %v2041
        %v2043 = vpop.f32.mrb[0].mxu0
        %2044 = vmatprep.mubr.f32.mxu0 0.0
        %2045 = vmatmul.mubr.f32.gmra.mrb[0].mxu0 %v1506
        %v2046 = vpop.f32.mrb[0].mxu0
        %v2047 = vadd.f32 %v1936, %v2046
        %v2048 = vpop.f32.mrb[0].mxu0
        %2049 = vmatprep.mubr.f32.mxu0 0.0
        %2050 = vmatmul.mubr.f32.gmra.mrb[0].mxu0 %v1509
        %v2051 = vpop.f32.mrb[0].mxu0
        %v2052 = vadd.f32 %v1937, %v2051
        %v2053 = vpop.f32.mrb[0].mxu0
        %2054 = vmatprep.mubr.f32.mxu0 0.0
        %2055 = vmatmul.mubr.f32.gmra.mrb[0].mxu0 %v1512
        %v2056 = vpop.f32.mrb[0].mxu0
        %v2057 = vadd.f32 %v1938, %v2056
        %v2058 = vpop.f32.mrb[0].mxu0
        %2059 = vmatprep.mubr.f32.mxu0 0.0
        %2060 = vmatmul.mubr.f32.gmra.mrb[0].mxu0 %v1515
        %v2061 = vpop.f32.mrb[0].mxu0
        %v2062 = vadd.f32 %v1939, %v2061
        %v2063 = vpop.f32.mrb[0].mxu0
        %2064 = vdwg.mxu0
        %v2065 = vld [vmem:[%s6] sm:$0xff]
        %v2066 = vld [vmem:[%s6 + $0x8] sm:$0xff]
        %v2067 = vld [vmem:[%s6 + $0x10] sm:$0xff]
        %v2068 = vld [vmem:[%s6 + $0x18] sm:$0xff]
        %v2069 = vld [vmem:[%s6 + $0x20] sm:$0xff]
        %v2070 = vld [vmem:[%s6 + $0x28] sm:$0xff]
        %v2071 = vld [vmem:[%s6 + $0x30] sm:$0xff]
        %v2072 = vld [vmem:[%s6 + $0x38] sm:$0xff]
        %v2073 = vld [vmem:[%s6 + $0x40] sm:$0xff]
        %v2074 = vld [vmem:[%s6 + $0x48] sm:$0xff]
        %v2075 = vld [vmem:[%s6 + $0x50] sm:$0xff]
        %v2076 = vld [vmem:[%s6 + $0x58] sm:$0xff]
        %v2078 = vsel %vm945, %v1584, 0
        %v2081 = vsel %vm945, %v1589, 0
        %v2084 = vsel %vm945, %v1594, 0
        %v2087 = vsel %vm945, %v1599, 0
        %v2090 = vsel %vm945, %v1604, 0
        %v2093 = vsel %vm945, %v1609, 0
        %v2096 = vsel %vm945, %v1614, 0
        %v2099 = vsel %vm945, %v1619, 0
        %v2102 = vsel %vm945, %v1624, 0
        %v2105 = vsel %vm945, %v1629, 0
        %v2108 = vsel %vm945, %v1634, 0
        %v2111 = vsel %vm945, %v1639, 0
        %v2114 = vsel %vm945, %v1725, 0
        %v2117 = vsel %vm945, %v1730, 0
        %v2120 = vsel %vm945, %v1735, 0
        %v2123 = vsel %vm945, %v1740, 0
        %v2126 = vsel %vm945, %v1745, 0
        %v2129 = vsel %vm945, %v1750, 0
        %v2132 = vsel %vm945, %v1755, 0
        %v2135 = vsel %vm945, %v1760, 0
        %v2138 = vsel %vm945, %v1765, 0
        %v2141 = vsel %vm945, %v1770, 0
        %v2144 = vsel %vm945, %v1775, 0
        %v2147 = vsel %vm945, %v1780, 0
        %2149 = vmatprep.subr.mxu0 0.0
        %2150 = vmatpush1.xpose.msra.mxu0 %v2114
        %2151 = vmatprep.subr.mxu0 0.0
        %2152 = vmatpush1.xpose.msra.mxu0 %v2117
        %2153 = vmatprep.subr.mxu0 0.0
        %2154 = vmatpush1.xpose.msra.mxu0 %v2120
        %2155 = vmatprep.subr.mxu0 0.0
        %2156 = vmatpush1.xpose.msra.mxu0 %v2123
        %2157 = vmatprep.subr.mxu0 0.0
        %2158 = vmatpush1.xpose.msra.mxu0 %v2126
        %2159 = vmatprep.subr.mxu0 0.0
        %2160 = vmatpush1.xpose.msra.mxu0 %v2129
        %2161 = vmatprep.subr.mxu0 0.0
        %2162 = vmatpush1.xpose.msra.mxu0 %v2132
        %2163 = vmatprep.subr.mxu0 0.0
        %2164 = vmatpush1.xpose.msra.mxu0 %v2135
        %2165 = vmatprep.subr.mxu0 0.0
        %2166 = vmatpush1.xpose.msra.mxu0 %v2138
        %2167 = vmatprep.subr.mxu0 0.0
        %2168 = vmatpush1.xpose.msra.mxu0 %v2141
        %2169 = vmatprep.subr.mxu0 0.0
        %2170 = vmatpush1.xpose.msra.mxu0 %v2144
        %2171 = vmatprep.subr.mxu0 0.0
        %2172 = vmatpush1.xpose.msra.mxu0 %v2147
        %2173 = vmatprep.subr.mxu0 0.0
        %2174 = vmatpush1.xpose.msra.mxu0 0.0
        %2175 = vmatprep.subr.mxu0 0.0
        %2176 = vmatpush1.xpose.msra.mxu0 0.0
        %2177 = vmatprep.subr.mxu0 0.0
        %2178 = vmatpush1.xpose.msra.mxu0 0.0
        %2179 = vmatprep.subr.mxu0 0.0
        %2180 = vmatpush1.xpose.msra.mxu0 0.0
        %2181 = vmatprep.subr.mxu0 0.0
        %2182 = vmatpush1.xpose.msra.mxu0 0.0
        %2183 = vmatprep.subr.mxu0 0.0
        %2184 = vmatpush1.xpose.msra.mxu0 0.0
        %2185 = vmatprep.subr.mxu0 0.0
        %2186 = vmatpush1.xpose.msra.mxu0 0.0
        %2187 = vmatprep.subr.mxu0 0.0
        %2188 = vmatpush1.xpose.msra.mxu0 0.0
        %2189 = vmatprep.subr.mxu0 0.0
        %2190 = vmatpush1.xpose.msra.mxu0 0.0
        %2191 = vmatprep.subr.mxu0 0.0
        %2192 = vmatpush1.xpose.msra.mxu0 0.0
        %2193 = vmatprep.subr.mxu0 0.0
        %2194 = vmatpush1.xpose.msra.mxu0 0.0
        %2195 = vmatprep.subr.mxu0 0.0
        %2196 = vmatpush1.xpose.msra.mxu0 0.0
        %2197 = vmatprep.subr.mxu0 0.0
        %2198 = vmatpush1.xpose.msra.mxu0 0.0
        %2199 = vmatprep.subr.mxu0 0.0
        %2200 = vmatpush1.xpose.msra.mxu0 0.0
        %2201 = vmatprep.subr.mxu0 0.0
        %2202 = vmatpush1.xpose.msra.mxu0 0.0
        %2203 = vmatprep.subr.mxu0 0.0
        %2204 = vmatpush1.xpose.msra.mxu0 0.0
        %2205 = vmatprep.subr.mxu0 0.0
        %2206 = vmatpush1.xpose.msra.mxu0 0.0
        %2207 = vmatprep.subr.mxu0 0.0
        %2208 = vmatpush1.xpose.msra.mxu0 0.0
        %2209 = vmatprep.subr.mxu0 0.0
        %2210 = vmatpush1.xpose.msra.mxu0 0.0
        %2211 = vmatprep.subr.mxu0 0.0
        %2212 = vmatpush1.xpose.msra.mxu0 0.0
        %2213 = vmatprep.mubr.f32.mxu0 0.0
        %2214 = vmatmul.mubr.f32.gmra.mrb[0].mxu0 %v2078
        %v2215 = vpop.f32.mrb[0].mxu0
        %v2216 = vadd.f32 %v2065, %v2215
        %v2217 = vpop.f32.mrb[0].mxu0
        %2218 = vmatprep.mubr.f32.mxu0 0.0
        %2219 = vmatmul.mubr.f32.gmra.mrb[0].mxu0 %v2081
        %v2220 = vpop.f32.mrb[0].mxu0
        %v2221 = vadd.f32 %v2066, %v2220
        %v2222 = vpop.f32.mrb[0].mxu0
        %2223 = vmatprep.mubr.f32.mxu0 0.0
        %2224 = vmatmul.mubr.f32.gmra.mrb[0].mxu0 %v2084
        %v2225 = vpop.f32.mrb[0].mxu0
        %v2226 = vadd.f32 %v2067, %v2225
        %v2227 = vpop.f32.mrb[0].mxu0
        %2228 = vmatprep.mubr.f32.mxu0 0.0
        %2229 = vmatmul.mubr.f32.gmra.mrb[0].mxu0 %v2087
        %v2230 = vpop.f32.mrb[0].mxu0
        %v2231 = vadd.f32 %v2068, %v2230
        %v2232 = vpop.f32.mrb[0].mxu0
        %2233 = vmatprep.mubr.f32.mxu0 0.0
        %2234 = vmatmul.mubr.f32.gmra.mrb[0].mxu0 %v2090
        %v2235 = vpop.f32.mrb[0].mxu0
        %v2236 = vadd.f32 %v2069, %v2235
        %v2237 = vpop.f32.mrb[0].mxu0
        %2238 = vmatprep.mubr.f32.mxu0 0.0
        %2239 = vmatmul.mubr.f32.gmra.mrb[0].mxu0 %v2093
        %v2240 = vpop.f32.mrb[0].mxu0
        %v2241 = vadd.f32 %v2070, %v2240
        %v2242 = vpop.f32.mrb[0].mxu0
        %2243 = vmatprep.mubr.f32.mxu0 0.0
        %2244 = vmatmul.mubr.f32.gmra.mrb[0].mxu0 %v2096
        %v2245 = vpop.f32.mrb[0].mxu0
        %v2246 = vadd.f32 %v2071, %v2245
        %v2247 = vpop.f32.mrb[0].mxu0
        %2248 = vmatprep.mubr.f32.mxu0 0.0
        %2249 = vmatmul.mubr.f32.gmra.mrb[0].mxu0 %v2099
        %v2250 = vpop.f32.mrb[0].mxu0
        %v2251 = vadd.f32 %v2072, %v2250
        %v2252 = vpop.f32.mrb[0].mxu0
        %2253 = vmatprep.mubr.f32.mxu0 0.0
        %2254 = vmatmul.mubr.f32.gmra.mrb[0].mxu0 %v2102
        %v2255 = vpop.f32.mrb[0].mxu0
        %v2256 = vadd.f32 %v2073, %v2255
        %v2257 = vpop.f32.mrb[0].mxu0
        %2258 = vmatprep.mubr.f32.mxu0 0.0
        %2259 = vmatmul.mubr.f32.gmra.mrb[0].mxu0 %v2105
        %v2260 = vpop.f32.mrb[0].mxu0
        %v2261 = vadd.f32 %v2074, %v2260
        %v2262 = vpop.f32.mrb[0].mxu0
        %2263 = vmatprep.mubr.f32.mxu0 0.0
        %2264 = vmatmul.mubr.f32.gmra.mrb[0].mxu0 %v2108
        %v2265 = vpop.f32.mrb[0].mxu0
        %v2266 = vadd.f32 %v2075, %v2265
        %v2267 = vpop.f32.mrb[0].mxu0
        %2268 = vmatprep.mubr.f32.mxu0 0.0
        %2269 = vmatmul.mubr.f32.gmra.mrb[0].mxu0 %v2111
        %v2270 = vpop.f32.mrb[0].mxu0
        %v2271 = vadd.f32 %v2076, %v2270
        %v2272 = vpop.f32.mrb[0].mxu0
        %2273 = vdwg.mxu0
        %vm2274 = vcmask 785408
        %v2275 = vsel %vm2274, %v2216, -inf
        %2276 = vmax.xlane.f32.xlu0 %v2275
        %v2277 = vpop.xlane.xlu0 %2276
        %v2278 = vsel %vm2274, %v2221, -inf
        %2279 = vmax.xlane.f32.xlu0 %v2278
        %v2280 = vpop.xlane.xlu0 %2279
        %v2281 = vsel %vm2274, %v2226, -inf
        %2282 = vmax.xlane.f32.xlu0 %v2281
        %v2283 = vpop.xlane.xlu0 %2282
        %v2284 = vsel %vm2274, %v2231, -inf
        %2285 = vmax.xlane.f32.xlu0 %v2284
        %v2286 = vpop.xlane.xlu0 %2285
        %v2287 = vsel %vm2274, %v2236, -inf
        %2288 = vmax.xlane.f32.xlu0 %v2287
        %v2289 = vpop.xlane.xlu0 %2288
        %v2290 = vsel %vm2274, %v2241, -inf
        %2291 = vmax.xlane.f32.xlu0 %v2290
        %v2292 = vpop.xlane.xlu0 %2291
        %v2293 = vsel %vm2274, %v2246, -inf
        %2294 = vmax.xlane.f32.xlu0 %v2293
        %v2295 = vpop.xlane.xlu0 %2294
        %v2296 = vsel %vm2274, %v2251, -inf
        %2297 = vmax.xlane.f32.xlu0 %v2296
        %v2298 = vpop.xlane.xlu0 %2297
        %v2299 = vsel %vm2274, %v2256, -inf
        %2300 = vmax.xlane.f32.xlu0 %v2299
        %v2301 = vpop.xlane.xlu0 %2300
        %v2302 = vsel %vm2274, %v2261, -inf
        %2303 = vmax.xlane.f32.xlu0 %v2302
        %v2304 = vpop.xlane.xlu0 %2303
        %v2305 = vsel %vm2274, %v2266, -inf
        %2306 = vmax.xlane.f32.xlu0 %v2305
        %v2307 = vpop.xlane.xlu0 %2306
        %v2308 = vsel %vm2274, %v2271, -inf
        %2309 = vmax.xlane.f32.xlu0 %v2308
        %v2310 = vpop.xlane.xlu0 %2309
        %v2311 = vsub.f32 %v2216, %v2277
        %v2312 = vsub.f32 %v2221, %v2280
        %v2313 = vsub.f32 %v2226, %v2283
        %v2314 = vsub.f32 %v2231, %v2286
        %v2315 = vsub.f32 %v2236, %v2289
        %v2316 = vsub.f32 %v2241, %v2292
        %v2317 = vsub.f32 %v2246, %v2295
        %v2318 = vsub.f32 %v2251, %v2298
        %v2319 = vsub.f32 %v2256, %v2301
        %v2320 = vsub.f32 %v2261, %v2304
        %v2321 = vsub.f32 %v2266, %v2307
        %v2322 = vsub.f32 %v2271, %v2310
        %v2323 = vmul.f32 %v2311, 1.442695
        %v2324 = vpow.pop %v2323
        %v2325 = vmul.f32 %v2312, 1.442695
        %v2326 = vpow.pop %v2325
        %v2327 = vmul.f32 %v2313, 1.442695
        %v2328 = vpow.pop %v2327
        %v2329 = vmul.f32 %v2314, 1.442695
        %v2330 = vpow.pop %v2329
        %v2331 = vmul.f32 %v2315, 1.442695
        %v2332 = vpow.pop %v2331
        %v2333 = vmul.f32 %v2316, 1.442695
        %v2334 = vpow.pop %v2333
        %v2335 = vmul.f32 %v2317, 1.442695
        %v2336 = vpow.pop %v2335
        %v2337 = vmul.f32 %v2318, 1.442695
        %v2338 = vpow.pop %v2337
        %v2339 = vmul.f32 %v2319, 1.442695
        %v2340 = vpow.pop %v2339
        %v2341 = vmul.f32 %v2320, 1.442695
        %v2342 = vpow.pop %v2341
        %v2343 = vmul.f32 %v2321, 1.442695
        %v2344 = vpow.pop %v2343
        %v2345 = vmul.f32 %v2322, 1.442695
        %v2346 = vpow.pop %v2345
        %v2347 = vsel %vm2274, %v2324, 0.0
        %2348 = vadd.xlane.f32.xlu0 %v2347
        %v2349 = vpop.xlane.xlu0 %2348
        %v2350 = vsel %vm2274, %v2326, 0.0
        %2351 = vadd.xlane.f32.xlu0 %v2350
        %v2352 = vpop.xlane.xlu0 %2351
        %v2353 = vsel %vm2274, %v2328, 0.0
        %2354 = vadd.xlane.f32.xlu0 %v2353
        %v2355 = vpop.xlane.xlu0 %2354
        %v2356 = vsel %vm2274, %v2330, 0.0
        %2357 = vadd.xlane.f32.xlu0 %v2356
        %v2358 = vpop.xlane.xlu0 %2357
        %v2359 = vsel %vm2274, %v2332, 0.0
        %2360 = vadd.xlane.f32.xlu0 %v2359
        %v2361 = vpop.xlane.xlu0 %2360
        %v2362 = vsel %vm2274, %v2334, 0.0
        %2363 = vadd.xlane.f32.xlu0 %v2362
        %v2364 = vpop.xlane.xlu0 %2363
        %v2365 = vsel %vm2274, %v2336, 0.0
        %2366 = vadd.xlane.f32.xlu0 %v2365
        %v2367 = vpop.xlane.xlu0 %2366
        %v2368 = vsel %vm2274, %v2338, 0.0
        %2369 = vadd.xlane.f32.xlu0 %v2368
        %v2370 = vpop.xlane.xlu0 %2369
        %v2371 = vsel %vm2274, %v2340, 0.0
        %2372 = vadd.xlane.f32.xlu0 %v2371
        %v2373 = vpop.xlane.xlu0 %2372
        %v2374 = vsel %vm2274, %v2342, 0.0
        %2375 = vadd.xlane.f32.xlu0 %v2374
        %v2376 = vpop.xlane.xlu0 %2375
        %v2377 = vsel %vm2274, %v2344, 0.0
        %2378 = vadd.xlane.f32.xlu0 %v2377
        %v2379 = vpop.xlane.xlu0 %2378
        %v2380 = vsel %vm2274, %v2346, 0.0
        %2381 = vadd.xlane.f32.xlu0 %v2380
        %v2382 = vpop.xlane.xlu0 %2381
        %v2383 = vrcp.pop %v2349
        %v2384 = vmul.f32 %v2324, %v2383
        %v2385 = vrcp.pop %v2352
        %v2386 = vmul.f32 %v2326, %v2385
        %v2387 = vrcp.pop %v2355
        %v2388 = vmul.f32 %v2328, %v2387
        %v2389 = vrcp.pop %v2358
        %v2390 = vmul.f32 %v2330, %v2389
        %v2391 = vrcp.pop %v2361
        %v2392 = vmul.f32 %v2332, %v2391
        %v2393 = vrcp.pop %v2364
        %v2394 = vmul.f32 %v2334, %v2393
        %v2395 = vrcp.pop %v2367
        %v2396 = vmul.f32 %v2336, %v2395
        %v2397 = vrcp.pop %v2370
        %v2398 = vmul.f32 %v2338, %v2397
        %v2399 = vrcp.pop %v2373
        %v2400 = vmul.f32 %v2340, %v2399
        %v2401 = vrcp.pop %v2376
        %v2402 = vmul.f32 %v2342, %v2401
        %v2403 = vrcp.pop %v2379
        %v2404 = vmul.f32 %v2344, %v2403
        %v2405 = vrcp.pop %v2382
        %v2406 = vmul.f32 %v2346, %v2405
        %v2407 = vld [vmem:[%s8 + $0x40] sm:$0xff]
        %v2408 = vld [vmem:[%s8 + $0x48] sm:$0xff]
        %v2409 = vld [vmem:[%s8 + $0x50] sm:$0xff]
        %v2410 = vld [vmem:[%s8 + $0x58] sm:$0xff]
        %v2411 = vld [vmem:[%s9 + $0xc0] sm:$0xff]
        %v2412 = vld [vmem:[%s9 + $0xc8] sm:$0xff]
        %v2413 = vld [vmem:[%s9 + $0xd0] sm:$0xff]
        %v2414 = vld [vmem:[%s9 + $0xd8] sm:$0xff]
        %v2415 = vld [vmem:[%s9 + $0xe0] sm:$0xff]
        %v2416 = vld [vmem:[%s9 + $0xe8] sm:$0xff]
        %v2417 = vld [vmem:[%s9 + $0xf0] sm:$0xff]
        %v2418 = vld [vmem:[%s9 + $0xf8] sm:$0xff]
        %v2419 = vld [vmem:[%s9 + $0x100] sm:$0xff]
        %v2420 = vld [vmem:[%s9 + $0x108] sm:$0xff]
        %v2421 = vld [vmem:[%s9 + $0x110] sm:$0xff]
        %v2422 = vld [vmem:[%s9 + $0x118] sm:$0xff]
        %2423 = vmatprep.subr.mxu0 0.0
        %2424 = vmatpush1.msra.mxu0 %v2407
        %2425 = vmatprep.subr.mxu0 0.0
        %2426 = vmatpush1.msra.mxu0 %v2408
        %2427 = vmatprep.subr.mxu0 0.0
        %2428 = vmatpush1.msra.mxu0 %v2409
        %2429 = vmatprep.subr.mxu0 0.0
        %2430 = vmatpush1.msra.mxu0 %v2410
        %2431 = vmatprep.subr.mxu0 0.0
        %2432 = vmatpush1.msra.mxu0 0.0
        %2433 = vmatprep.subr.mxu0 0.0
        %2434 = vmatpush1.msra.mxu0 0.0
        %2435 = vmatprep.subr.mxu0 0.0
        %2436 = vmatpush1.msra.mxu0 0.0
        %2437 = vmatprep.subr.mxu0 0.0
        %2438 = vmatpush1.msra.mxu0 0.0
        %2439 = vmatprep.subr.mxu0 0.0
        %2440 = vmatpush1.msra.mxu0 0.0
        %2441 = vmatprep.subr.mxu0 0.0
        %2442 = vmatpush1.msra.mxu0 0.0
        %2443 = vmatprep.subr.mxu0 0.0
        %2444 = vmatpush1.msra.mxu0 0.0
        %2445 = vmatprep.subr.mxu0 0.0
        %2446 = vmatpush1.msra.mxu0 0.0
        %2447 = vmatprep.subr.mxu0 0.0
        %2448 = vmatpush1.msra.mxu0 0.0
        %2449 = vmatprep.subr.mxu0 0.0
        %2450 = vmatpush1.msra.mxu0 0.0
        %2451 = vmatprep.subr.mxu0 0.0
        %2452 = vmatpush1.msra.mxu0 0.0
        %2453 = vmatprep.subr.mxu0 0.0
        %2454 = vmatpush1.msra.mxu0 0.0
        %2455 = vmatprep.subr.mxu0 0.0
        %2456 = vmatpush1.msra.mxu0 0.0
        %2457 = vmatprep.subr.mxu0 0.0
        %2458 = vmatpush1.msra.mxu0 0.0
        %2459 = vmatprep.subr.mxu0 0.0
        %2460 = vmatpush1.msra.mxu0 0.0
        %2461 = vmatprep.subr.mxu0 0.0
        %2462 = vmatpush1.msra.mxu0 0.0
        %2463 = vmatprep.subr.mxu0 0.0
        %2464 = vmatpush1.msra.mxu0 0.0
        %2465 = vmatprep.subr.mxu0 0.0
        %2466 = vmatpush1.msra.mxu0 0.0
        %2467 = vmatprep.subr.mxu0 0.0
        %2468 = vmatpush1.msra.mxu0 0.0
        %2469 = vmatprep.subr.mxu0 0.0
        %2470 = vmatpush1.msra.mxu0 0.0
        %2471 = vmatprep.subr.mxu0 0.0
        %2472 = vmatpush1.msra.mxu0 0.0
        %2473 = vmatprep.subr.mxu0 0.0
        %2474 = vmatpush1.msra.mxu0 0.0
        %2475 = vmatprep.subr.mxu0 0.0
        %2476 = vmatpush1.msra.mxu0 0.0
        %2477 = vmatprep.subr.mxu0 0.0
        %2478 = vmatpush1.msra.mxu0 0.0
        %2479 = vmatprep.subr.mxu0 0.0
        %2480 = vmatpush1.msra.mxu0 0.0
        %2481 = vmatprep.subr.mxu0 0.0
        %2482 = vmatpush1.msra.mxu0 0.0
        %2483 = vmatprep.subr.mxu0 0.0
        %2484 = vmatpush1.msra.mxu0 0.0
        %2485 = vmatprep.subr.mxu0 0.0
        %2486 = vmatpush1.msra.mxu0 0.0
        %2487 = vmatprep.mubr.f32.mxu0 0.0
        %2488 = vmatmul.mubr.f32.gmra.mrb[0].mxu0 %v1482
        %v2489 = vpop.f32.mrb[0].mxu0
        %v2490 = vadd.f32 %v2411, %v2489
        %v2491 = vpop.f32.mrb[0].mxu0
        %2492 = vmatprep.mubr.f32.mxu0 0.0
        %2493 = vmatmul.mubr.f32.gmra.mrb[0].mxu0 %v1485
        %v2494 = vpop.f32.mrb[0].mxu0
        %v2495 = vadd.f32 %v2412, %v2494
        %v2496 = vpop.f32.mrb[0].mxu0
        %2497 = vmatprep.mubr.f32.mxu0 0.0
        %2498 = vmatmul.mubr.f32.gmra.mrb[0].mxu0 %v1488
        %v2499 = vpop.f32.mrb[0].mxu0
        %v2500 = vadd.f32 %v2413, %v2499
        %v2501 = vpop.f32.mrb[0].mxu0
        %2502 = vmatprep.mubr.f32.mxu0 0.0
        %2503 = vmatmul.mubr.f32.gmra.mrb[0].mxu0 %v1491
        %v2504 = vpop.f32.mrb[0].mxu0
        %v2505 = vadd.f32 %v2414, %v2504
        %v2506 = vpop.f32.mrb[0].mxu0
        %2507 = vmatprep.mubr.f32.mxu0 0.0
        %2508 = vmatmul.mubr.f32.gmra.mrb[0].mxu0 %v1494
        %v2509 = vpop.f32.mrb[0].mxu0
        %v2510 = vadd.f32 %v2415, %v2509
        %v2511 = vpop.f32.mrb[0].mxu0
        %2512 = vmatprep.mubr.f32.mxu0 0.0
        %2513 = vmatmul.mubr.f32.gmra.mrb[0].mxu0 %v1497
        %v2514 = vpop.f32.mrb[0].mxu0
        %v2515 = vadd.f32 %v2416, %v2514
        %v2516 = vpop.f32.mrb[0].mxu0
        %2517 = vmatprep.mubr.f32.mxu0 0.0
        %2518 = vmatmul.mubr.f32.gmra.mrb[0].mxu0 %v1500
        %v2519 = vpop.f32.mrb[0].mxu0
        %v2520 = vadd.f32 %v2417, %v2519
        %v2521 = vpop.f32.mrb[0].mxu0
        %2522 = vmatprep.mubr.f32.mxu0 0.0
        %2523 = vmatmul.mubr.f32.gmra.mrb[0].mxu0 %v1503
        %v2524 = vpop.f32.mrb[0].mxu0
        %v2525 = vadd.f32 %v2418, %v2524
        %v2526 = vpop.f32.mrb[0].mxu0
        %2527 = vmatprep.mubr.f32.mxu0 0.0
        %2528 = vmatmul.mubr.f32.gmra.mrb[0].mxu0 %v1506
        %v2529 = vpop.f32.mrb[0].mxu0
        %v2530 = vadd.f32 %v2419, %v2529
        %v2531 = vpop.f32.mrb[0].mxu0
        %2532 = vmatprep.mubr.f32.mxu0 0.0
        %2533 = vmatmul.mubr.f32.gmra.mrb[0].mxu0 %v1509
        %v2534 = vpop.f32.mrb[0].mxu0
        %v2535 = vadd.f32 %v2420, %v2534
        %v2536 = vpop.f32.mrb[0].mxu0
        %2537 = vmatprep.mubr.f32.mxu0 0.0
        %2538 = vmatmul.mubr.f32.gmra.mrb[0].mxu0 %v1512
        %v2539 = vpop.f32.mrb[0].mxu0
        %v2540 = vadd.f32 %v2421, %v2539
        %v2541 = vpop.f32.mrb[0].mxu0
        %2542 = vmatprep.mubr.f32.mxu0 0.0
        %2543 = vmatmul.mubr.f32.gmra.mrb[0].mxu0 %v1515
        %v2544 = vpop.f32.mrb[0].mxu0
        %v2545 = vadd.f32 %v2422, %v2544
        %v2546 = vpop.f32.mrb[0].mxu0
        %2547 = vdwg.mxu0
        %v2548 = vld [vmem:[%s8 + $0x60] sm:$0xff]
        %v2549 = vld [vmem:[%s8 + $0x68] sm:$0xff]
        %v2550 = vld [vmem:[%s8 + $0x70] sm:$0xff]
        %v2551 = vld [vmem:[%s8 + $0x78] sm:$0xff]
        %v2552 = vld [vmem:[%s9 + $0x120] sm:$0xff]
        %v2553 = vld [vmem:[%s9 + $0x128] sm:$0xff]
        %v2554 = vld [vmem:[%s9 + $0x130] sm:$0xff]
        %v2555 = vld [vmem:[%s9 + $0x138] sm:$0xff]
        %v2556 = vld [vmem:[%s9 + $0x140] sm:$0xff]
        %v2557 = vld [vmem:[%s9 + $0x148] sm:$0xff]
        %v2558 = vld [vmem:[%s9 + $0x150] sm:$0xff]
        %v2559 = vld [vmem:[%s9 + $0x158] sm:$0xff]
        %v2560 = vld [vmem:[%s9 + $0x160] sm:$0xff]
        %v2561 = vld [vmem:[%s9 + $0x168] sm:$0xff]
        %v2562 = vld [vmem:[%s9 + $0x170] sm:$0xff]
        %v2563 = vld [vmem:[%s9 + $0x178] sm:$0xff]
        %2564 = vmatprep.subr.mxu0 0.0
        %2565 = vmatpush1.msra.mxu0 %v2548
        %2566 = vmatprep.subr.mxu0 0.0
        %2567 = vmatpush1.msra.mxu0 %v2549
        %2568 = vmatprep.subr.mxu0 0.0
        %2569 = vmatpush1.msra.mxu0 %v2550
        %2570 = vmatprep.subr.mxu0 0.0
        %2571 = vmatpush1.msra.mxu0 %v2551
        %2572 = vmatprep.subr.mxu0 0.0
        %2573 = vmatpush1.msra.mxu0 0.0
        %2574 = vmatprep.subr.mxu0 0.0
        %2575 = vmatpush1.msra.mxu0 0.0
        %2576 = vmatprep.subr.mxu0 0.0
        %2577 = vmatpush1.msra.mxu0 0.0
        %2578 = vmatprep.subr.mxu0 0.0
        %2579 = vmatpush1.msra.mxu0 0.0
        %2580 = vmatprep.subr.mxu0 0.0
        %2581 = vmatpush1.msra.mxu0 0.0
        %2582 = vmatprep.subr.mxu0 0.0
        %2583 = vmatpush1.msra.mxu0 0.0
        %2584 = vmatprep.subr.mxu0 0.0
        %2585 = vmatpush1.msra.mxu0 0.0
        %2586 = vmatprep.subr.mxu0 0.0
        %2587 = vmatpush1.msra.mxu0 0.0
        %2588 = vmatprep.subr.mxu0 0.0
        %2589 = vmatpush1.msra.mxu0 0.0
        %2590 = vmatprep.subr.mxu0 0.0
        %2591 = vmatpush1.msra.mxu0 0.0
        %2592 = vmatprep.subr.mxu0 0.0
        %2593 = vmatpush1.msra.mxu0 0.0
        %2594 = vmatprep.subr.mxu0 0.0
        %2595 = vmatpush1.msra.mxu0 0.0
        %2596 = vmatprep.subr.mxu0 0.0
        %2597 = vmatpush1.msra.mxu0 0.0
        %2598 = vmatprep.subr.mxu0 0.0
        %2599 = vmatpush1.msra.mxu0 0.0
        %2600 = vmatprep.subr.mxu0 0.0
        %2601 = vmatpush1.msra.mxu0 0.0
        %2602 = vmatprep.subr.mxu0 0.0
        %2603 = vmatpush1.msra.mxu0 0.0
        %2604 = vmatprep.subr.mxu0 0.0
        %2605 = vmatpush1.msra.mxu0 0.0
        %2606 = vmatprep.subr.mxu0 0.0
        %2607 = vmatpush1.msra.mxu0 0.0
        %2608 = vmatprep.subr.mxu0 0.0
        %2609 = vmatpush1.msra.mxu0 0.0
        %2610 = vmatprep.subr.mxu0 0.0
        %2611 = vmatpush1.msra.mxu0 0.0
        %2612 = vmatprep.subr.mxu0 0.0
        %2613 = vmatpush1.msra.mxu0 0.0
        %2614 = vmatprep.subr.mxu0 0.0
        %2615 = vmatpush1.msra.mxu0 0.0
        %2616 = vmatprep.subr.mxu0 0.0
        %2617 = vmatpush1.msra.mxu0 0.0
        %2618 = vmatprep.subr.mxu0 0.0
        %2619 = vmatpush1.msra.mxu0 0.0
        %2620 = vmatprep.subr.mxu0 0.0
        %2621 = vmatpush1.msra.mxu0 0.0
        %2622 = vmatprep.subr.mxu0 0.0
        %2623 = vmatpush1.msra.mxu0 0.0
        %2624 = vmatprep.subr.mxu0 0.0
        %2625 = vmatpush1.msra.mxu0 0.0
        %2626 = vmatprep.subr.mxu0 0.0
        %2627 = vmatpush1.msra.mxu0 0.0
        %2628 = vmatprep.mubr.f32.mxu0 0.0
        %2629 = vmatmul.mubr.f32.gmra.mrb[0].mxu0 %v1482
        %v2630 = vpop.f32.mrb[0].mxu0
        %v2631 = vadd.f32 %v2552, %v2630
        %v2632 = vpop.f32.mrb[0].mxu0
        %2633 = vmatprep.mubr.f32.mxu0 0.0
        %2634 = vmatmul.mubr.f32.gmra.mrb[0].mxu0 %v1485
        %v2635 = vpop.f32.mrb[0].mxu0
        %v2636 = vadd.f32 %v2553, %v2635
        %v2637 = vpop.f32.mrb[0].mxu0
        %2638 = vmatprep.mubr.f32.mxu0 0.0
        %2639 = vmatmul.mubr.f32.gmra.mrb[0].mxu0 %v1488
        %v2640 = vpop.f32.mrb[0].mxu0
        %v2641 = vadd.f32 %v2554, %v2640
        %v2642 = vpop.f32.mrb[0].mxu0
        %2643 = vmatprep.mubr.f32.mxu0 0.0
        %2644 = vmatmul.mubr.f32.gmra.mrb[0].mxu0 %v1491
        %v2645 = vpop.f32.mrb[0].mxu0
        %v2646 = vadd.f32 %v2555, %v2645
        %v2647 = vpop.f32.mrb[0].mxu0
        %2648 = vmatprep.mubr.f32.mxu0 0.0
        %2649 = vmatmul.mubr.f32.gmra.mrb[0].mxu0 %v1494
        %v2650 = vpop.f32.mrb[0].mxu0
        %v2651 = vadd.f32 %v2556, %v2650
        %v2652 = vpop.f32.mrb[0].mxu0
        %2653 = vmatprep.mubr.f32.mxu0 0.0
        %2654 = vmatmul.mubr.f32.gmra.mrb[0].mxu0 %v1497
        %v2655 = vpop.f32.mrb[0].mxu0
        %v2656 = vadd.f32 %v2557, %v2655
        %v2657 = vpop.f32.mrb[0].mxu0
        %2658 = vmatprep.mubr.f32.mxu0 0.0
        %2659 = vmatmul.mubr.f32.gmra.mrb[0].mxu0 %v1500
        %v2660 = vpop.f32.mrb[0].mxu0
        %v2661 = vadd.f32 %v2558, %v2660
        %v2662 = vpop.f32.mrb[0].mxu0
        %2663 = vmatprep.mubr.f32.mxu0 0.0
        %2664 = vmatmul.mubr.f32.gmra.mrb[0].mxu0 %v1503
        %v2665 = vpop.f32.mrb[0].mxu0
        %v2666 = vadd.f32 %v2559, %v2665
        %v2667 = vpop.f32.mrb[0].mxu0
        %2668 = vmatprep.mubr.f32.mxu0 0.0
        %2669 = vmatmul.mubr.f32.gmra.mrb[0].mxu0 %v1506
        %v2670 = vpop.f32.mrb[0].mxu0
        %v2671 = vadd.f32 %v2560, %v2670
        %v2672 = vpop.f32.mrb[0].mxu0
        %2673 = vmatprep.mubr.f32.mxu0 0.0
        %2674 = vmatmul.mubr.f32.gmra.mrb[0].mxu0 %v1509
        %v2675 = vpop.f32.mrb[0].mxu0
        %v2676 = vadd.f32 %v2561, %v2675
        %v2677 = vpop.f32.mrb[0].mxu0
        %2678 = vmatprep.mubr.f32.mxu0 0.0
        %2679 = vmatmul.mubr.f32.gmra.mrb[0].mxu0 %v1512
        %v2680 = vpop.f32.mrb[0].mxu0
        %v2681 = vadd.f32 %v2562, %v2680
        %v2682 = vpop.f32.mrb[0].mxu0
        %2683 = vmatprep.mubr.f32.mxu0 0.0
        %2684 = vmatmul.mubr.f32.gmra.mrb[0].mxu0 %v1515
        %v2685 = vpop.f32.mrb[0].mxu0
        %v2686 = vadd.f32 %v2563, %v2685
        %v2687 = vpop.f32.mrb[0].mxu0
        %2688 = vdwg.mxu0
        %v2689 = vld [vmem:[%s10 + $0x40] sm:$0xff]
        %v2690 = vld [vmem:[%s10 + $0x48] sm:$0xff]
        %v2691 = vld [vmem:[%s10 + $0x50] sm:$0xff]
        %v2692 = vld [vmem:[%s10 + $0x58] sm:$0xff]
        %v2693 = vld [vmem:[%s11 + $0xc0] sm:$0xff]
        %v2694 = vld [vmem:[%s11 + $0xc8] sm:$0xff]
        %v2695 = vld [vmem:[%s11 + $0xd0] sm:$0xff]
        %v2696 = vld [vmem:[%s11 + $0xd8] sm:$0xff]
        %v2697 = vld [vmem:[%s11 + $0xe0] sm:$0xff]
        %v2698 = vld [vmem:[%s11 + $0xe8] sm:$0xff]
        %v2699 = vld [vmem:[%s11 + $0xf0] sm:$0xff]
        %v2700 = vld [vmem:[%s11 + $0xf8] sm:$0xff]
        %v2701 = vld [vmem:[%s11 + $0x100] sm:$0xff]
        %v2702 = vld [vmem:[%s11 + $0x108] sm:$0xff]
        %v2703 = vld [vmem:[%s11 + $0x110] sm:$0xff]
        %v2704 = vld [vmem:[%s11 + $0x118] sm:$0xff]
        %2705 = vmatprep.subr.mxu0 0.0
        %2706 = vmatpush1.msra.mxu0 %v2689
        %2707 = vmatprep.subr.mxu0 0.0
        %2708 = vmatpush1.msra.mxu0 %v2690
        %2709 = vmatprep.subr.mxu0 0.0
        %2710 = vmatpush1.msra.mxu0 %v2691
        %2711 = vmatprep.subr.mxu0 0.0
        %2712 = vmatpush1.msra.mxu0 %v2692
        %2713 = vmatprep.subr.mxu0 0.0
        %2714 = vmatpush1.msra.mxu0 0.0
        %2715 = vmatprep.subr.mxu0 0.0
        %2716 = vmatpush1.msra.mxu0 0.0
        %2717 = vmatprep.subr.mxu0 0.0
        %2718 = vmatpush1.msra.mxu0 0.0
        %2719 = vmatprep.subr.mxu0 0.0
        %2720 = vmatpush1.msra.mxu0 0.0
        %2721 = vmatprep.subr.mxu0 0.0
        %2722 = vmatpush1.msra.mxu0 0.0
        %2723 = vmatprep.subr.mxu0 0.0
        %2724 = vmatpush1.msra.mxu0 0.0
        %2725 = vmatprep.subr.mxu0 0.0
        %2726 = vmatpush1.msra.mxu0 0.0
        %2727 = vmatprep.subr.mxu0 0.0
        %2728 = vmatpush1.msra.mxu0 0.0
        %2729 = vmatprep.subr.mxu0 0.0
        %2730 = vmatpush1.msra.mxu0 0.0
        %2731 = vmatprep.subr.mxu0 0.0
        %2732 = vmatpush1.msra.mxu0 0.0
        %2733 = vmatprep.subr.mxu0 0.0
        %2734 = vmatpush1.msra.mxu0 0.0
        %2735 = vmatprep.subr.mxu0 0.0
        %2736 = vmatpush1.msra.mxu0 0.0
        %2737 = vmatprep.subr.mxu0 0.0
        %2738 = vmatpush1.msra.mxu0 0.0
        %2739 = vmatprep.subr.mxu0 0.0
        %2740 = vmatpush1.msra.mxu0 0.0
        %2741 = vmatprep.subr.mxu0 0.0
        %2742 = vmatpush1.msra.mxu0 0.0
        %2743 = vmatprep.subr.mxu0 0.0
        %2744 = vmatpush1.msra.mxu0 0.0
        %2745 = vmatprep.subr.mxu0 0.0
        %2746 = vmatpush1.msra.mxu0 0.0
        %2747 = vmatprep.subr.mxu0 0.0
        %2748 = vmatpush1.msra.mxu0 0.0
        %2749 = vmatprep.subr.mxu0 0.0
        %2750 = vmatpush1.msra.mxu0 0.0
        %2751 = vmatprep.subr.mxu0 0.0
        %2752 = vmatpush1.msra.mxu0 0.0
        %2753 = vmatprep.subr.mxu0 0.0
        %2754 = vmatpush1.msra.mxu0 0.0
        %2755 = vmatprep.subr.mxu0 0.0
        %2756 = vmatpush1.msra.mxu0 0.0
        %2757 = vmatprep.subr.mxu0 0.0
        %2758 = vmatpush1.msra.mxu0 0.0
        %2759 = vmatprep.subr.mxu0 0.0
        %2760 = vmatpush1.msra.mxu0 0.0
        %2761 = vmatprep.subr.mxu0 0.0
        %2762 = vmatpush1.msra.mxu0 0.0
        %2763 = vmatprep.subr.mxu0 0.0
        %2764 = vmatpush1.msra.mxu0 0.0
        %2765 = vmatprep.subr.mxu0 0.0
        %2766 = vmatpush1.msra.mxu0 0.0
        %2767 = vmatprep.subr.mxu0 0.0
        %2768 = vmatpush1.msra.mxu0 0.0
        %2769 = vmatprep.mubr.f32.mxu0 0.0
        %2770 = vmatmul.mubr.f32.gmra.mrb[0].mxu0 %v1482
        %v2771 = vpop.f32.mrb[0].mxu0
        %v2772 = vadd.f32 %v2693, %v2771
        %v2773 = vpop.f32.mrb[0].mxu0
        %2774 = vmatprep.mubr.f32.mxu0 0.0
        %2775 = vmatmul.mubr.f32.gmra.mrb[0].mxu0 %v1485
        %v2776 = vpop.f32.mrb[0].mxu0
        %v2777 = vadd.f32 %v2694, %v2776
        %v2778 = vpop.f32.mrb[0].mxu0
        %2779 = vmatprep.mubr.f32.mxu0 0.0
        %2780 = vmatmul.mubr.f32.gmra.mrb[0].mxu0 %v1488
        %v2781 = vpop.f32.mrb[0].mxu0
        %v2782 = vadd.f32 %v2695, %v2781
        %v2783 = vpop.f32.mrb[0].mxu0
        %2784 = vmatprep.mubr.f32.mxu0 0.0
        %2785 = vmatmul.mubr.f32.gmra.mrb[0].mxu0 %v1491
        %v2786 = vpop.f32.mrb[0].mxu0
        %v2787 = vadd.f32 %v2696, %v2786
        %v2788 = vpop.f32.mrb[0].mxu0
        %2789 = vmatprep.mubr.f32.mxu0 0.0
        %2790 = vmatmul.mubr.f32.gmra.mrb[0].mxu0 %v1494
        %v2791 = vpop.f32.mrb[0].mxu0
        %v2792 = vadd.f32 %v2697, %v2791
        %v2793 = vpop.f32.mrb[0].mxu0
        %2794 = vmatprep.mubr.f32.mxu0 0.0
        %2795 = vmatmul.mubr.f32.gmra.mrb[0].mxu0 %v1497
        %v2796 = vpop.f32.mrb[0].mxu0
        %v2797 = vadd.f32 %v2698, %v2796
        %v2798 = vpop.f32.mrb[0].mxu0
        %2799 = vmatprep.mubr.f32.mxu0 0.0
        %2800 = vmatmul.mubr.f32.gmra.mrb[0].mxu0 %v1500
        %v2801 = vpop.f32.mrb[0].mxu0
        %v2802 = vadd.f32 %v2699, %v2801
        %v2803 = vpop.f32.mrb[0].mxu0
        %2804 = vmatprep.mubr.f32.mxu0 0.0
        %2805 = vmatmul.mubr.f32.gmra.mrb[0].mxu0 %v1503
        %v2806 = vpop.f32.mrb[0].mxu0
        %v2807 = vadd.f32 %v2700, %v2806
        %v2808 = vpop.f32.mrb[0].mxu0
        %2809 = vmatprep.mubr.f32.mxu0 0.0
        %2810 = vmatmul.mubr.f32.gmra.mrb[0].mxu0 %v1506
        %v2811 = vpop.f32.mrb[0].mxu0
        %v2812 = vadd.f32 %v2701, %v2811
        %v2813 = vpop.f32.mrb[0].mxu0
        %2814 = vmatprep.mubr.f32.mxu0 0.0
        %2815 = vmatmul.mubr.f32.gmra.mrb[0].mxu0 %v1509
        %v2816 = vpop.f32.mrb[0].mxu0
        %v2817 = vadd.f32 %v2702, %v2816
        %v2818 = vpop.f32.mrb[0].mxu0
        %2819 = vmatprep.mubr.f32.mxu0 0.0
        %2820 = vmatmul.mubr.f32.gmra.mrb[0].mxu0 %v1512
        %v2821 = vpop.f32.mrb[0].mxu0
        %v2822 = vadd.f32 %v2703, %v2821
        %v2823 = vpop.f32.mrb[0].mxu0
        %2824 = vmatprep.mubr.f32.mxu0 0.0
        %2825 = vmatmul.mubr.f32.gmra.mrb[0].mxu0 %v1515
        %v2826 = vpop.f32.mrb[0].mxu0
        %v2827 = vadd.f32 %v2704, %v2826
        %v2828 = vpop.f32.mrb[0].mxu0
        %2829 = vdwg.mxu0
        %v2830 = vld [vmem:[%s10 + $0x60] sm:$0xff]
        %v2831 = vld [vmem:[%s10 + $0x68] sm:$0xff]
        %v2832 = vld [vmem:[%s10 + $0x70] sm:$0xff]
        %v2833 = vld [vmem:[%s10 + $0x78] sm:$0xff]
        %v2834 = vld [vmem:[%s11 + $0x120] sm:$0xff]
        %v2835 = vld [vmem:[%s11 + $0x128] sm:$0xff]
        %v2836 = vld [vmem:[%s11 + $0x130] sm:$0xff]
        %v2837 = vld [vmem:[%s11 + $0x138] sm:$0xff]
        %v2838 = vld [vmem:[%s11 + $0x140] sm:$0xff]
        %v2839 = vld [vmem:[%s11 + $0x148] sm:$0xff]
        %v2840 = vld [vmem:[%s11 + $0x150] sm:$0xff]
        %v2841 = vld [vmem:[%s11 + $0x158] sm:$0xff]
        %v2842 = vld [vmem:[%s11 + $0x160] sm:$0xff]
        %v2843 = vld [vmem:[%s11 + $0x168] sm:$0xff]
        %v2844 = vld [vmem:[%s11 + $0x170] sm:$0xff]
        %v2845 = vld [vmem:[%s11 + $0x178] sm:$0xff]
        %2846 = vmatprep.subr.mxu0 0.0
        %2847 = vmatpush1.msra.mxu0 %v2830
        %2848 = vmatprep.subr.mxu0 0.0
        %2849 = vmatpush1.msra.mxu0 %v2831
        %2850 = vmatprep.subr.mxu0 0.0
        %2851 = vmatpush1.msra.mxu0 %v2832
        %2852 = vmatprep.subr.mxu0 0.0
        %2853 = vmatpush1.msra.mxu0 %v2833
        %2854 = vmatprep.subr.mxu0 0.0
        %2855 = vmatpush1.msra.mxu0 0.0
        %2856 = vmatprep.subr.mxu0 0.0
        %2857 = vmatpush1.msra.mxu0 0.0
        %2858 = vmatprep.subr.mxu0 0.0
        %2859 = vmatpush1.msra.mxu0 0.0
        %2860 = vmatprep.subr.mxu0 0.0
        %2861 = vmatpush1.msra.mxu0 0.0
        %2862 = vmatprep.subr.mxu0 0.0
        %2863 = vmatpush1.msra.mxu0 0.0
        %2864 = vmatprep.subr.mxu0 0.0
        %2865 = vmatpush1.msra.mxu0 0.0
        %2866 = vmatprep.subr.mxu0 0.0
        %2867 = vmatpush1.msra.mxu0 0.0
        %2868 = vmatprep.subr.mxu0 0.0
        %2869 = vmatpush1.msra.mxu0 0.0
        %2870 = vmatprep.subr.mxu0 0.0
        %2871 = vmatpush1.msra.mxu0 0.0
        %2872 = vmatprep.subr.mxu0 0.0
        %2873 = vmatpush1.msra.mxu0 0.0
        %2874 = vmatprep.subr.mxu0 0.0
        %2875 = vmatpush1.msra.mxu0 0.0
        %2876 = vmatprep.subr.mxu0 0.0
        %2877 = vmatpush1.msra.mxu0 0.0
        %2878 = vmatprep.subr.mxu0 0.0
        %2879 = vmatpush1.msra.mxu0 0.0
        %2880 = vmatprep.subr.mxu0 0.0
        %2881 = vmatpush1.msra.mxu0 0.0
        %2882 = vmatprep.subr.mxu0 0.0
        %2883 = vmatpush1.msra.mxu0 0.0
        %2884 = vmatprep.subr.mxu0 0.0
        %2885 = vmatpush1.msra.mxu0 0.0
        %2886 = vmatprep.subr.mxu0 0.0
        %2887 = vmatpush1.msra.mxu0 0.0
        %2888 = vmatprep.subr.mxu0 0.0
        %2889 = vmatpush1.msra.mxu0 0.0
        %2890 = vmatprep.subr.mxu0 0.0
        %2891 = vmatpush1.msra.mxu0 0.0
        %2892 = vmatprep.subr.mxu0 0.0
        %2893 = vmatpush1.msra.mxu0 0.0
        %2894 = vmatprep.subr.mxu0 0.0
        %2895 = vmatpush1.msra.mxu0 0.0
        %2896 = vmatprep.subr.mxu0 0.0
        %2897 = vmatpush1.msra.mxu0 0.0
        %2898 = vmatprep.subr.mxu0 0.0
        %2899 = vmatpush1.msra.mxu0 0.0
        %2900 = vmatprep.subr.mxu0 0.0
        %2901 = vmatpush1.msra.mxu0 0.0
        %2902 = vmatprep.subr.mxu0 0.0
        %2903 = vmatpush1.msra.mxu0 0.0
        %2904 = vmatprep.subr.mxu0 0.0
        %2905 = vmatpush1.msra.mxu0 0.0
        %2906 = vmatprep.subr.mxu0 0.0
        %2907 = vmatpush1.msra.mxu0 0.0
        %2908 = vmatprep.subr.mxu0 0.0
        %2909 = vmatpush1.msra.mxu0 0.0
        %2910 = vmatprep.mubr.f32.mxu0 0.0
        %2911 = vmatmul.mubr.f32.gmra.mrb[0].mxu0 %v1482
        %v2912 = vpop.f32.mrb[0].mxu0
        %v2913 = vadd.f32 %v2834, %v2912
        %v2914 = vpop.f32.mrb[0].mxu0
        %2915 = vmatprep.mubr.f32.mxu0 0.0
        %2916 = vmatmul.mubr.f32.gmra.mrb[0].mxu0 %v1485
        %v2917 = vpop.f32.mrb[0].mxu0
        %v2918 = vadd.f32 %v2835, %v2917
        %v2919 = vpop.f32.mrb[0].mxu0
        %2920 = vmatprep.mubr.f32.mxu0 0.0
        %2921 = vmatmul.mubr.f32.gmra.mrb[0].mxu0 %v1488
        %v2922 = vpop.f32.mrb[0].mxu0
        %v2923 = vadd.f32 %v2836, %v2922
        %v2924 = vpop.f32.mrb[0].mxu0
        %2925 = vmatprep.mubr.f32.mxu0 0.0
        %2926 = vmatmul.mubr.f32.gmra.mrb[0].mxu0 %v1491
        %v2927 = vpop.f32.mrb[0].mxu0
        %v2928 = vadd.f32 %v2837, %v2927
        %v2929 = vpop.f32.mrb[0].mxu0
        %2930 = vmatprep.mubr.f32.mxu0 0.0
        %2931 = vmatmul.mubr.f32.gmra.mrb[0].mxu0 %v1494
        %v2932 = vpop.f32.mrb[0].mxu0
        %v2933 = vadd.f32 %v2838, %v2932
        %v2934 = vpop.f32.mrb[0].mxu0
        %2935 = vmatprep.mubr.f32.mxu0 0.0
        %2936 = vmatmul.mubr.f32.gmra.mrb[0].mxu0 %v1497
        %v2937 = vpop.f32.mrb[0].mxu0
        %v2938 = vadd.f32 %v2839, %v2937
        %v2939 = vpop.f32.mrb[0].mxu0
        %2940 = vmatprep.mubr.f32.mxu0 0.0
        %2941 = vmatmul.mubr.f32.gmra.mrb[0].mxu0 %v1500
        %v2942 = vpop.f32.mrb[0].mxu0
        %v2943 = vadd.f32 %v2840, %v2942
        %v2944 = vpop.f32.mrb[0].mxu0
        %2945 = vmatprep.mubr.f32.mxu0 0.0
        %2946 = vmatmul.mubr.f32.gmra.mrb[0].mxu0 %v1503
        %v2947 = vpop.f32.mrb[0].mxu0
        %v2948 = vadd.f32 %v2841, %v2947
        %v2949 = vpop.f32.mrb[0].mxu0
        %2950 = vmatprep.mubr.f32.mxu0 0.0
        %2951 = vmatmul.mubr.f32.gmra.mrb[0].mxu0 %v1506
        %v2952 = vpop.f32.mrb[0].mxu0
        %v2953 = vadd.f32 %v2842, %v2952
        %v2954 = vpop.f32.mrb[0].mxu0
        %2955 = vmatprep.mubr.f32.mxu0 0.0
        %2956 = vmatmul.mubr.f32.gmra.mrb[0].mxu0 %v1509
        %v2957 = vpop.f32.mrb[0].mxu0
        %v2958 = vadd.f32 %v2843, %v2957
        %v2959 = vpop.f32.mrb[0].mxu0
        %2960 = vmatprep.mubr.f32.mxu0 0.0
        %2961 = vmatmul.mubr.f32.gmra.mrb[0].mxu0 %v1512
        %v2962 = vpop.f32.mrb[0].mxu0
        %v2963 = vadd.f32 %v2844, %v2962
        %v2964 = vpop.f32.mrb[0].mxu0
        %2965 = vmatprep.mubr.f32.mxu0 0.0
        %2966 = vmatmul.mubr.f32.gmra.mrb[0].mxu0 %v1515
        %v2967 = vpop.f32.mrb[0].mxu0
        %v2968 = vadd.f32 %v2845, %v2967
        %v2969 = vpop.f32.mrb[0].mxu0
        %2970 = vdwg.mxu0
        %v2972 = vsel %vm945, %v2490, 0
        %v2975 = vsel %vm945, %v2495, 0
        %v2978 = vsel %vm945, %v2500, 0
        %v2981 = vsel %vm945, %v2505, 0
        %v2984 = vsel %vm945, %v2510, 0
        %v2987 = vsel %vm945, %v2515, 0
        %v2990 = vsel %vm945, %v2520, 0
        %v2993 = vsel %vm945, %v2525, 0
        %v2996 = vsel %vm945, %v2530, 0
        %v2999 = vsel %vm945, %v2535, 0
        %v3002 = vsel %vm945, %v2540, 0
        %v3005 = vsel %vm945, %v2545, 0
        %v3008 = vsel %vm945, %v2631, 0
        %v3011 = vsel %vm945, %v2636, 0
        %v3014 = vsel %vm945, %v2641, 0
        %v3017 = vsel %vm945, %v2646, 0
        %v3020 = vsel %vm945, %v2651, 0
        %v3023 = vsel %vm945, %v2656, 0
        %v3026 = vsel %vm945, %v2661, 0
        %v3029 = vsel %vm945, %v2666, 0
        %v3032 = vsel %vm945, %v2671, 0
        %v3035 = vsel %vm945, %v2676, 0
        %v3038 = vsel %vm945, %v2681, 0
        %v3041 = vsel %vm945, %v2686, 0
        %3043 = vmatprep.subr.mxu0 0.0
        %3044 = vmatpush1.xpose.msra.mxu0 %v3008
        %3045 = vmatprep.subr.mxu0 0.0
        %3046 = vmatpush1.xpose.msra.mxu0 %v3011
        %3047 = vmatprep.subr.mxu0 0.0
        %3048 = vmatpush1.xpose.msra.mxu0 %v3014
        %3049 = vmatprep.subr.mxu0 0.0
        %3050 = vmatpush1.xpose.msra.mxu0 %v3017
        %3051 = vmatprep.subr.mxu0 0.0
        %3052 = vmatpush1.xpose.msra.mxu0 %v3020
        %3053 = vmatprep.subr.mxu0 0.0
        %3054 = vmatpush1.xpose.msra.mxu0 %v3023
        %3055 = vmatprep.subr.mxu0 0.0
        %3056 = vmatpush1.xpose.msra.mxu0 %v3026
        %3057 = vmatprep.subr.mxu0 0.0
        %3058 = vmatpush1.xpose.msra.mxu0 %v3029
        %3059 = vmatprep.subr.mxu0 0.0
        %3060 = vmatpush1.xpose.msra.mxu0 %v3032
        %3061 = vmatprep.subr.mxu0 0.0
        %3062 = vmatpush1.xpose.msra.mxu0 %v3035
        %3063 = vmatprep.subr.mxu0 0.0
        %3064 = vmatpush1.xpose.msra.mxu0 %v3038
        %3065 = vmatprep.subr.mxu0 0.0
        %3066 = vmatpush1.xpose.msra.mxu0 %v3041
        %3067 = vmatprep.subr.mxu0 0.0
        %3068 = vmatpush1.xpose.msra.mxu0 0.0
        %3069 = vmatprep.subr.mxu0 0.0
        %3070 = vmatpush1.xpose.msra.mxu0 0.0
        %3071 = vmatprep.subr.mxu0 0.0
        %3072 = vmatpush1.xpose.msra.mxu0 0.0
        %3073 = vmatprep.subr.mxu0 0.0
        %3074 = vmatpush1.xpose.msra.mxu0 0.0
        %3075 = vmatprep.subr.mxu0 0.0
        %3076 = vmatpush1.xpose.msra.mxu0 0.0
        %3077 = vmatprep.subr.mxu0 0.0
        %3078 = vmatpush1.xpose.msra.mxu0 0.0
        %3079 = vmatprep.subr.mxu0 0.0
        %3080 = vmatpush1.xpose.msra.mxu0 0.0
        %3081 = vmatprep.subr.mxu0 0.0
        %3082 = vmatpush1.xpose.msra.mxu0 0.0
        %3083 = vmatprep.subr.mxu0 0.0
        %3084 = vmatpush1.xpose.msra.mxu0 0.0
        %3085 = vmatprep.subr.mxu0 0.0
        %3086 = vmatpush1.xpose.msra.mxu0 0.0
        %3087 = vmatprep.subr.mxu0 0.0
        %3088 = vmatpush1.xpose.msra.mxu0 0.0
        %3089 = vmatprep.subr.mxu0 0.0
        %3090 = vmatpush1.xpose.msra.mxu0 0.0
        %3091 = vmatprep.subr.mxu0 0.0
        %3092 = vmatpush1.xpose.msra.mxu0 0.0
        %3093 = vmatprep.subr.mxu0 0.0
        %3094 = vmatpush1.xpose.msra.mxu0 0.0
        %3095 = vmatprep.subr.mxu0 0.0
        %3096 = vmatpush1.xpose.msra.mxu0 0.0
        %3097 = vmatprep.subr.mxu0 0.0
        %3098 = vmatpush1.xpose.msra.mxu0 0.0
        %3099 = vmatprep.subr.mxu0 0.0
        %3100 = vmatpush1.xpose.msra.mxu0 0.0
        %3101 = vmatprep.subr.mxu0 0.0
        %3102 = vmatpush1.xpose.msra.mxu0 0.0
        %3103 = vmatprep.subr.mxu0 0.0
        %3104 = vmatpush1.xpose.msra.mxu0 0.0
        %3105 = vmatprep.subr.mxu0 0.0
        %3106 = vmatpush1.xpose.msra.mxu0 0.0
        %3107 = vmatprep.mubr.f32.mxu0 0.0
        %3108 = vmatmul.mubr.f32.gmra.mrb[0].mxu0 %v2972
        %v3109 = vpop.f32.mrb[0].mxu0
        %v3110 = vadd.f32 %v2065, %v3109
        %v3111 = vpop.f32.mrb[0].mxu0
        %3112 = vmatprep.mubr.f32.mxu0 0.0
        %3113 = vmatmul.mubr.f32.gmra.mrb[0].mxu0 %v2975
        %v3114 = vpop.f32.mrb[0].mxu0
        %v3115 = vadd.f32 %v2066, %v3114
        %v3116 = vpop.f32.mrb[0].mxu0
        %3117 = vmatprep.mubr.f32.mxu0 0.0
        %3118 = vmatmul.mubr.f32.gmra.mrb[0].mxu0 %v2978
        %v3119 = vpop.f32.mrb[0].mxu0
        %v3120 = vadd.f32 %v2067, %v3119
        %v3121 = vpop.f32.mrb[0].mxu0
        %3122 = vmatprep.mubr.f32.mxu0 0.0
        %3123 = vmatmul.mubr.f32.gmra.mrb[0].mxu0 %v2981
        %v3124 = vpop.f32.mrb[0].mxu0
        %v3125 = vadd.f32 %v2068, %v3124
        %v3126 = vpop.f32.mrb[0].mxu0
        %3127 = vmatprep.mubr.f32.mxu0 0.0
        %3128 = vmatmul.mubr.f32.gmra.mrb[0].mxu0 %v2984
        %v3129 = vpop.f32.mrb[0].mxu0
        %v3130 = vadd.f32 %v2069, %v3129
        %v3131 = vpop.f32.mrb[0].mxu0
        %3132 = vmatprep.mubr.f32.mxu0 0.0
        %3133 = vmatmul.mubr.f32.gmra.mrb[0].mxu0 %v2987
        %v3134 = vpop.f32.mrb[0].mxu0
        %v3135 = vadd.f32 %v2070, %v3134
        %v3136 = vpop.f32.mrb[0].mxu0
        %3137 = vmatprep.mubr.f32.mxu0 0.0
        %3138 = vmatmul.mubr.f32.gmra.mrb[0].mxu0 %v2990
        %v3139 = vpop.f32.mrb[0].mxu0
        %v3140 = vadd.f32 %v2071, %v3139
        %v3141 = vpop.f32.mrb[0].mxu0
        %3142 = vmatprep.mubr.f32.mxu0 0.0
        %3143 = vmatmul.mubr.f32.gmra.mrb[0].mxu0 %v2993
        %v3144 = vpop.f32.mrb[0].mxu0
        %v3145 = vadd.f32 %v2072, %v3144
        %v3146 = vpop.f32.mrb[0].mxu0
        %3147 = vmatprep.mubr.f32.mxu0 0.0
        %3148 = vmatmul.mubr.f32.gmra.mrb[0].mxu0 %v2996
        %v3149 = vpop.f32.mrb[0].mxu0
        %v3150 = vadd.f32 %v2073, %v3149
        %v3151 = vpop.f32.mrb[0].mxu0
        %3152 = vmatprep.mubr.f32.mxu0 0.0
        %3153 = vmatmul.mubr.f32.gmra.mrb[0].mxu0 %v2999
        %v3154 = vpop.f32.mrb[0].mxu0
        %v3155 = vadd.f32 %v2074, %v3154
        %v3156 = vpop.f32.mrb[0].mxu0
        %3157 = vmatprep.mubr.f32.mxu0 0.0
        %3158 = vmatmul.mubr.f32.gmra.mrb[0].mxu0 %v3002
        %v3159 = vpop.f32.mrb[0].mxu0
        %v3160 = vadd.f32 %v2075, %v3159
        %v3161 = vpop.f32.mrb[0].mxu0
        %3162 = vmatprep.mubr.f32.mxu0 0.0
        %3163 = vmatmul.mubr.f32.gmra.mrb[0].mxu0 %v3005
        %v3164 = vpop.f32.mrb[0].mxu0
        %v3165 = vadd.f32 %v2076, %v3164
        %v3166 = vpop.f32.mrb[0].mxu0
        %3167 = vdwg.mxu0
        %v3168 = vsel %vm2274, %v3110, -inf
        %3169 = vmax.xlane.f32.xlu0 %v3168
        %v3170 = vpop.xlane.xlu0 %3169
        %v3171 = vsel %vm2274, %v3115, -inf
        %3172 = vmax.xlane.f32.xlu0 %v3171
        %v3173 = vpop.xlane.xlu0 %3172
        %v3174 = vsel %vm2274, %v3120, -inf
        %3175 = vmax.xlane.f32.xlu0 %v3174
        %v3176 = vpop.xlane.xlu0 %3175
        %v3177 = vsel %vm2274, %v3125, -inf
        %3178 = vmax.xlane.f32.xlu0 %v3177
        %v3179 = vpop.xlane.xlu0 %3178
        %v3180 = vsel %vm2274, %v3130, -inf
        %3181 = vmax.xlane.f32.xlu0 %v3180
        %v3182 = vpop.xlane.xlu0 %3181
        %v3183 = vsel %vm2274, %v3135, -inf
        %3184 = vmax.xlane.f32.xlu0 %v3183
        %v3185 = vpop.xlane.xlu0 %3184
        %v3186 = vsel %vm2274, %v3140, -inf
        %3187 = vmax.xlane.f32.xlu0 %v3186
        %v3188 = vpop.xlane.xlu0 %3187
        %v3189 = vsel %vm2274, %v3145, -inf
        %3190 = vmax.xlane.f32.xlu0 %v3189
        %v3191 = vpop.xlane.xlu0 %3190
        %v3192 = vsel %vm2274, %v3150, -inf
        %3193 = vmax.xlane.f32.xlu0 %v3192
        %v3194 = vpop.xlane.xlu0 %3193
        %v3195 = vsel %vm2274, %v3155, -inf
        %3196 = vmax.xlane.f32.xlu0 %v3195
        %v3197 = vpop.xlane.xlu0 %3196
        %v3198 = vsel %vm2274, %v3160, -inf
        %3199 = vmax.xlane.f32.xlu0 %v3198
        %v3200 = vpop.xlane.xlu0 %3199
        %v3201 = vsel %vm2274, %v3165, -inf
        %3202 = vmax.xlane.f32.xlu0 %v3201
        %v3203 = vpop.xlane.xlu0 %3202
        %v3204 = vsub.f32 %v3110, %v3170
        %v3205 = vsub.f32 %v3115, %v3173
        %v3206 = vsub.f32 %v3120, %v3176
        %v3207 = vsub.f32 %v3125, %v3179
        %v3208 = vsub.f32 %v3130, %v3182
        %v3209 = vsub.f32 %v3135, %v3185
        %v3210 = vsub.f32 %v3140, %v3188
        %v3211 = vsub.f32 %v3145, %v3191
        %v3212 = vsub.f32 %v3150, %v3194
        %v3213 = vsub.f32 %v3155, %v3197
        %v3214 = vsub.f32 %v3160, %v3200
        %v3215 = vsub.f32 %v3165, %v3203
        %v3216 = vmul.f32 %v3204, 1.442695
        %v3217 = vpow.pop %v3216
        %v3218 = vmul.f32 %v3205, 1.442695
        %v3219 = vpow.pop %v3218
        %v3220 = vmul.f32 %v3206, 1.442695
        %v3221 = vpow.pop %v3220
        %v3222 = vmul.f32 %v3207, 1.442695
        %v3223 = vpow.pop %v3222
        %v3224 = vmul.f32 %v3208, 1.442695
        %v3225 = vpow.pop %v3224
        %v3226 = vmul.f32 %v3209, 1.442695
        %v3227 = vpow.pop %v3226
        %v3228 = vmul.f32 %v3210, 1.442695
        %v3229 = vpow.pop %v3228
        %v3230 = vmul.f32 %v3211, 1.442695
        %v3231 = vpow.pop %v3230
        %v3232 = vmul.f32 %v3212, 1.442695
        %v3233 = vpow.pop %v3232
        %v3234 = vmul.f32 %v3213, 1.442695
        %v3235 = vpow.pop %v3234
        %v3236 = vmul.f32 %v3214, 1.442695
        %v3237 = vpow.pop %v3236
        %v3238 = vmul.f32 %v3215, 1.442695
        %v3239 = vpow.pop %v3238
        %v3240 = vsel %vm2274, %v3217, 0.0
        %3241 = vadd.xlane.f32.xlu0 %v3240
        %v3242 = vpop.xlane.xlu0 %3241
        %v3243 = vsel %vm2274, %v3219, 0.0
        %3244 = vadd.xlane.f32.xlu0 %v3243
        %v3245 = vpop.xlane.xlu0 %3244
        %v3246 = vsel %vm2274, %v3221, 0.0
        %3247 = vadd.xlane.f32.xlu0 %v3246
        %v3248 = vpop.xlane.xlu0 %3247
        %v3249 = vsel %vm2274, %v3223, 0.0
        %3250 = vadd.xlane.f32.xlu0 %v3249
        %v3251 = vpop.xlane.xlu0 %3250
        %v3252 = vsel %vm2274, %v3225, 0.0
        %3253 = vadd.xlane.f32.xlu0 %v3252
        %v3254 = vpop.xlane.xlu0 %3253
        %v3255 = vsel %vm2274, %v3227, 0.0
        %3256 = vadd.xlane.f32.xlu0 %v3255
        %v3257 = vpop.xlane.xlu0 %3256
        %v3258 = vsel %vm2274, %v3229, 0.0
        %3259 = vadd.xlane.f32.xlu0 %v3258
        %v3260 = vpop.xlane.xlu0 %3259
        %v3261 = vsel %vm2274, %v3231, 0.0
        %3262 = vadd.xlane.f32.xlu0 %v3261
        %v3263 = vpop.xlane.xlu0 %3262
        %v3264 = vsel %vm2274, %v3233, 0.0
        %3265 = vadd.xlane.f32.xlu0 %v3264
        %v3266 = vpop.xlane.xlu0 %3265
        %v3267 = vsel %vm2274, %v3235, 0.0
        %3268 = vadd.xlane.f32.xlu0 %v3267
        %v3269 = vpop.xlane.xlu0 %3268
        %v3270 = vsel %vm2274, %v3237, 0.0
        %3271 = vadd.xlane.f32.xlu0 %v3270
        %v3272 = vpop.xlane.xlu0 %3271
        %v3273 = vsel %vm2274, %v3239, 0.0
        %3274 = vadd.xlane.f32.xlu0 %v3273
        %v3275 = vpop.xlane.xlu0 %3274
        %v3276 = vrcp.pop %v3242
        %v3277 = vmul.f32 %v3217, %v3276
        %v3278 = vrcp.pop %v3245
        %v3279 = vmul.f32 %v3219, %v3278
        %v3280 = vrcp.pop %v3248
        %v3281 = vmul.f32 %v3221, %v3280
        %v3282 = vrcp.pop %v3251
        %v3283 = vmul.f32 %v3223, %v3282
        %v3284 = vrcp.pop %v3254
        %v3285 = vmul.f32 %v3225, %v3284
        %v3286 = vrcp.pop %v3257
        %v3287 = vmul.f32 %v3227, %v3286
        %v3288 = vrcp.pop %v3260
        %v3289 = vmul.f32 %v3229, %v3288
        %v3290 = vrcp.pop %v3263
        %v3291 = vmul.f32 %v3231, %v3290
        %v3292 = vrcp.pop %v3266
        %v3293 = vmul.f32 %v3233, %v3292
        %v3294 = vrcp.pop %v3269
        %v3295 = vmul.f32 %v3235, %v3294
        %v3296 = vrcp.pop %v3272
        %v3297 = vmul.f32 %v3237, %v3296
        %v3298 = vrcp.pop %v3275
        %v3299 = vmul.f32 %v3239, %v3298
        %v3301 = vsel %vm2274, %v3277, 0
        %v3304 = vsel %vm2274, %v3279, 0
        %v3307 = vsel %vm2274, %v3281, 0
        %v3310 = vsel %vm2274, %v3283, 0
        %v3313 = vsel %vm2274, %v3285, 0
        %v3316 = vsel %vm2274, %v3287, 0
        %v3319 = vsel %vm2274, %v3289, 0
        %v3322 = vsel %vm2274, %v3291, 0
        %v3325 = vsel %vm2274, %v3293, 0
        %v3328 = vsel %vm2274, %v3295, 0
        %v3331 = vsel %vm2274, %v3297, 0
        %v3334 = vsel %vm2274, %v3299, 0
        %3336 = vmatprep.subr.mxu0 0.0
        %3337 = vmatpush1.msra.mxu0 %v2772
        %3338 = vmatprep.subr.mxu0 0.0
        %3339 = vmatpush1.msra.mxu0 %v2777
        %3340 = vmatprep.subr.mxu0 0.0
        %3341 = vmatpush1.msra.mxu0 %v2782
        %3342 = vmatprep.subr.mxu0 0.0
        %3343 = vmatpush1.msra.mxu0 %v2787
        %3344 = vmatprep.subr.mxu0 0.0
        %3345 = vmatpush1.msra.mxu0 %v2792
        %3346 = vmatprep.subr.mxu0 0.0
        %3347 = vmatpush1.msra.mxu0 %v2797
        %3348 = vmatprep.subr.mxu0 0.0
        %3349 = vmatpush1.msra.mxu0 %v2802
        %3350 = vmatprep.subr.mxu0 0.0
        %3351 = vmatpush1.msra.mxu0 %v2807
        %3352 = vmatprep.subr.mxu0 0.0
        %3353 = vmatpush1.msra.mxu0 %v2812
        %3354 = vmatprep.subr.mxu0 0.0
        %3355 = vmatpush1.msra.mxu0 %v2817
        %3356 = vmatprep.subr.mxu0 0.0
        %3357 = vmatpush1.msra.mxu0 %v2822
        %3358 = vmatprep.subr.mxu0 0.0
        %3359 = vmatpush1.msra.mxu0 %v2827
        %3360 = vmatprep.subr.mxu0 0.0
        %3361 = vmatpush1.msra.mxu0 0.0
        %3362 = vmatprep.subr.mxu0 0.0
        %3363 = vmatpush1.msra.mxu0 0.0
        %3364 = vmatprep.subr.mxu0 0.0
        %3365 = vmatpush1.msra.mxu0 0.0
        %3366 = vmatprep.subr.mxu0 0.0
        %3367 = vmatpush1.msra.mxu0 0.0
        %3368 = vmatprep.subr.mxu0 0.0
        %3369 = vmatpush1.msra.mxu0 0.0
        %3370 = vmatprep.subr.mxu0 0.0
        %3371 = vmatpush1.msra.mxu0 0.0
        %3372 = vmatprep.subr.mxu0 0.0
        %3373 = vmatpush1.msra.mxu0 0.0
        %3374 = vmatprep.subr.mxu0 0.0
        %3375 = vmatpush1.msra.mxu0 0.0
        %3376 = vmatprep.subr.mxu0 0.0
        %3377 = vmatpush1.msra.mxu0 0.0
        %3378 = vmatprep.subr.mxu0 0.0
        %3379 = vmatpush1.msra.mxu0 0.0
        %3380 = vmatprep.subr.mxu0 0.0
        %3381 = vmatpush1.msra.mxu0 0.0
        %3382 = vmatprep.subr.mxu0 0.0
        %3383 = vmatpush1.msra.mxu0 0.0
        %3384 = vmatprep.subr.mxu0 0.0
        %3385 = vmatpush1.msra.mxu0 0.0
        %3386 = vmatprep.subr.mxu0 0.0
        %3387 = vmatpush1.msra.mxu0 0.0
        %3388 = vmatprep.subr.mxu0 0.0
        %3389 = vmatpush1.msra.mxu0 0.0
        %3390 = vmatprep.subr.mxu0 0.0
        %3391 = vmatpush1.msra.mxu0 0.0
        %3392 = vmatprep.subr.mxu0 0.0
        %3393 = vmatpush1.msra.mxu0 0.0
        %3394 = vmatprep.subr.mxu0 0.0
        %3395 = vmatpush1.msra.mxu0 0.0
        %3396 = vmatprep.subr.mxu0 0.0
        %3397 = vmatpush1.msra.mxu0 0.0
        %3398 = vmatprep.subr.mxu0 0.0
        %3399 = vmatpush1.msra.mxu0 0.0
        %3400 = vmatprep.mubr.f32.mxu0 0.0
        %3401 = vmatmul.mubr.f32.gmra.mrb[0].mxu0 %v3301
        %v3402 = vpop.f32.mrb[0].mxu0
        %v3403 = vadd.f32 0.0, %v3402
        %v3404 = vpop.f32.mrb[0].mxu0
        %3405 = vmatprep.mubr.f32.mxu0 0.0
        %3406 = vmatmul.mubr.f32.gmra.mrb[0].mxu0 %v3304
        %v3407 = vpop.f32.mrb[0].mxu0
        %v3408 = vadd.f32 0.0, %v3407
        %v3409 = vpop.f32.mrb[0].mxu0
        %3410 = vmatprep.mubr.f32.mxu0 0.0
        %3411 = vmatmul.mubr.f32.gmra.mrb[0].mxu0 %v3307
        %v3412 = vpop.f32.mrb[0].mxu0
        %v3413 = vadd.f32 0.0, %v3412
        %v3414 = vpop.f32.mrb[0].mxu0
        %3415 = vmatprep.mubr.f32.mxu0 0.0
        %3416 = vmatmul.mubr.f32.gmra.mrb[0].mxu0 %v3310
        %v3417 = vpop.f32.mrb[0].mxu0
        %v3418 = vadd.f32 0.0, %v3417
        %v3419 = vpop.f32.mrb[0].mxu0
        %3420 = vmatprep.mubr.f32.mxu0 0.0
        %3421 = vmatmul.mubr.f32.gmra.mrb[0].mxu0 %v3313
        %v3422 = vpop.f32.mrb[0].mxu0
        %v3423 = vadd.f32 0.0, %v3422
        %v3424 = vpop.f32.mrb[0].mxu0
        %3425 = vmatprep.mubr.f32.mxu0 0.0
        %3426 = vmatmul.mubr.f32.gmra.mrb[0].mxu0 %v3316
        %v3427 = vpop.f32.mrb[0].mxu0
        %v3428 = vadd.f32 0.0, %v3427
        %v3429 = vpop.f32.mrb[0].mxu0
        %3430 = vmatprep.mubr.f32.mxu0 0.0
        %3431 = vmatmul.mubr.f32.gmra.mrb[0].mxu0 %v3319
        %v3432 = vpop.f32.mrb[0].mxu0
        %v3433 = vadd.f32 0.0, %v3432
        %v3434 = vpop.f32.mrb[0].mxu0
        %3435 = vmatprep.mubr.f32.mxu0 0.0
        %3436 = vmatmul.mubr.f32.gmra.mrb[0].mxu0 %v3322
        %v3437 = vpop.f32.mrb[0].mxu0
        %v3438 = vadd.f32 0.0, %v3437
        %v3439 = vpop.f32.mrb[0].mxu0
        %3440 = vmatprep.mubr.f32.mxu0 0.0
        %3441 = vmatmul.mubr.f32.gmra.mrb[0].mxu0 %v3325
        %v3442 = vpop.f32.mrb[0].mxu0
        %v3443 = vadd.f32 0.0, %v3442
        %v3444 = vpop.f32.mrb[0].mxu0
        %3445 = vmatprep.mubr.f32.mxu0 0.0
        %3446 = vmatmul.mubr.f32.gmra.mrb[0].mxu0 %v3328
        %v3447 = vpop.f32.mrb[0].mxu0
        %v3448 = vadd.f32 0.0, %v3447
        %v3449 = vpop.f32.mrb[0].mxu0
        %3450 = vmatprep.mubr.f32.mxu0 0.0
        %3451 = vmatmul.mubr.f32.gmra.mrb[0].mxu0 %v3331
        %v3452 = vpop.f32.mrb[0].mxu0
        %v3453 = vadd.f32 0.0, %v3452
        %v3454 = vpop.f32.mrb[0].mxu0
        %3455 = vmatprep.mubr.f32.mxu0 0.0
        %3456 = vmatmul.mubr.f32.gmra.mrb[0].mxu0 %v3334
        %v3457 = vpop.f32.mrb[0].mxu0
        %v3458 = vadd.f32 0.0, %v3457
        %v3459 = vpop.f32.mrb[0].mxu0
        %3460 = vdwg.mxu0
        %v3462 = vsel %vm2274, %v2384, 0
        %v3465 = vsel %vm2274, %v2386, 0
        %v3468 = vsel %vm2274, %v2388, 0
        %v3471 = vsel %vm2274, %v2390, 0
        %v3474 = vsel %vm2274, %v2392, 0
        %v3477 = vsel %vm2274, %v2394, 0
        %v3480 = vsel %vm2274, %v2396, 0
        %v3483 = vsel %vm2274, %v2398, 0
        %v3486 = vsel %vm2274, %v2400, 0
        %v3489 = vsel %vm2274, %v2402, 0
        %v3492 = vsel %vm2274, %v2404, 0
        %v3495 = vsel %vm2274, %v2406, 0
        %3497 = vmatprep.subr.mxu0 0.0
        %3498 = vmatpush1.msra.mxu0 %v1866
        %3499 = vmatprep.subr.mxu0 0.0
        %3500 = vmatpush1.msra.mxu0 %v1871
        %3501 = vmatprep.subr.mxu0 0.0
        %3502 = vmatpush1.msra.mxu0 %v1876
        %3503 = vmatprep.subr.mxu0 0.0
        %3504 = vmatpush1.msra.mxu0 %v1881
        %3505 = vmatprep.subr.mxu0 0.0
        %3506 = vmatpush1.msra.mxu0 %v1886
        %3507 = vmatprep.subr.mxu0 0.0
        %3508 = vmatpush1.msra.mxu0 %v1891
        %3509 = vmatprep.subr.mxu0 0.0
        %3510 = vmatpush1.msra.mxu0 %v1896
        %3511 = vmatprep.subr.mxu0 0.0
        %3512 = vmatpush1.msra.mxu0 %v1901
        %3513 = vmatprep.subr.mxu0 0.0
        %3514 = vmatpush1.msra.mxu0 %v1906
        %3515 = vmatprep.subr.mxu0 0.0
        %3516 = vmatpush1.msra.mxu0 %v1911
        %3517 = vmatprep.subr.mxu0 0.0
        %3518 = vmatpush1.msra.mxu0 %v1916
        %3519 = vmatprep.subr.mxu0 0.0
        %3520 = vmatpush1.msra.mxu0 %v1921
        %3521 = vmatprep.subr.mxu0 0.0
        %3522 = vmatpush1.msra.mxu0 0.0
        %3523 = vmatprep.subr.mxu0 0.0
        %3524 = vmatpush1.msra.mxu0 0.0
        %3525 = vmatprep.subr.mxu0 0.0
        %3526 = vmatpush1.msra.mxu0 0.0
        %3527 = vmatprep.subr.mxu0 0.0
        %3528 = vmatpush1.msra.mxu0 0.0
        %3529 = vmatprep.subr.mxu0 0.0
        %3530 = vmatpush1.msra.mxu0 0.0
        %3531 = vmatprep.subr.mxu0 0.0
        %3532 = vmatpush1.msra.mxu0 0.0
        %3533 = vmatprep.subr.mxu0 0.0
        %3534 = vmatpush1.msra.mxu0 0.0
        %3535 = vmatprep.subr.mxu0 0.0
        %3536 = vmatpush1.msra.mxu0 0.0
        %3537 = vmatprep.subr.mxu0 0.0
        %3538 = vmatpush1.msra.mxu0 0.0
        %3539 = vmatprep.subr.mxu0 0.0
        %3540 = vmatpush1.msra.mxu0 0.0
        %3541 = vmatprep.subr.mxu0 0.0
        %3542 = vmatpush1.msra.mxu0 0.0
        %3543 = vmatprep.subr.mxu0 0.0
        %3544 = vmatpush1.msra.mxu0 0.0
        %3545 = vmatprep.subr.mxu0 0.0
        %3546 = vmatpush1.msra.mxu0 0.0
        %3547 = vmatprep.subr.mxu0 0.0
        %3548 = vmatpush1.msra.mxu0 0.0
        %3549 = vmatprep.subr.mxu0 0.0
        %3550 = vmatpush1.msra.mxu0 0.0
        %3551 = vmatprep.subr.mxu0 0.0
        %3552 = vmatpush1.msra.mxu0 0.0
        %3553 = vmatprep.subr.mxu0 0.0
        %3554 = vmatpush1.msra.mxu0 0.0
        %3555 = vmatprep.subr.mxu0 0.0
        %3556 = vmatpush1.msra.mxu0 0.0
        %3557 = vmatprep.subr.mxu0 0.0
        %3558 = vmatpush1.msra.mxu0 0.0
        %3559 = vmatprep.subr.mxu0 0.0
        %3560 = vmatpush1.msra.mxu0 0.0
        %3561 = vmatprep.mubr.f32.mxu0 0.0
        %3562 = vmatmul.mubr.f32.gmra.mrb[0].mxu0 %v3462
        %v3563 = vpop.f32.mrb[0].mxu0
        %v3564 = vadd.f32 %v3403, %v3563
        %v3565 = vpop.f32.mrb[0].mxu0
        %3566 = vmatprep.mubr.f32.mxu0 0.0
        %3567 = vmatmul.mubr.f32.gmra.mrb[0].mxu0 %v3465
        %v3568 = vpop.f32.mrb[0].mxu0
        %v3569 = vadd.f32 %v3408, %v3568
        %v3570 = vpop.f32.mrb[0].mxu0
        %3571 = vmatprep.mubr.f32.mxu0 0.0
        %3572 = vmatmul.mubr.f32.gmra.mrb[0].mxu0 %v3468
        %v3573 = vpop.f32.mrb[0].mxu0
        %v3574 = vadd.f32 %v3413, %v3573
        %v3575 = vpop.f32.mrb[0].mxu0
        %3576 = vmatprep.mubr.f32.mxu0 0.0
        %3577 = vmatmul.mubr.f32.gmra.mrb[0].mxu0 %v3471
        %v3578 = vpop.f32.mrb[0].mxu0
        %v3579 = vadd.f32 %v3418, %v3578
        %v3580 = vpop.f32.mrb[0].mxu0
        %3581 = vmatprep.mubr.f32.mxu0 0.0
        %3582 = vmatmul.mubr.f32.gmra.mrb[0].mxu0 %v3474
        %v3583 = vpop.f32.mrb[0].mxu0
        %v3584 = vadd.f32 %v3423, %v3583
        %v3585 = vpop.f32.mrb[0].mxu0
        %3586 = vmatprep.mubr.f32.mxu0 0.0
        %3587 = vmatmul.mubr.f32.gmra.mrb[0].mxu0 %v3477
        %v3588 = vpop.f32.mrb[0].mxu0
        %v3589 = vadd.f32 %v3428, %v3588
        %v3590 = vpop.f32.mrb[0].mxu0
        %3591 = vmatprep.mubr.f32.mxu0 0.0
        %3592 = vmatmul.mubr.f32.gmra.mrb[0].mxu0 %v3480
        %v3593 = vpop.f32.mrb[0].mxu0
        %v3594 = vadd.f32 %v3433, %v3593
        %v3595 = vpop.f32.mrb[0].mxu0
        %3596 = vmatprep.mubr.f32.mxu0 0.0
        %3597 = vmatmul.mubr.f32.gmra.mrb[0].mxu0 %v3483
        %v3598 = vpop.f32.mrb[0].mxu0
        %v3599 = vadd.f32 %v3438, %v3598
        %v3600 = vpop.f32.mrb[0].mxu0
        %3601 = vmatprep.mubr.f32.mxu0 0.0
        %3602 = vmatmul.mubr.f32.gmra.mrb[0].mxu0 %v3486
        %v3603 = vpop.f32.mrb[0].mxu0
        %v3604 = vadd.f32 %v3443, %v3603
        %v3605 = vpop.f32.mrb[0].mxu0
        %3606 = vmatprep.mubr.f32.mxu0 0.0
        %3607 = vmatmul.mubr.f32.gmra.mrb[0].mxu0 %v3489
        %v3608 = vpop.f32.mrb[0].mxu0
        %v3609 = vadd.f32 %v3448, %v3608
        %v3610 = vpop.f32.mrb[0].mxu0
        %3611 = vmatprep.mubr.f32.mxu0 0.0
        %3612 = vmatmul.mubr.f32.gmra.mrb[0].mxu0 %v3492
        %v3613 = vpop.f32.mrb[0].mxu0
        %v3614 = vadd.f32 %v3453, %v3613
        %v3615 = vpop.f32.mrb[0].mxu0
        %3616 = vmatprep.mubr.f32.mxu0 0.0
        %3617 = vmatmul.mubr.f32.gmra.mrb[0].mxu0 %v3495
        %v3618 = vpop.f32.mrb[0].mxu0
        %v3619 = vadd.f32 %v3458, %v3618
        %v3620 = vpop.f32.mrb[0].mxu0
        %3621 = vdwg.mxu0
        %3622 = vmatprep.subr.mxu0 0.0
        %3623 = vmatpush1.msra.mxu0 %v2913
        %3624 = vmatprep.subr.mxu0 0.0
        %3625 = vmatpush1.msra.mxu0 %v2918
        %3626 = vmatprep.subr.mxu0 0.0
        %3627 = vmatpush1.msra.mxu0 %v2923
        %3628 = vmatprep.subr.mxu0 0.0
        %3629 = vmatpush1.msra.mxu0 %v2928
        %3630 = vmatprep.subr.mxu0 0.0
        %3631 = vmatpush1.msra.mxu0 %v2933
        %3632 = vmatprep.subr.mxu0 0.0
        %3633 = vmatpush1.msra.mxu0 %v2938
        %3634 = vmatprep.subr.mxu0 0.0
        %3635 = vmatpush1.msra.mxu0 %v2943
        %3636 = vmatprep.subr.mxu0 0.0
        %3637 = vmatpush1.msra.mxu0 %v2948
        %3638 = vmatprep.subr.mxu0 0.0
        %3639 = vmatpush1.msra.mxu0 %v2953
        %3640 = vmatprep.subr.mxu0 0.0
        %3641 = vmatpush1.msra.mxu0 %v2958
        %3642 = vmatprep.subr.mxu0 0.0
        %3643 = vmatpush1.msra.mxu0 %v2963
        %3644 = vmatprep.subr.mxu0 0.0
        %3645 = vmatpush1.msra.mxu0 %v2968
        %3646 = vmatprep.subr.mxu0 0.0
        %3647 = vmatpush1.msra.mxu0 0.0
        %3648 = vmatprep.subr.mxu0 0.0
        %3649 = vmatpush1.msra.mxu0 0.0
        %3650 = vmatprep.subr.mxu0 0.0
        %3651 = vmatpush1.msra.mxu0 0.0
        %3652 = vmatprep.subr.mxu0 0.0
        %3653 = vmatpush1.msra.mxu0 0.0
        %3654 = vmatprep.subr.mxu0 0.0
        %3655 = vmatpush1.msra.mxu0 0.0
        %3656 = vmatprep.subr.mxu0 0.0
        %3657 = vmatpush1.msra.mxu0 0.0
        %3658 = vmatprep.subr.mxu0 0.0
        %3659 = vmatpush1.msra.mxu0 0.0
        %3660 = vmatprep.subr.mxu0 0.0
        %3661 = vmatpush1.msra.mxu0 0.0
        %3662 = vmatprep.subr.mxu0 0.0
        %3663 = vmatpush1.msra.mxu0 0.0
        %3664 = vmatprep.subr.mxu0 0.0
        %3665 = vmatpush1.msra.mxu0 0.0
        %3666 = vmatprep.subr.mxu0 0.0
        %3667 = vmatpush1.msra.mxu0 0.0
        %3668 = vmatprep.subr.mxu0 0.0
        %3669 = vmatpush1.msra.mxu0 0.0
        %3670 = vmatprep.subr.mxu0 0.0
        %3671 = vmatpush1.msra.mxu0 0.0
        %3672 = vmatprep.subr.mxu0 0.0
        %3673 = vmatpush1.msra.mxu0 0.0
        %3674 = vmatprep.subr.mxu0 0.0
        %3675 = vmatpush1.msra.mxu0 0.0
        %3676 = vmatprep.subr.mxu0 0.0
        %3677 = vmatpush1.msra.mxu0 0.0
        %3678 = vmatprep.subr.mxu0 0.0
        %3679 = vmatpush1.msra.mxu0 0.0
        %3680 = vmatprep.subr.mxu0 0.0
        %3681 = vmatpush1.msra.mxu0 0.0
        %3682 = vmatprep.subr.mxu0 0.0
        %3683 = vmatpush1.msra.mxu0 0.0
        %3684 = vmatprep.subr.mxu0 0.0
        %3685 = vmatpush1.msra.mxu0 0.0
        %3686 = vmatprep.mubr.f32.mxu0 0.0
        %3687 = vmatmul.mubr.f32.gmra.mrb[0].mxu0 %v3301
        %v3688 = vpop.f32.mrb[0].mxu0
        %v3689 = vadd.f32 0.0, %v3688
        %v3690 = vpop.f32.mrb[0].mxu0
        %3691 = vmatprep.mubr.f32.mxu0 0.0
        %3692 = vmatmul.mubr.f32.gmra.mrb[0].mxu0 %v3304
        %v3693 = vpop.f32.mrb[0].mxu0
        %v3694 = vadd.f32 0.0, %v3693
        %v3695 = vpop.f32.mrb[0].mxu0
        %3696 = vmatprep.mubr.f32.mxu0 0.0
        %3697 = vmatmul.mubr.f32.gmra.mrb[0].mxu0 %v3307
        %v3698 = vpop.f32.mrb[0].mxu0
        %v3699 = vadd.f32 0.0, %v3698
        %v3700 = vpop.f32.mrb[0].mxu0
        %3701 = vmatprep.mubr.f32.mxu0 0.0
        %3702 = vmatmul.mubr.f32.gmra.mrb[0].mxu0 %v3310
        %v3703 = vpop.f32.mrb[0].mxu0
        %v3704 = vadd.f32 0.0, %v3703
        %v3705 = vpop.f32.mrb[0].mxu0
        %3706 = vmatprep.mubr.f32.mxu0 0.0
        %3707 = vmatmul.mubr.f32.gmra.mrb[0].mxu0 %v3313
        %v3708 = vpop.f32.mrb[0].mxu0
        %v3709 = vadd.f32 0.0, %v3708
        %v3710 = vpop.f32.mrb[0].mxu0
        %3711 = vmatprep.mubr.f32.mxu0 0.0
        %3712 = vmatmul.mubr.f32.gmra.mrb[0].mxu0 %v3316
        %v3713 = vpop.f32.mrb[0].mxu0
        %v3714 = vadd.f32 0.0, %v3713
        %v3715 = vpop.f32.mrb[0].mxu0
        %3716 = vmatprep.mubr.f32.mxu0 0.0
        %3717 = vmatmul.mubr.f32.gmra.mrb[0].mxu0 %v3319
        %v3718 = vpop.f32.mrb[0].mxu0
        %v3719 = vadd.f32 0.0, %v3718
        %v3720 = vpop.f32.mrb[0].mxu0
        %3721 = vmatprep.mubr.f32.mxu0 0.0
        %3722 = vmatmul.mubr.f32.gmra.mrb[0].mxu0 %v3322
        %v3723 = vpop.f32.mrb[0].mxu0
        %v3724 = vadd.f32 0.0, %v3723
        %v3725 = vpop.f32.mrb[0].mxu0
        %3726 = vmatprep.mubr.f32.mxu0 0.0
        %3727 = vmatmul.mubr.f32.gmra.mrb[0].mxu0 %v3325
        %v3728 = vpop.f32.mrb[0].mxu0
        %v3729 = vadd.f32 0.0, %v3728
        %v3730 = vpop.f32.mrb[0].mxu0
        %3731 = vmatprep.mubr.f32.mxu0 0.0
        %3732 = vmatmul.mubr.f32.gmra.mrb[0].mxu0 %v3328
        %v3733 = vpop.f32.mrb[0].mxu0
        %v3734 = vadd.f32 0.0, %v3733
        %v3735 = vpop.f32.mrb[0].mxu0
        %3736 = vmatprep.mubr.f32.mxu0 0.0
        %3737 = vmatmul.mubr.f32.gmra.mrb[0].mxu0 %v3331
        %v3738 = vpop.f32.mrb[0].mxu0
        %v3739 = vadd.f32 0.0, %v3738
        %v3740 = vpop.f32.mrb[0].mxu0
        %3741 = vmatprep.mubr.f32.mxu0 0.0
        %3742 = vmatmul.mubr.f32.gmra.mrb[0].mxu0 %v3334
        %v3743 = vpop.f32.mrb[0].mxu0
        %v3744 = vadd.f32 0.0, %v3743
        %v3745 = vpop.f32.mrb[0].mxu0
        %3746 = vdwg.mxu0
        %3747 = vmatprep.subr.mxu0 0.0
        %3748 = vmatpush1.msra.mxu0 %v2007
        %3749 = vmatprep.subr.mxu0 0.0
        %3750 = vmatpush1.msra.mxu0 %v2012
        %3751 = vmatprep.subr.mxu0 0.0
        %3752 = vmatpush1.msra.mxu0 %v2017
        %3753 = vmatprep.subr.mxu0 0.0
        %3754 = vmatpush1.msra.mxu0 %v2022
        %3755 = vmatprep.subr.mxu0 0.0
        %3756 = vmatpush1.msra.mxu0 %v2027
        %3757 = vmatprep.subr.mxu0 0.0
        %3758 = vmatpush1.msra.mxu0 %v2032
        %3759 = vmatprep.subr.mxu0 0.0
        %3760 = vmatpush1.msra.mxu0 %v2037
        %3761 = vmatprep.subr.mxu0 0.0
        %3762 = vmatpush1.msra.mxu0 %v2042
        %3763 = vmatprep.subr.mxu0 0.0
        %3764 = vmatpush1.msra.mxu0 %v2047
        %3765 = vmatprep.subr.mxu0 0.0
        %3766 = vmatpush1.msra.mxu0 %v2052
        %3767 = vmatprep.subr.mxu0 0.0
        %3768 = vmatpush1.msra.mxu0 %v2057
        %3769 = vmatprep.subr.mxu0 0.0
        %3770 = vmatpush1.msra.mxu0 %v2062
        %3771 = vmatprep.subr.mxu0 0.0
        %3772 = vmatpush1.msra.mxu0 0.0
        %3773 = vmatprep.subr.mxu0 0.0
        %3774 = vmatpush1.msra.mxu0 0.0
        %3775 = vmatprep.subr.mxu0 0.0
        %3776 = vmatpush1.msra.mxu0 0.0
        %3777 = vmatprep.subr.mxu0 0.0
        %3778 = vmatpush1.msra.mxu0 0.0
        %3779 = vmatprep.subr.mxu0 0.0
        %3780 = vmatpush1.msra.mxu0 0.0
        %3781 = vmatprep.subr.mxu0 0.0
        %3782 = vmatpush1.msra.mxu0 0.0
        %3783 = vmatprep.subr.mxu0 0.0
        %3784 = vmatpush1.msra.mxu0 0.0
        %3785 = vmatprep.subr.mxu0 0.0
        %3786 = vmatpush1.msra.mxu0 0.0
        %3787 = vmatprep.subr.mxu0 0.0
        %3788 = vmatpush1.msra.mxu0 0.0
        %3789 = vmatprep.subr.mxu0 0.0
        %3790 = vmatpush1.msra.mxu0 0.0
        %3791 = vmatprep.subr.mxu0 0.0
        %3792 = vmatpush1.msra.mxu0 0.0
        %3793 = vmatprep.subr.mxu0 0.0
        %3794 = vmatpush1.msra.mxu0 0.0
        %3795 = vmatprep.subr.mxu0 0.0
        %3796 = vmatpush1.msra.mxu0 0.0
        %3797 = vmatprep.subr.mxu0 0.0
        %3798 = vmatpush1.msra.mxu0 0.0
        %3799 = vmatprep.subr.mxu0 0.0
        %3800 = vmatpush1.msra.mxu0 0.0
        %3801 = vmatprep.subr.mxu0 0.0
        %3802 = vmatpush1.msra.mxu0 0.0
        %3803 = vmatprep.subr.mxu0 0.0
        %3804 = vmatpush1.msra.mxu0 0.0
        %3805 = vmatprep.subr.mxu0 0.0
        %3806 = vmatpush1.msra.mxu0 0.0
        %3807 = vmatprep.subr.mxu0 0.0
        %3808 = vmatpush1.msra.mxu0 0.0
        %3809 = vmatprep.subr.mxu0 0.0
        %3810 = vmatpush1.msra.mxu0 0.0
        %3811 = vmatprep.mubr.f32.mxu0 0.0
        %3812 = vmatmul.mubr.f32.gmra.mrb[0].mxu0 %v3462
        %v3813 = vpop.f32.mrb[0].mxu0
        %v3814 = vadd.f32 %v3689, %v3813
        %v3815 = vpop.f32.mrb[0].mxu0
        %3816 = vmatprep.mubr.f32.mxu0 0.0
        %3817 = vmatmul.mubr.f32.gmra.mrb[0].mxu0 %v3465
        %v3818 = vpop.f32.mrb[0].mxu0
        %v3819 = vadd.f32 %v3694, %v3818
        %v3820 = vpop.f32.mrb[0].mxu0
        %3821 = vmatprep.mubr.f32.mxu0 0.0
        %3822 = vmatmul.mubr.f32.gmra.mrb[0].mxu0 %v3468
        %v3823 = vpop.f32.mrb[0].mxu0
        %v3824 = vadd.f32 %v3699, %v3823
        %v3825 = vpop.f32.mrb[0].mxu0
        %3826 = vmatprep.mubr.f32.mxu0 0.0
        %3827 = vmatmul.mubr.f32.gmra.mrb[0].mxu0 %v3471
        %v3828 = vpop.f32.mrb[0].mxu0
        %v3829 = vadd.f32 %v3704, %v3828
        %v3830 = vpop.f32.mrb[0].mxu0
        %3831 = vmatprep.mubr.f32.mxu0 0.0
        %3832 = vmatmul.mubr.f32.gmra.mrb[0].mxu0 %v3474
        %v3833 = vpop.f32.mrb[0].mxu0
        %v3834 = vadd.f32 %v3709, %v3833
        %v3835 = vpop.f32.mrb[0].mxu0
        %3836 = vmatprep.mubr.f32.mxu0 0.0
        %3837 = vmatmul.mubr.f32.gmra.mrb[0].mxu0 %v3477
        %v3838 = vpop.f32.mrb[0].mxu0
        %v3839 = vadd.f32 %v3714, %v3838
        %v3840 = vpop.f32.mrb[0].mxu0
        %3841 = vmatprep.mubr.f32.mxu0 0.0
        %3842 = vmatmul.mubr.f32.gmra.mrb[0].mxu0 %v3480
        %v3843 = vpop.f32.mrb[0].mxu0
        %v3844 = vadd.f32 %v3719, %v3843
        %v3845 = vpop.f32.mrb[0].mxu0
        %3846 = vmatprep.mubr.f32.mxu0 0.0
        %3847 = vmatmul.mubr.f32.gmra.mrb[0].mxu0 %v3483
        %v3848 = vpop.f32.mrb[0].mxu0
        %v3849 = vadd.f32 %v3724, %v3848
        %v3850 = vpop.f32.mrb[0].mxu0
        %3851 = vmatprep.mubr.f32.mxu0 0.0
        %3852 = vmatmul.mubr.f32.gmra.mrb[0].mxu0 %v3486
        %v3853 = vpop.f32.mrb[0].mxu0
        %v3854 = vadd.f32 %v3729, %v3853
        %v3855 = vpop.f32.mrb[0].mxu0
        %3856 = vmatprep.mubr.f32.mxu0 0.0
        %3857 = vmatmul.mubr.f32.gmra.mrb[0].mxu0 %v3489
        %v3858 = vpop.f32.mrb[0].mxu0
        %v3859 = vadd.f32 %v3734, %v3858
        %v3860 = vpop.f32.mrb[0].mxu0
        %3861 = vmatprep.mubr.f32.mxu0 0.0
        %3862 = vmatmul.mubr.f32.gmra.mrb[0].mxu0 %v3492
        %v3863 = vpop.f32.mrb[0].mxu0
        %v3864 = vadd.f32 %v3739, %v3863
        %v3865 = vpop.f32.mrb[0].mxu0
        %3866 = vmatprep.mubr.f32.mxu0 0.0
        %3867 = vmatmul.mubr.f32.gmra.mrb[0].mxu0 %v3495
        %v3868 = vpop.f32.mrb[0].mxu0
        %v3869 = vadd.f32 %v3744, %v3868
        %v3870 = vpop.f32.mrb[0].mxu0
        %3871 = vdwg.mxu0
        %v3872 = vld [vmem:[%s4] sm:$0xff]
        %v3873 = vld [vmem:[%s4 + $0x8] sm:$0xff]
        %v3874 = vld [vmem:[%s4 + $0x10] sm:$0xff]
        %v3875 = vld [vmem:[%s4 + $0x18] sm:$0xff]
        %v3876 = vld [vmem:[%s4 + $0x20] sm:$0xff]
        %v3877 = vld [vmem:[%s4 + $0x28] sm:$0xff]
        %v3878 = vld [vmem:[%s4 + $0x30] sm:$0xff]
        %v3879 = vld [vmem:[%s4 + $0x38] sm:$0xff]
        %v3880 = vld [vmem:[%s4 + $0x40] sm:$0xff]
        %v3881 = vld [vmem:[%s4 + $0x48] sm:$0xff]
        %v3882 = vld [vmem:[%s4 + $0x50] sm:$0xff]
        %v3883 = vld [vmem:[%s4 + $0x58] sm:$0xff]
        %v3884 = vld [vmem:[%s4 + $0x60] sm:$0xff]
        %v3885 = vld [vmem:[%s4 + $0x68] sm:$0xff]
        %v3886 = vld [vmem:[%s4 + $0x70] sm:$0xff]
        %v3887 = vld [vmem:[%s4 + $0x78] sm:$0xff]
        %v3888 = vld [vmem:[%s5] sm:$0xff]
        %v3889 = vld [vmem:[%s5 + $0x8] sm:$0xff]
        %v3890 = vld [vmem:[%s5 + $0x10] sm:$0xff]
        %v3891 = vld [vmem:[%s5 + $0x18] sm:$0xff]
        %v3892 = vld [vmem:[%s5 + $0x20] sm:$0xff]
        %v3893 = vld [vmem:[%s5 + $0x28] sm:$0xff]
        %v3894 = vld [vmem:[%s5 + $0x30] sm:$0xff]
        %v3895 = vld [vmem:[%s5 + $0x38] sm:$0xff]
        %v3896 = vld [vmem:[%s5 + $0x40] sm:$0xff]
        %v3897 = vld [vmem:[%s5 + $0x48] sm:$0xff]
        %v3898 = vld [vmem:[%s5 + $0x50] sm:$0xff]
        %v3899 = vld [vmem:[%s5 + $0x58] sm:$0xff]
        %v3900 = vld [vmem:[%s5 + $0x60] sm:$0xff]
        %v3901 = vld [vmem:[%s5 + $0x68] sm:$0xff]
        %v3902 = vld [vmem:[%s5 + $0x70] sm:$0xff]
        %v3903 = vld [vmem:[%s5 + $0x78] sm:$0xff]
        %v3905 = vsel %vm2274, %v3888, 0
        %v3908 = vsel %vm2274, %v3889, 0
        %v3911 = vsel %vm2274, %v3890, 0
        %v3914 = vsel %vm2274, %v3891, 0
        %v3917 = vsel %vm2274, %v3892, 0
        %v3920 = vsel %vm2274, %v3893, 0
        %v3923 = vsel %vm2274, %v3894, 0
        %v3926 = vsel %vm2274, %v3895, 0
        %v3929 = vsel %vm2274, %v3896, 0
        %v3932 = vsel %vm2274, %v3897, 0
        %v3935 = vsel %vm2274, %v3898, 0
        %v3938 = vsel %vm2274, %v3899, 0
        %v3941 = vsel %vm2274, %v3900, 0
        %v3944 = vsel %vm2274, %v3901, 0
        %v3947 = vsel %vm2274, %v3902, 0
        %v3950 = vsel %vm2274, %v3903, 0
        %3952 = vmatprep.subr.mxu0 0.0
        %3953 = vmatpush1.msra.mxu0 %v3814
        %3954 = vmatprep.subr.mxu0 0.0
        %3955 = vmatpush1.msra.mxu0 %v3819
        %3956 = vmatprep.subr.mxu0 0.0
        %3957 = vmatpush1.msra.mxu0 %v3824
        %3958 = vmatprep.subr.mxu0 0.0
        %3959 = vmatpush1.msra.mxu0 %v3829
        %3960 = vmatprep.subr.mxu0 0.0
        %3961 = vmatpush1.msra.mxu0 %v3834
        %3962 = vmatprep.subr.mxu0 0.0
        %3963 = vmatpush1.msra.mxu0 %v3839
        %3964 = vmatprep.subr.mxu0 0.0
        %3965 = vmatpush1.msra.mxu0 %v3844
        %3966 = vmatprep.subr.mxu0 0.0
        %3967 = vmatpush1.msra.mxu0 %v3849
        %3968 = vmatprep.subr.mxu0 0.0
        %3969 = vmatpush1.msra.mxu0 %v3854
        %3970 = vmatprep.subr.mxu0 0.0
        %3971 = vmatpush1.msra.mxu0 %v3859
        %3972 = vmatprep.subr.mxu0 0.0
        %3973 = vmatpush1.msra.mxu0 %v3864
        %3974 = vmatprep.subr.mxu0 0.0
        %3975 = vmatpush1.msra.mxu0 %v3869
        %3976 = vmatprep.subr.mxu0 0.0
        %3977 = vmatpush1.msra.mxu0 0.0
        %3978 = vmatprep.subr.mxu0 0.0
        %3979 = vmatpush1.msra.mxu0 0.0
        %3980 = vmatprep.subr.mxu0 0.0
        %3981 = vmatpush1.msra.mxu0 0.0
        %3982 = vmatprep.subr.mxu0 0.0
        %3983 = vmatpush1.msra.mxu0 0.0
        %3984 = vmatprep.subr.mxu0 0.0
        %3985 = vmatpush1.msra.mxu0 0.0
        %3986 = vmatprep.subr.mxu0 0.0
        %3987 = vmatpush1.msra.mxu0 0.0
        %3988 = vmatprep.subr.mxu0 0.0
        %3989 = vmatpush1.msra.mxu0 0.0
        %3990 = vmatprep.subr.mxu0 0.0
        %3991 = vmatpush1.msra.mxu0 0.0
        %3992 = vmatprep.subr.mxu0 0.0
        %3993 = vmatpush1.msra.mxu0 0.0
        %3994 = vmatprep.subr.mxu0 0.0
        %3995 = vmatpush1.msra.mxu0 0.0
        %3996 = vmatprep.subr.mxu0 0.0
        %3997 = vmatpush1.msra.mxu0 0.0
        %3998 = vmatprep.subr.mxu0 0.0
        %3999 = vmatpush1.msra.mxu0 0.0
        %4000 = vmatprep.subr.mxu0 0.0
        %4001 = vmatpush1.msra.mxu0 0.0
        %4002 = vmatprep.subr.mxu0 0.0
        %4003 = vmatpush1.msra.mxu0 0.0
        %4004 = vmatprep.subr.mxu0 0.0
        %4005 = vmatpush1.msra.mxu0 0.0
        %4006 = vmatprep.subr.mxu0 0.0
        %4007 = vmatpush1.msra.mxu0 0.0
        %4008 = vmatprep.subr.mxu0 0.0
        %4009 = vmatpush1.msra.mxu0 0.0
        %4010 = vmatprep.subr.mxu0 0.0
        %4011 = vmatpush1.msra.mxu0 0.0
        %4012 = vmatprep.subr.mxu0 0.0
        %4013 = vmatpush1.msra.mxu0 0.0
        %4014 = vmatprep.subr.mxu0 0.0
        %4015 = vmatpush1.msra.mxu0 0.0
        %4016 = vmatprep.mubr.f32.mxu0 0.0
        %4017 = vmatmul.mubr.f32.gmra.mrb[0].mxu0 %v3905
        %v4018 = vpop.f32.mrb[0].mxu0
        %v4019 = vadd.f32 0.0, %v4018
        %v4020 = vpop.f32.mrb[0].mxu0
        %4021 = vmatprep.mubr.f32.mxu0 0.0
        %4022 = vmatmul.mubr.f32.gmra.mrb[0].mxu0 %v3908
        %v4023 = vpop.f32.mrb[0].mxu0
        %v4024 = vadd.f32 0.0, %v4023
        %v4025 = vpop.f32.mrb[0].mxu0
        %4026 = vmatprep.mubr.f32.mxu0 0.0
        %4027 = vmatmul.mubr.f32.gmra.mrb[0].mxu0 %v3911
        %v4028 = vpop.f32.mrb[0].mxu0
        %v4029 = vadd.f32 0.0, %v4028
        %v4030 = vpop.f32.mrb[0].mxu0
        %4031 = vmatprep.mubr.f32.mxu0 0.0
        %4032 = vmatmul.mubr.f32.gmra.mrb[0].mxu0 %v3914
        %v4033 = vpop.f32.mrb[0].mxu0
        %v4034 = vadd.f32 0.0, %v4033
        %v4035 = vpop.f32.mrb[0].mxu0
        %4036 = vmatprep.mubr.f32.mxu0 0.0
        %4037 = vmatmul.mubr.f32.gmra.mrb[0].mxu0 %v3917
        %v4038 = vpop.f32.mrb[0].mxu0
        %v4039 = vadd.f32 0.0, %v4038
        %v4040 = vpop.f32.mrb[0].mxu0
        %4041 = vmatprep.mubr.f32.mxu0 0.0
        %4042 = vmatmul.mubr.f32.gmra.mrb[0].mxu0 %v3920
        %v4043 = vpop.f32.mrb[0].mxu0
        %v4044 = vadd.f32 0.0, %v4043
        %v4045 = vpop.f32.mrb[0].mxu0
        %4046 = vmatprep.mubr.f32.mxu0 0.0
        %4047 = vmatmul.mubr.f32.gmra.mrb[0].mxu0 %v3923
        %v4048 = vpop.f32.mrb[0].mxu0
        %v4049 = vadd.f32 0.0, %v4048
        %v4050 = vpop.f32.mrb[0].mxu0
        %4051 = vmatprep.mubr.f32.mxu0 0.0
        %4052 = vmatmul.mubr.f32.gmra.mrb[0].mxu0 %v3926
        %v4053 = vpop.f32.mrb[0].mxu0
        %v4054 = vadd.f32 0.0, %v4053
        %v4055 = vpop.f32.mrb[0].mxu0
        %4056 = vmatprep.mubr.f32.mxu0 0.0
        %4057 = vmatmul.mubr.f32.gmra.mrb[0].mxu0 %v3929
        %v4058 = vpop.f32.mrb[0].mxu0
        %v4059 = vadd.f32 0.0, %v4058
        %v4060 = vpop.f32.mrb[0].mxu0
        %4061 = vmatprep.mubr.f32.mxu0 0.0
        %4062 = vmatmul.mubr.f32.gmra.mrb[0].mxu0 %v3932
        %v4063 = vpop.f32.mrb[0].mxu0
        %v4064 = vadd.f32 0.0, %v4063
        %v4065 = vpop.f32.mrb[0].mxu0
        %4066 = vmatprep.mubr.f32.mxu0 0.0
        %4067 = vmatmul.mubr.f32.gmra.mrb[0].mxu0 %v3935
        %v4068 = vpop.f32.mrb[0].mxu0
        %v4069 = vadd.f32 0.0, %v4068
        %v4070 = vpop.f32.mrb[0].mxu0
        %4071 = vmatprep.mubr.f32.mxu0 0.0
        %4072 = vmatmul.mubr.f32.gmra.mrb[0].mxu0 %v3938
        %v4073 = vpop.f32.mrb[0].mxu0
        %v4074 = vadd.f32 0.0, %v4073
        %v4075 = vpop.f32.mrb[0].mxu0
        %4076 = vmatprep.mubr.f32.mxu0 0.0
        %4077 = vmatmul.mubr.f32.gmra.mrb[0].mxu0 %v3941
        %v4078 = vpop.f32.mrb[0].mxu0
        %v4079 = vadd.f32 0.0, %v4078
        %v4080 = vpop.f32.mrb[0].mxu0
        %4081 = vmatprep.mubr.f32.mxu0 0.0
        %4082 = vmatmul.mubr.f32.gmra.mrb[0].mxu0 %v3944
        %v4083 = vpop.f32.mrb[0].mxu0
        %v4084 = vadd.f32 0.0, %v4083
        %v4085 = vpop.f32.mrb[0].mxu0
        %4086 = vmatprep.mubr.f32.mxu0 0.0
        %4087 = vmatmul.mubr.f32.gmra.mrb[0].mxu0 %v3947
        %v4088 = vpop.f32.mrb[0].mxu0
        %v4089 = vadd.f32 0.0, %v4088
        %v4090 = vpop.f32.mrb[0].mxu0
        %4091 = vmatprep.mubr.f32.mxu0 0.0
        %4092 = vmatmul.mubr.f32.gmra.mrb[0].mxu0 %v3950
        %v4093 = vpop.f32.mrb[0].mxu0
        %v4094 = vadd.f32 0.0, %v4093
        %v4095 = vpop.f32.mrb[0].mxu0
        %4096 = vdwg.mxu0
        %v4098 = vsel %vm2274, %v3872, 0
        %v4101 = vsel %vm2274, %v3873, 0
        %v4104 = vsel %vm2274, %v3874, 0
        %v4107 = vsel %vm2274, %v3875, 0
        %v4110 = vsel %vm2274, %v3876, 0
        %v4113 = vsel %vm2274, %v3877, 0
        %v4116 = vsel %vm2274, %v3878, 0
        %v4119 = vsel %vm2274, %v3879, 0
        %v4122 = vsel %vm2274, %v3880, 0
        %v4125 = vsel %vm2274, %v3881, 0
        %v4128 = vsel %vm2274, %v3882, 0
        %v4131 = vsel %vm2274, %v3883, 0
        %v4134 = vsel %vm2274, %v3884, 0
        %v4137 = vsel %vm2274, %v3885, 0
        %v4140 = vsel %vm2274, %v3886, 0
        %v4143 = vsel %vm2274, %v3887, 0
        %4145 = vmatprep.subr.mxu0 0.0
        %4146 = vmatpush1.msra.mxu0 %v3564
        %4147 = vmatprep.subr.mxu0 0.0
        %4148 = vmatpush1.msra.mxu0 %v3569
        %4149 = vmatprep.subr.mxu0 0.0
        %4150 = vmatpush1.msra.mxu0 %v3574
        %4151 = vmatprep.subr.mxu0 0.0
        %4152 = vmatpush1.msra.mxu0 %v3579
        %4153 = vmatprep.subr.mxu0 0.0
        %4154 = vmatpush1.msra.mxu0 %v3584
        %4155 = vmatprep.subr.mxu0 0.0
        %4156 = vmatpush1.msra.mxu0 %v3589
        %4157 = vmatprep.subr.mxu0 0.0
        %4158 = vmatpush1.msra.mxu0 %v3594
        %4159 = vmatprep.subr.mxu0 0.0
        %4160 = vmatpush1.msra.mxu0 %v3599
        %4161 = vmatprep.subr.mxu0 0.0
        %4162 = vmatpush1.msra.mxu0 %v3604
        %4163 = vmatprep.subr.mxu0 0.0
        %4164 = vmatpush1.msra.mxu0 %v3609
        %4165 = vmatprep.subr.mxu0 0.0
        %4166 = vmatpush1.msra.mxu0 %v3614
        %4167 = vmatprep.subr.mxu0 0.0
        %4168 = vmatpush1.msra.mxu0 %v3619
        %4169 = vmatprep.subr.mxu0 0.0
        %4170 = vmatpush1.msra.mxu0 0.0
        %4171 = vmatprep.subr.mxu0 0.0
        %4172 = vmatpush1.msra.mxu0 0.0
        %4173 = vmatprep.subr.mxu0 0.0
        %4174 = vmatpush1.msra.mxu0 0.0
        %4175 = vmatprep.subr.mxu0 0.0
        %4176 = vmatpush1.msra.mxu0 0.0
        %4177 = vmatprep.subr.mxu0 0.0
        %4178 = vmatpush1.msra.mxu0 0.0
        %4179 = vmatprep.subr.mxu0 0.0
        %4180 = vmatpush1.msra.mxu0 0.0
        %4181 = vmatprep.subr.mxu0 0.0
        %4182 = vmatpush1.msra.mxu0 0.0
        %4183 = vmatprep.subr.mxu0 0.0
        %4184 = vmatpush1.msra.mxu0 0.0
        %4185 = vmatprep.subr.mxu0 0.0
        %4186 = vmatpush1.msra.mxu0 0.0
        %4187 = vmatprep.subr.mxu0 0.0
        %4188 = vmatpush1.msra.mxu0 0.0
        %4189 = vmatprep.subr.mxu0 0.0
        %4190 = vmatpush1.msra.mxu0 0.0
        %4191 = vmatprep.subr.mxu0 0.0
        %4192 = vmatpush1.msra.mxu0 0.0
        %4193 = vmatprep.subr.mxu0 0.0
        %4194 = vmatpush1.msra.mxu0 0.0
        %4195 = vmatprep.subr.mxu0 0.0
        %4196 = vmatpush1.msra.mxu0 0.0
        %4197 = vmatprep.subr.mxu0 0.0
        %4198 = vmatpush1.msra.mxu0 0.0
        %4199 = vmatprep.subr.mxu0 0.0
        %4200 = vmatpush1.msra.mxu0 0.0
        %4201 = vmatprep.subr.mxu0 0.0
        %4202 = vmatpush1.msra.mxu0 0.0
        %4203 = vmatprep.subr.mxu0 0.0
        %4204 = vmatpush1.msra.mxu0 0.0
        %4205 = vmatprep.subr.mxu0 0.0
        %4206 = vmatpush1.msra.mxu0 0.0
        %4207 = vmatprep.subr.mxu0 0.0
        %4208 = vmatpush1.msra.mxu0 0.0
        %4209 = vmatprep.mubr.f32.mxu0 0.0
        %4210 = vmatmul.mubr.f32.gmra.mrb[0].mxu0 %v4098
        %v4211 = vpop.f32.mrb[0].mxu0
        %v4212 = vadd.f32 %v4019, %v4211
        %v4213 = vpop.f32.mrb[0].mxu0
        %4214 = vmatprep.mubr.f32.mxu0 0.0
        %4215 = vmatmul.mubr.f32.gmra.mrb[0].mxu0 %v4101
        %v4216 = vpop.f32.mrb[0].mxu0
        %v4217 = vadd.f32 %v4024, %v4216
        %v4218 = vpop.f32.mrb[0].mxu0
        %4219 = vmatprep.mubr.f32.mxu0 0.0
        %4220 = vmatmul.mubr.f32.gmra.mrb[0].mxu0 %v4104
        %v4221 = vpop.f32.mrb[0].mxu0
        %v4222 = vadd.f32 %v4029, %v4221
        %v4223 = vpop.f32.mrb[0].mxu0
        %4224 = vmatprep.mubr.f32.mxu0 0.0
        %4225 = vmatmul.mubr.f32.gmra.mrb[0].mxu0 %v4107
        %v4226 = vpop.f32.mrb[0].mxu0
        %v4227 = vadd.f32 %v4034, %v4226
        %v4228 = vpop.f32.mrb[0].mxu0
        %4229 = vmatprep.mubr.f32.mxu0 0.0
        %4230 = vmatmul.mubr.f32.gmra.mrb[0].mxu0 %v4110
        %v4231 = vpop.f32.mrb[0].mxu0
        %v4232 = vadd.f32 %v4039, %v4231
        %v4233 = vpop.f32.mrb[0].mxu0
        %4234 = vmatprep.mubr.f32.mxu0 0.0
        %4235 = vmatmul.mubr.f32.gmra.mrb[0].mxu0 %v4113
        %v4236 = vpop.f32.mrb[0].mxu0
        %v4237 = vadd.f32 %v4044, %v4236
        %v4238 = vpop.f32.mrb[0].mxu0
        %4239 = vmatprep.mubr.f32.mxu0 0.0
        %4240 = vmatmul.mubr.f32.gmra.mrb[0].mxu0 %v4116
        %v4241 = vpop.f32.mrb[0].mxu0
        %v4242 = vadd.f32 %v4049, %v4241
        %v4243 = vpop.f32.mrb[0].mxu0
        %4244 = vmatprep.mubr.f32.mxu0 0.0
        %4245 = vmatmul.mubr.f32.gmra.mrb[0].mxu0 %v4119
        %v4246 = vpop.f32.mrb[0].mxu0
        %v4247 = vadd.f32 %v4054, %v4246
        %v4248 = vpop.f32.mrb[0].mxu0
        %4249 = vmatprep.mubr.f32.mxu0 0.0
        %4250 = vmatmul.mubr.f32.gmra.mrb[0].mxu0 %v4122
        %v4251 = vpop.f32.mrb[0].mxu0
        %v4252 = vadd.f32 %v4059, %v4251
        %v4253 = vpop.f32.mrb[0].mxu0
        %4254 = vmatprep.mubr.f32.mxu0 0.0
        %4255 = vmatmul.mubr.f32.gmra.mrb[0].mxu0 %v4125
        %v4256 = vpop.f32.mrb[0].mxu0
        %v4257 = vadd.f32 %v4064, %v4256
        %v4258 = vpop.f32.mrb[0].mxu0
        %4259 = vmatprep.mubr.f32.mxu0 0.0
        %4260 = vmatmul.mubr.f32.gmra.mrb[0].mxu0 %v4128
        %v4261 = vpop.f32.mrb[0].mxu0
        %v4262 = vadd.f32 %v4069, %v4261
        %v4263 = vpop.f32.mrb[0].mxu0
        %4264 = vmatprep.mubr.f32.mxu0 0.0
        %4265 = vmatmul.mubr.f32.gmra.mrb[0].mxu0 %v4131
        %v4266 = vpop.f32.mrb[0].mxu0
        %v4267 = vadd.f32 %v4074, %v4266
        %v4268 = vpop.f32.mrb[0].mxu0
        %4269 = vmatprep.mubr.f32.mxu0 0.0
        %4270 = vmatmul.mubr.f32.gmra.mrb[0].mxu0 %v4134
        %v4271 = vpop.f32.mrb[0].mxu0
        %v4272 = vadd.f32 %v4079, %v4271
        %v4273 = vpop.f32.mrb[0].mxu0
        %4274 = vmatprep.mubr.f32.mxu0 0.0
        %4275 = vmatmul.mubr.f32.gmra.mrb[0].mxu0 %v4137
        %v4276 = vpop.f32.mrb[0].mxu0
        %v4277 = vadd.f32 %v4084, %v4276
        %v4278 = vpop.f32.mrb[0].mxu0
        %4279 = vmatprep.mubr.f32.mxu0 0.0
        %4280 = vmatmul.mubr.f32.gmra.mrb[0].mxu0 %v4140
        %v4281 = vpop.f32.mrb[0].mxu0
        %v4282 = vadd.f32 %v4089, %v4281
        %v4283 = vpop.f32.mrb[0].mxu0
        %4284 = vmatprep.mubr.f32.mxu0 0.0
        %4285 = vmatmul.mubr.f32.gmra.mrb[0].mxu0 %v4143
        %v4286 = vpop.f32.mrb[0].mxu0
        %v4287 = vadd.f32 %v4094, %v4286
        %v4288 = vpop.f32.mrb[0].mxu0
        %4289 = vdwg.mxu0
        %v4290 = vadd.f32 %v865, %v4212
        %v4291 = vadd.f32 %v870, %v4217
        %v4292 = vadd.f32 %v875, %v4222
        %v4293 = vadd.f32 %v880, %v4227
        %v4294 = vadd.f32 %v885, %v4232
        %v4295 = vadd.f32 %v890, %v4237
        %v4296 = vadd.f32 %v895, %v4242
        %v4297 = vadd.f32 %v900, %v4247
        %v4298 = vadd.f32 %v905, %v4252
        %v4299 = vadd.f32 %v910, %v4257
        %v4300 = vadd.f32 %v915, %v4262
        %v4301 = vadd.f32 %v920, %v4267
        %v4302 = vadd.f32 %v925, %v4272
        %v4303 = vadd.f32 %v930, %v4277
        %v4304 = vadd.f32 %v935, %v4282
        %v4305 = vadd.f32 %v940, %v4287
        %v4306 = vld [vmem:[%s7 + $0x2] sm:$0x1]
        %v4307 = vld [vmem:[%s7 + $0x3] sm:$0x1]
        %v4308 = vsel %vm945, %v4290, 0.0
        %4309 = vadd.xlane.f32.xlu0 %v4308
        %v4310 = vpop.xlane.xlu0 %4309
        %v4311 = vsel %vm945, %v4291, 0.0
        %4312 = vadd.xlane.f32.xlu0 %v4311
        %v4313 = vpop.xlane.xlu0 %4312
        %v4314 = vsel %vm945, %v4292, 0.0
        %4315 = vadd.xlane.f32.xlu0 %v4314
        %v4316 = vpop.xlane.xlu0 %4315
        %v4317 = vsel %vm945, %v4293, 0.0
        %4318 = vadd.xlane.f32.xlu0 %v4317
        %v4319 = vpop.xlane.xlu0 %4318
        %v4320 = vsel %vm945, %v4294, 0.0
        %4321 = vadd.xlane.f32.xlu0 %v4320
        %v4322 = vpop.xlane.xlu0 %4321
        %v4323 = vsel %vm945, %v4295, 0.0
        %4324 = vadd.xlane.f32.xlu0 %v4323
        %v4325 = vpop.xlane.xlu0 %4324
        %v4326 = vsel %vm945, %v4296, 0.0
        %4327 = vadd.xlane.f32.xlu0 %v4326
        %v4328 = vpop.xlane.xlu0 %4327
        %v4329 = vsel %vm945, %v4297, 0.0
        %4330 = vadd.xlane.f32.xlu0 %v4329
        %v4331 = vpop.xlane.xlu0 %4330
        %v4332 = vsel %vm945, %v4298, 0.0
        %4333 = vadd.xlane.f32.xlu0 %v4332
        %v4334 = vpop.xlane.xlu0 %4333
        %v4335 = vsel %vm945, %v4299, 0.0
        %4336 = vadd.xlane.f32.xlu0 %v4335
        %v4337 = vpop.xlane.xlu0 %4336
        %v4338 = vsel %vm945, %v4300, 0.0
        %4339 = vadd.xlane.f32.xlu0 %v4338
        %v4340 = vpop.xlane.xlu0 %4339
        %v4341 = vsel %vm945, %v4301, 0.0
        %4342 = vadd.xlane.f32.xlu0 %v4341
        %v4343 = vpop.xlane.xlu0 %4342
        %v4344 = vsel %vm945, %v4302, 0.0
        %4345 = vadd.xlane.f32.xlu0 %v4344
        %v4346 = vpop.xlane.xlu0 %4345
        %v4347 = vsel %vm945, %v4303, 0.0
        %4348 = vadd.xlane.f32.xlu0 %v4347
        %v4349 = vpop.xlane.xlu0 %4348
        %v4350 = vsel %vm945, %v4304, 0.0
        %4351 = vadd.xlane.f32.xlu0 %v4350
        %v4352 = vpop.xlane.xlu0 %4351
        %v4353 = vsel %vm945, %v4305, 0.0
        %4354 = vadd.xlane.f32.xlu0 %v4353
        %v4355 = vpop.xlane.xlu0 %4354
        %v4356 = vmul.f32 %v4310, %v994
        %v4357 = vmul.f32 %v4313, %v994
        %v4358 = vmul.f32 %v4316, %v994
        %v4359 = vmul.f32 %v4319, %v994
        %v4360 = vmul.f32 %v4322, %v994
        %v4361 = vmul.f32 %v4325, %v994
        %v4362 = vmul.f32 %v4328, %v994
        %v4363 = vmul.f32 %v4331, %v994
        %v4364 = vmul.f32 %v4334, %v994
        %v4365 = vmul.f32 %v4337, %v994
        %v4366 = vmul.f32 %v4340, %v994
        %v4367 = vmul.f32 %v4343, %v994
        %v4368 = vmul.f32 %v4346, %v994
        %v4369 = vmul.f32 %v4349, %v994
        %v4370 = vmul.f32 %v4352, %v994
        %v4371 = vmul.f32 %v4355, %v994
        %v4372 = vsub.f32 %v4290, %v4356
        %v4373 = vsub.f32 %v4291, %v4357
        %v4374 = vsub.f32 %v4292, %v4358
        %v4375 = vsub.f32 %v4293, %v4359
        %v4376 = vsub.f32 %v4294, %v4360
        %v4377 = vsub.f32 %v4295, %v4361
        %v4378 = vsub.f32 %v4296, %v4362
        %v4379 = vsub.f32 %v4297, %v4363
        %v4380 = vsub.f32 %v4298, %v4364
        %v4381 = vsub.f32 %v4299, %v4365
        %v4382 = vsub.f32 %v4300, %v4366
        %v4383 = vsub.f32 %v4301, %v4367
        %v4384 = vsub.f32 %v4302, %v4368
        %v4385 = vsub.f32 %v4303, %v4369
        %v4386 = vsub.f32 %v4304, %v4370
        %v4387 = vsub.f32 %v4305, %v4371
        %v4388 = vmul.f32 %v4372, %v4372
        %v4389 = vmul.f32 %v4373, %v4373
        %v4390 = vmul.f32 %v4374, %v4374
        %v4391 = vmul.f32 %v4375, %v4375
        %v4392 = vmul.f32 %v4376, %v4376
        %v4393 = vmul.f32 %v4377, %v4377
        %v4394 = vmul.f32 %v4378, %v4378
        %v4395 = vmul.f32 %v4379, %v4379
        %v4396 = vmul.f32 %v4380, %v4380
        %v4397 = vmul.f32 %v4381, %v4381
        %v4398 = vmul.f32 %v4382, %v4382
        %v4399 = vmul.f32 %v4383, %v4383
        %v4400 = vmul.f32 %v4384, %v4384
        %v4401 = vmul.f32 %v4385, %v4385
        %v4402 = vmul.f32 %v4386, %v4386
        %v4403 = vmul.f32 %v4387, %v4387
        %v4404 = vsel %vm945, %v4388, 0.0
        %4405 = vadd.xlane.f32.xlu0 %v4404
        %v4406 = vpop.xlane.xlu0 %4405
        %v4407 = vsel %vm945, %v4389, 0.0
        %4408 = vadd.xlane.f32.xlu0 %v4407
        %v4409 = vpop.xlane.xlu0 %4408
        %v4410 = vsel %vm945, %v4390, 0.0
        %4411 = vadd.xlane.f32.xlu0 %v4410
        %v4412 = vpop.xlane.xlu0 %4411
        %v4413 = vsel %vm945, %v4391, 0.0
        %4414 = vadd.xlane.f32.xlu0 %v4413
        %v4415 = vpop.xlane.xlu0 %4414
        %v4416 = vsel %vm945, %v4392, 0.0
        %4417 = vadd.xlane.f32.xlu0 %v4416
        %v4418 = vpop.xlane.xlu0 %4417
        %v4419 = vsel %vm945, %v4393, 0.0
        %4420 = vadd.xlane.f32.xlu0 %v4419
        %v4421 = vpop.xlane.xlu0 %4420
        %v4422 = vsel %vm945, %v4394, 0.0
        %4423 = vadd.xlane.f32.xlu0 %v4422
        %v4424 = vpop.xlane.xlu0 %4423
        %v4425 = vsel %vm945, %v4395, 0.0
        %4426 = vadd.xlane.f32.xlu0 %v4425
        %v4427 = vpop.xlane.xlu0 %4426
        %v4428 = vsel %vm945, %v4396, 0.0
        %4429 = vadd.xlane.f32.xlu0 %v4428
        %v4430 = vpop.xlane.xlu0 %4429
        %v4431 = vsel %vm945, %v4397, 0.0
        %4432 = vadd.xlane.f32.xlu0 %v4431
        %v4433 = vpop.xlane.xlu0 %4432
        %v4434 = vsel %vm945, %v4398, 0.0
        %4435 = vadd.xlane.f32.xlu0 %v4434
        %v4436 = vpop.xlane.xlu0 %4435
        %v4437 = vsel %vm945, %v4399, 0.0
        %4438 = vadd.xlane.f32.xlu0 %v4437
        %v4439 = vpop.xlane.xlu0 %4438
        %v4440 = vsel %vm945, %v4400, 0.0
        %4441 = vadd.xlane.f32.xlu0 %v4440
        %v4442 = vpop.xlane.xlu0 %4441
        %v4443 = vsel %vm945, %v4401, 0.0
        %4444 = vadd.xlane.f32.xlu0 %v4443
        %v4445 = vpop.xlane.xlu0 %4444
        %v4446 = vsel %vm945, %v4402, 0.0
        %4447 = vadd.xlane.f32.xlu0 %v4446
        %v4448 = vpop.xlane.xlu0 %4447
        %v4449 = vsel %vm945, %v4403, 0.0
        %4450 = vadd.xlane.f32.xlu0 %v4449
        %v4451 = vpop.xlane.xlu0 %4450
        %v4452 = vmul.f32 %v4406, %v994
        %v4453 = vmul.f32 %v4409, %v994
        %v4454 = vmul.f32 %v4412, %v994
        %v4455 = vmul.f32 %v4415, %v994
        %v4456 = vmul.f32 %v4418, %v994
        %v4457 = vmul.f32 %v4421, %v994
        %v4458 = vmul.f32 %v4424, %v994
        %v4459 = vmul.f32 %v4427, %v994
        %v4460 = vmul.f32 %v4430, %v994
        %v4461 = vmul.f32 %v4433, %v994
        %v4462 = vmul.f32 %v4436, %v994
        %v4463 = vmul.f32 %v4439, %v994
        %v4464 = vmul.f32 %v4442, %v994
        %v4465 = vmul.f32 %v4445, %v994
        %v4466 = vmul.f32 %v4448, %v994
        %v4467 = vmul.f32 %v4451, %v994
        %v4468 = vadd.f32 %v4452, 1e-06
        %v4469 = vadd.f32 %v4453, 1e-06
        %v4470 = vadd.f32 %v4454, 1e-06
        %v4471 = vadd.f32 %v4455, 1e-06
        %v4472 = vadd.f32 %v4456, 1e-06
        %v4473 = vadd.f32 %v4457, 1e-06
        %v4474 = vadd.f32 %v4458, 1e-06
        %v4475 = vadd.f32 %v4459, 1e-06
        %v4476 = vadd.f32 %v4460, 1e-06
        %v4477 = vadd.f32 %v4461, 1e-06
        %v4478 = vadd.f32 %v4462, 1e-06
        %v4479 = vadd.f32 %v4463, 1e-06
        %v4480 = vadd.f32 %v4464, 1e-06
        %v4481 = vadd.f32 %v4465, 1e-06
        %v4482 = vadd.f32 %v4466, 1e-06
        %v4483 = vadd.f32 %v4467, 1e-06
        %v4484 = vrsqrt.pop %v4468
        %v4485 = vrsqrt.pop %v4469
        %v4486 = vrsqrt.pop %v4470
        %v4487 = vrsqrt.pop %v4471
        %v4488 = vrsqrt.pop %v4472
        %v4489 = vrsqrt.pop %v4473
        %v4490 = vrsqrt.pop %v4474
        %v4491 = vrsqrt.pop %v4475
        %v4492 = vrsqrt.pop %v4476
        %v4493 = vrsqrt.pop %v4477
        %v4494 = vrsqrt.pop %v4478
        %v4495 = vrsqrt.pop %v4479
        %v4496 = vrsqrt.pop %v4480
        %v4497 = vrsqrt.pop %v4481
        %v4498 = vrsqrt.pop %v4482
        %v4499 = vrsqrt.pop %v4483
        %v4500 = vmul.f32 %v4372, %v4484
        %v4501 = vmul.f32 %v4373, %v4485
        %v4502 = vmul.f32 %v4374, %v4486
        %v4503 = vmul.f32 %v4375, %v4487
        %v4504 = vmul.f32 %v4376, %v4488
        %v4505 = vmul.f32 %v4377, %v4489
        %v4506 = vmul.f32 %v4378, %v4490
        %v4507 = vmul.f32 %v4379, %v4491
        %v4508 = vmul.f32 %v4380, %v4492
        %v4509 = vmul.f32 %v4381, %v4493
        %v4510 = vmul.f32 %v4382, %v4494
        %v4511 = vmul.f32 %v4383, %v4495
        %v4512 = vmul.f32 %v4384, %v4496
        %v4513 = vmul.f32 %v4385, %v4497
        %v4514 = vmul.f32 %v4386, %v4498
        %v4515 = vmul.f32 %v4387, %v4499
        %v4516 = vlaneseq
        %v4517 = vshrl.u32 %v4516, 7
        %v4518 = vsub.s32 0, %v4517
        %v4519 = vrot.slane %v4306, %v4518
        %v4520 = vmul.f32 %v4500, %v4519
        %v4521 = vmul.f32 %v4501, %v4519
        %v4522 = vmul.f32 %v4502, %v4519
        %v4523 = vmul.f32 %v4503, %v4519
        %v4524 = vmul.f32 %v4504, %v4519
        %v4525 = vmul.f32 %v4505, %v4519
        %v4526 = vmul.f32 %v4506, %v4519
        %v4527 = vmul.f32 %v4507, %v4519
        %v4528 = vmul.f32 %v4508, %v4519
        %v4529 = vmul.f32 %v4509, %v4519
        %v4530 = vmul.f32 %v4510, %v4519
        %v4531 = vmul.f32 %v4511, %v4519
        %v4532 = vmul.f32 %v4512, %v4519
        %v4533 = vmul.f32 %v4513, %v4519
        %v4534 = vmul.f32 %v4514, %v4519
        %v4535 = vmul.f32 %v4515, %v4519
        %v4536 = vlaneseq
        %v4537 = vshrl.u32 %v4536, 7
        %v4538 = vsub.s32 0, %v4537
        %v4539 = vrot.slane %v4307, %v4538
        %v4540 = vadd.f32 %v4520, %v4539
        %v4541 = vadd.f32 %v4521, %v4539
        %v4542 = vadd.f32 %v4522, %v4539
        %v4543 = vadd.f32 %v4523, %v4539
        %v4544 = vadd.f32 %v4524, %v4539
        %v4545 = vadd.f32 %v4525, %v4539
        %v4546 = vadd.f32 %v4526, %v4539
        %v4547 = vadd.f32 %v4527, %v4539
        %v4548 = vadd.f32 %v4528, %v4539
        %v4549 = vadd.f32 %v4529, %v4539
        %v4550 = vadd.f32 %v4530, %v4539
        %v4551 = vadd.f32 %v4531, %v4539
        %v4552 = vadd.f32 %v4532, %v4539
        %v4553 = vadd.f32 %v4533, %v4539
        %v4554 = vadd.f32 %v4534, %v4539
        %v4555 = vadd.f32 %v4535, %v4539
        %v4556 = vld [vmem:[%s12] sm:$0xff]
        %v4557 = vld [vmem:[%s12 + $0x8] sm:$0xff]
        %v4558 = vld [vmem:[%s13] sm:$0x1]
        %v4559 = vlaneseq
        %v4560 = vshrl.u32 %v4559, 7
        %v4561 = vsub.s32 0, %v4560
        %v4562 = vrot.slane %v4558, %v4561
        %v4564 = vsel %vm945, %v4540, 0
        %v4567 = vsel %vm945, %v4541, 0
        %v4570 = vsel %vm945, %v4542, 0
        %v4573 = vsel %vm945, %v4543, 0
        %v4576 = vsel %vm945, %v4544, 0
        %v4579 = vsel %vm945, %v4545, 0
        %v4582 = vsel %vm945, %v4546, 0
        %v4585 = vsel %vm945, %v4547, 0
        %v4588 = vsel %vm945, %v4548, 0
        %v4591 = vsel %vm945, %v4549, 0
        %v4594 = vsel %vm945, %v4550, 0
        %v4597 = vsel %vm945, %v4551, 0
        %v4600 = vsel %vm945, %v4552, 0
        %v4603 = vsel %vm945, %v4553, 0
        %v4606 = vsel %vm945, %v4554, 0
        %v4609 = vsel %vm945, %v4555, 0
        %4611 = vmatprep.subr.mxu0 0.0
        %4612 = vmatpush1.msra.mxu0 %v4556
        %4613 = vmatprep.subr.mxu0 0.0
        %4614 = vmatpush1.msra.mxu0 %v4557
        %4615 = vmatprep.subr.mxu0 0.0
        %4616 = vmatpush1.msra.mxu0 0.0
        %4617 = vmatprep.subr.mxu0 0.0
        %4618 = vmatpush1.msra.mxu0 0.0
        %4619 = vmatprep.subr.mxu0 0.0
        %4620 = vmatpush1.msra.mxu0 0.0
        %4621 = vmatprep.subr.mxu0 0.0
        %4622 = vmatpush1.msra.mxu0 0.0
        %4623 = vmatprep.subr.mxu0 0.0
        %4624 = vmatpush1.msra.mxu0 0.0
        %4625 = vmatprep.subr.mxu0 0.0
        %4626 = vmatpush1.msra.mxu0 0.0
        %4627 = vmatprep.subr.mxu0 0.0
        %4628 = vmatpush1.msra.mxu0 0.0
        %4629 = vmatprep.subr.mxu0 0.0
        %4630 = vmatpush1.msra.mxu0 0.0
        %4631 = vmatprep.subr.mxu0 0.0
        %4632 = vmatpush1.msra.mxu0 0.0
        %4633 = vmatprep.subr.mxu0 0.0
        %4634 = vmatpush1.msra.mxu0 0.0
        %4635 = vmatprep.subr.mxu0 0.0
        %4636 = vmatpush1.msra.mxu0 0.0
        %4637 = vmatprep.subr.mxu0 0.0
        %4638 = vmatpush1.msra.mxu0 0.0
        %4639 = vmatprep.subr.mxu0 0.0
        %4640 = vmatpush1.msra.mxu0 0.0
        %4641 = vmatprep.subr.mxu0 0.0
        %4642 = vmatpush1.msra.mxu0 0.0
        %4643 = vmatprep.subr.mxu0 0.0
        %4644 = vmatpush1.msra.mxu0 0.0
        %4645 = vmatprep.subr.mxu0 0.0
        %4646 = vmatpush1.msra.mxu0 0.0
        %4647 = vmatprep.subr.mxu0 0.0
        %4648 = vmatpush1.msra.mxu0 0.0
        %4649 = vmatprep.subr.mxu0 0.0
        %4650 = vmatpush1.msra.mxu0 0.0
        %4651 = vmatprep.subr.mxu0 0.0
        %4652 = vmatpush1.msra.mxu0 0.0
        %4653 = vmatprep.subr.mxu0 0.0
        %4654 = vmatpush1.msra.mxu0 0.0
        %4655 = vmatprep.subr.mxu0 0.0
        %4656 = vmatpush1.msra.mxu0 0.0
        %4657 = vmatprep.subr.mxu0 0.0
        %4658 = vmatpush1.msra.mxu0 0.0
        %4659 = vmatprep.subr.mxu0 0.0
        %4660 = vmatpush1.msra.mxu0 0.0
        %4661 = vmatprep.subr.mxu0 0.0
        %4662 = vmatpush1.msra.mxu0 0.0
        %4663 = vmatprep.subr.mxu0 0.0
        %4664 = vmatpush1.msra.mxu0 0.0
        %4665 = vmatprep.subr.mxu0 0.0
        %4666 = vmatpush1.msra.mxu0 0.0
        %4667 = vmatprep.subr.mxu0 0.0
        %4668 = vmatpush1.msra.mxu0 0.0
        %4669 = vmatprep.subr.mxu0 0.0
        %4670 = vmatpush1.msra.mxu0 0.0
        %4671 = vmatprep.subr.mxu0 0.0
        %4672 = vmatpush1.msra.mxu0 0.0
        %4673 = vmatprep.subr.mxu0 0.0
        %4674 = vmatpush1.msra.mxu0 0.0
        %4675 = vmatprep.mubr.f32.mxu0 0.0
        %4676 = vmatmul.mubr.f32.gmra.mrb[0].mxu0 %v4564
        %v4677 = vpop.f32.mrb[0].mxu0
        %v4678 = vadd.f32 %v4562, %v4677
        %v4679 = vpop.f32.mrb[0].mxu0
        %4680 = vmatprep.mubr.f32.mxu0 0.0
        %4681 = vmatmul.mubr.f32.gmra.mrb[0].mxu0 %v4567
        %v4682 = vpop.f32.mrb[0].mxu0
        %v4683 = vadd.f32 %v4562, %v4682
        %v4684 = vpop.f32.mrb[0].mxu0
        %4685 = vmatprep.mubr.f32.mxu0 0.0
        %4686 = vmatmul.mubr.f32.gmra.mrb[0].mxu0 %v4570
        %v4687 = vpop.f32.mrb[0].mxu0
        %v4688 = vadd.f32 %v4562, %v4687
        %v4689 = vpop.f32.mrb[0].mxu0
        %4690 = vmatprep.mubr.f32.mxu0 0.0
        %4691 = vmatmul.mubr.f32.gmra.mrb[0].mxu0 %v4573
        %v4692 = vpop.f32.mrb[0].mxu0
        %v4693 = vadd.f32 %v4562, %v4692
        %v4694 = vpop.f32.mrb[0].mxu0
        %4695 = vmatprep.mubr.f32.mxu0 0.0
        %4696 = vmatmul.mubr.f32.gmra.mrb[0].mxu0 %v4576
        %v4697 = vpop.f32.mrb[0].mxu0
        %v4698 = vadd.f32 %v4562, %v4697
        %v4699 = vpop.f32.mrb[0].mxu0
        %4700 = vmatprep.mubr.f32.mxu0 0.0
        %4701 = vmatmul.mubr.f32.gmra.mrb[0].mxu0 %v4579
        %v4702 = vpop.f32.mrb[0].mxu0
        %v4703 = vadd.f32 %v4562, %v4702
        %v4704 = vpop.f32.mrb[0].mxu0
        %4705 = vmatprep.mubr.f32.mxu0 0.0
        %4706 = vmatmul.mubr.f32.gmra.mrb[0].mxu0 %v4582
        %v4707 = vpop.f32.mrb[0].mxu0
        %v4708 = vadd.f32 %v4562, %v4707
        %v4709 = vpop.f32.mrb[0].mxu0
        %4710 = vmatprep.mubr.f32.mxu0 0.0
        %4711 = vmatmul.mubr.f32.gmra.mrb[0].mxu0 %v4585
        %v4712 = vpop.f32.mrb[0].mxu0
        %v4713 = vadd.f32 %v4562, %v4712
        %v4714 = vpop.f32.mrb[0].mxu0
        %4715 = vmatprep.mubr.f32.mxu0 0.0
        %4716 = vmatmul.mubr.f32.gmra.mrb[0].mxu0 %v4588
        %v4717 = vpop.f32.mrb[0].mxu0
        %v4718 = vadd.f32 %v4562, %v4717
        %v4719 = vpop.f32.mrb[0].mxu0
        %4720 = vmatprep.mubr.f32.mxu0 0.0
        %4721 = vmatmul.mubr.f32.gmra.mrb[0].mxu0 %v4591
        %v4722 = vpop.f32.mrb[0].mxu0
        %v4723 = vadd.f32 %v4562, %v4722
        %v4724 = vpop.f32.mrb[0].mxu0
        %4725 = vmatprep.mubr.f32.mxu0 0.0
        %4726 = vmatmul.mubr.f32.gmra.mrb[0].mxu0 %v4594
        %v4727 = vpop.f32.mrb[0].mxu0
        %v4728 = vadd.f32 %v4562, %v4727
        %v4729 = vpop.f32.mrb[0].mxu0
        %4730 = vmatprep.mubr.f32.mxu0 0.0
        %4731 = vmatmul.mubr.f32.gmra.mrb[0].mxu0 %v4597
        %v4732 = vpop.f32.mrb[0].mxu0
        %v4733 = vadd.f32 %v4562, %v4732
        %v4734 = vpop.f32.mrb[0].mxu0
        %4735 = vmatprep.mubr.f32.mxu0 0.0
        %4736 = vmatmul.mubr.f32.gmra.mrb[0].mxu0 %v4600
        %v4737 = vpop.f32.mrb[0].mxu0
        %v4738 = vadd.f32 %v4562, %v4737
        %v4739 = vpop.f32.mrb[0].mxu0
        %4740 = vmatprep.mubr.f32.mxu0 0.0
        %4741 = vmatmul.mubr.f32.gmra.mrb[0].mxu0 %v4603
        %v4742 = vpop.f32.mrb[0].mxu0
        %v4743 = vadd.f32 %v4562, %v4742
        %v4744 = vpop.f32.mrb[0].mxu0
        %4745 = vmatprep.mubr.f32.mxu0 0.0
        %4746 = vmatmul.mubr.f32.gmra.mrb[0].mxu0 %v4606
        %v4747 = vpop.f32.mrb[0].mxu0
        %v4748 = vadd.f32 %v4562, %v4747
        %v4749 = vpop.f32.mrb[0].mxu0
        %4750 = vmatprep.mubr.f32.mxu0 0.0
        %4751 = vmatmul.mubr.f32.gmra.mrb[0].mxu0 %v4609
        %v4752 = vpop.f32.mrb[0].mxu0
        %v4753 = vadd.f32 %v4562, %v4752
        %v4754 = vpop.f32.mrb[0].mxu0
        %4755 = vdwg.mxu0
        %v4756 = vmul.f32 %v4678, 0.5
        %v4757 = vmul.f32 %v4683, 0.5
        %v4758 = vmul.f32 %v4688, 0.5
        %v4759 = vmul.f32 %v4693, 0.5
        %v4760 = vmul.f32 %v4698, 0.5
        %v4761 = vmul.f32 %v4703, 0.5
        %v4762 = vmul.f32 %v4708, 0.5
        %v4763 = vmul.f32 %v4713, 0.5
        %v4764 = vmul.f32 %v4718, 0.5
        %v4765 = vmul.f32 %v4723, 0.5
        %v4766 = vmul.f32 %v4728, 0.5
        %v4767 = vmul.f32 %v4733, 0.5
        %v4768 = vmul.f32 %v4738, 0.5
        %v4769 = vmul.f32 %v4743, 0.5
        %v4770 = vmul.f32 %v4748, 0.5
        %v4771 = vmul.f32 %v4753, 0.5
        %v4772 = vmul.f32 %v4678, 0.70710677
        %v4773 = vmul.f32 %v4683, 0.70710677
        %v4774 = vmul.f32 %v4688, 0.70710677
        %v4775 = vmul.f32 %v4693, 0.70710677
        %v4776 = vmul.f32 %v4698, 0.70710677
        %v4777 = vmul.f32 %v4703, 0.70710677
        %v4778 = vmul.f32 %v4708, 0.70710677
        %v4779 = vmul.f32 %v4713, 0.70710677
        %v4780 = vmul.f32 %v4718, 0.70710677
        %v4781 = vmul.f32 %v4723, 0.70710677
        %v4782 = vmul.f32 %v4728, 0.70710677
        %v4783 = vmul.f32 %v4733, 0.70710677
        %v4784 = vmul.f32 %v4738, 0.70710677
        %v4785 = vmul.f32 %v4743, 0.70710677
        %v4786 = vmul.f32 %v4748, 0.70710677
        %v4787 = vmul.f32 %v4753, 0.70710677
        %v4788 = verf.f32.pop %v4772
        %v4789 = verf.f32.pop %v4773
        %v4790 = verf.f32.pop %v4774
        %v4791 = verf.f32.pop %v4775
        %v4792 = verf.f32.pop %v4776
        %v4793 = verf.f32.pop %v4777
        %v4794 = verf.f32.pop %v4778
        %v4795 = verf.f32.pop %v4779
        %v4796 = verf.f32.pop %v4780
        %v4797 = verf.f32.pop %v4781
        %v4798 = verf.f32.pop %v4782
        %v4799 = verf.f32.pop %v4783
        %v4800 = verf.f32.pop %v4784
        %v4801 = verf.f32.pop %v4785
        %v4802 = verf.f32.pop %v4786
        %v4803 = verf.f32.pop %v4787
        %v4804 = vadd.f32 %v4788, 1.0
        %v4805 = vadd.f32 %v4789, 1.0
        %v4806 = vadd.f32 %v4790, 1.0
        %v4807 = vadd.f32 %v4791, 1.0
        %v4808 = vadd.f32 %v4792, 1.0
        %v4809 = vadd.f32 %v4793, 1.0
        %v4810 = vadd.f32 %v4794, 1.0
        %v4811 = vadd.f32 %v4795, 1.0
        %v4812 = vadd.f32 %v4796, 1.0
        %v4813 = vadd.f32 %v4797, 1.0
        %v4814 = vadd.f32 %v4798, 1.0
        %v4815 = vadd.f32 %v4799, 1.0
        %v4816 = vadd.f32 %v4800, 1.0
        %v4817 = vadd.f32 %v4801, 1.0
        %v4818 = vadd.f32 %v4802, 1.0
        %v4819 = vadd.f32 %v4803, 1.0
        %v4820 = vmul.f32 %v4756, %v4804
        %v4821 = vmul.f32 %v4757, %v4805
        %v4822 = vmul.f32 %v4758, %v4806
        %v4823 = vmul.f32 %v4759, %v4807
        %v4824 = vmul.f32 %v4760, %v4808
        %v4825 = vmul.f32 %v4761, %v4809
        %v4826 = vmul.f32 %v4762, %v4810
        %v4827 = vmul.f32 %v4763, %v4811
        %v4828 = vmul.f32 %v4764, %v4812
        %v4829 = vmul.f32 %v4765, %v4813
        %v4830 = vmul.f32 %v4766, %v4814
        %v4831 = vmul.f32 %v4767, %v4815
        %v4832 = vmul.f32 %v4768, %v4816
        %v4833 = vmul.f32 %v4769, %v4817
        %v4834 = vmul.f32 %v4770, %v4818
        %v4835 = vmul.f32 %v4771, %v4819
        %v4836 = vld [vmem:[%s14] sm:$0xff]
        %v4837 = vld [vmem:[%s14 + $0x8] sm:$0xff]
        %v4838 = vld [vmem:[%s14 + $0x10] sm:$0xff]
        %v4839 = vld [vmem:[%s14 + $0x18] sm:$0xff]
        %v4840 = vld [vmem:[%s15] sm:$0x1]
        %v4841 = vlaneseq
        %v4842 = vshrl.u32 %v4841, 7
        %v4843 = vsub.s32 0, %v4842
        %v4844 = vrot.slane %v4840, %v4843
        %v4846 = vsel %vm1480, %v4820, 0
        %v4849 = vsel %vm1480, %v4821, 0
        %v4852 = vsel %vm1480, %v4822, 0
        %v4855 = vsel %vm1480, %v4823, 0
        %v4858 = vsel %vm1480, %v4824, 0
        %v4861 = vsel %vm1480, %v4825, 0
        %v4864 = vsel %vm1480, %v4826, 0
        %v4867 = vsel %vm1480, %v4827, 0
        %v4870 = vsel %vm1480, %v4828, 0
        %v4873 = vsel %vm1480, %v4829, 0
        %v4876 = vsel %vm1480, %v4830, 0
        %v4879 = vsel %vm1480, %v4831, 0
        %v4882 = vsel %vm1480, %v4832, 0
        %v4885 = vsel %vm1480, %v4833, 0
        %v4888 = vsel %vm1480, %v4834, 0
        %v4891 = vsel %vm1480, %v4835, 0
        %4893 = vmatprep.subr.mxu0 0.0
        %4894 = vmatpush1.msra.mxu0 %v4836
        %4895 = vmatprep.subr.mxu0 0.0
        %4896 = vmatpush1.msra.mxu0 %v4837
        %4897 = vmatprep.subr.mxu0 0.0
        %4898 = vmatpush1.msra.mxu0 %v4838
        %4899 = vmatprep.subr.mxu0 0.0
        %4900 = vmatpush1.msra.mxu0 %v4839
        %4901 = vmatprep.subr.mxu0 0.0
        %4902 = vmatpush1.msra.mxu0 0.0
        %4903 = vmatprep.subr.mxu0 0.0
        %4904 = vmatpush1.msra.mxu0 0.0
        %4905 = vmatprep.subr.mxu0 0.0
        %4906 = vmatpush1.msra.mxu0 0.0
        %4907 = vmatprep.subr.mxu0 0.0
        %4908 = vmatpush1.msra.mxu0 0.0
        %4909 = vmatprep.subr.mxu0 0.0
        %4910 = vmatpush1.msra.mxu0 0.0
        %4911 = vmatprep.subr.mxu0 0.0
        %4912 = vmatpush1.msra.mxu0 0.0
        %4913 = vmatprep.subr.mxu0 0.0
        %4914 = vmatpush1.msra.mxu0 0.0
        %4915 = vmatprep.subr.mxu0 0.0
        %4916 = vmatpush1.msra.mxu0 0.0
        %4917 = vmatprep.subr.mxu0 0.0
        %4918 = vmatpush1.msra.mxu0 0.0
        %4919 = vmatprep.subr.mxu0 0.0
        %4920 = vmatpush1.msra.mxu0 0.0
        %4921 = vmatprep.subr.mxu0 0.0
        %4922 = vmatpush1.msra.mxu0 0.0
        %4923 = vmatprep.subr.mxu0 0.0
        %4924 = vmatpush1.msra.mxu0 0.0
        %4925 = vmatprep.subr.mxu0 0.0
        %4926 = vmatpush1.msra.mxu0 0.0
        %4927 = vmatprep.subr.mxu0 0.0
        %4928 = vmatpush1.msra.mxu0 0.0
        %4929 = vmatprep.subr.mxu0 0.0
        %4930 = vmatpush1.msra.mxu0 0.0
        %4931 = vmatprep.subr.mxu0 0.0
        %4932 = vmatpush1.msra.mxu0 0.0
        %4933 = vmatprep.subr.mxu0 0.0
        %4934 = vmatpush1.msra.mxu0 0.0
        %4935 = vmatprep.subr.mxu0 0.0
        %4936 = vmatpush1.msra.mxu0 0.0
        %4937 = vmatprep.subr.mxu0 0.0
        %4938 = vmatpush1.msra.mxu0 0.0
        %4939 = vmatprep.subr.mxu0 0.0
        %4940 = vmatpush1.msra.mxu0 0.0
        %4941 = vmatprep.subr.mxu0 0.0
        %4942 = vmatpush1.msra.mxu0 0.0
        %4943 = vmatprep.subr.mxu0 0.0
        %4944 = vmatpush1.msra.mxu0 0.0
        %4945 = vmatprep.subr.mxu0 0.0
        %4946 = vmatpush1.msra.mxu0 0.0
        %4947 = vmatprep.subr.mxu0 0.0
        %4948 = vmatpush1.msra.mxu0 0.0
        %4949 = vmatprep.subr.mxu0 0.0
        %4950 = vmatpush1.msra.mxu0 0.0
        %4951 = vmatprep.subr.mxu0 0.0
        %4952 = vmatpush1.msra.mxu0 0.0
        %4953 = vmatprep.subr.mxu0 0.0
        %4954 = vmatpush1.msra.mxu0 0.0
        %4955 = vmatprep.subr.mxu0 0.0
        %4956 = vmatpush1.msra.mxu0 0.0
        %4957 = vmatprep.mubr.f32.mxu0 0.0
        %4958 = vmatmul.mubr.f32.gmra.mrb[0].mxu0 %v4846
        %v4959 = vpop.f32.mrb[0].mxu0
        %v4960 = vadd.f32 %v4844, %v4959
        %v4961 = vpop.f32.mrb[0].mxu0
        %4962 = vmatprep.mubr.f32.mxu0 0.0
        %4963 = vmatmul.mubr.f32.gmra.mrb[0].mxu0 %v4849
        %v4964 = vpop.f32.mrb[0].mxu0
        %v4965 = vadd.f32 %v4844, %v4964
        %v4966 = vpop.f32.mrb[0].mxu0
        %4967 = vmatprep.mubr.f32.mxu0 0.0
        %4968 = vmatmul.mubr.f32.gmra.mrb[0].mxu0 %v4852
        %v4969 = vpop.f32.mrb[0].mxu0
        %v4970 = vadd.f32 %v4844, %v4969
        %v4971 = vpop.f32.mrb[0].mxu0
        %4972 = vmatprep.mubr.f32.mxu0 0.0
        %4973 = vmatmul.mubr.f32.gmra.mrb[0].mxu0 %v4855
        %v4974 = vpop.f32.mrb[0].mxu0
        %v4975 = vadd.f32 %v4844, %v4974
        %v4976 = vpop.f32.mrb[0].mxu0
        %4977 = vmatprep.mubr.f32.mxu0 0.0
        %4978 = vmatmul.mubr.f32.gmra.mrb[0].mxu0 %v4858
        %v4979 = vpop.f32.mrb[0].mxu0
        %v4980 = vadd.f32 %v4844, %v4979
        %v4981 = vpop.f32.mrb[0].mxu0
        %4982 = vmatprep.mubr.f32.mxu0 0.0
        %4983 = vmatmul.mubr.f32.gmra.mrb[0].mxu0 %v4861
        %v4984 = vpop.f32.mrb[0].mxu0
        %v4985 = vadd.f32 %v4844, %v4984
        %v4986 = vpop.f32.mrb[0].mxu0
        %4987 = vmatprep.mubr.f32.mxu0 0.0
        %4988 = vmatmul.mubr.f32.gmra.mrb[0].mxu0 %v4864
        %v4989 = vpop.f32.mrb[0].mxu0
        %v4990 = vadd.f32 %v4844, %v4989
        %v4991 = vpop.f32.mrb[0].mxu0
        %4992 = vmatprep.mubr.f32.mxu0 0.0
        %4993 = vmatmul.mubr.f32.gmra.mrb[0].mxu0 %v4867
        %v4994 = vpop.f32.mrb[0].mxu0
        %v4995 = vadd.f32 %v4844, %v4994
        %v4996 = vpop.f32.mrb[0].mxu0
        %4997 = vmatprep.mubr.f32.mxu0 0.0
        %4998 = vmatmul.mubr.f32.gmra.mrb[0].mxu0 %v4870
        %v4999 = vpop.f32.mrb[0].mxu0
        %v5000 = vadd.f32 %v4844, %v4999
        %v5001 = vpop.f32.mrb[0].mxu0
        %5002 = vmatprep.mubr.f32.mxu0 0.0
        %5003 = vmatmul.mubr.f32.gmra.mrb[0].mxu0 %v4873
        %v5004 = vpop.f32.mrb[0].mxu0
        %v5005 = vadd.f32 %v4844, %v5004
        %v5006 = vpop.f32.mrb[0].mxu0
        %5007 = vmatprep.mubr.f32.mxu0 0.0
        %5008 = vmatmul.mubr.f32.gmra.mrb[0].mxu0 %v4876
        %v5009 = vpop.f32.mrb[0].mxu0
        %v5010 = vadd.f32 %v4844, %v5009
        %v5011 = vpop.f32.mrb[0].mxu0
        %5012 = vmatprep.mubr.f32.mxu0 0.0
        %5013 = vmatmul.mubr.f32.gmra.mrb[0].mxu0 %v4879
        %v5014 = vpop.f32.mrb[0].mxu0
        %v5015 = vadd.f32 %v4844, %v5014
        %v5016 = vpop.f32.mrb[0].mxu0
        %5017 = vmatprep.mubr.f32.mxu0 0.0
        %5018 = vmatmul.mubr.f32.gmra.mrb[0].mxu0 %v4882
        %v5019 = vpop.f32.mrb[0].mxu0
        %v5020 = vadd.f32 %v4844, %v5019
        %v5021 = vpop.f32.mrb[0].mxu0
        %5022 = vmatprep.mubr.f32.mxu0 0.0
        %5023 = vmatmul.mubr.f32.gmra.mrb[0].mxu0 %v4885
        %v5024 = vpop.f32.mrb[0].mxu0
        %v5025 = vadd.f32 %v4844, %v5024
        %v5026 = vpop.f32.mrb[0].mxu0
        %5027 = vmatprep.mubr.f32.mxu0 0.0
        %5028 = vmatmul.mubr.f32.gmra.mrb[0].mxu0 %v4888
        %v5029 = vpop.f32.mrb[0].mxu0
        %v5030 = vadd.f32 %v4844, %v5029
        %v5031 = vpop.f32.mrb[0].mxu0
        %5032 = vmatprep.mubr.f32.mxu0 0.0
        %5033 = vmatmul.mubr.f32.gmra.mrb[0].mxu0 %v4891
        %v5034 = vpop.f32.mrb[0].mxu0
        %v5035 = vadd.f32 %v4844, %v5034
        %v5036 = vpop.f32.mrb[0].mxu0
        %5037 = vdwg.mxu0
        %v5038 = vadd.f32 %v4290, %v4960
        %v5039 = vadd.f32 %v4291, %v4965
        %v5040 = vadd.f32 %v4292, %v4970
        %v5041 = vadd.f32 %v4293, %v4975
        %v5042 = vadd.f32 %v4294, %v4980
        %v5043 = vadd.f32 %v4295, %v4985
        %v5044 = vadd.f32 %v4296, %v4990
        %v5045 = vadd.f32 %v4297, %v4995
        %v5046 = vadd.f32 %v4298, %v5000
        %v5047 = vadd.f32 %v4299, %v5005
        %v5048 = vadd.f32 %v4300, %v5010
        %v5049 = vadd.f32 %v4301, %v5015
        %v5050 = vadd.f32 %v4302, %v5020
        %v5051 = vadd.f32 %v4303, %v5025
        %v5052 = vadd.f32 %v4304, %v5030
        %v5053 = vadd.f32 %v4305, %v5035
        %v5054 = vld [vmem:[%s7 + $0x4] sm:$0x1]
        %v5055 = vld [vmem:[%s7 + $0x5] sm:$0x1]
        %v5056 = vsel %vm945, %v5038, 0.0
        %5057 = vadd.xlane.f32.xlu0 %v5056
        %v5058 = vpop.xlane.xlu0 %5057
        %v5059 = vsel %vm945, %v5039, 0.0
        %5060 = vadd.xlane.f32.xlu0 %v5059
        %v5061 = vpop.xlane.xlu0 %5060
        %v5062 = vsel %vm945, %v5040, 0.0
        %5063 = vadd.xlane.f32.xlu0 %v5062
        %v5064 = vpop.xlane.xlu0 %5063
        %v5065 = vsel %vm945, %v5041, 0.0
        %5066 = vadd.xlane.f32.xlu0 %v5065
        %v5067 = vpop.xlane.xlu0 %5066
        %v5068 = vsel %vm945, %v5042, 0.0
        %5069 = vadd.xlane.f32.xlu0 %v5068
        %v5070 = vpop.xlane.xlu0 %5069
        %v5071 = vsel %vm945, %v5043, 0.0
        %5072 = vadd.xlane.f32.xlu0 %v5071
        %v5073 = vpop.xlane.xlu0 %5072
        %v5074 = vsel %vm945, %v5044, 0.0
        %5075 = vadd.xlane.f32.xlu0 %v5074
        %v5076 = vpop.xlane.xlu0 %5075
        %v5077 = vsel %vm945, %v5045, 0.0
        %5078 = vadd.xlane.f32.xlu0 %v5077
        %v5079 = vpop.xlane.xlu0 %5078
        %v5080 = vsel %vm945, %v5046, 0.0
        %5081 = vadd.xlane.f32.xlu0 %v5080
        %v5082 = vpop.xlane.xlu0 %5081
        %v5083 = vsel %vm945, %v5047, 0.0
        %5084 = vadd.xlane.f32.xlu0 %v5083
        %v5085 = vpop.xlane.xlu0 %5084
        %v5086 = vsel %vm945, %v5048, 0.0
        %5087 = vadd.xlane.f32.xlu0 %v5086
        %v5088 = vpop.xlane.xlu0 %5087
        %v5089 = vsel %vm945, %v5049, 0.0
        %5090 = vadd.xlane.f32.xlu0 %v5089
        %v5091 = vpop.xlane.xlu0 %5090
        %v5092 = vsel %vm945, %v5050, 0.0
        %5093 = vadd.xlane.f32.xlu0 %v5092
        %v5094 = vpop.xlane.xlu0 %5093
        %v5095 = vsel %vm945, %v5051, 0.0
        %5096 = vadd.xlane.f32.xlu0 %v5095
        %v5097 = vpop.xlane.xlu0 %5096
        %v5098 = vsel %vm945, %v5052, 0.0
        %5099 = vadd.xlane.f32.xlu0 %v5098
        %v5100 = vpop.xlane.xlu0 %5099
        %v5101 = vsel %vm945, %v5053, 0.0
        %5102 = vadd.xlane.f32.xlu0 %v5101
        %v5103 = vpop.xlane.xlu0 %5102
        %v5104 = vmul.f32 %v5058, %v994
        %v5105 = vmul.f32 %v5061, %v994
        %v5106 = vmul.f32 %v5064, %v994
        %v5107 = vmul.f32 %v5067, %v994
        %v5108 = vmul.f32 %v5070, %v994
        %v5109 = vmul.f32 %v5073, %v994
        %v5110 = vmul.f32 %v5076, %v994
        %v5111 = vmul.f32 %v5079, %v994
        %v5112 = vmul.f32 %v5082, %v994
        %v5113 = vmul.f32 %v5085, %v994
        %v5114 = vmul.f32 %v5088, %v994
        %v5115 = vmul.f32 %v5091, %v994
        %v5116 = vmul.f32 %v5094, %v994
        %v5117 = vmul.f32 %v5097, %v994
        %v5118 = vmul.f32 %v5100, %v994
        %v5119 = vmul.f32 %v5103, %v994
        %v5120 = vsub.f32 %v5038, %v5104
        %v5121 = vsub.f32 %v5039, %v5105
        %v5122 = vsub.f32 %v5040, %v5106
        %v5123 = vsub.f32 %v5041, %v5107
        %v5124 = vsub.f32 %v5042, %v5108
        %v5125 = vsub.f32 %v5043, %v5109
        %v5126 = vsub.f32 %v5044, %v5110
        %v5127 = vsub.f32 %v5045, %v5111
        %v5128 = vsub.f32 %v5046, %v5112
        %v5129 = vsub.f32 %v5047, %v5113
        %v5130 = vsub.f32 %v5048, %v5114
        %v5131 = vsub.f32 %v5049, %v5115
        %v5132 = vsub.f32 %v5050, %v5116
        %v5133 = vsub.f32 %v5051, %v5117
        %v5134 = vsub.f32 %v5052, %v5118
        %v5135 = vsub.f32 %v5053, %v5119
        %v5136 = vmul.f32 %v5120, %v5120
        %v5137 = vmul.f32 %v5121, %v5121
        %v5138 = vmul.f32 %v5122, %v5122
        %v5139 = vmul.f32 %v5123, %v5123
        %v5140 = vmul.f32 %v5124, %v5124
        %v5141 = vmul.f32 %v5125, %v5125
        %v5142 = vmul.f32 %v5126, %v5126
        %v5143 = vmul.f32 %v5127, %v5127
        %v5144 = vmul.f32 %v5128, %v5128
        %v5145 = vmul.f32 %v5129, %v5129
        %v5146 = vmul.f32 %v5130, %v5130
        %v5147 = vmul.f32 %v5131, %v5131
        %v5148 = vmul.f32 %v5132, %v5132
        %v5149 = vmul.f32 %v5133, %v5133
        %v5150 = vmul.f32 %v5134, %v5134
        %v5151 = vmul.f32 %v5135, %v5135
        %v5152 = vsel %vm945, %v5136, 0.0
        %5153 = vadd.xlane.f32.xlu0 %v5152
        %v5154 = vpop.xlane.xlu0 %5153
        %v5155 = vsel %vm945, %v5137, 0.0
        %5156 = vadd.xlane.f32.xlu0 %v5155
        %v5157 = vpop.xlane.xlu0 %5156
        %v5158 = vsel %vm945, %v5138, 0.0
        %5159 = vadd.xlane.f32.xlu0 %v5158
        %v5160 = vpop.xlane.xlu0 %5159
        %v5161 = vsel %vm945, %v5139, 0.0
        %5162 = vadd.xlane.f32.xlu0 %v5161
        %v5163 = vpop.xlane.xlu0 %5162
        %v5164 = vsel %vm945, %v5140, 0.0
        %5165 = vadd.xlane.f32.xlu0 %v5164
        %v5166 = vpop.xlane.xlu0 %5165
        %v5167 = vsel %vm945, %v5141, 0.0
        %5168 = vadd.xlane.f32.xlu0 %v5167
        %v5169 = vpop.xlane.xlu0 %5168
        %v5170 = vsel %vm945, %v5142, 0.0
        %5171 = vadd.xlane.f32.xlu0 %v5170
        %v5172 = vpop.xlane.xlu0 %5171
        %v5173 = vsel %vm945, %v5143, 0.0
        %5174 = vadd.xlane.f32.xlu0 %v5173
        %v5175 = vpop.xlane.xlu0 %5174
        %v5176 = vsel %vm945, %v5144, 0.0
        %5177 = vadd.xlane.f32.xlu0 %v5176
        %v5178 = vpop.xlane.xlu0 %5177
        %v5179 = vsel %vm945, %v5145, 0.0
        %5180 = vadd.xlane.f32.xlu0 %v5179
        %v5181 = vpop.xlane.xlu0 %5180
        %v5182 = vsel %vm945, %v5146, 0.0
        %5183 = vadd.xlane.f32.xlu0 %v5182
        %v5184 = vpop.xlane.xlu0 %5183
        %v5185 = vsel %vm945, %v5147, 0.0
        %5186 = vadd.xlane.f32.xlu0 %v5185
        %v5187 = vpop.xlane.xlu0 %5186
        %v5188 = vsel %vm945, %v5148, 0.0
        %5189 = vadd.xlane.f32.xlu0 %v5188
        %v5190 = vpop.xlane.xlu0 %5189
        %v5191 = vsel %vm945, %v5149, 0.0
        %5192 = vadd.xlane.f32.xlu0 %v5191
        %v5193 = vpop.xlane.xlu0 %5192
        %v5194 = vsel %vm945, %v5150, 0.0
        %5195 = vadd.xlane.f32.xlu0 %v5194
        %v5196 = vpop.xlane.xlu0 %5195
        %v5197 = vsel %vm945, %v5151, 0.0
        %5198 = vadd.xlane.f32.xlu0 %v5197
        %v5199 = vpop.xlane.xlu0 %5198
        %v5200 = vmul.f32 %v5154, %v994
        %v5201 = vmul.f32 %v5157, %v994
        %v5202 = vmul.f32 %v5160, %v994
        %v5203 = vmul.f32 %v5163, %v994
        %v5204 = vmul.f32 %v5166, %v994
        %v5205 = vmul.f32 %v5169, %v994
        %v5206 = vmul.f32 %v5172, %v994
        %v5207 = vmul.f32 %v5175, %v994
        %v5208 = vmul.f32 %v5178, %v994
        %v5209 = vmul.f32 %v5181, %v994
        %v5210 = vmul.f32 %v5184, %v994
        %v5211 = vmul.f32 %v5187, %v994
        %v5212 = vmul.f32 %v5190, %v994
        %v5213 = vmul.f32 %v5193, %v994
        %v5214 = vmul.f32 %v5196, %v994
        %v5215 = vmul.f32 %v5199, %v994
        %v5216 = vadd.f32 %v5200, 1e-06
        %v5217 = vadd.f32 %v5201, 1e-06
        %v5218 = vadd.f32 %v5202, 1e-06
        %v5219 = vadd.f32 %v5203, 1e-06
        %v5220 = vadd.f32 %v5204, 1e-06
        %v5221 = vadd.f32 %v5205, 1e-06
        %v5222 = vadd.f32 %v5206, 1e-06
        %v5223 = vadd.f32 %v5207, 1e-06
        %v5224 = vadd.f32 %v5208, 1e-06
        %v5225 = vadd.f32 %v5209, 1e-06
        %v5226 = vadd.f32 %v5210, 1e-06
        %v5227 = vadd.f32 %v5211, 1e-06
        %v5228 = vadd.f32 %v5212, 1e-06
        %v5229 = vadd.f32 %v5213, 1e-06
        %v5230 = vadd.f32 %v5214, 1e-06
        %v5231 = vadd.f32 %v5215, 1e-06
        %v5232 = vrsqrt.pop %v5216
        %v5233 = vrsqrt.pop %v5217
        %v5234 = vrsqrt.pop %v5218
        %v5235 = vrsqrt.pop %v5219
        %v5236 = vrsqrt.pop %v5220
        %v5237 = vrsqrt.pop %v5221
        %v5238 = vrsqrt.pop %v5222
        %v5239 = vrsqrt.pop %v5223
        %v5240 = vrsqrt.pop %v5224
        %v5241 = vrsqrt.pop %v5225
        %v5242 = vrsqrt.pop %v5226
        %v5243 = vrsqrt.pop %v5227
        %v5244 = vrsqrt.pop %v5228
        %v5245 = vrsqrt.pop %v5229
        %v5246 = vrsqrt.pop %v5230
        %v5247 = vrsqrt.pop %v5231
        %v5248 = vmul.f32 %v5120, %v5232
        %v5249 = vmul.f32 %v5121, %v5233
        %v5250 = vmul.f32 %v5122, %v5234
        %v5251 = vmul.f32 %v5123, %v5235
        %v5252 = vmul.f32 %v5124, %v5236
        %v5253 = vmul.f32 %v5125, %v5237
        %v5254 = vmul.f32 %v5126, %v5238
        %v5255 = vmul.f32 %v5127, %v5239
        %v5256 = vmul.f32 %v5128, %v5240
        %v5257 = vmul.f32 %v5129, %v5241
        %v5258 = vmul.f32 %v5130, %v5242
        %v5259 = vmul.f32 %v5131, %v5243
        %v5260 = vmul.f32 %v5132, %v5244
        %v5261 = vmul.f32 %v5133, %v5245
        %v5262 = vmul.f32 %v5134, %v5246
        %v5263 = vmul.f32 %v5135, %v5247
        %v5264 = vlaneseq
        %v5265 = vshrl.u32 %v5264, 7
        %v5266 = vsub.s32 0, %v5265
        %v5267 = vrot.slane %v5054, %v5266
        %v5268 = vmul.f32 %v5248, %v5267
        %v5269 = vmul.f32 %v5249, %v5267
        %v5270 = vmul.f32 %v5250, %v5267
        %v5271 = vmul.f32 %v5251, %v5267
        %v5272 = vmul.f32 %v5252, %v5267
        %v5273 = vmul.f32 %v5253, %v5267
        %v5274 = vmul.f32 %v5254, %v5267
        %v5275 = vmul.f32 %v5255, %v5267
        %v5276 = vmul.f32 %v5256, %v5267
        %v5277 = vmul.f32 %v5257, %v5267
        %v5278 = vmul.f32 %v5258, %v5267
        %v5279 = vmul.f32 %v5259, %v5267
        %v5280 = vmul.f32 %v5260, %v5267
        %v5281 = vmul.f32 %v5261, %v5267
        %v5282 = vmul.f32 %v5262, %v5267
        %v5283 = vmul.f32 %v5263, %v5267
        %v5284 = vlaneseq
        %v5285 = vshrl.u32 %v5284, 7
        %v5286 = vsub.s32 0, %v5285
        %v5287 = vrot.slane %v5055, %v5286
        %v5288 = vadd.f32 %v5268, %v5287
        %v5289 = vadd.f32 %v5269, %v5287
        %v5290 = vadd.f32 %v5270, %v5287
        %v5291 = vadd.f32 %v5271, %v5287
        %v5292 = vadd.f32 %v5272, %v5287
        %v5293 = vadd.f32 %v5273, %v5287
        %v5294 = vadd.f32 %v5274, %v5287
        %v5295 = vadd.f32 %v5275, %v5287
        %v5296 = vadd.f32 %v5276, %v5287
        %v5297 = vadd.f32 %v5277, %v5287
        %v5298 = vadd.f32 %v5278, %v5287
        %v5299 = vadd.f32 %v5279, %v5287
        %v5300 = vadd.f32 %v5280, %v5287
        %v5301 = vadd.f32 %v5281, %v5287
        %v5302 = vadd.f32 %v5282, %v5287
        %v5303 = vadd.f32 %v5283, %v5287
        %5304 = vmatprep.subr.mxu0 0.0
        %5305 = vmatpush1.msra.mxu0 %v5288
        %5306 = vmatprep.subr.mxu0 0.0
        %5307 = vmatpush1.msra.mxu0 %v5289
        %5308 = vmatprep.subr.mxu0 0.0
        %5309 = vmatpush1.msra.mxu0 %v5290
        %5310 = vmatprep.subr.mxu0 0.0
        %5311 = vmatpush1.msra.mxu0 %v5291
        %5312 = vmatprep.subr.mxu0 0.0
        %5313 = vmatpush1.msra.mxu0 %v5292
        %5314 = vmatprep.subr.mxu0 0.0
        %5315 = vmatpush1.msra.mxu0 %v5293
        %5316 = vmatprep.subr.mxu0 0.0
        %5317 = vmatpush1.msra.mxu0 %v5294
        %5318 = vmatprep.subr.mxu0 0.0
        %5319 = vmatpush1.msra.mxu0 %v5295
        %5320 = vmatprep.subr.mxu0 0.0
        %5321 = vmatpush1.msra.mxu0 %v5296
        %5322 = vmatprep.subr.mxu0 0.0
        %5323 = vmatpush1.msra.mxu0 %v5297
        %5324 = vmatprep.subr.mxu0 0.0
        %5325 = vmatpush1.msra.mxu0 %v5298
        %5326 = vmatprep.subr.mxu0 0.0
        %5327 = vmatpush1.msra.mxu0 %v5299
        %5328 = vmatprep.subr.mxu0 0.0
        %5329 = vmatpush1.msra.mxu0 %v5300
        %5330 = vmatprep.subr.mxu0 0.0
        %5331 = vmatpush1.msra.mxu0 %v5301
        %5332 = vmatprep.subr.mxu0 0.0
        %5333 = vmatpush1.msra.mxu0 %v5302
        %5334 = vmatprep.subr.mxu0 0.0
        %5335 = vmatpush1.msra.mxu0 %v5303
        %5336 = vmatprep.subr.mxu0 0.0
        %5337 = vmatpush1.msra.mxu0 0.0
        %5338 = vmatprep.subr.mxu0 0.0
        %5339 = vmatpush1.msra.mxu0 0.0
        %5340 = vmatprep.subr.mxu0 0.0
        %5341 = vmatpush1.msra.mxu0 0.0
        %5342 = vmatprep.subr.mxu0 0.0
        %5343 = vmatpush1.msra.mxu0 0.0
        %5344 = vmatprep.subr.mxu0 0.0
        %5345 = vmatpush1.msra.mxu0 0.0
        %5346 = vmatprep.subr.mxu0 0.0
        %5347 = vmatpush1.msra.mxu0 0.0
        %5348 = vmatprep.subr.mxu0 0.0
        %5349 = vmatpush1.msra.mxu0 0.0
        %5350 = vmatprep.subr.mxu0 0.0
        %5351 = vmatpush1.msra.mxu0 0.0
        %5352 = vmatprep.subr.mxu0 0.0
        %5353 = vmatpush1.msra.mxu0 0.0
        %5354 = vmatprep.subr.mxu0 0.0
        %5355 = vmatpush1.msra.mxu0 0.0
        %5356 = vmatprep.subr.mxu0 0.0
        %5357 = vmatpush1.msra.mxu0 0.0
        %5358 = vmatprep.subr.mxu0 0.0
        %5359 = vmatpush1.msra.mxu0 0.0
        %5360 = vmatprep.subr.mxu0 0.0
        %5361 = vmatpush1.msra.mxu0 0.0
        %5362 = vmatprep.subr.mxu0 0.0
        %5363 = vmatpush1.msra.mxu0 0.0
        %5364 = vmatprep.subr.mxu0 0.0
        %5365 = vmatpush1.msra.mxu0 0.0
        %5366 = vmatprep.subr.mxu0 0.0
        %5367 = vmatpush1.msra.mxu0 0.0
        %5368 = vmatprep.mubr.f32.mxu0 0.0
        %5369 = vmatmul.mubr.f32.gmra.mrb[0].mxu0 %v1195
        %v5370 = vpop.f32.mrb[0].mxu0
        %v5371 = vadd.f32 0.0, %v5370
        %v5372 = vpop.f32.mrb[0].mxu0
        %5373 = vmatprep.mubr.f32.mxu0 0.0
        %5374 = vmatmul.mubr.f32.gmra.mrb[0].mxu0 %v1196
        %v5375 = vpop.f32.mrb[0].mxu0
        %v5376 = vadd.f32 0.0, %v5375
        %v5377 = vpop.f32.mrb[0].mxu0
        %5378 = vmatprep.mubr.f32.mxu0 0.0
        %5379 = vmatmul.mubr.f32.gmra.mrb[0].mxu0 %v1197
        %v5380 = vpop.f32.mrb[0].mxu0
        %v5381 = vadd.f32 0.0, %v5380
        %v5382 = vpop.f32.mrb[0].mxu0
        %5383 = vmatprep.mubr.f32.mxu0 0.0
        %5384 = vmatmul.mubr.f32.gmra.mrb[0].mxu0 %v1198
        %v5385 = vpop.f32.mrb[0].mxu0
        %v5386 = vadd.f32 0.0, %v5385
        %v5387 = vpop.f32.mrb[0].mxu0
        %5388 = vmatprep.mubr.f32.mxu0 0.0
        %5389 = vmatmul.mubr.f32.gmra.mrb[0].mxu0 %v1199
        %v5390 = vpop.f32.mrb[0].mxu0
        %v5391 = vadd.f32 0.0, %v5390
        %v5392 = vpop.f32.mrb[0].mxu0
        %5393 = vmatprep.mubr.f32.mxu0 0.0
        %5394 = vmatmul.mubr.f32.gmra.mrb[0].mxu0 %v1200
        %v5395 = vpop.f32.mrb[0].mxu0
        %v5396 = vadd.f32 0.0, %v5395
        %v5397 = vpop.f32.mrb[0].mxu0
        %5398 = vmatprep.mubr.f32.mxu0 0.0
        %5399 = vmatmul.mubr.f32.gmra.mrb[0].mxu0 %v1201
        %v5400 = vpop.f32.mrb[0].mxu0
        %v5401 = vadd.f32 0.0, %v5400
        %v5402 = vpop.f32.mrb[0].mxu0
        %5403 = vmatprep.mubr.f32.mxu0 0.0
        %5404 = vmatmul.mubr.f32.gmra.mrb[0].mxu0 %v1202
        %v5405 = vpop.f32.mrb[0].mxu0
        %v5406 = vadd.f32 0.0, %v5405
        %v5407 = vpop.f32.mrb[0].mxu0
        %5408 = vmatprep.mubr.f32.mxu0 0.0
        %5409 = vmatmul.mubr.f32.gmra.mrb[0].mxu0 %v1203
        %v5410 = vpop.f32.mrb[0].mxu0
        %v5411 = vadd.f32 0.0, %v5410
        %v5412 = vpop.f32.mrb[0].mxu0
        %5413 = vmatprep.mubr.f32.mxu0 0.0
        %5414 = vmatmul.mubr.f32.gmra.mrb[0].mxu0 %v1204
        %v5415 = vpop.f32.mrb[0].mxu0
        %v5416 = vadd.f32 0.0, %v5415
        %v5417 = vpop.f32.mrb[0].mxu0
        %5418 = vmatprep.mubr.f32.mxu0 0.0
        %5419 = vmatmul.mubr.f32.gmra.mrb[0].mxu0 %v1205
        %v5420 = vpop.f32.mrb[0].mxu0
        %v5421 = vadd.f32 0.0, %v5420
        %v5422 = vpop.f32.mrb[0].mxu0
        %5423 = vmatprep.mubr.f32.mxu0 0.0
        %5424 = vmatmul.mubr.f32.gmra.mrb[0].mxu0 %v1206
        %v5425 = vpop.f32.mrb[0].mxu0
        %v5426 = vadd.f32 0.0, %v5425
        %v5427 = vpop.f32.mrb[0].mxu0
        %5428 = vmatprep.mubr.f32.mxu0 0.0
        %5429 = vmatmul.mubr.f32.gmra.mrb[0].mxu0 %v1207
        %v5430 = vpop.f32.mrb[0].mxu0
        %v5431 = vadd.f32 0.0, %v5430
        %v5432 = vpop.f32.mrb[0].mxu0
        %5433 = vmatprep.mubr.f32.mxu0 0.0
        %5434 = vmatmul.mubr.f32.gmra.mrb[0].mxu0 %v1208
        %v5435 = vpop.f32.mrb[0].mxu0
        %v5436 = vadd.f32 0.0, %v5435
        %v5437 = vpop.f32.mrb[0].mxu0
        %5438 = vmatprep.mubr.f32.mxu0 0.0
        %5439 = vmatmul.mubr.f32.gmra.mrb[0].mxu0 %v1209
        %v5440 = vpop.f32.mrb[0].mxu0
        %v5441 = vadd.f32 0.0, %v5440
        %v5442 = vpop.f32.mrb[0].mxu0
        %5443 = vmatprep.mubr.f32.mxu0 0.0
        %5444 = vmatmul.mubr.f32.gmra.mrb[0].mxu0 %v1210
        %v5445 = vpop.f32.mrb[0].mxu0
        %v5446 = vadd.f32 0.0, %v5445
        %v5447 = vpop.f32.mrb[0].mxu0
        %5448 = vmatprep.mubr.f32.mxu0 0.0
        %5449 = vmatmul.mubr.f32.gmra.mrb[0].mxu0 %v1211
        %v5450 = vpop.f32.mrb[0].mxu0
        %v5451 = vadd.f32 0.0, %v5450
        %v5452 = vpop.f32.mrb[0].mxu0
        %5453 = vmatprep.mubr.f32.mxu0 0.0
        %5454 = vmatmul.mubr.f32.gmra.mrb[0].mxu0 %v1212
        %v5455 = vpop.f32.mrb[0].mxu0
        %v5456 = vadd.f32 0.0, %v5455
        %v5457 = vpop.f32.mrb[0].mxu0
        %5458 = vmatprep.mubr.f32.mxu0 0.0
        %5459 = vmatmul.mubr.f32.gmra.mrb[0].mxu0 %v1213
        %v5460 = vpop.f32.mrb[0].mxu0
        %v5461 = vadd.f32 0.0, %v5460
        %v5462 = vpop.f32.mrb[0].mxu0
        %5463 = vmatprep.mubr.f32.mxu0 0.0
        %5464 = vmatmul.mubr.f32.gmra.mrb[0].mxu0 %v1214
        %v5465 = vpop.f32.mrb[0].mxu0
        %v5466 = vadd.f32 0.0, %v5465
        %v5467 = vpop.f32.mrb[0].mxu0
        %5468 = vmatprep.mubr.f32.mxu0 0.0
        %5469 = vmatmul.mubr.f32.gmra.mrb[0].mxu0 %v1215
        %v5470 = vpop.f32.mrb[0].mxu0
        %v5471 = vadd.f32 0.0, %v5470
        %v5472 = vpop.f32.mrb[0].mxu0
        %5473 = vmatprep.mubr.f32.mxu0 0.0
        %5474 = vmatmul.mubr.f32.gmra.mrb[0].mxu0 %v1216
        %v5475 = vpop.f32.mrb[0].mxu0
        %v5476 = vadd.f32 0.0, %v5475
        %v5477 = vpop.f32.mrb[0].mxu0
        %5478 = vmatprep.mubr.f32.mxu0 0.0
        %5479 = vmatmul.mubr.f32.gmra.mrb[0].mxu0 %v1217
        %v5480 = vpop.f32.mrb[0].mxu0
        %v5481 = vadd.f32 0.0, %v5480
        %v5482 = vpop.f32.mrb[0].mxu0
        %5483 = vmatprep.mubr.f32.mxu0 0.0
        %5484 = vmatmul.mubr.f32.gmra.mrb[0].mxu0 %v1218
        %v5485 = vpop.f32.mrb[0].mxu0
        %v5486 = vadd.f32 0.0, %v5485
        %v5487 = vpop.f32.mrb[0].mxu0
        %5488 = vdwg.mxu0
        %5501 = vrot.lane.b32.xlu0 %v5431, 16
        %v5502 = vpop.permute.xlu0 %5501
        %5503 = vrot.lane.b32.xlu0 %v5436, 16
        %v5504 = vpop.permute.xlu0 %5503
        %5505 = vrot.lane.b32.xlu0 %v5441, 16
        %v5506 = vpop.permute.xlu0 %5505
        %5507 = vrot.lane.b32.xlu0 %v5446, 16
        %v5508 = vpop.permute.xlu0 %5507
        %5509 = vrot.lane.b32.xlu0 %v5451, 16
        %v5510 = vpop.permute.xlu0 %5509
        %5511 = vrot.lane.b32.xlu0 %v5456, 16
        %v5512 = vpop.permute.xlu0 %5511
        %5513 = vrot.lane.b32.xlu0 %v5461, 16
        %v5514 = vpop.permute.xlu0 %5513
        %5515 = vrot.lane.b32.xlu0 %v5466, 16
        %v5516 = vpop.permute.xlu0 %5515
        %5517 = vrot.lane.b32.xlu0 %v5471, 16
        %v5518 = vpop.permute.xlu0 %5517
        %5519 = vrot.lane.b32.xlu0 %v5476, 16
        %v5520 = vpop.permute.xlu0 %5519
        %5521 = vrot.lane.b32.xlu0 %v5481, 16
        %v5522 = vpop.permute.xlu0 %5521
        %5523 = vrot.lane.b32.xlu0 %v5486, 16
        %v5524 = vpop.permute.xlu0 %5523
        %v5537 = vsel %vm945, %v5371, %v5502
        %v5538 = vsel %vm945, %v5376, %v5504
        %v5539 = vsel %vm945, %v5381, %v5506
        %v5540 = vsel %vm945, %v5386, %v5508
        %v5541 = vsel %vm945, %v5391, %v5510
        %v5542 = vsel %vm945, %v5396, %v5512
        %v5543 = vsel %vm945, %v5401, %v5514
        %v5544 = vsel %vm945, %v5406, %v5516
        %v5545 = vsel %vm945, %v5411, %v5518
        %v5546 = vsel %vm945, %v5416, %v5520
        %v5547 = vsel %vm945, %v5421, %v5522
        %v5548 = vsel %vm945, %v5426, %v5524
        %v5549 = vld [vmem:[%s8 + $0x80] sm:$0xff]
        %v5550 = vld [vmem:[%s8 + $0x88] sm:$0xff]
        %v5551 = vld [vmem:[%s8 + $0x90] sm:$0xff]
        %v5552 = vld [vmem:[%s8 + $0x98] sm:$0xff]
        %v5553 = vld [vmem:[%s9 + $0x180] sm:$0xff]
        %v5554 = vld [vmem:[%s9 + $0x188] sm:$0xff]
        %v5555 = vld [vmem:[%s9 + $0x190] sm:$0xff]
        %v5556 = vld [vmem:[%s9 + $0x198] sm:$0xff]
        %v5557 = vld [vmem:[%s9 + $0x1a0] sm:$0xff]
        %v5558 = vld [vmem:[%s9 + $0x1a8] sm:$0xff]
        %v5559 = vld [vmem:[%s9 + $0x1b0] sm:$0xff]
        %v5560 = vld [vmem:[%s9 + $0x1b8] sm:$0xff]
        %v5561 = vld [vmem:[%s9 + $0x1c0] sm:$0xff]
        %v5562 = vld [vmem:[%s9 + $0x1c8] sm:$0xff]
        %v5563 = vld [vmem:[%s9 + $0x1d0] sm:$0xff]
        %v5564 = vld [vmem:[%s9 + $0x1d8] sm:$0xff]
        %v5566 = vsel %vm1480, %v5537, 0
        %v5569 = vsel %vm1480, %v5538, 0
        %v5572 = vsel %vm1480, %v5539, 0
        %v5575 = vsel %vm1480, %v5540, 0
        %v5578 = vsel %vm1480, %v5541, 0
        %v5581 = vsel %vm1480, %v5542, 0
        %v5584 = vsel %vm1480, %v5543, 0
        %v5587 = vsel %vm1480, %v5544, 0
        %v5590 = vsel %vm1480, %v5545, 0
        %v5593 = vsel %vm1480, %v5546, 0
        %v5596 = vsel %vm1480, %v5547, 0
        %v5599 = vsel %vm1480, %v5548, 0
        %5601 = vmatprep.subr.mxu0 0.0
        %5602 = vmatpush1.msra.mxu0 %v5549
        %5603 = vmatprep.subr.mxu0 0.0
        %5604 = vmatpush1.msra.mxu0 %v5550
        %5605 = vmatprep.subr.mxu0 0.0
        %5606 = vmatpush1.msra.mxu0 %v5551
        %5607 = vmatprep.subr.mxu0 0.0
        %5608 = vmatpush1.msra.mxu0 %v5552
        %5609 = vmatprep.subr.mxu0 0.0
        %5610 = vmatpush1.msra.mxu0 0.0
        %5611 = vmatprep.subr.mxu0 0.0
        %5612 = vmatpush1.msra.mxu0 0.0
        %5613 = vmatprep.subr.mxu0 0.0
        %5614 = vmatpush1.msra.mxu0 0.0
        %5615 = vmatprep.subr.mxu0 0.0
        %5616 = vmatpush1.msra.mxu0 0.0
        %5617 = vmatprep.subr.mxu0 0.0
        %5618 = vmatpush1.msra.mxu0 0.0
        %5619 = vmatprep.subr.mxu0 0.0
        %5620 = vmatpush1.msra.mxu0 0.0
        %5621 = vmatprep.subr.mxu0 0.0
        %5622 = vmatpush1.msra.mxu0 0.0
        %5623 = vmatprep.subr.mxu0 0.0
        %5624 = vmatpush1.msra.mxu0 0.0
        %5625 = vmatprep.subr.mxu0 0.0
        %5626 = vmatpush1.msra.mxu0 0.0
        %5627 = vmatprep.subr.mxu0 0.0
        %5628 = vmatpush1.msra.mxu0 0.0
        %5629 = vmatprep.subr.mxu0 0.0
        %5630 = vmatpush1.msra.mxu0 0.0
        %5631 = vmatprep.subr.mxu0 0.0
        %5632 = vmatpush1.msra.mxu0 0.0
        %5633 = vmatprep.subr.mxu0 0.0
        %5634 = vmatpush1.msra.mxu0 0.0
        %5635 = vmatprep.subr.mxu0 0.0
        %5636 = vmatpush1.msra.mxu0 0.0
        %5637 = vmatprep.subr.mxu0 0.0
        %5638 = vmatpush1.msra.mxu0 0.0
        %5639 = vmatprep.subr.mxu0 0.0
        %5640 = vmatpush1.msra.mxu0 0.0
        %5641 = vmatprep.subr.mxu0 0.0
        %5642 = vmatpush1.msra.mxu0 0.0
        %5643 = vmatprep.subr.mxu0 0.0
        %5644 = vmatpush1.msra.mxu0 0.0
        %5645 = vmatprep.subr.mxu0 0.0
        %5646 = vmatpush1.msra.mxu0 0.0
        %5647 = vmatprep.subr.mxu0 0.0
        %5648 = vmatpush1.msra.mxu0 0.0
        %5649 = vmatprep.subr.mxu0 0.0
        %5650 = vmatpush1.msra.mxu0 0.0
        %5651 = vmatprep.subr.mxu0 0.0
        %5652 = vmatpush1.msra.mxu0 0.0
        %5653 = vmatprep.subr.mxu0 0.0
        %5654 = vmatpush1.msra.mxu0 0.0
        %5655 = vmatprep.subr.mxu0 0.0
        %5656 = vmatpush1.msra.mxu0 0.0
        %5657 = vmatprep.subr.mxu0 0.0
        %5658 = vmatpush1.msra.mxu0 0.0
        %5659 = vmatprep.subr.mxu0 0.0
        %5660 = vmatpush1.msra.mxu0 0.0
        %5661 = vmatprep.subr.mxu0 0.0
        %5662 = vmatpush1.msra.mxu0 0.0
        %5663 = vmatprep.subr.mxu0 0.0
        %5664 = vmatpush1.msra.mxu0 0.0
        %5665 = vmatprep.mubr.f32.mxu0 0.0
        %5666 = vmatmul.mubr.f32.gmra.mrb[0].mxu0 %v5566
        %v5667 = vpop.f32.mrb[0].mxu0
        %v5668 = vadd.f32 %v5553, %v5667
        %v5669 = vpop.f32.mrb[0].mxu0
        %5670 = vmatprep.mubr.f32.mxu0 0.0
        %5671 = vmatmul.mubr.f32.gmra.mrb[0].mxu0 %v5569
        %v5672 = vpop.f32.mrb[0].mxu0
        %v5673 = vadd.f32 %v5554, %v5672
        %v5674 = vpop.f32.mrb[0].mxu0
        %5675 = vmatprep.mubr.f32.mxu0 0.0
        %5676 = vmatmul.mubr.f32.gmra.mrb[0].mxu0 %v5572
        %v5677 = vpop.f32.mrb[0].mxu0
        %v5678 = vadd.f32 %v5555, %v5677
        %v5679 = vpop.f32.mrb[0].mxu0
        %5680 = vmatprep.mubr.f32.mxu0 0.0
        %5681 = vmatmul.mubr.f32.gmra.mrb[0].mxu0 %v5575
        %v5682 = vpop.f32.mrb[0].mxu0
        %v5683 = vadd.f32 %v5556, %v5682
        %v5684 = vpop.f32.mrb[0].mxu0
        %5685 = vmatprep.mubr.f32.mxu0 0.0
        %5686 = vmatmul.mubr.f32.gmra.mrb[0].mxu0 %v5578
        %v5687 = vpop.f32.mrb[0].mxu0
        %v5688 = vadd.f32 %v5557, %v5687
        %v5689 = vpop.f32.mrb[0].mxu0
        %5690 = vmatprep.mubr.f32.mxu0 0.0
        %5691 = vmatmul.mubr.f32.gmra.mrb[0].mxu0 %v5581
        %v5692 = vpop.f32.mrb[0].mxu0
        %v5693 = vadd.f32 %v5558, %v5692
        %v5694 = vpop.f32.mrb[0].mxu0
        %5695 = vmatprep.mubr.f32.mxu0 0.0
        %5696 = vmatmul.mubr.f32.gmra.mrb[0].mxu0 %v5584
        %v5697 = vpop.f32.mrb[0].mxu0
        %v5698 = vadd.f32 %v5559, %v5697
        %v5699 = vpop.f32.mrb[0].mxu0
        %5700 = vmatprep.mubr.f32.mxu0 0.0
        %5701 = vmatmul.mubr.f32.gmra.mrb[0].mxu0 %v5587
        %v5702 = vpop.f32.mrb[0].mxu0
        %v5703 = vadd.f32 %v5560, %v5702
        %v5704 = vpop.f32.mrb[0].mxu0
        %5705 = vmatprep.mubr.f32.mxu0 0.0
        %5706 = vmatmul.mubr.f32.gmra.mrb[0].mxu0 %v5590
        %v5707 = vpop.f32.mrb[0].mxu0
        %v5708 = vadd.f32 %v5561, %v5707
        %v5709 = vpop.f32.mrb[0].mxu0
        %5710 = vmatprep.mubr.f32.mxu0 0.0
        %5711 = vmatmul.mubr.f32.gmra.mrb[0].mxu0 %v5593
        %v5712 = vpop.f32.mrb[0].mxu0
        %v5713 = vadd.f32 %v5562, %v5712
        %v5714 = vpop.f32.mrb[0].mxu0
        %5715 = vmatprep.mubr.f32.mxu0 0.0
        %5716 = vmatmul.mubr.f32.gmra.mrb[0].mxu0 %v5596
        %v5717 = vpop.f32.mrb[0].mxu0
        %v5718 = vadd.f32 %v5563, %v5717
        %v5719 = vpop.f32.mrb[0].mxu0
        %5720 = vmatprep.mubr.f32.mxu0 0.0
        %5721 = vmatmul.mubr.f32.gmra.mrb[0].mxu0 %v5599
        %v5722 = vpop.f32.mrb[0].mxu0
        %v5723 = vadd.f32 %v5564, %v5722
        %v5724 = vpop.f32.mrb[0].mxu0
        %5725 = vdwg.mxu0
        %v5726 = vld [vmem:[%s8 + $0xa0] sm:$0xff]
        %v5727 = vld [vmem:[%s8 + $0xa8] sm:$0xff]
        %v5728 = vld [vmem:[%s8 + $0xb0] sm:$0xff]
        %v5729 = vld [vmem:[%s8 + $0xb8] sm:$0xff]
        %v5730 = vld [vmem:[%s9 + $0x1e0] sm:$0xff]
        %v5731 = vld [vmem:[%s9 + $0x1e8] sm:$0xff]
        %v5732 = vld [vmem:[%s9 + $0x1f0] sm:$0xff]
        %v5733 = vld [vmem:[%s9 + $0x1f8] sm:$0xff]
        %v5734 = vld [vmem:[%s9 + $0x200] sm:$0xff]
        %v5735 = vld [vmem:[%s9 + $0x208] sm:$0xff]
        %v5736 = vld [vmem:[%s9 + $0x210] sm:$0xff]
        %v5737 = vld [vmem:[%s9 + $0x218] sm:$0xff]
        %v5738 = vld [vmem:[%s9 + $0x220] sm:$0xff]
        %v5739 = vld [vmem:[%s9 + $0x228] sm:$0xff]
        %v5740 = vld [vmem:[%s9 + $0x230] sm:$0xff]
        %v5741 = vld [vmem:[%s9 + $0x238] sm:$0xff]
        %5742 = vmatprep.subr.mxu0 0.0
        %5743 = vmatpush1.msra.mxu0 %v5726
        %5744 = vmatprep.subr.mxu0 0.0
        %5745 = vmatpush1.msra.mxu0 %v5727
        %5746 = vmatprep.subr.mxu0 0.0
        %5747 = vmatpush1.msra.mxu0 %v5728
        %5748 = vmatprep.subr.mxu0 0.0
        %5749 = vmatpush1.msra.mxu0 %v5729
        %5750 = vmatprep.subr.mxu0 0.0
        %5751 = vmatpush1.msra.mxu0 0.0
        %5752 = vmatprep.subr.mxu0 0.0
        %5753 = vmatpush1.msra.mxu0 0.0
        %5754 = vmatprep.subr.mxu0 0.0
        %5755 = vmatpush1.msra.mxu0 0.0
        %5756 = vmatprep.subr.mxu0 0.0
        %5757 = vmatpush1.msra.mxu0 0.0
        %5758 = vmatprep.subr.mxu0 0.0
        %5759 = vmatpush1.msra.mxu0 0.0
        %5760 = vmatprep.subr.mxu0 0.0
        %5761 = vmatpush1.msra.mxu0 0.0
        %5762 = vmatprep.subr.mxu0 0.0
        %5763 = vmatpush1.msra.mxu0 0.0
        %5764 = vmatprep.subr.mxu0 0.0
        %5765 = vmatpush1.msra.mxu0 0.0
        %5766 = vmatprep.subr.mxu0 0.0
        %5767 = vmatpush1.msra.mxu0 0.0
        %5768 = vmatprep.subr.mxu0 0.0
        %5769 = vmatpush1.msra.mxu0 0.0
        %5770 = vmatprep.subr.mxu0 0.0
        %5771 = vmatpush1.msra.mxu0 0.0
        %5772 = vmatprep.subr.mxu0 0.0
        %5773 = vmatpush1.msra.mxu0 0.0
        %5774 = vmatprep.subr.mxu0 0.0
        %5775 = vmatpush1.msra.mxu0 0.0
        %5776 = vmatprep.subr.mxu0 0.0
        %5777 = vmatpush1.msra.mxu0 0.0
        %5778 = vmatprep.subr.mxu0 0.0
        %5779 = vmatpush1.msra.mxu0 0.0
        %5780 = vmatprep.subr.mxu0 0.0
        %5781 = vmatpush1.msra.mxu0 0.0
        %5782 = vmatprep.subr.mxu0 0.0
        %5783 = vmatpush1.msra.mxu0 0.0
        %5784 = vmatprep.subr.mxu0 0.0
        %5785 = vmatpush1.msra.mxu0 0.0
        %5786 = vmatprep.subr.mxu0 0.0
        %5787 = vmatpush1.msra.mxu0 0.0
        %5788 = vmatprep.subr.mxu0 0.0
        %5789 = vmatpush1.msra.mxu0 0.0
        %5790 = vmatprep.subr.mxu0 0.0
        %5791 = vmatpush1.msra.mxu0 0.0
        %5792 = vmatprep.subr.mxu0 0.0
        %5793 = vmatpush1.msra.mxu0 0.0
        %5794 = vmatprep.subr.mxu0 0.0
        %5795 = vmatpush1.msra.mxu0 0.0
        %5796 = vmatprep.subr.mxu0 0.0
        %5797 = vmatpush1.msra.mxu0 0.0
        %5798 = vmatprep.subr.mxu0 0.0
        %5799 = vmatpush1.msra.mxu0 0.0
        %5800 = vmatprep.subr.mxu0 0.0
        %5801 = vmatpush1.msra.mxu0 0.0
        %5802 = vmatprep.subr.mxu0 0.0
        %5803 = vmatpush1.msra.mxu0 0.0
        %5804 = vmatprep.subr.mxu0 0.0
        %5805 = vmatpush1.msra.mxu0 0.0
        %5806 = vmatprep.mubr.f32.mxu0 0.0
        %5807 = vmatmul.mubr.f32.gmra.mrb[0].mxu0 %v5566
        %v5808 = vpop.f32.mrb[0].mxu0
        %v5809 = vadd.f32 %v5730, %v5808
        %v5810 = vpop.f32.mrb[0].mxu0
        %5811 = vmatprep.mubr.f32.mxu0 0.0
        %5812 = vmatmul.mubr.f32.gmra.mrb[0].mxu0 %v5569
        %v5813 = vpop.f32.mrb[0].mxu0
        %v5814 = vadd.f32 %v5731, %v5813
        %v5815 = vpop.f32.mrb[0].mxu0
        %5816 = vmatprep.mubr.f32.mxu0 0.0
        %5817 = vmatmul.mubr.f32.gmra.mrb[0].mxu0 %v5572
        %v5818 = vpop.f32.mrb[0].mxu0
        %v5819 = vadd.f32 %v5732, %v5818
        %v5820 = vpop.f32.mrb[0].mxu0
        %5821 = vmatprep.mubr.f32.mxu0 0.0
        %5822 = vmatmul.mubr.f32.gmra.mrb[0].mxu0 %v5575
        %v5823 = vpop.f32.mrb[0].mxu0
        %v5824 = vadd.f32 %v5733, %v5823
        %v5825 = vpop.f32.mrb[0].mxu0
        %5826 = vmatprep.mubr.f32.mxu0 0.0
        %5827 = vmatmul.mubr.f32.gmra.mrb[0].mxu0 %v5578
        %v5828 = vpop.f32.mrb[0].mxu0
        %v5829 = vadd.f32 %v5734, %v5828
        %v5830 = vpop.f32.mrb[0].mxu0
        %5831 = vmatprep.mubr.f32.mxu0 0.0
        %5832 = vmatmul.mubr.f32.gmra.mrb[0].mxu0 %v5581
        %v5833 = vpop.f32.mrb[0].mxu0
        %v5834 = vadd.f32 %v5735, %v5833
        %v5835 = vpop.f32.mrb[0].mxu0
        %5836 = vmatprep.mubr.f32.mxu0 0.0
        %5837 = vmatmul.mubr.f32.gmra.mrb[0].mxu0 %v5584
        %v5838 = vpop.f32.mrb[0].mxu0
        %v5839 = vadd.f32 %v5736, %v5838
        %v5840 = vpop.f32.mrb[0].mxu0
        %5841 = vmatprep.mubr.f32.mxu0 0.0
        %5842 = vmatmul.mubr.f32.gmra.mrb[0].mxu0 %v5587
        %v5843 = vpop.f32.mrb[0].mxu0
        %v5844 = vadd.f32 %v5737, %v5843
        %v5845 = vpop.f32.mrb[0].mxu0
        %5846 = vmatprep.mubr.f32.mxu0 0.0
        %5847 = vmatmul.mubr.f32.gmra.mrb[0].mxu0 %v5590
        %v5848 = vpop.f32.mrb[0].mxu0
        %v5849 = vadd.f32 %v5738, %v5848
        %v5850 = vpop.f32.mrb[0].mxu0
        %5851 = vmatprep.mubr.f32.mxu0 0.0
        %5852 = vmatmul.mubr.f32.gmra.mrb[0].mxu0 %v5593
        %v5853 = vpop.f32.mrb[0].mxu0
        %v5854 = vadd.f32 %v5739, %v5853
        %v5855 = vpop.f32.mrb[0].mxu0
        %5856 = vmatprep.mubr.f32.mxu0 0.0
        %5857 = vmatmul.mubr.f32.gmra.mrb[0].mxu0 %v5596
        %v5858 = vpop.f32.mrb[0].mxu0
        %v5859 = vadd.f32 %v5740, %v5858
        %v5860 = vpop.f32.mrb[0].mxu0
        %5861 = vmatprep.mubr.f32.mxu0 0.0
        %5862 = vmatmul.mubr.f32.gmra.mrb[0].mxu0 %v5599
        %v5863 = vpop.f32.mrb[0].mxu0
        %v5864 = vadd.f32 %v5741, %v5863
        %v5865 = vpop.f32.mrb[0].mxu0
        %5866 = vdwg.mxu0
        %v5867 = vld [vmem:[%s10 + $0x80] sm:$0xff]
        %v5868 = vld [vmem:[%s10 + $0x88] sm:$0xff]
        %v5869 = vld [vmem:[%s10 + $0x90] sm:$0xff]
        %v5870 = vld [vmem:[%s10 + $0x98] sm:$0xff]
        %v5871 = vld [vmem:[%s11 + $0x180] sm:$0xff]
        %v5872 = vld [vmem:[%s11 + $0x188] sm:$0xff]
        %v5873 = vld [vmem:[%s11 + $0x190] sm:$0xff]
        %v5874 = vld [vmem:[%s11 + $0x198] sm:$0xff]
        %v5875 = vld [vmem:[%s11 + $0x1a0] sm:$0xff]
        %v5876 = vld [vmem:[%s11 + $0x1a8] sm:$0xff]
        %v5877 = vld [vmem:[%s11 + $0x1b0] sm:$0xff]
        %v5878 = vld [vmem:[%s11 + $0x1b8] sm:$0xff]
        %v5879 = vld [vmem:[%s11 + $0x1c0] sm:$0xff]
        %v5880 = vld [vmem:[%s11 + $0x1c8] sm:$0xff]
        %v5881 = vld [vmem:[%s11 + $0x1d0] sm:$0xff]
        %v5882 = vld [vmem:[%s11 + $0x1d8] sm:$0xff]
        %5883 = vmatprep.subr.mxu0 0.0
        %5884 = vmatpush1.msra.mxu0 %v5867
        %5885 = vmatprep.subr.mxu0 0.0
        %5886 = vmatpush1.msra.mxu0 %v5868
        %5887 = vmatprep.subr.mxu0 0.0
        %5888 = vmatpush1.msra.mxu0 %v5869
        %5889 = vmatprep.subr.mxu0 0.0
        %5890 = vmatpush1.msra.mxu0 %v5870
        %5891 = vmatprep.subr.mxu0 0.0
        %5892 = vmatpush1.msra.mxu0 0.0
        %5893 = vmatprep.subr.mxu0 0.0
        %5894 = vmatpush1.msra.mxu0 0.0
        %5895 = vmatprep.subr.mxu0 0.0
        %5896 = vmatpush1.msra.mxu0 0.0
        %5897 = vmatprep.subr.mxu0 0.0
        %5898 = vmatpush1.msra.mxu0 0.0
        %5899 = vmatprep.subr.mxu0 0.0
        %5900 = vmatpush1.msra.mxu0 0.0
        %5901 = vmatprep.subr.mxu0 0.0
        %5902 = vmatpush1.msra.mxu0 0.0
        %5903 = vmatprep.subr.mxu0 0.0
        %5904 = vmatpush1.msra.mxu0 0.0
        %5905 = vmatprep.subr.mxu0 0.0
        %5906 = vmatpush1.msra.mxu0 0.0
        %5907 = vmatprep.subr.mxu0 0.0
        %5908 = vmatpush1.msra.mxu0 0.0
        %5909 = vmatprep.subr.mxu0 0.0
        %5910 = vmatpush1.msra.mxu0 0.0
        %5911 = vmatprep.subr.mxu0 0.0
        %5912 = vmatpush1.msra.mxu0 0.0
        %5913 = vmatprep.subr.mxu0 0.0
        %5914 = vmatpush1.msra.mxu0 0.0
        %5915 = vmatprep.subr.mxu0 0.0
        %5916 = vmatpush1.msra.mxu0 0.0
        %5917 = vmatprep.subr.mxu0 0.0
        %5918 = vmatpush1.msra.mxu0 0.0
        %5919 = vmatprep.subr.mxu0 0.0
        %5920 = vmatpush1.msra.mxu0 0.0
        %5921 = vmatprep.subr.mxu0 0.0
        %5922 = vmatpush1.msra.mxu0 0.0
        %5923 = vmatprep.subr.mxu0 0.0
        %5924 = vmatpush1.msra.mxu0 0.0
        %5925 = vmatprep.subr.mxu0 0.0
        %5926 = vmatpush1.msra.mxu0 0.0
        %5927 = vmatprep.subr.mxu0 0.0
        %5928 = vmatpush1.msra.mxu0 0.0
        %5929 = vmatprep.subr.mxu0 0.0
        %5930 = vmatpush1.msra.mxu0 0.0
        %5931 = vmatprep.subr.mxu0 0.0
        %5932 = vmatpush1.msra.mxu0 0.0
        %5933 = vmatprep.subr.mxu0 0.0
        %5934 = vmatpush1.msra.mxu0 0.0
        %5935 = vmatprep.subr.mxu0 0.0
        %5936 = vmatpush1.msra.mxu0 0.0
        %5937 = vmatprep.subr.mxu0 0.0
        %5938 = vmatpush1.msra.mxu0 0.0
        %5939 = vmatprep.subr.mxu0 0.0
        %5940 = vmatpush1.msra.mxu0 0.0
        %5941 = vmatprep.subr.mxu0 0.0
        %5942 = vmatpush1.msra.mxu0 0.0
        %5943 = vmatprep.subr.mxu0 0.0
        %5944 = vmatpush1.msra.mxu0 0.0
        %5945 = vmatprep.subr.mxu0 0.0
        %5946 = vmatpush1.msra.mxu0 0.0
        %5947 = vmatprep.mubr.f32.mxu0 0.0
        %5948 = vmatmul.mubr.f32.gmra.mrb[0].mxu0 %v5566
        %v5949 = vpop.f32.mrb[0].mxu0
        %v5950 = vadd.f32 %v5871, %v5949
        %v5951 = vpop.f32.mrb[0].mxu0
        %5952 = vmatprep.mubr.f32.mxu0 0.0
        %5953 = vmatmul.mubr.f32.gmra.mrb[0].mxu0 %v5569
        %v5954 = vpop.f32.mrb[0].mxu0
        %v5955 = vadd.f32 %v5872, %v5954
        %v5956 = vpop.f32.mrb[0].mxu0
        %5957 = vmatprep.mubr.f32.mxu0 0.0
        %5958 = vmatmul.mubr.f32.gmra.mrb[0].mxu0 %v5572
        %v5959 = vpop.f32.mrb[0].mxu0
        %v5960 = vadd.f32 %v5873, %v5959
        %v5961 = vpop.f32.mrb[0].mxu0
        %5962 = vmatprep.mubr.f32.mxu0 0.0
        %5963 = vmatmul.mubr.f32.gmra.mrb[0].mxu0 %v5575
        %v5964 = vpop.f32.mrb[0].mxu0
        %v5965 = vadd.f32 %v5874, %v5964
        %v5966 = vpop.f32.mrb[0].mxu0
        %5967 = vmatprep.mubr.f32.mxu0 0.0
        %5968 = vmatmul.mubr.f32.gmra.mrb[0].mxu0 %v5578
        %v5969 = vpop.f32.mrb[0].mxu0
        %v5970 = vadd.f32 %v5875, %v5969
        %v5971 = vpop.f32.mrb[0].mxu0
        %5972 = vmatprep.mubr.f32.mxu0 0.0
        %5973 = vmatmul.mubr.f32.gmra.mrb[0].mxu0 %v5581
        %v5974 = vpop.f32.mrb[0].mxu0
        %v5975 = vadd.f32 %v5876, %v5974
        %v5976 = vpop.f32.mrb[0].mxu0
        %5977 = vmatprep.mubr.f32.mxu0 0.0
        %5978 = vmatmul.mubr.f32.gmra.mrb[0].mxu0 %v5584
        %v5979 = vpop.f32.mrb[0].mxu0
        %v5980 = vadd.f32 %v5877, %v5979
        %v5981 = vpop.f32.mrb[0].mxu0
        %5982 = vmatprep.mubr.f32.mxu0 0.0
        %5983 = vmatmul.mubr.f32.gmra.mrb[0].mxu0 %v5587
        %v5984 = vpop.f32.mrb[0].mxu0
        %v5985 = vadd.f32 %v5878, %v5984
        %v5986 = vpop.f32.mrb[0].mxu0
        %5987 = vmatprep.mubr.f32.mxu0 0.0
        %5988 = vmatmul.mubr.f32.gmra.mrb[0].mxu0 %v5590
        %v5989 = vpop.f32.mrb[0].mxu0
        %v5990 = vadd.f32 %v5879, %v5989
        %v5991 = vpop.f32.mrb[0].mxu0
        %5992 = vmatprep.mubr.f32.mxu0 0.0
        %5993 = vmatmul.mubr.f32.gmra.mrb[0].mxu0 %v5593
        %v5994 = vpop.f32.mrb[0].mxu0
        %v5995 = vadd.f32 %v5880, %v5994
        %v5996 = vpop.f32.mrb[0].mxu0
        %5997 = vmatprep.mubr.f32.mxu0 0.0
        %5998 = vmatmul.mubr.f32.gmra.mrb[0].mxu0 %v5596
        %v5999 = vpop.f32.mrb[0].mxu0
        %v6000 = vadd.f32 %v5881, %v5999
        %v6001 = vpop.f32.mrb[0].mxu0
        %6002 = vmatprep.mubr.f32.mxu0 0.0
        %6003 = vmatmul.mubr.f32.gmra.mrb[0].mxu0 %v5599
        %v6004 = vpop.f32.mrb[0].mxu0
        %v6005 = vadd.f32 %v5882, %v6004
        %v6006 = vpop.f32.mrb[0].mxu0
        %6007 = vdwg.mxu0
        %v6008 = vld [vmem:[%s10 + $0xa0] sm:$0xff]
        %v6009 = vld [vmem:[%s10 + $0xa8] sm:$0xff]
        %v6010 = vld [vmem:[%s10 + $0xb0] sm:$0xff]
        %v6011 = vld [vmem:[%s10 + $0xb8] sm:$0xff]
        %v6012 = vld [vmem:[%s11 + $0x1e0] sm:$0xff]
        %v6013 = vld [vmem:[%s11 + $0x1e8] sm:$0xff]
        %v6014 = vld [vmem:[%s11 + $0x1f0] sm:$0xff]
        %v6015 = vld [vmem:[%s11 + $0x1f8] sm:$0xff]
        %v6016 = vld [vmem:[%s11 + $0x200] sm:$0xff]
        %v6017 = vld [vmem:[%s11 + $0x208] sm:$0xff]
        %v6018 = vld [vmem:[%s11 + $0x210] sm:$0xff]
        %v6019 = vld [vmem:[%s11 + $0x218] sm:$0xff]
        %v6020 = vld [vmem:[%s11 + $0x220] sm:$0xff]
        %v6021 = vld [vmem:[%s11 + $0x228] sm:$0xff]
        %v6022 = vld [vmem:[%s11 + $0x230] sm:$0xff]
        %v6023 = vld [vmem:[%s11 + $0x238] sm:$0xff]
        %6024 = vmatprep.subr.mxu0 0.0
        %6025 = vmatpush1.msra.mxu0 %v6008
        %6026 = vmatprep.subr.mxu0 0.0
        %6027 = vmatpush1.msra.mxu0 %v6009
        %6028 = vmatprep.subr.mxu0 0.0
        %6029 = vmatpush1.msra.mxu0 %v6010
        %6030 = vmatprep.subr.mxu0 0.0
        %6031 = vmatpush1.msra.mxu0 %v6011
        %6032 = vmatprep.subr.mxu0 0.0
        %6033 = vmatpush1.msra.mxu0 0.0
        %6034 = vmatprep.subr.mxu0 0.0
        %6035 = vmatpush1.msra.mxu0 0.0
        %6036 = vmatprep.subr.mxu0 0.0
        %6037 = vmatpush1.msra.mxu0 0.0
        %6038 = vmatprep.subr.mxu0 0.0
        %6039 = vmatpush1.msra.mxu0 0.0
        %6040 = vmatprep.subr.mxu0 0.0
        %6041 = vmatpush1.msra.mxu0 0.0
        %6042 = vmatprep.subr.mxu0 0.0
        %6043 = vmatpush1.msra.mxu0 0.0
        %6044 = vmatprep.subr.mxu0 0.0
        %6045 = vmatpush1.msra.mxu0 0.0
        %6046 = vmatprep.subr.mxu0 0.0
        %6047 = vmatpush1.msra.mxu0 0.0
        %6048 = vmatprep.subr.mxu0 0.0
        %6049 = vmatpush1.msra.mxu0 0.0
        %6050 = vmatprep.subr.mxu0 0.0
        %6051 = vmatpush1.msra.mxu0 0.0
        %6052 = vmatprep.subr.mxu0 0.0
        %6053 = vmatpush1.msra.mxu0 0.0
        %6054 = vmatprep.subr.mxu0 0.0
        %6055 = vmatpush1.msra.mxu0 0.0
        %6056 = vmatprep.subr.mxu0 0.0
        %6057 = vmatpush1.msra.mxu0 0.0
        %6058 = vmatprep.subr.mxu0 0.0
        %6059 = vmatpush1.msra.mxu0 0.0
        %6060 = vmatprep.subr.mxu0 0.0
        %6061 = vmatpush1.msra.mxu0 0.0
        %6062 = vmatprep.subr.mxu0 0.0
        %6063 = vmatpush1.msra.mxu0 0.0
        %6064 = vmatprep.subr.mxu0 0.0
        %6065 = vmatpush1.msra.mxu0 0.0
        %6066 = vmatprep.subr.mxu0 0.0
        %6067 = vmatpush1.msra.mxu0 0.0
        %6068 = vmatprep.subr.mxu0 0.0
        %6069 = vmatpush1.msra.mxu0 0.0
        %6070 = vmatprep.subr.mxu0 0.0
        %6071 = vmatpush1.msra.mxu0 0.0
        %6072 = vmatprep.subr.mxu0 0.0
        %6073 = vmatpush1.msra.mxu0 0.0
        %6074 = vmatprep.subr.mxu0 0.0
        %6075 = vmatpush1.msra.mxu0 0.0
        %6076 = vmatprep.subr.mxu0 0.0
        %6077 = vmatpush1.msra.mxu0 0.0
        %6078 = vmatprep.subr.mxu0 0.0
        %6079 = vmatpush1.msra.mxu0 0.0
        %6080 = vmatprep.subr.mxu0 0.0
        %6081 = vmatpush1.msra.mxu0 0.0
        %6082 = vmatprep.subr.mxu0 0.0
        %6083 = vmatpush1.msra.mxu0 0.0
        %6084 = vmatprep.subr.mxu0 0.0
        %6085 = vmatpush1.msra.mxu0 0.0
        %6086 = vmatprep.subr.mxu0 0.0
        %6087 = vmatpush1.msra.mxu0 0.0
        %6088 = vmatprep.mubr.f32.mxu0 0.0
        %6089 = vmatmul.mubr.f32.gmra.mrb[0].mxu0 %v5566
        %v6090 = vpop.f32.mrb[0].mxu0
        %v6091 = vadd.f32 %v6012, %v6090
        %v6092 = vpop.f32.mrb[0].mxu0
        %6093 = vmatprep.mubr.f32.mxu0 0.0
        %6094 = vmatmul.mubr.f32.gmra.mrb[0].mxu0 %v5569
        %v6095 = vpop.f32.mrb[0].mxu0
        %v6096 = vadd.f32 %v6013, %v6095
        %v6097 = vpop.f32.mrb[0].mxu0
        %6098 = vmatprep.mubr.f32.mxu0 0.0
        %6099 = vmatmul.mubr.f32.gmra.mrb[0].mxu0 %v5572
        %v6100 = vpop.f32.mrb[0].mxu0
        %v6101 = vadd.f32 %v6014, %v6100
        %v6102 = vpop.f32.mrb[0].mxu0
        %6103 = vmatprep.mubr.f32.mxu0 0.0
        %6104 = vmatmul.mubr.f32.gmra.mrb[0].mxu0 %v5575
        %v6105 = vpop.f32.mrb[0].mxu0
        %v6106 = vadd.f32 %v6015, %v6105
        %v6107 = vpop.f32.mrb[0].mxu0
        %6108 = vmatprep.mubr.f32.mxu0 0.0
        %6109 = vmatmul.mubr.f32.gmra.mrb[0].mxu0 %v5578
        %v6110 = vpop.f32.mrb[0].mxu0
        %v6111 = vadd.f32 %v6016, %v6110
        %v6112 = vpop.f32.mrb[0].mxu0
        %6113 = vmatprep.mubr.f32.mxu0 0.0
        %6114 = vmatmul.mubr.f32.gmra.mrb[0].mxu0 %v5581
        %v6115 = vpop.f32.mrb[0].mxu0
        %v6116 = vadd.f32 %v6017, %v6115
        %v6117 = vpop.f32.mrb[0].mxu0
        %6118 = vmatprep.mubr.f32.mxu0 0.0
        %6119 = vmatmul.mubr.f32.gmra.mrb[0].mxu0 %v5584
        %v6120 = vpop.f32.mrb[0].mxu0
        %v6121 = vadd.f32 %v6018, %v6120
        %v6122 = vpop.f32.mrb[0].mxu0
        %6123 = vmatprep.mubr.f32.mxu0 0.0
        %6124 = vmatmul.mubr.f32.gmra.mrb[0].mxu0 %v5587
        %v6125 = vpop.f32.mrb[0].mxu0
        %v6126 = vadd.f32 %v6019, %v6125
        %v6127 = vpop.f32.mrb[0].mxu0
        %6128 = vmatprep.mubr.f32.mxu0 0.0
        %6129 = vmatmul.mubr.f32.gmra.mrb[0].mxu0 %v5590
        %v6130 = vpop.f32.mrb[0].mxu0
        %v6131 = vadd.f32 %v6020, %v6130
        %v6132 = vpop.f32.mrb[0].mxu0
        %6133 = vmatprep.mubr.f32.mxu0 0.0
        %6134 = vmatmul.mubr.f32.gmra.mrb[0].mxu0 %v5593
        %v6135 = vpop.f32.mrb[0].mxu0
        %v6136 = vadd.f32 %v6021, %v6135
        %v6137 = vpop.f32.mrb[0].mxu0
        %6138 = vmatprep.mubr.f32.mxu0 0.0
        %6139 = vmatmul.mubr.f32.gmra.mrb[0].mxu0 %v5596
        %v6140 = vpop.f32.mrb[0].mxu0
        %v6141 = vadd.f32 %v6022, %v6140
        %v6142 = vpop.f32.mrb[0].mxu0
        %6143 = vmatprep.mubr.f32.mxu0 0.0
        %6144 = vmatmul.mubr.f32.gmra.mrb[0].mxu0 %v5599
        %v6145 = vpop.f32.mrb[0].mxu0
        %v6146 = vadd.f32 %v6023, %v6145
        %v6147 = vpop.f32.mrb[0].mxu0
        %6148 = vdwg.mxu0
        %v6150 = vsel %vm945, %v5668, 0
        %v6153 = vsel %vm945, %v5673, 0
        %v6156 = vsel %vm945, %v5678, 0
        %v6159 = vsel %vm945, %v5683, 0
        %v6162 = vsel %vm945, %v5688, 0
        %v6165 = vsel %vm945, %v5693, 0
        %v6168 = vsel %vm945, %v5698, 0
        %v6171 = vsel %vm945, %v5703, 0
        %v6174 = vsel %vm945, %v5708, 0
        %v6177 = vsel %vm945, %v5713, 0
        %v6180 = vsel %vm945, %v5718, 0
        %v6183 = vsel %vm945, %v5723, 0
        %v6186 = vsel %vm945, %v5809, 0
        %v6189 = vsel %vm945, %v5814, 0
        %v6192 = vsel %vm945, %v5819, 0
        %v6195 = vsel %vm945, %v5824, 0
        %v6198 = vsel %vm945, %v5829, 0
        %v6201 = vsel %vm945, %v5834, 0
        %v6204 = vsel %vm945, %v5839, 0
        %v6207 = vsel %vm945, %v5844, 0
        %v6210 = vsel %vm945, %v5849, 0
        %v6213 = vsel %vm945, %v5854, 0
        %v6216 = vsel %vm945, %v5859, 0
        %v6219 = vsel %vm945, %v5864, 0
        %6221 = vmatprep.subr.mxu0 0.0
        %6222 = vmatpush1.xpose.msra.mxu0 %v6186
        %6223 = vmatprep.subr.mxu0 0.0
        %6224 = vmatpush1.xpose.msra.mxu0 %v6189
        %6225 = vmatprep.subr.mxu0 0.0
        %6226 = vmatpush1.xpose.msra.mxu0 %v6192
        %6227 = vmatprep.subr.mxu0 0.0
        %6228 = vmatpush1.xpose.msra.mxu0 %v6195
        %6229 = vmatprep.subr.mxu0 0.0
        %6230 = vmatpush1.xpose.msra.mxu0 %v6198
        %6231 = vmatprep.subr.mxu0 0.0
        %6232 = vmatpush1.xpose.msra.mxu0 %v6201
        %6233 = vmatprep.subr.mxu0 0.0
        %6234 = vmatpush1.xpose.msra.mxu0 %v6204
        %6235 = vmatprep.subr.mxu0 0.0
        %6236 = vmatpush1.xpose.msra.mxu0 %v6207
        %6237 = vmatprep.subr.mxu0 0.0
        %6238 = vmatpush1.xpose.msra.mxu0 %v6210
        %6239 = vmatprep.subr.mxu0 0.0
        %6240 = vmatpush1.xpose.msra.mxu0 %v6213
        %6241 = vmatprep.subr.mxu0 0.0
        %6242 = vmatpush1.xpose.msra.mxu0 %v6216
        %6243 = vmatprep.subr.mxu0 0.0
        %6244 = vmatpush1.xpose.msra.mxu0 %v6219
        %6245 = vmatprep.subr.mxu0 0.0
        %6246 = vmatpush1.xpose.msra.mxu0 0.0
        %6247 = vmatprep.subr.mxu0 0.0
        %6248 = vmatpush1.xpose.msra.mxu0 0.0
        %6249 = vmatprep.subr.mxu0 0.0
        %6250 = vmatpush1.xpose.msra.mxu0 0.0
        %6251 = vmatprep.subr.mxu0 0.0
        %6252 = vmatpush1.xpose.msra.mxu0 0.0
        %6253 = vmatprep.subr.mxu0 0.0
        %6254 = vmatpush1.xpose.msra.mxu0 0.0
        %6255 = vmatprep.subr.mxu0 0.0
        %6256 = vmatpush1.xpose.msra.mxu0 0.0
        %6257 = vmatprep.subr.mxu0 0.0
        %6258 = vmatpush1.xpose.msra.mxu0 0.0
        %6259 = vmatprep.subr.mxu0 0.0
        %6260 = vmatpush1.xpose.msra.mxu0 0.0
        %6261 = vmatprep.subr.mxu0 0.0
        %6262 = vmatpush1.xpose.msra.mxu0 0.0
        %6263 = vmatprep.subr.mxu0 0.0
        %6264 = vmatpush1.xpose.msra.mxu0 0.0
        %6265 = vmatprep.subr.mxu0 0.0
        %6266 = vmatpush1.xpose.msra.mxu0 0.0
        %6267 = vmatprep.subr.mxu0 0.0
        %6268 = vmatpush1.xpose.msra.mxu0 0.0
        %6269 = vmatprep.subr.mxu0 0.0
        %6270 = vmatpush1.xpose.msra.mxu0 0.0
        %6271 = vmatprep.subr.mxu0 0.0
        %6272 = vmatpush1.xpose.msra.mxu0 0.0
        %6273 = vmatprep.subr.mxu0 0.0
        %6274 = vmatpush1.xpose.msra.mxu0 0.0
        %6275 = vmatprep.subr.mxu0 0.0
        %6276 = vmatpush1.xpose.msra.mxu0 0.0
        %6277 = vmatprep.subr.mxu0 0.0
        %6278 = vmatpush1.xpose.msra.mxu0 0.0
        %6279 = vmatprep.subr.mxu0 0.0
        %6280 = vmatpush1.xpose.msra.mxu0 0.0
        %6281 = vmatprep.subr.mxu0 0.0
        %6282 = vmatpush1.xpose.msra.mxu0 0.0
        %6283 = vmatprep.subr.mxu0 0.0
        %6284 = vmatpush1.xpose.msra.mxu0 0.0
        %6285 = vmatprep.mubr.f32.mxu0 0.0
        %6286 = vmatmul.mubr.f32.gmra.mrb[0].mxu0 %v6150
        %v6287 = vpop.f32.mrb[0].mxu0
        %v6288 = vadd.f32 %v2065, %v6287
        %v6289 = vpop.f32.mrb[0].mxu0
        %6290 = vmatprep.mubr.f32.mxu0 0.0
        %6291 = vmatmul.mubr.f32.gmra.mrb[0].mxu0 %v6153
        %v6292 = vpop.f32.mrb[0].mxu0
        %v6293 = vadd.f32 %v2066, %v6292
        %v6294 = vpop.f32.mrb[0].mxu0
        %6295 = vmatprep.mubr.f32.mxu0 0.0
        %6296 = vmatmul.mubr.f32.gmra.mrb[0].mxu0 %v6156
        %v6297 = vpop.f32.mrb[0].mxu0
        %v6298 = vadd.f32 %v2067, %v6297
        %v6299 = vpop.f32.mrb[0].mxu0
        %6300 = vmatprep.mubr.f32.mxu0 0.0
        %6301 = vmatmul.mubr.f32.gmra.mrb[0].mxu0 %v6159
        %v6302 = vpop.f32.mrb[0].mxu0
        %v6303 = vadd.f32 %v2068, %v6302
        %v6304 = vpop.f32.mrb[0].mxu0
        %6305 = vmatprep.mubr.f32.mxu0 0.0
        %6306 = vmatmul.mubr.f32.gmra.mrb[0].mxu0 %v6162
        %v6307 = vpop.f32.mrb[0].mxu0
        %v6308 = vadd.f32 %v2069, %v6307
        %v6309 = vpop.f32.mrb[0].mxu0
        %6310 = vmatprep.mubr.f32.mxu0 0.0
        %6311 = vmatmul.mubr.f32.gmra.mrb[0].mxu0 %v6165
        %v6312 = vpop.f32.mrb[0].mxu0
        %v6313 = vadd.f32 %v2070, %v6312
        %v6314 = vpop.f32.mrb[0].mxu0
        %6315 = vmatprep.mubr.f32.mxu0 0.0
        %6316 = vmatmul.mubr.f32.gmra.mrb[0].mxu0 %v6168
        %v6317 = vpop.f32.mrb[0].mxu0
        %v6318 = vadd.f32 %v2071, %v6317
        %v6319 = vpop.f32.mrb[0].mxu0
        %6320 = vmatprep.mubr.f32.mxu0 0.0
        %6321 = vmatmul.mubr.f32.gmra.mrb[0].mxu0 %v6171
        %v6322 = vpop.f32.mrb[0].mxu0
        %v6323 = vadd.f32 %v2072, %v6322
        %v6324 = vpop.f32.mrb[0].mxu0
        %6325 = vmatprep.mubr.f32.mxu0 0.0
        %6326 = vmatmul.mubr.f32.gmra.mrb[0].mxu0 %v6174
        %v6327 = vpop.f32.mrb[0].mxu0
        %v6328 = vadd.f32 %v2073, %v6327
        %v6329 = vpop.f32.mrb[0].mxu0
        %6330 = vmatprep.mubr.f32.mxu0 0.0
        %6331 = vmatmul.mubr.f32.gmra.mrb[0].mxu0 %v6177
        %v6332 = vpop.f32.mrb[0].mxu0
        %v6333 = vadd.f32 %v2074, %v6332
        %v6334 = vpop.f32.mrb[0].mxu0
        %6335 = vmatprep.mubr.f32.mxu0 0.0
        %6336 = vmatmul.mubr.f32.gmra.mrb[0].mxu0 %v6180
        %v6337 = vpop.f32.mrb[0].mxu0
        %v6338 = vadd.f32 %v2075, %v6337
        %v6339 = vpop.f32.mrb[0].mxu0
        %6340 = vmatprep.mubr.f32.mxu0 0.0
        %6341 = vmatmul.mubr.f32.gmra.mrb[0].mxu0 %v6183
        %v6342 = vpop.f32.mrb[0].mxu0
        %v6343 = vadd.f32 %v2076, %v6342
        %v6344 = vpop.f32.mrb[0].mxu0
        %6345 = vdwg.mxu0
        %v6346 = vsel %vm2274, %v6288, -inf
        %6347 = vmax.xlane.f32.xlu0 %v6346
        %v6348 = vpop.xlane.xlu0 %6347
        %v6349 = vsel %vm2274, %v6293, -inf
        %6350 = vmax.xlane.f32.xlu0 %v6349
        %v6351 = vpop.xlane.xlu0 %6350
        %v6352 = vsel %vm2274, %v6298, -inf
        %6353 = vmax.xlane.f32.xlu0 %v6352
        %v6354 = vpop.xlane.xlu0 %6353
        %v6355 = vsel %vm2274, %v6303, -inf
        %6356 = vmax.xlane.f32.xlu0 %v6355
        %v6357 = vpop.xlane.xlu0 %6356
        %v6358 = vsel %vm2274, %v6308, -inf
        %6359 = vmax.xlane.f32.xlu0 %v6358
        %v6360 = vpop.xlane.xlu0 %6359
        %v6361 = vsel %vm2274, %v6313, -inf
        %6362 = vmax.xlane.f32.xlu0 %v6361
        %v6363 = vpop.xlane.xlu0 %6362
        %v6364 = vsel %vm2274, %v6318, -inf
        %6365 = vmax.xlane.f32.xlu0 %v6364
        %v6366 = vpop.xlane.xlu0 %6365
        %v6367 = vsel %vm2274, %v6323, -inf
        %6368 = vmax.xlane.f32.xlu0 %v6367
        %v6369 = vpop.xlane.xlu0 %6368
        %v6370 = vsel %vm2274, %v6328, -inf
        %6371 = vmax.xlane.f32.xlu0 %v6370
        %v6372 = vpop.xlane.xlu0 %6371
        %v6373 = vsel %vm2274, %v6333, -inf
        %6374 = vmax.xlane.f32.xlu0 %v6373
        %v6375 = vpop.xlane.xlu0 %6374
        %v6376 = vsel %vm2274, %v6338, -inf
        %6377 = vmax.xlane.f32.xlu0 %v6376
        %v6378 = vpop.xlane.xlu0 %6377
        %v6379 = vsel %vm2274, %v6343, -inf
        %6380 = vmax.xlane.f32.xlu0 %v6379
        %v6381 = vpop.xlane.xlu0 %6380
        %v6382 = vsub.f32 %v6288, %v6348
        %v6383 = vsub.f32 %v6293, %v6351
        %v6384 = vsub.f32 %v6298, %v6354
        %v6385 = vsub.f32 %v6303, %v6357
        %v6386 = vsub.f32 %v6308, %v6360
        %v6387 = vsub.f32 %v6313, %v6363
        %v6388 = vsub.f32 %v6318, %v6366
        %v6389 = vsub.f32 %v6323, %v6369
        %v6390 = vsub.f32 %v6328, %v6372
        %v6391 = vsub.f32 %v6333, %v6375
        %v6392 = vsub.f32 %v6338, %v6378
        %v6393 = vsub.f32 %v6343, %v6381
        %v6394 = vmul.f32 %v6382, 1.442695
        %v6395 = vpow.pop %v6394
        %v6396 = vmul.f32 %v6383, 1.442695
        %v6397 = vpow.pop %v6396
        %v6398 = vmul.f32 %v6384, 1.442695
        %v6399 = vpow.pop %v6398
        %v6400 = vmul.f32 %v6385, 1.442695
        %v6401 = vpow.pop %v6400
        %v6402 = vmul.f32 %v6386, 1.442695
        %v6403 = vpow.pop %v6402
        %v6404 = vmul.f32 %v6387, 1.442695
        %v6405 = vpow.pop %v6404
        %v6406 = vmul.f32 %v6388, 1.442695
        %v6407 = vpow.pop %v6406
        %v6408 = vmul.f32 %v6389, 1.442695
        %v6409 = vpow.pop %v6408
        %v6410 = vmul.f32 %v6390, 1.442695
        %v6411 = vpow.pop %v6410
        %v6412 = vmul.f32 %v6391, 1.442695
        %v6413 = vpow.pop %v6412
        %v6414 = vmul.f32 %v6392, 1.442695
        %v6415 = vpow.pop %v6414
        %v6416 = vmul.f32 %v6393, 1.442695
        %v6417 = vpow.pop %v6416
        %v6418 = vsel %vm2274, %v6395, 0.0
        %6419 = vadd.xlane.f32.xlu0 %v6418
        %v6420 = vpop.xlane.xlu0 %6419
        %v6421 = vsel %vm2274, %v6397, 0.0
        %6422 = vadd.xlane.f32.xlu0 %v6421
        %v6423 = vpop.xlane.xlu0 %6422
        %v6424 = vsel %vm2274, %v6399, 0.0
        %6425 = vadd.xlane.f32.xlu0 %v6424
        %v6426 = vpop.xlane.xlu0 %6425
        %v6427 = vsel %vm2274, %v6401, 0.0
        %6428 = vadd.xlane.f32.xlu0 %v6427
        %v6429 = vpop.xlane.xlu0 %6428
        %v6430 = vsel %vm2274, %v6403, 0.0
        %6431 = vadd.xlane.f32.xlu0 %v6430
        %v6432 = vpop.xlane.xlu0 %6431
        %v6433 = vsel %vm2274, %v6405, 0.0
        %6434 = vadd.xlane.f32.xlu0 %v6433
        %v6435 = vpop.xlane.xlu0 %6434
        %v6436 = vsel %vm2274, %v6407, 0.0
        %6437 = vadd.xlane.f32.xlu0 %v6436
        %v6438 = vpop.xlane.xlu0 %6437
        %v6439 = vsel %vm2274, %v6409, 0.0
        %6440 = vadd.xlane.f32.xlu0 %v6439
        %v6441 = vpop.xlane.xlu0 %6440
        %v6442 = vsel %vm2274, %v6411, 0.0
        %6443 = vadd.xlane.f32.xlu0 %v6442
        %v6444 = vpop.xlane.xlu0 %6443
        %v6445 = vsel %vm2274, %v6413, 0.0
        %6446 = vadd.xlane.f32.xlu0 %v6445
        %v6447 = vpop.xlane.xlu0 %6446
        %v6448 = vsel %vm2274, %v6415, 0.0
        %6449 = vadd.xlane.f32.xlu0 %v6448
        %v6450 = vpop.xlane.xlu0 %6449
        %v6451 = vsel %vm2274, %v6417, 0.0
        %6452 = vadd.xlane.f32.xlu0 %v6451
        %v6453 = vpop.xlane.xlu0 %6452
        %v6454 = vrcp.pop %v6420
        %v6455 = vmul.f32 %v6395, %v6454
        %v6456 = vrcp.pop %v6423
        %v6457 = vmul.f32 %v6397, %v6456
        %v6458 = vrcp.pop %v6426
        %v6459 = vmul.f32 %v6399, %v6458
        %v6460 = vrcp.pop %v6429
        %v6461 = vmul.f32 %v6401, %v6460
        %v6462 = vrcp.pop %v6432
        %v6463 = vmul.f32 %v6403, %v6462
        %v6464 = vrcp.pop %v6435
        %v6465 = vmul.f32 %v6405, %v6464
        %v6466 = vrcp.pop %v6438
        %v6467 = vmul.f32 %v6407, %v6466
        %v6468 = vrcp.pop %v6441
        %v6469 = vmul.f32 %v6409, %v6468
        %v6470 = vrcp.pop %v6444
        %v6471 = vmul.f32 %v6411, %v6470
        %v6472 = vrcp.pop %v6447
        %v6473 = vmul.f32 %v6413, %v6472
        %v6474 = vrcp.pop %v6450
        %v6475 = vmul.f32 %v6415, %v6474
        %v6476 = vrcp.pop %v6453
        %v6477 = vmul.f32 %v6417, %v6476
        %v6478 = vld [vmem:[%s8 + $0xc0] sm:$0xff]
        %v6479 = vld [vmem:[%s8 + $0xc8] sm:$0xff]
        %v6480 = vld [vmem:[%s8 + $0xd0] sm:$0xff]
        %v6481 = vld [vmem:[%s8 + $0xd8] sm:$0xff]
        %v6482 = vld [vmem:[%s9 + $0x240] sm:$0xff]
        %v6483 = vld [vmem:[%s9 + $0x248] sm:$0xff]
        %v6484 = vld [vmem:[%s9 + $0x250] sm:$0xff]
        %v6485 = vld [vmem:[%s9 + $0x258] sm:$0xff]
        %v6486 = vld [vmem:[%s9 + $0x260] sm:$0xff]
        %v6487 = vld [vmem:[%s9 + $0x268] sm:$0xff]
        %v6488 = vld [vmem:[%s9 + $0x270] sm:$0xff]
        %v6489 = vld [vmem:[%s9 + $0x278] sm:$0xff]
        %v6490 = vld [vmem:[%s9 + $0x280] sm:$0xff]
        %v6491 = vld [vmem:[%s9 + $0x288] sm:$0xff]
        %v6492 = vld [vmem:[%s9 + $0x290] sm:$0xff]
        %v6493 = vld [vmem:[%s9 + $0x298] sm:$0xff]
        %6494 = vmatprep.subr.mxu0 0.0
        %6495 = vmatpush1.msra.mxu0 %v6478
        %6496 = vmatprep.subr.mxu0 0.0
        %6497 = vmatpush1.msra.mxu0 %v6479
        %6498 = vmatprep.subr.mxu0 0.0
        %6499 = vmatpush1.msra.mxu0 %v6480
        %6500 = vmatprep.subr.mxu0 0.0
        %6501 = vmatpush1.msra.mxu0 %v6481
        %6502 = vmatprep.subr.mxu0 0.0
        %6503 = vmatpush1.msra.mxu0 0.0
        %6504 = vmatprep.subr.mxu0 0.0
        %6505 = vmatpush1.msra.mxu0 0.0
        %6506 = vmatprep.subr.mxu0 0.0
        %6507 = vmatpush1.msra.mxu0 0.0
        %6508 = vmatprep.subr.mxu0 0.0
        %6509 = vmatpush1.msra.mxu0 0.0
        %6510 = vmatprep.subr.mxu0 0.0
        %6511 = vmatpush1.msra.mxu0 0.0
        %6512 = vmatprep.subr.mxu0 0.0
        %6513 = vmatpush1.msra.mxu0 0.0
        %6514 = vmatprep.subr.mxu0 0.0
        %6515 = vmatpush1.msra.mxu0 0.0
        %6516 = vmatprep.subr.mxu0 0.0
        %6517 = vmatpush1.msra.mxu0 0.0
        %6518 = vmatprep.subr.mxu0 0.0
        %6519 = vmatpush1.msra.mxu0 0.0
        %6520 = vmatprep.subr.mxu0 0.0
        %6521 = vmatpush1.msra.mxu0 0.0
        %6522 = vmatprep.subr.mxu0 0.0
        %6523 = vmatpush1.msra.mxu0 0.0
        %6524 = vmatprep.subr.mxu0 0.0
        %6525 = vmatpush1.msra.mxu0 0.0
        %6526 = vmatprep.subr.mxu0 0.0
        %6527 = vmatpush1.msra.mxu0 0.0
        %6528 = vmatprep.subr.mxu0 0.0
        %6529 = vmatpush1.msra.mxu0 0.0
        %6530 = vmatprep.subr.mxu0 0.0
        %6531 = vmatpush1.msra.mxu0 0.0
        %6532 = vmatprep.subr.mxu0 0.0
        %6533 = vmatpush1.msra.mxu0 0.0
        %6534 = vmatprep.subr.mxu0 0.0
        %6535 = vmatpush1.msra.mxu0 0.0
        %6536 = vmatprep.subr.mxu0 0.0
        %6537 = vmatpush1.msra.mxu0 0.0
        %6538 = vmatprep.subr.mxu0 0.0
        %6539 = vmatpush1.msra.mxu0 0.0
        %6540 = vmatprep.subr.mxu0 0.0
        %6541 = vmatpush1.msra.mxu0 0.0
        %6542 = vmatprep.subr.mxu0 0.0
        %6543 = vmatpush1.msra.mxu0 0.0
        %6544 = vmatprep.subr.mxu0 0.0
        %6545 = vmatpush1.msra.mxu0 0.0
        %6546 = vmatprep.subr.mxu0 0.0
        %6547 = vmatpush1.msra.mxu0 0.0
        %6548 = vmatprep.subr.mxu0 0.0
        %6549 = vmatpush1.msra.mxu0 0.0
        %6550 = vmatprep.subr.mxu0 0.0
        %6551 = vmatpush1.msra.mxu0 0.0
        %6552 = vmatprep.subr.mxu0 0.0
        %6553 = vmatpush1.msra.mxu0 0.0
        %6554 = vmatprep.subr.mxu0 0.0
        %6555 = vmatpush1.msra.mxu0 0.0
        %6556 = vmatprep.subr.mxu0 0.0
        %6557 = vmatpush1.msra.mxu0 0.0
        %6558 = vmatprep.mubr.f32.mxu0 0.0
        %6559 = vmatmul.mubr.f32.gmra.mrb[0].mxu0 %v5566
        %v6560 = vpop.f32.mrb[0].mxu0
        %v6561 = vadd.f32 %v6482, %v6560
        %v6562 = vpop.f32.mrb[0].mxu0
        %6563 = vmatprep.mubr.f32.mxu0 0.0
        %6564 = vmatmul.mubr.f32.gmra.mrb[0].mxu0 %v5569
        %v6565 = vpop.f32.mrb[0].mxu0
        %v6566 = vadd.f32 %v6483, %v6565
        %v6567 = vpop.f32.mrb[0].mxu0
        %6568 = vmatprep.mubr.f32.mxu0 0.0
        %6569 = vmatmul.mubr.f32.gmra.mrb[0].mxu0 %v5572
        %v6570 = vpop.f32.mrb[0].mxu0
        %v6571 = vadd.f32 %v6484, %v6570
        %v6572 = vpop.f32.mrb[0].mxu0
        %6573 = vmatprep.mubr.f32.mxu0 0.0
        %6574 = vmatmul.mubr.f32.gmra.mrb[0].mxu0 %v5575
        %v6575 = vpop.f32.mrb[0].mxu0
        %v6576 = vadd.f32 %v6485, %v6575
        %v6577 = vpop.f32.mrb[0].mxu0
        %6578 = vmatprep.mubr.f32.mxu0 0.0
        %6579 = vmatmul.mubr.f32.gmra.mrb[0].mxu0 %v5578
        %v6580 = vpop.f32.mrb[0].mxu0
        %v6581 = vadd.f32 %v6486, %v6580
        %v6582 = vpop.f32.mrb[0].mxu0
        %6583 = vmatprep.mubr.f32.mxu0 0.0
        %6584 = vmatmul.mubr.f32.gmra.mrb[0].mxu0 %v5581
        %v6585 = vpop.f32.mrb[0].mxu0
        %v6586 = vadd.f32 %v6487, %v6585
        %v6587 = vpop.f32.mrb[0].mxu0
        %6588 = vmatprep.mubr.f32.mxu0 0.0
        %6589 = vmatmul.mubr.f32.gmra.mrb[0].mxu0 %v5584
        %v6590 = vpop.f32.mrb[0].mxu0
        %v6591 = vadd.f32 %v6488, %v6590
        %v6592 = vpop.f32.mrb[0].mxu0
        %6593 = vmatprep.mubr.f32.mxu0 0.0
        %6594 = vmatmul.mubr.f32.gmra.mrb[0].mxu0 %v5587
        %v6595 = vpop.f32.mrb[0].mxu0
        %v6596 = vadd.f32 %v6489, %v6595
        %v6597 = vpop.f32.mrb[0].mxu0
        %6598 = vmatprep.mubr.f32.mxu0 0.0
        %6599 = vmatmul.mubr.f32.gmra.mrb[0].mxu0 %v5590
        %v6600 = vpop.f32.mrb[0].mxu0
        %v6601 = vadd.f32 %v6490, %v6600
        %v6602 = vpop.f32.mrb[0].mxu0
        %6603 = vmatprep.mubr.f32.mxu0 0.0
        %6604 = vmatmul.mubr.f32.gmra.mrb[0].mxu0 %v5593
        %v6605 = vpop.f32.mrb[0].mxu0
        %v6606 = vadd.f32 %v6491, %v6605
        %v6607 = vpop.f32.mrb[0].mxu0
        %6608 = vmatprep.mubr.f32.mxu0 0.0
        %6609 = vmatmul.mubr.f32.gmra.mrb[0].mxu0 %v5596
        %v6610 = vpop.f32.mrb[0].mxu0
        %v6611 = vadd.f32 %v6492, %v6610
        %v6612 = vpop.f32.mrb[0].mxu0
        %6613 = vmatprep.mubr.f32.mxu0 0.0
        %6614 = vmatmul.mubr.f32.gmra.mrb[0].mxu0 %v5599
        %v6615 = vpop.f32.mrb[0].mxu0
        %v6616 = vadd.f32 %v6493, %v6615
        %v6617 = vpop.f32.mrb[0].mxu0
        %6618 = vdwg.mxu0
        %v6619 = vld [vmem:[%s8 + $0xe0] sm:$0xff]
        %v6620 = vld [vmem:[%s8 + $0xe8] sm:$0xff]
        %v6621 = vld [vmem:[%s8 + $0xf0] sm:$0xff]
        %v6622 = vld [vmem:[%s8 + $0xf8] sm:$0xff]
        %v6623 = vld [vmem:[%s9 + $0x2a0] sm:$0xff]
        %v6624 = vld [vmem:[%s9 + $0x2a8] sm:$0xff]
        %v6625 = vld [vmem:[%s9 + $0x2b0] sm:$0xff]
        %v6626 = vld [vmem:[%s9 + $0x2b8] sm:$0xff]
        %v6627 = vld [vmem:[%s9 + $0x2c0] sm:$0xff]
        %v6628 = vld [vmem:[%s9 + $0x2c8] sm:$0xff]
        %v6629 = vld [vmem:[%s9 + $0x2d0] sm:$0xff]
        %v6630 = vld [vmem:[%s9 + $0x2d8] sm:$0xff]
        %v6631 = vld [vmem:[%s9 + $0x2e0] sm:$0xff]
        %v6632 = vld [vmem:[%s9 + $0x2e8] sm:$0xff]
        %v6633 = vld [vmem:[%s9 + $0x2f0] sm:$0xff]
        %v6634 = vld [vmem:[%s9 + $0x2f8] sm:$0xff]
        %6635 = vmatprep.subr.mxu0 0.0
        %6636 = vmatpush1.msra.mxu0 %v6619
        %6637 = vmatprep.subr.mxu0 0.0
        %6638 = vmatpush1.msra.mxu0 %v6620
        %6639 = vmatprep.subr.mxu0 0.0
        %6640 = vmatpush1.msra.mxu0 %v6621
        %6641 = vmatprep.subr.mxu0 0.0
        %6642 = vmatpush1.msra.mxu0 %v6622
        %6643 = vmatprep.subr.mxu0 0.0
        %6644 = vmatpush1.msra.mxu0 0.0
        %6645 = vmatprep.subr.mxu0 0.0
        %6646 = vmatpush1.msra.mxu0 0.0
        %6647 = vmatprep.subr.mxu0 0.0
        %6648 = vmatpush1.msra.mxu0 0.0
        %6649 = vmatprep.subr.mxu0 0.0
        %6650 = vmatpush1.msra.mxu0 0.0
        %6651 = vmatprep.subr.mxu0 0.0
        %6652 = vmatpush1.msra.mxu0 0.0
        %6653 = vmatprep.subr.mxu0 0.0
        %6654 = vmatpush1.msra.mxu0 0.0
        %6655 = vmatprep.subr.mxu0 0.0
        %6656 = vmatpush1.msra.mxu0 0.0
        %6657 = vmatprep.subr.mxu0 0.0
        %6658 = vmatpush1.msra.mxu0 0.0
        %6659 = vmatprep.subr.mxu0 0.0
        %6660 = vmatpush1.msra.mxu0 0.0
        %6661 = vmatprep.subr.mxu0 0.0
        %6662 = vmatpush1.msra.mxu0 0.0
        %6663 = vmatprep.subr.mxu0 0.0
        %6664 = vmatpush1.msra.mxu0 0.0
        %6665 = vmatprep.subr.mxu0 0.0
        %6666 = vmatpush1.msra.mxu0 0.0
        %6667 = vmatprep.subr.mxu0 0.0
        %6668 = vmatpush1.msra.mxu0 0.0
        %6669 = vmatprep.subr.mxu0 0.0
        %6670 = vmatpush1.msra.mxu0 0.0
        %6671 = vmatprep.subr.mxu0 0.0
        %6672 = vmatpush1.msra.mxu0 0.0
        %6673 = vmatprep.subr.mxu0 0.0
        %6674 = vmatpush1.msra.mxu0 0.0
        %6675 = vmatprep.subr.mxu0 0.0
        %6676 = vmatpush1.msra.mxu0 0.0
        %6677 = vmatprep.subr.mxu0 0.0
        %6678 = vmatpush1.msra.mxu0 0.0
        %6679 = vmatprep.subr.mxu0 0.0
        %6680 = vmatpush1.msra.mxu0 0.0
        %6681 = vmatprep.subr.mxu0 0.0
        %6682 = vmatpush1.msra.mxu0 0.0
        %6683 = vmatprep.subr.mxu0 0.0
        %6684 = vmatpush1.msra.mxu0 0.0
        %6685 = vmatprep.subr.mxu0 0.0
        %6686 = vmatpush1.msra.mxu0 0.0
        %6687 = vmatprep.subr.mxu0 0.0
        %6688 = vmatpush1.msra.mxu0 0.0
        %6689 = vmatprep.subr.mxu0 0.0
        %6690 = vmatpush1.msra.mxu0 0.0
        %6691 = vmatprep.subr.mxu0 0.0
        %6692 = vmatpush1.msra.mxu0 0.0
        %6693 = vmatprep.subr.mxu0 0.0
        %6694 = vmatpush1.msra.mxu0 0.0
        %6695 = vmatprep.subr.mxu0 0.0
        %6696 = vmatpush1.msra.mxu0 0.0
        %6697 = vmatprep.subr.mxu0 0.0
        %6698 = vmatpush1.msra.mxu0 0.0
        %6699 = vmatprep.mubr.f32.mxu0 0.0
        %6700 = vmatmul.mubr.f32.gmra.mrb[0].mxu0 %v5566
        %v6701 = vpop.f32.mrb[0].mxu0
        %v6702 = vadd.f32 %v6623, %v6701
        %v6703 = vpop.f32.mrb[0].mxu0
        %6704 = vmatprep.mubr.f32.mxu0 0.0
        %6705 = vmatmul.mubr.f32.gmra.mrb[0].mxu0 %v5569
        %v6706 = vpop.f32.mrb[0].mxu0
        %v6707 = vadd.f32 %v6624, %v6706
        %v6708 = vpop.f32.mrb[0].mxu0
        %6709 = vmatprep.mubr.f32.mxu0 0.0
        %6710 = vmatmul.mubr.f32.gmra.mrb[0].mxu0 %v5572
        %v6711 = vpop.f32.mrb[0].mxu0
        %v6712 = vadd.f32 %v6625, %v6711
        %v6713 = vpop.f32.mrb[0].mxu0
        %6714 = vmatprep.mubr.f32.mxu0 0.0
        %6715 = vmatmul.mubr.f32.gmra.mrb[0].mxu0 %v5575
        %v6716 = vpop.f32.mrb[0].mxu0
        %v6717 = vadd.f32 %v6626, %v6716
        %v6718 = vpop.f32.mrb[0].mxu0
        %6719 = vmatprep.mubr.f32.mxu0 0.0
        %6720 = vmatmul.mubr.f32.gmra.mrb[0].mxu0 %v5578
        %v6721 = vpop.f32.mrb[0].mxu0
        %v6722 = vadd.f32 %v6627, %v6721
        %v6723 = vpop.f32.mrb[0].mxu0
        %6724 = vmatprep.mubr.f32.mxu0 0.0
        %6725 = vmatmul.mubr.f32.gmra.mrb[0].mxu0 %v5581
        %v6726 = vpop.f32.mrb[0].mxu0
        %v6727 = vadd.f32 %v6628, %v6726
        %v6728 = vpop.f32.mrb[0].mxu0
        %6729 = vmatprep.mubr.f32.mxu0 0.0
        %6730 = vmatmul.mubr.f32.gmra.mrb[0].mxu0 %v5584
        %v6731 = vpop.f32.mrb[0].mxu0
        %v6732 = vadd.f32 %v6629, %v6731
        %v6733 = vpop.f32.mrb[0].mxu0
        %6734 = vmatprep.mubr.f32.mxu0 0.0
        %6735 = vmatmul.mubr.f32.gmra.mrb[0].mxu0 %v5587
        %v6736 = vpop.f32.mrb[0].mxu0
        %v6737 = vadd.f32 %v6630, %v6736
        %v6738 = vpop.f32.mrb[0].mxu0
        %6739 = vmatprep.mubr.f32.mxu0 0.0
        %6740 = vmatmul.mubr.f32.gmra.mrb[0].mxu0 %v5590
        %v6741 = vpop.f32.mrb[0].mxu0
        %v6742 = vadd.f32 %v6631, %v6741
        %v6743 = vpop.f32.mrb[0].mxu0
        %6744 = vmatprep.mubr.f32.mxu0 0.0
        %6745 = vmatmul.mubr.f32.gmra.mrb[0].mxu0 %v5593
        %v6746 = vpop.f32.mrb[0].mxu0
        %v6747 = vadd.f32 %v6632, %v6746
        %v6748 = vpop.f32.mrb[0].mxu0
        %6749 = vmatprep.mubr.f32.mxu0 0.0
        %6750 = vmatmul.mubr.f32.gmra.mrb[0].mxu0 %v5596
        %v6751 = vpop.f32.mrb[0].mxu0
        %v6752 = vadd.f32 %v6633, %v6751
        %v6753 = vpop.f32.mrb[0].mxu0
        %6754 = vmatprep.mubr.f32.mxu0 0.0
        %6755 = vmatmul.mubr.f32.gmra.mrb[0].mxu0 %v5599
        %v6756 = vpop.f32.mrb[0].mxu0
        %v6757 = vadd.f32 %v6634, %v6756
        %v6758 = vpop.f32.mrb[0].mxu0
        %6759 = vdwg.mxu0
        %v6760 = vld [vmem:[%s10 + $0xc0] sm:$0xff]
        %v6761 = vld [vmem:[%s10 + $0xc8] sm:$0xff]
        %v6762 = vld [vmem:[%s10 + $0xd0] sm:$0xff]
        %v6763 = vld [vmem:[%s10 + $0xd8] sm:$0xff]
        %v6764 = vld [vmem:[%s11 + $0x240] sm:$0xff]
        %v6765 = vld [vmem:[%s11 + $0x248] sm:$0xff]
        %v6766 = vld [vmem:[%s11 + $0x250] sm:$0xff]
        %v6767 = vld [vmem:[%s11 + $0x258] sm:$0xff]
        %v6768 = vld [vmem:[%s11 + $0x260] sm:$0xff]
        %v6769 = vld [vmem:[%s11 + $0x268] sm:$0xff]
        %v6770 = vld [vmem:[%s11 + $0x270] sm:$0xff]
        %v6771 = vld [vmem:[%s11 + $0x278] sm:$0xff]
        %v6772 = vld [vmem:[%s11 + $0x280] sm:$0xff]
        %v6773 = vld [vmem:[%s11 + $0x288] sm:$0xff]
        %v6774 = vld [vmem:[%s11 + $0x290] sm:$0xff]
        %v6775 = vld [vmem:[%s11 + $0x298] sm:$0xff]
        %6776 = vmatprep.subr.mxu0 0.0
        %6777 = vmatpush1.msra.mxu0 %v6760
        %6778 = vmatprep.subr.mxu0 0.0
        %6779 = vmatpush1.msra.mxu0 %v6761
        %6780 = vmatprep.subr.mxu0 0.0
        %6781 = vmatpush1.msra.mxu0 %v6762
        %6782 = vmatprep.subr.mxu0 0.0
        %6783 = vmatpush1.msra.mxu0 %v6763
        %6784 = vmatprep.subr.mxu0 0.0
        %6785 = vmatpush1.msra.mxu0 0.0
        %6786 = vmatprep.subr.mxu0 0.0
        %6787 = vmatpush1.msra.mxu0 0.0
        %6788 = vmatprep.subr.mxu0 0.0
        %6789 = vmatpush1.msra.mxu0 0.0
        %6790 = vmatprep.subr.mxu0 0.0
        %6791 = vmatpush1.msra.mxu0 0.0
        %6792 = vmatprep.subr.mxu0 0.0
        %6793 = vmatpush1.msra.mxu0 0.0
        %6794 = vmatprep.subr.mxu0 0.0
        %6795 = vmatpush1.msra.mxu0 0.0
        %6796 = vmatprep.subr.mxu0 0.0
        %6797 = vmatpush1.msra.mxu0 0.0
        %6798 = vmatprep.subr.mxu0 0.0
        %6799 = vmatpush1.msra.mxu0 0.0
        %6800 = vmatprep.subr.mxu0 0.0
        %6801 = vmatpush1.msra.mxu0 0.0
        %6802 = vmatprep.subr.mxu0 0.0
        %6803 = vmatpush1.msra.mxu0 0.0
        %6804 = vmatprep.subr.mxu0 0.0
        %6805 = vmatpush1.msra.mxu0 0.0
        %6806 = vmatprep.subr.mxu0 0.0
        %6807 = vmatpush1.msra.mxu0 0.0
        %6808 = vmatprep.subr.mxu0 0.0
        %6809 = vmatpush1.msra.mxu0 0.0
        %6810 = vmatprep.subr.mxu0 0.0
        %6811 = vmatpush1.msra.mxu0 0.0
        %6812 = vmatprep.subr.mxu0 0.0
        %6813 = vmatpush1.msra.mxu0 0.0
        %6814 = vmatprep.subr.mxu0 0.0
        %6815 = vmatpush1.msra.mxu0 0.0
        %6816 = vmatprep.subr.mxu0 0.0
        %6817 = vmatpush1.msra.mxu0 0.0
        %6818 = vmatprep.subr.mxu0 0.0
        %6819 = vmatpush1.msra.mxu0 0.0
        %6820 = vmatprep.subr.mxu0 0.0
        %6821 = vmatpush1.msra.mxu0 0.0
        %6822 = vmatprep.subr.mxu0 0.0
        %6823 = vmatpush1.msra.mxu0 0.0
        %6824 = vmatprep.subr.mxu0 0.0
        %6825 = vmatpush1.msra.mxu0 0.0
        %6826 = vmatprep.subr.mxu0 0.0
        %6827 = vmatpush1.msra.mxu0 0.0
        %6828 = vmatprep.subr.mxu0 0.0
        %6829 = vmatpush1.msra.mxu0 0.0
        %6830 = vmatprep.subr.mxu0 0.0
        %6831 = vmatpush1.msra.mxu0 0.0
        %6832 = vmatprep.subr.mxu0 0.0
        %6833 = vmatpush1.msra.mxu0 0.0
        %6834 = vmatprep.subr.mxu0 0.0
        %6835 = vmatpush1.msra.mxu0 0.0
        %6836 = vmatprep.subr.mxu0 0.0
        %6837 = vmatpush1.msra.mxu0 0.0
        %6838 = vmatprep.subr.mxu0 0.0
        %6839 = vmatpush1.msra.mxu0 0.0
        %6840 = vmatprep.mubr.f32.mxu0 0.0
        %6841 = vmatmul.mubr.f32.gmra.mrb[0].mxu0 %v5566
        %v6842 = vpop.f32.mrb[0].mxu0
        %v6843 = vadd.f32 %v6764, %v6842
        %v6844 = vpop.f32.mrb[0].mxu0
        %6845 = vmatprep.mubr.f32.mxu0 0.0
        %6846 = vmatmul.mubr.f32.gmra.mrb[0].mxu0 %v5569
        %v6847 = vpop.f32.mrb[0].mxu0
        %v6848 = vadd.f32 %v6765, %v6847
        %v6849 = vpop.f32.mrb[0].mxu0
        %6850 = vmatprep.mubr.f32.mxu0 0.0
        %6851 = vmatmul.mubr.f32.gmra.mrb[0].mxu0 %v5572
        %v6852 = vpop.f32.mrb[0].mxu0
        %v6853 = vadd.f32 %v6766, %v6852
        %v6854 = vpop.f32.mrb[0].mxu0
        %6855 = vmatprep.mubr.f32.mxu0 0.0
        %6856 = vmatmul.mubr.f32.gmra.mrb[0].mxu0 %v5575
        %v6857 = vpop.f32.mrb[0].mxu0
        %v6858 = vadd.f32 %v6767, %v6857
        %v6859 = vpop.f32.mrb[0].mxu0
        %6860 = vmatprep.mubr.f32.mxu0 0.0
        %6861 = vmatmul.mubr.f32.gmra.mrb[0].mxu0 %v5578
        %v6862 = vpop.f32.mrb[0].mxu0
        %v6863 = vadd.f32 %v6768, %v6862
        %v6864 = vpop.f32.mrb[0].mxu0
        %6865 = vmatprep.mubr.f32.mxu0 0.0
        %6866 = vmatmul.mubr.f32.gmra.mrb[0].mxu0 %v5581
        %v6867 = vpop.f32.mrb[0].mxu0
        %v6868 = vadd.f32 %v6769, %v6867
        %v6869 = vpop.f32.mrb[0].mxu0
        %6870 = vmatprep.mubr.f32.mxu0 0.0
        %6871 = vmatmul.mubr.f32.gmra.mrb[0].mxu0 %v5584
        %v6872 = vpop.f32.mrb[0].mxu0
        %v6873 = vadd.f32 %v6770, %v6872
        %v6874 = vpop.f32.mrb[0].mxu0
        %6875 = vmatprep.mubr.f32.mxu0 0.0
        %6876 = vmatmul.mubr.f32.gmra.mrb[0].mxu0 %v5587
        %v6877 = vpop.f32.mrb[0].mxu0
        %v6878 = vadd.f32 %v6771, %v6877
        %v6879 = vpop.f32.mrb[0].mxu0
        %6880 = vmatprep.mubr.f32.mxu0 0.0
        %6881 = vmatmul.mubr.f32.gmra.mrb[0].mxu0 %v5590
        %v6882 = vpop.f32.mrb[0].mxu0
        %v6883 = vadd.f32 %v6772, %v6882
        %v6884 = vpop.f32.mrb[0].mxu0
        %6885 = vmatprep.mubr.f32.mxu0 0.0
        %6886 = vmatmul.mubr.f32.gmra.mrb[0].mxu0 %v5593
        %v6887 = vpop.f32.mrb[0].mxu0
        %v6888 = vadd.f32 %v6773, %v6887
        %v6889 = vpop.f32.mrb[0].mxu0
        %6890 = vmatprep.mubr.f32.mxu0 0.0
        %6891 = vmatmul.mubr.f32.gmra.mrb[0].mxu0 %v5596
        %v6892 = vpop.f32.mrb[0].mxu0
        %v6893 = vadd.f32 %v6774, %v6892
        %v6894 = vpop.f32.mrb[0].mxu0
        %6895 = vmatprep.mubr.f32.mxu0 0.0
        %6896 = vmatmul.mubr.f32.gmra.mrb[0].mxu0 %v5599
        %v6897 = vpop.f32.mrb[0].mxu0
        %v6898 = vadd.f32 %v6775, %v6897
        %v6899 = vpop.f32.mrb[0].mxu0
        %6900 = vdwg.mxu0
        %v6901 = vld [vmem:[%s10 + $0xe0] sm:$0xff]
        %v6902 = vld [vmem:[%s10 + $0xe8] sm:$0xff]
        %v6903 = vld [vmem:[%s10 + $0xf0] sm:$0xff]
        %v6904 = vld [vmem:[%s10 + $0xf8] sm:$0xff]
        %v6905 = vld [vmem:[%s11 + $0x2a0] sm:$0xff]
        %v6906 = vld [vmem:[%s11 + $0x2a8] sm:$0xff]
        %v6907 = vld [vmem:[%s11 + $0x2b0] sm:$0xff]
        %v6908 = vld [vmem:[%s11 + $0x2b8] sm:$0xff]
        %v6909 = vld [vmem:[%s11 + $0x2c0] sm:$0xff]
        %v6910 = vld [vmem:[%s11 + $0x2c8] sm:$0xff]
        %v6911 = vld [vmem:[%s11 + $0x2d0] sm:$0xff]
        %v6912 = vld [vmem:[%s11 + $0x2d8] sm:$0xff]
        %v6913 = vld [vmem:[%s11 + $0x2e0] sm:$0xff]
        %v6914 = vld [vmem:[%s11 + $0x2e8] sm:$0xff]
        %v6915 = vld [vmem:[%s11 + $0x2f0] sm:$0xff]
        %v6916 = vld [vmem:[%s11 + $0x2f8] sm:$0xff]
        %6917 = vmatprep.subr.mxu0 0.0
        %6918 = vmatpush1.msra.mxu0 %v6901
        %6919 = vmatprep.subr.mxu0 0.0
        %6920 = vmatpush1.msra.mxu0 %v6902
        %6921 = vmatprep.subr.mxu0 0.0
        %6922 = vmatpush1.msra.mxu0 %v6903
        %6923 = vmatprep.subr.mxu0 0.0
        %6924 = vmatpush1.msra.mxu0 %v6904
        %6925 = vmatprep.subr.mxu0 0.0
        %6926 = vmatpush1.msra.mxu0 0.0
        %6927 = vmatprep.subr.mxu0 0.0
        %6928 = vmatpush1.msra.mxu0 0.0
        %6929 = vmatprep.subr.mxu0 0.0
        %6930 = vmatpush1.msra.mxu0 0.0
        %6931 = vmatprep.subr.mxu0 0.0
        %6932 = vmatpush1.msra.mxu0 0.0
        %6933 = vmatprep.subr.mxu0 0.0
        %6934 = vmatpush1.msra.mxu0 0.0
        %6935 = vmatprep.subr.mxu0 0.0
        %6936 = vmatpush1.msra.mxu0 0.0
        %6937 = vmatprep.subr.mxu0 0.0
        %6938 = vmatpush1.msra.mxu0 0.0
        %6939 = vmatprep.subr.mxu0 0.0
        %6940 = vmatpush1.msra.mxu0 0.0
        %6941 = vmatprep.subr.mxu0 0.0
        %6942 = vmatpush1.msra.mxu0 0.0
        %6943 = vmatprep.subr.mxu0 0.0
        %6944 = vmatpush1.msra.mxu0 0.0
        %6945 = vmatprep.subr.mxu0 0.0
        %6946 = vmatpush1.msra.mxu0 0.0
        %6947 = vmatprep.subr.mxu0 0.0
        %6948 = vmatpush1.msra.mxu0 0.0
        %6949 = vmatprep.subr.mxu0 0.0
        %6950 = vmatpush1.msra.mxu0 0.0
        %6951 = vmatprep.subr.mxu0 0.0
        %6952 = vmatpush1.msra.mxu0 0.0
        %6953 = vmatprep.subr.mxu0 0.0
        %6954 = vmatpush1.msra.mxu0 0.0
        %6955 = vmatprep.subr.mxu0 0.0
        %6956 = vmatpush1.msra.mxu0 0.0
        %6957 = vmatprep.subr.mxu0 0.0
        %6958 = vmatpush1.msra.mxu0 0.0
        %6959 = vmatprep.subr.mxu0 0.0
        %6960 = vmatpush1.msra.mxu0 0.0
        %6961 = vmatprep.subr.mxu0 0.0
        %6962 = vmatpush1.msra.mxu0 0.0
        %6963 = vmatprep.subr.mxu0 0.0
        %6964 = vmatpush1.msra.mxu0 0.0
        %6965 = vmatprep.subr.mxu0 0.0
        %6966 = vmatpush1.msra.mxu0 0.0
        %6967 = vmatprep.subr.mxu0 0.0
        %6968 = vmatpush1.msra.mxu0 0.0
        %6969 = vmatprep.subr.mxu0 0.0
        %6970 = vmatpush1.msra.mxu0 0.0
        %6971 = vmatprep.subr.mxu0 0.0
        %6972 = vmatpush1.msra.mxu0 0.0
        %6973 = vmatprep.subr.mxu0 0.0
        %6974 = vmatpush1.msra.mxu0 0.0
        %6975 = vmatprep.subr.mxu0 0.0
        %6976 = vmatpush1.msra.mxu0 0.0
        %6977 = vmatprep.subr.mxu0 0.0
        %6978 = vmatpush1.msra.mxu0 0.0
        %6979 = vmatprep.subr.mxu0 0.0
        %6980 = vmatpush1.msra.mxu0 0.0
        %6981 = vmatprep.mubr.f32.mxu0 0.0
        %6982 = vmatmul.mubr.f32.gmra.mrb[0].mxu0 %v5566
        %v6983 = vpop.f32.mrb[0].mxu0
        %v6984 = vadd.f32 %v6905, %v6983
        %v6985 = vpop.f32.mrb[0].mxu0
        %6986 = vmatprep.mubr.f32.mxu0 0.0
        %6987 = vmatmul.mubr.f32.gmra.mrb[0].mxu0 %v5569
        %v6988 = vpop.f32.mrb[0].mxu0
        %v6989 = vadd.f32 %v6906, %v6988
        %v6990 = vpop.f32.mrb[0].mxu0
        %6991 = vmatprep.mubr.f32.mxu0 0.0
        %6992 = vmatmul.mubr.f32.gmra.mrb[0].mxu0 %v5572
        %v6993 = vpop.f32.mrb[0].mxu0
        %v6994 = vadd.f32 %v6907, %v6993
        %v6995 = vpop.f32.mrb[0].mxu0
        %6996 = vmatprep.mubr.f32.mxu0 0.0
        %6997 = vmatmul.mubr.f32.gmra.mrb[0].mxu0 %v5575
        %v6998 = vpop.f32.mrb[0].mxu0
        %v6999 = vadd.f32 %v6908, %v6998
        %v7000 = vpop.f32.mrb[0].mxu0
        %7001 = vmatprep.mubr.f32.mxu0 0.0
        %7002 = vmatmul.mubr.f32.gmra.mrb[0].mxu0 %v5578
        %v7003 = vpop.f32.mrb[0].mxu0
        %v7004 = vadd.f32 %v6909, %v7003
        %v7005 = vpop.f32.mrb[0].mxu0
        %7006 = vmatprep.mubr.f32.mxu0 0.0
        %7007 = vmatmul.mubr.f32.gmra.mrb[0].mxu0 %v5581
        %v7008 = vpop.f32.mrb[0].mxu0
        %v7009 = vadd.f32 %v6910, %v7008
        %v7010 = vpop.f32.mrb[0].mxu0
        %7011 = vmatprep.mubr.f32.mxu0 0.0
        %7012 = vmatmul.mubr.f32.gmra.mrb[0].mxu0 %v5584
        %v7013 = vpop.f32.mrb[0].mxu0
        %v7014 = vadd.f32 %v6911, %v7013
        %v7015 = vpop.f32.mrb[0].mxu0
        %7016 = vmatprep.mubr.f32.mxu0 0.0
        %7017 = vmatmul.mubr.f32.gmra.mrb[0].mxu0 %v5587
        %v7018 = vpop.f32.mrb[0].mxu0
        %v7019 = vadd.f32 %v6912, %v7018
        %v7020 = vpop.f32.mrb[0].mxu0
        %7021 = vmatprep.mubr.f32.mxu0 0.0
        %7022 = vmatmul.mubr.f32.gmra.mrb[0].mxu0 %v5590
        %v7023 = vpop.f32.mrb[0].mxu0
        %v7024 = vadd.f32 %v6913, %v7023
        %v7025 = vpop.f32.mrb[0].mxu0
        %7026 = vmatprep.mubr.f32.mxu0 0.0
        %7027 = vmatmul.mubr.f32.gmra.mrb[0].mxu0 %v5593
        %v7028 = vpop.f32.mrb[0].mxu0
        %v7029 = vadd.f32 %v6914, %v7028
        %v7030 = vpop.f32.mrb[0].mxu0
        %7031 = vmatprep.mubr.f32.mxu0 0.0
        %7032 = vmatmul.mubr.f32.gmra.mrb[0].mxu0 %v5596
        %v7033 = vpop.f32.mrb[0].mxu0
        %v7034 = vadd.f32 %v6915, %v7033
        %v7035 = vpop.f32.mrb[0].mxu0
        %7036 = vmatprep.mubr.f32.mxu0 0.0
        %7037 = vmatmul.mubr.f32.gmra.mrb[0].mxu0 %v5599
        %v7038 = vpop.f32.mrb[0].mxu0
        %v7039 = vadd.f32 %v6916, %v7038
        %v7040 = vpop.f32.mrb[0].mxu0
        %7041 = vdwg.mxu0
        %v7043 = vsel %vm945, %v6561, 0
        %v7046 = vsel %vm945, %v6566, 0
        %v7049 = vsel %vm945, %v6571, 0
        %v7052 = vsel %vm945, %v6576, 0
        %v7055 = vsel %vm945, %v6581, 0
        %v7058 = vsel %vm945, %v6586, 0
        %v7061 = vsel %vm945, %v6591, 0
        %v7064 = vsel %vm945, %v6596, 0
        %v7067 = vsel %vm945, %v6601, 0
        %v7070 = vsel %vm945, %v6606, 0
        %v7073 = vsel %vm945, %v6611, 0
        %v7076 = vsel %vm945, %v6616, 0
        %v7079 = vsel %vm945, %v6702, 0
        %v7082 = vsel %vm945, %v6707, 0
        %v7085 = vsel %vm945, %v6712, 0
        %v7088 = vsel %vm945, %v6717, 0
        %v7091 = vsel %vm945, %v6722, 0
        %v7094 = vsel %vm945, %v6727, 0
        %v7097 = vsel %vm945, %v6732, 0
        %v7100 = vsel %vm945, %v6737, 0
        %v7103 = vsel %vm945, %v6742, 0
        %v7106 = vsel %vm945, %v6747, 0
        %v7109 = vsel %vm945, %v6752, 0
        %v7112 = vsel %vm945, %v6757, 0
        %7114 = vmatprep.subr.mxu0 0.0
        %7115 = vmatpush1.xpose.msra.mxu0 %v7079
        %7116 = vmatprep.subr.mxu0 0.0
        %7117 = vmatpush1.xpose.msra.mxu0 %v7082
        %7118 = vmatprep.subr.mxu0 0.0
        %7119 = vmatpush1.xpose.msra.mxu0 %v7085
        %7120 = vmatprep.subr.mxu0 0.0
        %7121 = vmatpush1.xpose.msra.mxu0 %v7088
        %7122 = vmatprep.subr.mxu0 0.0
        %7123 = vmatpush1.xpose.msra.mxu0 %v7091
        %7124 = vmatprep.subr.mxu0 0.0
        %7125 = vmatpush1.xpose.msra.mxu0 %v7094
        %7126 = vmatprep.subr.mxu0 0.0
        %7127 = vmatpush1.xpose.msra.mxu0 %v7097
        %7128 = vmatprep.subr.mxu0 0.0
        %7129 = vmatpush1.xpose.msra.mxu0 %v7100
        %7130 = vmatprep.subr.mxu0 0.0
        %7131 = vmatpush1.xpose.msra.mxu0 %v7103
        %7132 = vmatprep.subr.mxu0 0.0
        %7133 = vmatpush1.xpose.msra.mxu0 %v7106
        %7134 = vmatprep.subr.mxu0 0.0
        %7135 = vmatpush1.xpose.msra.mxu0 %v7109
        %7136 = vmatprep.subr.mxu0 0.0
        %7137 = vmatpush1.xpose.msra.mxu0 %v7112
        %7138 = vmatprep.subr.mxu0 0.0
        %7139 = vmatpush1.xpose.msra.mxu0 0.0
        %7140 = vmatprep.subr.mxu0 0.0
        %7141 = vmatpush1.xpose.msra.mxu0 0.0
        %7142 = vmatprep.subr.mxu0 0.0
        %7143 = vmatpush1.xpose.msra.mxu0 0.0
        %7144 = vmatprep.subr.mxu0 0.0
        %7145 = vmatpush1.xpose.msra.mxu0 0.0
        %7146 = vmatprep.subr.mxu0 0.0
        %7147 = vmatpush1.xpose.msra.mxu0 0.0
        %7148 = vmatprep.subr.mxu0 0.0
        %7149 = vmatpush1.xpose.msra.mxu0 0.0
        %7150 = vmatprep.subr.mxu0 0.0
        %7151 = vmatpush1.xpose.msra.mxu0 0.0
        %7152 = vmatprep.subr.mxu0 0.0
        %7153 = vmatpush1.xpose.msra.mxu0 0.0
        %7154 = vmatprep.subr.mxu0 0.0
        %7155 = vmatpush1.xpose.msra.mxu0 0.0
        %7156 = vmatprep.subr.mxu0 0.0
        %7157 = vmatpush1.xpose.msra.mxu0 0.0
        %7158 = vmatprep.subr.mxu0 0.0
        %7159 = vmatpush1.xpose.msra.mxu0 0.0
        %7160 = vmatprep.subr.mxu0 0.0
        %7161 = vmatpush1.xpose.msra.mxu0 0.0
        %7162 = vmatprep.subr.mxu0 0.0
        %7163 = vmatpush1.xpose.msra.mxu0 0.0
        %7164 = vmatprep.subr.mxu0 0.0
        %7165 = vmatpush1.xpose.msra.mxu0 0.0
        %7166 = vmatprep.subr.mxu0 0.0
        %7167 = vmatpush1.xpose.msra.mxu0 0.0
        %7168 = vmatprep.subr.mxu0 0.0
        %7169 = vmatpush1.xpose.msra.mxu0 0.0
        %7170 = vmatprep.subr.mxu0 0.0
        %7171 = vmatpush1.xpose.msra.mxu0 0.0
        %7172 = vmatprep.subr.mxu0 0.0
        %7173 = vmatpush1.xpose.msra.mxu0 0.0
        %7174 = vmatprep.subr.mxu0 0.0
        %7175 = vmatpush1.xpose.msra.mxu0 0.0
        %7176 = vmatprep.subr.mxu0 0.0
        %7177 = vmatpush1.xpose.msra.mxu0 0.0
        %7178 = vmatprep.mubr.f32.mxu0 0.0
        %7179 = vmatmul.mubr.f32.gmra.mrb[0].mxu0 %v7043
        %v7180 = vpop.f32.mrb[0].mxu0
        %v7181 = vadd.f32 %v2065, %v7180
        %v7182 = vpop.f32.mrb[0].mxu0
        %7183 = vmatprep.mubr.f32.mxu0 0.0
        %7184 = vmatmul.mubr.f32.gmra.mrb[0].mxu0 %v7046
        %v7185 = vpop.f32.mrb[0].mxu0
        %v7186 = vadd.f32 %v2066, %v7185
        %v7187 = vpop.f32.mrb[0].mxu0
        %7188 = vmatprep.mubr.f32.mxu0 0.0
        %7189 = vmatmul.mubr.f32.gmra.mrb[0].mxu0 %v7049
        %v7190 = vpop.f32.mrb[0].mxu0
        %v7191 = vadd.f32 %v2067, %v7190
        %v7192 = vpop.f32.mrb[0].mxu0
        %7193 = vmatprep.mubr.f32.mxu0 0.0
        %7194 = vmatmul.mubr.f32.gmra.mrb[0].mxu0 %v7052
        %v7195 = vpop.f32.mrb[0].mxu0
        %v7196 = vadd.f32 %v2068, %v7195
        %v7197 = vpop.f32.mrb[0].mxu0
        %7198 = vmatprep.mubr.f32.mxu0 0.0
        %7199 = vmatmul.mubr.f32.gmra.mrb[0].mxu0 %v7055
        %v7200 = vpop.f32.mrb[0].mxu0
        %v7201 = vadd.f32 %v2069, %v7200
        %v7202 = vpop.f32.mrb[0].mxu0
        %7203 = vmatprep.mubr.f32.mxu0 0.0
        %7204 = vmatmul.mubr.f32.gmra.mrb[0].mxu0 %v7058
        %v7205 = vpop.f32.mrb[0].mxu0
        %v7206 = vadd.f32 %v2070, %v7205
        %v7207 = vpop.f32.mrb[0].mxu0
        %7208 = vmatprep.mubr.f32.mxu0 0.0
        %7209 = vmatmul.mubr.f32.gmra.mrb[0].mxu0 %v7061
        %v7210 = vpop.f32.mrb[0].mxu0
        %v7211 = vadd.f32 %v2071, %v7210
        %v7212 = vpop.f32.mrb[0].mxu0
        %7213 = vmatprep.mubr.f32.mxu0 0.0
        %7214 = vmatmul.mubr.f32.gmra.mrb[0].mxu0 %v7064
        %v7215 = vpop.f32.mrb[0].mxu0
        %v7216 = vadd.f32 %v2072, %v7215
        %v7217 = vpop.f32.mrb[0].mxu0
        %7218 = vmatprep.mubr.f32.mxu0 0.0
        %7219 = vmatmul.mubr.f32.gmra.mrb[0].mxu0 %v7067
        %v7220 = vpop.f32.mrb[0].mxu0
        %v7221 = vadd.f32 %v2073, %v7220
        %v7222 = vpop.f32.mrb[0].mxu0
        %7223 = vmatprep.mubr.f32.mxu0 0.0
        %7224 = vmatmul.mubr.f32.gmra.mrb[0].mxu0 %v7070
        %v7225 = vpop.f32.mrb[0].mxu0
        %v7226 = vadd.f32 %v2074, %v7225
        %v7227 = vpop.f32.mrb[0].mxu0
        %7228 = vmatprep.mubr.f32.mxu0 0.0
        %7229 = vmatmul.mubr.f32.gmra.mrb[0].mxu0 %v7073
        %v7230 = vpop.f32.mrb[0].mxu0
        %v7231 = vadd.f32 %v2075, %v7230
        %v7232 = vpop.f32.mrb[0].mxu0
        %7233 = vmatprep.mubr.f32.mxu0 0.0
        %7234 = vmatmul.mubr.f32.gmra.mrb[0].mxu0 %v7076
        %v7235 = vpop.f32.mrb[0].mxu0
        %v7236 = vadd.f32 %v2076, %v7235
        %v7237 = vpop.f32.mrb[0].mxu0
        %7238 = vdwg.mxu0
        %v7239 = vsel %vm2274, %v7181, -inf
        %7240 = vmax.xlane.f32.xlu0 %v7239
        %v7241 = vpop.xlane.xlu0 %7240
        %v7242 = vsel %vm2274, %v7186, -inf
        %7243 = vmax.xlane.f32.xlu0 %v7242
        %v7244 = vpop.xlane.xlu0 %7243
        %v7245 = vsel %vm2274, %v7191, -inf
        %7246 = vmax.xlane.f32.xlu0 %v7245
        %v7247 = vpop.xlane.xlu0 %7246
        %v7248 = vsel %vm2274, %v7196, -inf
        %7249 = vmax.xlane.f32.xlu0 %v7248
        %v7250 = vpop.xlane.xlu0 %7249
        %v7251 = vsel %vm2274, %v7201, -inf
        %7252 = vmax.xlane.f32.xlu0 %v7251
        %v7253 = vpop.xlane.xlu0 %7252
        %v7254 = vsel %vm2274, %v7206, -inf
        %7255 = vmax.xlane.f32.xlu0 %v7254
        %v7256 = vpop.xlane.xlu0 %7255
        %v7257 = vsel %vm2274, %v7211, -inf
        %7258 = vmax.xlane.f32.xlu0 %v7257
        %v7259 = vpop.xlane.xlu0 %7258
        %v7260 = vsel %vm2274, %v7216, -inf
        %7261 = vmax.xlane.f32.xlu0 %v7260
        %v7262 = vpop.xlane.xlu0 %7261
        %v7263 = vsel %vm2274, %v7221, -inf
        %7264 = vmax.xlane.f32.xlu0 %v7263
        %v7265 = vpop.xlane.xlu0 %7264
        %v7266 = vsel %vm2274, %v7226, -inf
        %7267 = vmax.xlane.f32.xlu0 %v7266
        %v7268 = vpop.xlane.xlu0 %7267
        %v7269 = vsel %vm2274, %v7231, -inf
        %7270 = vmax.xlane.f32.xlu0 %v7269
        %v7271 = vpop.xlane.xlu0 %7270
        %v7272 = vsel %vm2274, %v7236, -inf
        %7273 = vmax.xlane.f32.xlu0 %v7272
        %v7274 = vpop.xlane.xlu0 %7273
        %v7275 = vsub.f32 %v7181, %v7241
        %v7276 = vsub.f32 %v7186, %v7244
        %v7277 = vsub.f32 %v7191, %v7247
        %v7278 = vsub.f32 %v7196, %v7250
        %v7279 = vsub.f32 %v7201, %v7253
        %v7280 = vsub.f32 %v7206, %v7256
        %v7281 = vsub.f32 %v7211, %v7259
        %v7282 = vsub.f32 %v7216, %v7262
        %v7283 = vsub.f32 %v7221, %v7265
        %v7284 = vsub.f32 %v7226, %v7268
        %v7285 = vsub.f32 %v7231, %v7271
        %v7286 = vsub.f32 %v7236, %v7274
        %v7287 = vmul.f32 %v7275, 1.442695
        %v7288 = vpow.pop %v7287
        %v7289 = vmul.f32 %v7276, 1.442695
        %v7290 = vpow.pop %v7289
        %v7291 = vmul.f32 %v7277, 1.442695
        %v7292 = vpow.pop %v7291
        %v7293 = vmul.f32 %v7278, 1.442695
        %v7294 = vpow.pop %v7293
        %v7295 = vmul.f32 %v7279, 1.442695
        %v7296 = vpow.pop %v7295
        %v7297 = vmul.f32 %v7280, 1.442695
        %v7298 = vpow.pop %v7297
        %v7299 = vmul.f32 %v7281, 1.442695
        %v7300 = vpow.pop %v7299
        %v7301 = vmul.f32 %v7282, 1.442695
        %v7302 = vpow.pop %v7301
        %v7303 = vmul.f32 %v7283, 1.442695
        %v7304 = vpow.pop %v7303
        %v7305 = vmul.f32 %v7284, 1.442695
        %v7306 = vpow.pop %v7305
        %v7307 = vmul.f32 %v7285, 1.442695
        %v7308 = vpow.pop %v7307
        %v7309 = vmul.f32 %v7286, 1.442695
        %v7310 = vpow.pop %v7309
        %v7311 = vsel %vm2274, %v7288, 0.0
        %7312 = vadd.xlane.f32.xlu0 %v7311
        %v7313 = vpop.xlane.xlu0 %7312
        %v7314 = vsel %vm2274, %v7290, 0.0
        %7315 = vadd.xlane.f32.xlu0 %v7314
        %v7316 = vpop.xlane.xlu0 %7315
        %v7317 = vsel %vm2274, %v7292, 0.0
        %7318 = vadd.xlane.f32.xlu0 %v7317
        %v7319 = vpop.xlane.xlu0 %7318
        %v7320 = vsel %vm2274, %v7294, 0.0
        %7321 = vadd.xlane.f32.xlu0 %v7320
        %v7322 = vpop.xlane.xlu0 %7321
        %v7323 = vsel %vm2274, %v7296, 0.0
        %7324 = vadd.xlane.f32.xlu0 %v7323
        %v7325 = vpop.xlane.xlu0 %7324
        %v7326 = vsel %vm2274, %v7298, 0.0
        %7327 = vadd.xlane.f32.xlu0 %v7326
        %v7328 = vpop.xlane.xlu0 %7327
        %v7329 = vsel %vm2274, %v7300, 0.0
        %7330 = vadd.xlane.f32.xlu0 %v7329
        %v7331 = vpop.xlane.xlu0 %7330
        %v7332 = vsel %vm2274, %v7302, 0.0
        %7333 = vadd.xlane.f32.xlu0 %v7332
        %v7334 = vpop.xlane.xlu0 %7333
        %v7335 = vsel %vm2274, %v7304, 0.0
        %7336 = vadd.xlane.f32.xlu0 %v7335
        %v7337 = vpop.xlane.xlu0 %7336
        %v7338 = vsel %vm2274, %v7306, 0.0
        %7339 = vadd.xlane.f32.xlu0 %v7338
        %v7340 = vpop.xlane.xlu0 %7339
        %v7341 = vsel %vm2274, %v7308, 0.0
        %7342 = vadd.xlane.f32.xlu0 %v7341
        %v7343 = vpop.xlane.xlu0 %7342
        %v7344 = vsel %vm2274, %v7310, 0.0
        %7345 = vadd.xlane.f32.xlu0 %v7344
        %v7346 = vpop.xlane.xlu0 %7345
        %v7347 = vrcp.pop %v7313
        %v7348 = vmul.f32 %v7288, %v7347
        %v7349 = vrcp.pop %v7316
        %v7350 = vmul.f32 %v7290, %v7349
        %v7351 = vrcp.pop %v7319
        %v7352 = vmul.f32 %v7292, %v7351
        %v7353 = vrcp.pop %v7322
        %v7354 = vmul.f32 %v7294, %v7353
        %v7355 = vrcp.pop %v7325
        %v7356 = vmul.f32 %v7296, %v7355
        %v7357 = vrcp.pop %v7328
        %v7358 = vmul.f32 %v7298, %v7357
        %v7359 = vrcp.pop %v7331
        %v7360 = vmul.f32 %v7300, %v7359
        %v7361 = vrcp.pop %v7334
        %v7362 = vmul.f32 %v7302, %v7361
        %v7363 = vrcp.pop %v7337
        %v7364 = vmul.f32 %v7304, %v7363
        %v7365 = vrcp.pop %v7340
        %v7366 = vmul.f32 %v7306, %v7365
        %v7367 = vrcp.pop %v7343
        %v7368 = vmul.f32 %v7308, %v7367
        %v7369 = vrcp.pop %v7346
        %v7370 = vmul.f32 %v7310, %v7369
        %v7372 = vsel %vm2274, %v7348, 0
        %v7375 = vsel %vm2274, %v7350, 0
        %v7378 = vsel %vm2274, %v7352, 0
        %v7381 = vsel %vm2274, %v7354, 0
        %v7384 = vsel %vm2274, %v7356, 0
        %v7387 = vsel %vm2274, %v7358, 0
        %v7390 = vsel %vm2274, %v7360, 0
        %v7393 = vsel %vm2274, %v7362, 0
        %v7396 = vsel %vm2274, %v7364, 0
        %v7399 = vsel %vm2274, %v7366, 0
        %v7402 = vsel %vm2274, %v7368, 0
        %v7405 = vsel %vm2274, %v7370, 0
        %7407 = vmatprep.subr.mxu0 0.0
        %7408 = vmatpush1.msra.mxu0 %v6843
        %7409 = vmatprep.subr.mxu0 0.0
        %7410 = vmatpush1.msra.mxu0 %v6848
        %7411 = vmatprep.subr.mxu0 0.0
        %7412 = vmatpush1.msra.mxu0 %v6853
        %7413 = vmatprep.subr.mxu0 0.0
        %7414 = vmatpush1.msra.mxu0 %v6858
        %7415 = vmatprep.subr.mxu0 0.0
        %7416 = vmatpush1.msra.mxu0 %v6863
        %7417 = vmatprep.subr.mxu0 0.0
        %7418 = vmatpush1.msra.mxu0 %v6868
        %7419 = vmatprep.subr.mxu0 0.0
        %7420 = vmatpush1.msra.mxu0 %v6873
        %7421 = vmatprep.subr.mxu0 0.0
        %7422 = vmatpush1.msra.mxu0 %v6878
        %7423 = vmatprep.subr.mxu0 0.0
        %7424 = vmatpush1.msra.mxu0 %v6883
        %7425 = vmatprep.subr.mxu0 0.0
        %7426 = vmatpush1.msra.mxu0 %v6888
        %7427 = vmatprep.subr.mxu0 0.0
        %7428 = vmatpush1.msra.mxu0 %v6893
        %7429 = vmatprep.subr.mxu0 0.0
        %7430 = vmatpush1.msra.mxu0 %v6898
        %7431 = vmatprep.subr.mxu0 0.0
        %7432 = vmatpush1.msra.mxu0 0.0
        %7433 = vmatprep.subr.mxu0 0.0
        %7434 = vmatpush1.msra.mxu0 0.0
        %7435 = vmatprep.subr.mxu0 0.0
        %7436 = vmatpush1.msra.mxu0 0.0
        %7437 = vmatprep.subr.mxu0 0.0
        %7438 = vmatpush1.msra.mxu0 0.0
        %7439 = vmatprep.subr.mxu0 0.0
        %7440 = vmatpush1.msra.mxu0 0.0
        %7441 = vmatprep.subr.mxu0 0.0
        %7442 = vmatpush1.msra.mxu0 0.0
        %7443 = vmatprep.subr.mxu0 0.0
        %7444 = vmatpush1.msra.mxu0 0.0
        %7445 = vmatprep.subr.mxu0 0.0
        %7446 = vmatpush1.msra.mxu0 0.0
        %7447 = vmatprep.subr.mxu0 0.0
        %7448 = vmatpush1.msra.mxu0 0.0
        %7449 = vmatprep.subr.mxu0 0.0
        %7450 = vmatpush1.msra.mxu0 0.0
        %7451 = vmatprep.subr.mxu0 0.0
        %7452 = vmatpush1.msra.mxu0 0.0
        %7453 = vmatprep.subr.mxu0 0.0
        %7454 = vmatpush1.msra.mxu0 0.0
        %7455 = vmatprep.subr.mxu0 0.0
        %7456 = vmatpush1.msra.mxu0 0.0
        %7457 = vmatprep.subr.mxu0 0.0
        %7458 = vmatpush1.msra.mxu0 0.0
        %7459 = vmatprep.subr.mxu0 0.0
        %7460 = vmatpush1.msra.mxu0 0.0
        %7461 = vmatprep.subr.mxu0 0.0
        %7462 = vmatpush1.msra.mxu0 0.0
        %7463 = vmatprep.subr.mxu0 0.0
        %7464 = vmatpush1.msra.mxu0 0.0
        %7465 = vmatprep.subr.mxu0 0.0
        %7466 = vmatpush1.msra.mxu0 0.0
        %7467 = vmatprep.subr.mxu0 0.0
        %7468 = vmatpush1.msra.mxu0 0.0
        %7469 = vmatprep.subr.mxu0 0.0
        %7470 = vmatpush1.msra.mxu0 0.0
        %7471 = vmatprep.mubr.f32.mxu0 0.0
        %7472 = vmatmul.mubr.f32.gmra.mrb[0].mxu0 %v7372
        %v7473 = vpop.f32.mrb[0].mxu0
        %v7474 = vadd.f32 0.0, %v7473
        %v7475 = vpop.f32.mrb[0].mxu0
        %7476 = vmatprep.mubr.f32.mxu0 0.0
        %7477 = vmatmul.mubr.f32.gmra.mrb[0].mxu0 %v7375
        %v7478 = vpop.f32.mrb[0].mxu0
        %v7479 = vadd.f32 0.0, %v7478
        %v7480 = vpop.f32.mrb[0].mxu0
        %7481 = vmatprep.mubr.f32.mxu0 0.0
        %7482 = vmatmul.mubr.f32.gmra.mrb[0].mxu0 %v7378
        %v7483 = vpop.f32.mrb[0].mxu0
        %v7484 = vadd.f32 0.0, %v7483
        %v7485 = vpop.f32.mrb[0].mxu0
        %7486 = vmatprep.mubr.f32.mxu0 0.0
        %7487 = vmatmul.mubr.f32.gmra.mrb[0].mxu0 %v7381
        %v7488 = vpop.f32.mrb[0].mxu0
        %v7489 = vadd.f32 0.0, %v7488
        %v7490 = vpop.f32.mrb[0].mxu0
        %7491 = vmatprep.mubr.f32.mxu0 0.0
        %7492 = vmatmul.mubr.f32.gmra.mrb[0].mxu0 %v7384
        %v7493 = vpop.f32.mrb[0].mxu0
        %v7494 = vadd.f32 0.0, %v7493
        %v7495 = vpop.f32.mrb[0].mxu0
        %7496 = vmatprep.mubr.f32.mxu0 0.0
        %7497 = vmatmul.mubr.f32.gmra.mrb[0].mxu0 %v7387
        %v7498 = vpop.f32.mrb[0].mxu0
        %v7499 = vadd.f32 0.0, %v7498
        %v7500 = vpop.f32.mrb[0].mxu0
        %7501 = vmatprep.mubr.f32.mxu0 0.0
        %7502 = vmatmul.mubr.f32.gmra.mrb[0].mxu0 %v7390
        %v7503 = vpop.f32.mrb[0].mxu0
        %v7504 = vadd.f32 0.0, %v7503
        %v7505 = vpop.f32.mrb[0].mxu0
        %7506 = vmatprep.mubr.f32.mxu0 0.0
        %7507 = vmatmul.mubr.f32.gmra.mrb[0].mxu0 %v7393
        %v7508 = vpop.f32.mrb[0].mxu0
        %v7509 = vadd.f32 0.0, %v7508
        %v7510 = vpop.f32.mrb[0].mxu0
        %7511 = vmatprep.mubr.f32.mxu0 0.0
        %7512 = vmatmul.mubr.f32.gmra.mrb[0].mxu0 %v7396
        %v7513 = vpop.f32.mrb[0].mxu0
        %v7514 = vadd.f32 0.0, %v7513
        %v7515 = vpop.f32.mrb[0].mxu0
        %7516 = vmatprep.mubr.f32.mxu0 0.0
        %7517 = vmatmul.mubr.f32.gmra.mrb[0].mxu0 %v7399
        %v7518 = vpop.f32.mrb[0].mxu0
        %v7519 = vadd.f32 0.0, %v7518
        %v7520 = vpop.f32.mrb[0].mxu0
        %7521 = vmatprep.mubr.f32.mxu0 0.0
        %7522 = vmatmul.mubr.f32.gmra.mrb[0].mxu0 %v7402
        %v7523 = vpop.f32.mrb[0].mxu0
        %v7524 = vadd.f32 0.0, %v7523
        %v7525 = vpop.f32.mrb[0].mxu0
        %7526 = vmatprep.mubr.f32.mxu0 0.0
        %7527 = vmatmul.mubr.f32.gmra.mrb[0].mxu0 %v7405
        %v7528 = vpop.f32.mrb[0].mxu0
        %v7529 = vadd.f32 0.0, %v7528
        %v7530 = vpop.f32.mrb[0].mxu0
        %7531 = vdwg.mxu0
        %v7533 = vsel %vm2274, %v6455, 0
        %v7536 = vsel %vm2274, %v6457, 0
        %v7539 = vsel %vm2274, %v6459, 0
        %v7542 = vsel %vm2274, %v6461, 0
        %v7545 = vsel %vm2274, %v6463, 0
        %v7548 = vsel %vm2274, %v6465, 0
        %v7551 = vsel %vm2274, %v6467, 0
        %v7554 = vsel %vm2274, %v6469, 0
        %v7557 = vsel %vm2274, %v6471, 0
        %v7560 = vsel %vm2274, %v6473, 0
        %v7563 = vsel %vm2274, %v6475, 0
        %v7566 = vsel %vm2274, %v6477, 0
        %7568 = vmatprep.subr.mxu0 0.0
        %7569 = vmatpush1.msra.mxu0 %v5950
        %7570 = vmatprep.subr.mxu0 0.0
        %7571 = vmatpush1.msra.mxu0 %v5955
        %7572 = vmatprep.subr.mxu0 0.0
        %7573 = vmatpush1.msra.mxu0 %v5960
        %7574 = vmatprep.subr.mxu0 0.0
        %7575 = vmatpush1.msra.mxu0 %v5965
        %7576 = vmatprep.subr.mxu0 0.0
        %7577 = vmatpush1.msra.mxu0 %v5970
        %7578 = vmatprep.subr.mxu0 0.0
        %7579 = vmatpush1.msra.mxu0 %v5975
        %7580 = vmatprep.subr.mxu0 0.0
        %7581 = vmatpush1.msra.mxu0 %v5980
        %7582 = vmatprep.subr.mxu0 0.0
        %7583 = vmatpush1.msra.mxu0 %v5985
        %7584 = vmatprep.subr.mxu0 0.0
        %7585 = vmatpush1.msra.mxu0 %v5990
        %7586 = vmatprep.subr.mxu0 0.0
        %7587 = vmatpush1.msra.mxu0 %v5995
        %7588 = vmatprep.subr.mxu0 0.0
        %7589 = vmatpush1.msra.mxu0 %v6000
        %7590 = vmatprep.subr.mxu0 0.0
        %7591 = vmatpush1.msra.mxu0 %v6005
        %7592 = vmatprep.subr.mxu0 0.0
        %7593 = vmatpush1.msra.mxu0 0.0
        %7594 = vmatprep.subr.mxu0 0.0
        %7595 = vmatpush1.msra.mxu0 0.0
        %7596 = vmatprep.subr.mxu0 0.0
        %7597 = vmatpush1.msra.mxu0 0.0
        %7598 = vmatprep.subr.mxu0 0.0
        %7599 = vmatpush1.msra.mxu0 0.0
        %7600 = vmatprep.subr.mxu0 0.0
        %7601 = vmatpush1.msra.mxu0 0.0
        %7602 = vmatprep.subr.mxu0 0.0
        %7603 = vmatpush1.msra.mxu0 0.0
        %7604 = vmatprep.subr.mxu0 0.0
        %7605 = vmatpush1.msra.mxu0 0.0
        %7606 = vmatprep.subr.mxu0 0.0
        %7607 = vmatpush1.msra.mxu0 0.0
        %7608 = vmatprep.subr.mxu0 0.0
        %7609 = vmatpush1.msra.mxu0 0.0
        %7610 = vmatprep.subr.mxu0 0.0
        %7611 = vmatpush1.msra.mxu0 0.0
        %7612 = vmatprep.subr.mxu0 0.0
        %7613 = vmatpush1.msra.mxu0 0.0
        %7614 = vmatprep.subr.mxu0 0.0
        %7615 = vmatpush1.msra.mxu0 0.0
        %7616 = vmatprep.subr.mxu0 0.0
        %7617 = vmatpush1.msra.mxu0 0.0
        %7618 = vmatprep.subr.mxu0 0.0
        %7619 = vmatpush1.msra.mxu0 0.0
        %7620 = vmatprep.subr.mxu0 0.0
        %7621 = vmatpush1.msra.mxu0 0.0
        %7622 = vmatprep.subr.mxu0 0.0
        %7623 = vmatpush1.msra.mxu0 0.0
        %7624 = vmatprep.subr.mxu0 0.0
        %7625 = vmatpush1.msra.mxu0 0.0
        %7626 = vmatprep.subr.mxu0 0.0
        %7627 = vmatpush1.msra.mxu0 0.0
        %7628 = vmatprep.subr.mxu0 0.0
        %7629 = vmatpush1.msra.mxu0 0.0
        %7630 = vmatprep.subr.mxu0 0.0
        %7631 = vmatpush1.msra.mxu0 0.0
        %7632 = vmatprep.mubr.f32.mxu0 0.0
        %7633 = vmatmul.mubr.f32.gmra.mrb[0].mxu0 %v7533
        %v7634 = vpop.f32.mrb[0].mxu0
        %v7635 = vadd.f32 %v7474, %v7634
        %v7636 = vpop.f32.mrb[0].mxu0
        %7637 = vmatprep.mubr.f32.mxu0 0.0
        %7638 = vmatmul.mubr.f32.gmra.mrb[0].mxu0 %v7536
        %v7639 = vpop.f32.mrb[0].mxu0
        %v7640 = vadd.f32 %v7479, %v7639
        %v7641 = vpop.f32.mrb[0].mxu0
        %7642 = vmatprep.mubr.f32.mxu0 0.0
        %7643 = vmatmul.mubr.f32.gmra.mrb[0].mxu0 %v7539
        %v7644 = vpop.f32.mrb[0].mxu0
        %v7645 = vadd.f32 %v7484, %v7644
        %v7646 = vpop.f32.mrb[0].mxu0
        %7647 = vmatprep.mubr.f32.mxu0 0.0
        %7648 = vmatmul.mubr.f32.gmra.mrb[0].mxu0 %v7542
        %v7649 = vpop.f32.mrb[0].mxu0
        %v7650 = vadd.f32 %v7489, %v7649
        %v7651 = vpop.f32.mrb[0].mxu0
        %7652 = vmatprep.mubr.f32.mxu0 0.0
        %7653 = vmatmul.mubr.f32.gmra.mrb[0].mxu0 %v7545
        %v7654 = vpop.f32.mrb[0].mxu0
        %v7655 = vadd.f32 %v7494, %v7654
        %v7656 = vpop.f32.mrb[0].mxu0
        %7657 = vmatprep.mubr.f32.mxu0 0.0
        %7658 = vmatmul.mubr.f32.gmra.mrb[0].mxu0 %v7548
        %v7659 = vpop.f32.mrb[0].mxu0
        %v7660 = vadd.f32 %v7499, %v7659
        %v7661 = vpop.f32.mrb[0].mxu0
        %7662 = vmatprep.mubr.f32.mxu0 0.0
        %7663 = vmatmul.mubr.f32.gmra.mrb[0].mxu0 %v7551
        %v7664 = vpop.f32.mrb[0].mxu0
        %v7665 = vadd.f32 %v7504, %v7664
        %v7666 = vpop.f32.mrb[0].mxu0
        %7667 = vmatprep.mubr.f32.mxu0 0.0
        %7668 = vmatmul.mubr.f32.gmra.mrb[0].mxu0 %v7554
        %v7669 = vpop.f32.mrb[0].mxu0
        %v7670 = vadd.f32 %v7509, %v7669
        %v7671 = vpop.f32.mrb[0].mxu0
        %7672 = vmatprep.mubr.f32.mxu0 0.0
        %7673 = vmatmul.mubr.f32.gmra.mrb[0].mxu0 %v7557
        %v7674 = vpop.f32.mrb[0].mxu0
        %v7675 = vadd.f32 %v7514, %v7674
        %v7676 = vpop.f32.mrb[0].mxu0
        %7677 = vmatprep.mubr.f32.mxu0 0.0
        %7678 = vmatmul.mubr.f32.gmra.mrb[0].mxu0 %v7560
        %v7679 = vpop.f32.mrb[0].mxu0
        %v7680 = vadd.f32 %v7519, %v7679
        %v7681 = vpop.f32.mrb[0].mxu0
        %7682 = vmatprep.mubr.f32.mxu0 0.0
        %7683 = vmatmul.mubr.f32.gmra.mrb[0].mxu0 %v7563
        %v7684 = vpop.f32.mrb[0].mxu0
        %v7685 = vadd.f32 %v7524, %v7684
        %v7686 = vpop.f32.mrb[0].mxu0
        %7687 = vmatprep.mubr.f32.mxu0 0.0
        %7688 = vmatmul.mubr.f32.gmra.mrb[0].mxu0 %v7566
        %v7689 = vpop.f32.mrb[0].mxu0
        %v7690 = vadd.f32 %v7529, %v7689
        %v7691 = vpop.f32.mrb[0].mxu0
        %7692 = vdwg.mxu0
        %7693 = vmatprep.subr.mxu0 0.0
        %7694 = vmatpush1.msra.mxu0 %v6984
        %7695 = vmatprep.subr.mxu0 0.0
        %7696 = vmatpush1.msra.mxu0 %v6989
        %7697 = vmatprep.subr.mxu0 0.0
        %7698 = vmatpush1.msra.mxu0 %v6994
        %7699 = vmatprep.subr.mxu0 0.0
        %7700 = vmatpush1.msra.mxu0 %v6999
        %7701 = vmatprep.subr.mxu0 0.0
        %7702 = vmatpush1.msra.mxu0 %v7004
        %7703 = vmatprep.subr.mxu0 0.0
        %7704 = vmatpush1.msra.mxu0 %v7009
        %7705 = vmatprep.subr.mxu0 0.0
        %7706 = vmatpush1.msra.mxu0 %v7014
        %7707 = vmatprep.subr.mxu0 0.0
        %7708 = vmatpush1.msra.mxu0 %v7019
        %7709 = vmatprep.subr.mxu0 0.0
        %7710 = vmatpush1.msra.mxu0 %v7024
        %7711 = vmatprep.subr.mxu0 0.0
        %7712 = vmatpush1.msra.mxu0 %v7029
        %7713 = vmatprep.subr.mxu0 0.0
        %7714 = vmatpush1.msra.mxu0 %v7034
        %7715 = vmatprep.subr.mxu0 0.0
        %7716 = vmatpush1.msra.mxu0 %v7039
        %7717 = vmatprep.subr.mxu0 0.0
        %7718 = vmatpush1.msra.mxu0 0.0
        %7719 = vmatprep.subr.mxu0 0.0
        %7720 = vmatpush1.msra.mxu0 0.0
        %7721 = vmatprep.subr.mxu0 0.0
        %7722 = vmatpush1.msra.mxu0 0.0
        %7723 = vmatprep.subr.mxu0 0.0
        %7724 = vmatpush1.msra.mxu0 0.0
        %7725 = vmatprep.subr.mxu0 0.0
        %7726 = vmatpush1.msra.mxu0 0.0
        %7727 = vmatprep.subr.mxu0 0.0
        %7728 = vmatpush1.msra.mxu0 0.0
        %7729 = vmatprep.subr.mxu0 0.0
        %7730 = vmatpush1.msra.mxu0 0.0
        %7731 = vmatprep.subr.mxu0 0.0
        %7732 = vmatpush1.msra.mxu0 0.0
        %7733 = vmatprep.subr.mxu0 0.0
        %7734 = vmatpush1.msra.mxu0 0.0
        %7735 = vmatprep.subr.mxu0 0.0
        %7736 = vmatpush1.msra.mxu0 0.0
        %7737 = vmatprep.subr.mxu0 0.0
        %7738 = vmatpush1.msra.mxu0 0.0
        %7739 = vmatprep.subr.mxu0 0.0
        %7740 = vmatpush1.msra.mxu0 0.0
        %7741 = vmatprep.subr.mxu0 0.0
        %7742 = vmatpush1.msra.mxu0 0.0
        %7743 = vmatprep.subr.mxu0 0.0
        %7744 = vmatpush1.msra.mxu0 0.0
        %7745 = vmatprep.subr.mxu0 0.0
        %7746 = vmatpush1.msra.mxu0 0.0
        %7747 = vmatprep.subr.mxu0 0.0
        %7748 = vmatpush1.msra.mxu0 0.0
        %7749 = vmatprep.subr.mxu0 0.0
        %7750 = vmatpush1.msra.mxu0 0.0
        %7751 = vmatprep.subr.mxu0 0.0
        %7752 = vmatpush1.msra.mxu0 0.0
        %7753 = vmatprep.subr.mxu0 0.0
        %7754 = vmatpush1.msra.mxu0 0.0
        %7755 = vmatprep.subr.mxu0 0.0
        %7756 = vmatpush1.msra.mxu0 0.0
        %7757 = vmatprep.mubr.f32.mxu0 0.0
        %7758 = vmatmul.mubr.f32.gmra.mrb[0].mxu0 %v7372
        %v7759 = vpop.f32.mrb[0].mxu0
        %v7760 = vadd.f32 0.0, %v7759
        %v7761 = vpop.f32.mrb[0].mxu0
        %7762 = vmatprep.mubr.f32.mxu0 0.0
        %7763 = vmatmul.mubr.f32.gmra.mrb[0].mxu0 %v7375
        %v7764 = vpop.f32.mrb[0].mxu0
        %v7765 = vadd.f32 0.0, %v7764
        %v7766 = vpop.f32.mrb[0].mxu0
        %7767 = vmatprep.mubr.f32.mxu0 0.0
        %7768 = vmatmul.mubr.f32.gmra.mrb[0].mxu0 %v7378
        %v7769 = vpop.f32.mrb[0].mxu0
        %v7770 = vadd.f32 0.0, %v7769
        %v7771 = vpop.f32.mrb[0].mxu0
        %7772 = vmatprep.mubr.f32.mxu0 0.0
        %7773 = vmatmul.mubr.f32.gmra.mrb[0].mxu0 %v7381
        %v7774 = vpop.f32.mrb[0].mxu0
        %v7775 = vadd.f32 0.0, %v7774
        %v7776 = vpop.f32.mrb[0].mxu0
        %7777 = vmatprep.mubr.f32.mxu0 0.0
        %7778 = vmatmul.mubr.f32.gmra.mrb[0].mxu0 %v7384
        %v7779 = vpop.f32.mrb[0].mxu0
        %v7780 = vadd.f32 0.0, %v7779
        %v7781 = vpop.f32.mrb[0].mxu0
        %7782 = vmatprep.mubr.f32.mxu0 0.0
        %7783 = vmatmul.mubr.f32.gmra.mrb[0].mxu0 %v7387
        %v7784 = vpop.f32.mrb[0].mxu0
        %v7785 = vadd.f32 0.0, %v7784
        %v7786 = vpop.f32.mrb[0].mxu0
        %7787 = vmatprep.mubr.f32.mxu0 0.0
        %7788 = vmatmul.mubr.f32.gmra.mrb[0].mxu0 %v7390
        %v7789 = vpop.f32.mrb[0].mxu0
        %v7790 = vadd.f32 0.0, %v7789
        %v7791 = vpop.f32.mrb[0].mxu0
        %7792 = vmatprep.mubr.f32.mxu0 0.0
        %7793 = vmatmul.mubr.f32.gmra.mrb[0].mxu0 %v7393
        %v7794 = vpop.f32.mrb[0].mxu0
        %v7795 = vadd.f32 0.0, %v7794
        %v7796 = vpop.f32.mrb[0].mxu0
        %7797 = vmatprep.mubr.f32.mxu0 0.0
        %7798 = vmatmul.mubr.f32.gmra.mrb[0].mxu0 %v7396
        %v7799 = vpop.f32.mrb[0].mxu0
        %v7800 = vadd.f32 0.0, %v7799
        %v7801 = vpop.f32.mrb[0].mxu0
        %7802 = vmatprep.mubr.f32.mxu0 0.0
        %7803 = vmatmul.mubr.f32.gmra.mrb[0].mxu0 %v7399
        %v7804 = vpop.f32.mrb[0].mxu0
        %v7805 = vadd.f32 0.0, %v7804
        %v7806 = vpop.f32.mrb[0].mxu0
        %7807 = vmatprep.mubr.f32.mxu0 0.0
        %7808 = vmatmul.mubr.f32.gmra.mrb[0].mxu0 %v7402
        %v7809 = vpop.f32.mrb[0].mxu0
        %v7810 = vadd.f32 0.0, %v7809
        %v7811 = vpop.f32.mrb[0].mxu0
        %7812 = vmatprep.mubr.f32.mxu0 0.0
        %7813 = vmatmul.mubr.f32.gmra.mrb[0].mxu0 %v7405
        %v7814 = vpop.f32.mrb[0].mxu0
        %v7815 = vadd.f32 0.0, %v7814
        %v7816 = vpop.f32.mrb[0].mxu0
        %7817 = vdwg.mxu0
        %7818 = vmatprep.subr.mxu0 0.0
        %7819 = vmatpush1.msra.mxu0 %v6091
        %7820 = vmatprep.subr.mxu0 0.0
        %7821 = vmatpush1.msra.mxu0 %v6096
        %7822 = vmatprep.subr.mxu0 0.0
        %7823 = vmatpush1.msra.mxu0 %v6101
        %7824 = vmatprep.subr.mxu0 0.0
        %7825 = vmatpush1.msra.mxu0 %v6106
        %7826 = vmatprep.subr.mxu0 0.0
        %7827 = vmatpush1.msra.mxu0 %v6111
        %7828 = vmatprep.subr.mxu0 0.0
        %7829 = vmatpush1.msra.mxu0 %v6116
        %7830 = vmatprep.subr.mxu0 0.0
        %7831 = vmatpush1.msra.mxu0 %v6121
        %7832 = vmatprep.subr.mxu0 0.0
        %7833 = vmatpush1.msra.mxu0 %v6126
        %7834 = vmatprep.subr.mxu0 0.0
        %7835 = vmatpush1.msra.mxu0 %v6131
        %7836 = vmatprep.subr.mxu0 0.0
        %7837 = vmatpush1.msra.mxu0 %v6136
        %7838 = vmatprep.subr.mxu0 0.0
        %7839 = vmatpush1.msra.mxu0 %v6141
        %7840 = vmatprep.subr.mxu0 0.0
        %7841 = vmatpush1.msra.mxu0 %v6146
        %7842 = vmatprep.subr.mxu0 0.0
        %7843 = vmatpush1.msra.mxu0 0.0
        %7844 = vmatprep.subr.mxu0 0.0
        %7845 = vmatpush1.msra.mxu0 0.0
        %7846 = vmatprep.subr.mxu0 0.0
        %7847 = vmatpush1.msra.mxu0 0.0
        %7848 = vmatprep.subr.mxu0 0.0
        %7849 = vmatpush1.msra.mxu0 0.0
        %7850 = vmatprep.subr.mxu0 0.0
        %7851 = vmatpush1.msra.mxu0 0.0
        %7852 = vmatprep.subr.mxu0 0.0
        %7853 = vmatpush1.msra.mxu0 0.0
        %7854 = vmatprep.subr.mxu0 0.0
        %7855 = vmatpush1.msra.mxu0 0.0
        %7856 = vmatprep.subr.mxu0 0.0
        %7857 = vmatpush1.msra.mxu0 0.0
        %7858 = vmatprep.subr.mxu0 0.0
        %7859 = vmatpush1.msra.mxu0 0.0
        %7860 = vmatprep.subr.mxu0 0.0
        %7861 = vmatpush1.msra.mxu0 0.0
        %7862 = vmatprep.subr.mxu0 0.0
        %7863 = vmatpush1.msra.mxu0 0.0
        %7864 = vmatprep.subr.mxu0 0.0
        %7865 = vmatpush1.msra.mxu0 0.0
        %7866 = vmatprep.subr.mxu0 0.0
        %7867 = vmatpush1.msra.mxu0 0.0
        %7868 = vmatprep.subr.mxu0 0.0
        %7869 = vmatpush1.msra.mxu0 0.0
        %7870 = vmatprep.subr.mxu0 0.0
        %7871 = vmatpush1.msra.mxu0 0.0
        %7872 = vmatprep.subr.mxu0 0.0
        %7873 = vmatpush1.msra.mxu0 0.0
        %7874 = vmatprep.subr.mxu0 0.0
        %7875 = vmatpush1.msra.mxu0 0.0
        %7876 = vmatprep.subr.mxu0 0.0
        %7877 = vmatpush1.msra.mxu0 0.0
        %7878 = vmatprep.subr.mxu0 0.0
        %7879 = vmatpush1.msra.mxu0 0.0
        %7880 = vmatprep.subr.mxu0 0.0
        %7881 = vmatpush1.msra.mxu0 0.0
        %7882 = vmatprep.mubr.f32.mxu0 0.0
        %7883 = vmatmul.mubr.f32.gmra.mrb[0].mxu0 %v7533
        %v7884 = vpop.f32.mrb[0].mxu0
        %v7885 = vadd.f32 %v7760, %v7884
        %v7886 = vpop.f32.mrb[0].mxu0
        %7887 = vmatprep.mubr.f32.mxu0 0.0
        %7888 = vmatmul.mubr.f32.gmra.mrb[0].mxu0 %v7536
        %v7889 = vpop.f32.mrb[0].mxu0
        %v7890 = vadd.f32 %v7765, %v7889
        %v7891 = vpop.f32.mrb[0].mxu0
        %7892 = vmatprep.mubr.f32.mxu0 0.0
        %7893 = vmatmul.mubr.f32.gmra.mrb[0].mxu0 %v7539
        %v7894 = vpop.f32.mrb[0].mxu0
        %v7895 = vadd.f32 %v7770, %v7894
        %v7896 = vpop.f32.mrb[0].mxu0
        %7897 = vmatprep.mubr.f32.mxu0 0.0
        %7898 = vmatmul.mubr.f32.gmra.mrb[0].mxu0 %v7542
        %v7899 = vpop.f32.mrb[0].mxu0
        %v7900 = vadd.f32 %v7775, %v7899
        %v7901 = vpop.f32.mrb[0].mxu0
        %7902 = vmatprep.mubr.f32.mxu0 0.0
        %7903 = vmatmul.mubr.f32.gmra.mrb[0].mxu0 %v7545
        %v7904 = vpop.f32.mrb[0].mxu0
        %v7905 = vadd.f32 %v7780, %v7904
        %v7906 = vpop.f32.mrb[0].mxu0
        %7907 = vmatprep.mubr.f32.mxu0 0.0
        %7908 = vmatmul.mubr.f32.gmra.mrb[0].mxu0 %v7548
        %v7909 = vpop.f32.mrb[0].mxu0
        %v7910 = vadd.f32 %v7785, %v7909
        %v7911 = vpop.f32.mrb[0].mxu0
        %7912 = vmatprep.mubr.f32.mxu0 0.0
        %7913 = vmatmul.mubr.f32.gmra.mrb[0].mxu0 %v7551
        %v7914 = vpop.f32.mrb[0].mxu0
        %v7915 = vadd.f32 %v7790, %v7914
        %v7916 = vpop.f32.mrb[0].mxu0
        %7917 = vmatprep.mubr.f32.mxu0 0.0
        %7918 = vmatmul.mubr.f32.gmra.mrb[0].mxu0 %v7554
        %v7919 = vpop.f32.mrb[0].mxu0
        %v7920 = vadd.f32 %v7795, %v7919
        %v7921 = vpop.f32.mrb[0].mxu0
        %7922 = vmatprep.mubr.f32.mxu0 0.0
        %7923 = vmatmul.mubr.f32.gmra.mrb[0].mxu0 %v7557
        %v7924 = vpop.f32.mrb[0].mxu0
        %v7925 = vadd.f32 %v7800, %v7924
        %v7926 = vpop.f32.mrb[0].mxu0
        %7927 = vmatprep.mubr.f32.mxu0 0.0
        %7928 = vmatmul.mubr.f32.gmra.mrb[0].mxu0 %v7560
        %v7929 = vpop.f32.mrb[0].mxu0
        %v7930 = vadd.f32 %v7805, %v7929
        %v7931 = vpop.f32.mrb[0].mxu0
        %7932 = vmatprep.mubr.f32.mxu0 0.0
        %7933 = vmatmul.mubr.f32.gmra.mrb[0].mxu0 %v7563
        %v7934 = vpop.f32.mrb[0].mxu0
        %v7935 = vadd.f32 %v7810, %v7934
        %v7936 = vpop.f32.mrb[0].mxu0
        %7937 = vmatprep.mubr.f32.mxu0 0.0
        %7938 = vmatmul.mubr.f32.gmra.mrb[0].mxu0 %v7566
        %v7939 = vpop.f32.mrb[0].mxu0
        %v7940 = vadd.f32 %v7815, %v7939
        %v7941 = vpop.f32.mrb[0].mxu0
        %7942 = vdwg.mxu0
        %7943 = vmatprep.subr.mxu0 0.0
        %7944 = vmatpush1.msra.mxu0 %v7885
        %7945 = vmatprep.subr.mxu0 0.0
        %7946 = vmatpush1.msra.mxu0 %v7890
        %7947 = vmatprep.subr.mxu0 0.0
        %7948 = vmatpush1.msra.mxu0 %v7895
        %7949 = vmatprep.subr.mxu0 0.0
        %7950 = vmatpush1.msra.mxu0 %v7900
        %7951 = vmatprep.subr.mxu0 0.0
        %7952 = vmatpush1.msra.mxu0 %v7905
        %7953 = vmatprep.subr.mxu0 0.0
        %7954 = vmatpush1.msra.mxu0 %v7910
        %7955 = vmatprep.subr.mxu0 0.0
        %7956 = vmatpush1.msra.mxu0 %v7915
        %7957 = vmatprep.subr.mxu0 0.0
        %7958 = vmatpush1.msra.mxu0 %v7920
        %7959 = vmatprep.subr.mxu0 0.0
        %7960 = vmatpush1.msra.mxu0 %v7925
        %7961 = vmatprep.subr.mxu0 0.0
        %7962 = vmatpush1.msra.mxu0 %v7930
        %7963 = vmatprep.subr.mxu0 0.0
        %7964 = vmatpush1.msra.mxu0 %v7935
        %7965 = vmatprep.subr.mxu0 0.0
        %7966 = vmatpush1.msra.mxu0 %v7940
        %7967 = vmatprep.subr.mxu0 0.0
        %7968 = vmatpush1.msra.mxu0 0.0
        %7969 = vmatprep.subr.mxu0 0.0
        %7970 = vmatpush1.msra.mxu0 0.0
        %7971 = vmatprep.subr.mxu0 0.0
        %7972 = vmatpush1.msra.mxu0 0.0
        %7973 = vmatprep.subr.mxu0 0.0
        %7974 = vmatpush1.msra.mxu0 0.0
        %7975 = vmatprep.subr.mxu0 0.0
        %7976 = vmatpush1.msra.mxu0 0.0
        %7977 = vmatprep.subr.mxu0 0.0
        %7978 = vmatpush1.msra.mxu0 0.0
        %7979 = vmatprep.subr.mxu0 0.0
        %7980 = vmatpush1.msra.mxu0 0.0
        %7981 = vmatprep.subr.mxu0 0.0
        %7982 = vmatpush1.msra.mxu0 0.0
        %7983 = vmatprep.subr.mxu0 0.0
        %7984 = vmatpush1.msra.mxu0 0.0
        %7985 = vmatprep.subr.mxu0 0.0
        %7986 = vmatpush1.msra.mxu0 0.0
        %7987 = vmatprep.subr.mxu0 0.0
        %7988 = vmatpush1.msra.mxu0 0.0
        %7989 = vmatprep.subr.mxu0 0.0
        %7990 = vmatpush1.msra.mxu0 0.0
        %7991 = vmatprep.subr.mxu0 0.0
        %7992 = vmatpush1.msra.mxu0 0.0
        %7993 = vmatprep.subr.mxu0 0.0
        %7994 = vmatpush1.msra.mxu0 0.0
        %7995 = vmatprep.subr.mxu0 0.0
        %7996 = vmatpush1.msra.mxu0 0.0
        %7997 = vmatprep.subr.mxu0 0.0
        %7998 = vmatpush1.msra.mxu0 0.0
        %7999 = vmatprep.subr.mxu0 0.0
        %8000 = vmatpush1.msra.mxu0 0.0
        %8001 = vmatprep.subr.mxu0 0.0
        %8002 = vmatpush1.msra.mxu0 0.0
        %8003 = vmatprep.subr.mxu0 0.0
        %8004 = vmatpush1.msra.mxu0 0.0
        %8005 = vmatprep.subr.mxu0 0.0
        %8006 = vmatpush1.msra.mxu0 0.0
        %8007 = vmatprep.mubr.f32.mxu0 0.0
        %8008 = vmatmul.mubr.f32.gmra.mrb[0].mxu0 %v3905
        %v8009 = vpop.f32.mrb[0].mxu0
        %v8010 = vadd.f32 0.0, %v8009
        %v8011 = vpop.f32.mrb[0].mxu0
        %8012 = vmatprep.mubr.f32.mxu0 0.0
        %8013 = vmatmul.mubr.f32.gmra.mrb[0].mxu0 %v3908
        %v8014 = vpop.f32.mrb[0].mxu0
        %v8015 = vadd.f32 0.0, %v8014
        %v8016 = vpop.f32.mrb[0].mxu0
        %8017 = vmatprep.mubr.f32.mxu0 0.0
        %8018 = vmatmul.mubr.f32.gmra.mrb[0].mxu0 %v3911
        %v8019 = vpop.f32.mrb[0].mxu0
        %v8020 = vadd.f32 0.0, %v8019
        %v8021 = vpop.f32.mrb[0].mxu0
        %8022 = vmatprep.mubr.f32.mxu0 0.0
        %8023 = vmatmul.mubr.f32.gmra.mrb[0].mxu0 %v3914
        %v8024 = vpop.f32.mrb[0].mxu0
        %v8025 = vadd.f32 0.0, %v8024
        %v8026 = vpop.f32.mrb[0].mxu0
        %8027 = vmatprep.mubr.f32.mxu0 0.0
        %8028 = vmatmul.mubr.f32.gmra.mrb[0].mxu0 %v3917
        %v8029 = vpop.f32.mrb[0].mxu0
        %v8030 = vadd.f32 0.0, %v8029
        %v8031 = vpop.f32.mrb[0].mxu0
        %8032 = vmatprep.mubr.f32.mxu0 0.0
        %8033 = vmatmul.mubr.f32.gmra.mrb[0].mxu0 %v3920
        %v8034 = vpop.f32.mrb[0].mxu0
        %v8035 = vadd.f32 0.0, %v8034
        %v8036 = vpop.f32.mrb[0].mxu0
        %8037 = vmatprep.mubr.f32.mxu0 0.0
        %8038 = vmatmul.mubr.f32.gmra.mrb[0].mxu0 %v3923
        %v8039 = vpop.f32.mrb[0].mxu0
        %v8040 = vadd.f32 0.0, %v8039
        %v8041 = vpop.f32.mrb[0].mxu0
        %8042 = vmatprep.mubr.f32.mxu0 0.0
        %8043 = vmatmul.mubr.f32.gmra.mrb[0].mxu0 %v3926
        %v8044 = vpop.f32.mrb[0].mxu0
        %v8045 = vadd.f32 0.0, %v8044
        %v8046 = vpop.f32.mrb[0].mxu0
        %8047 = vmatprep.mubr.f32.mxu0 0.0
        %8048 = vmatmul.mubr.f32.gmra.mrb[0].mxu0 %v3929
        %v8049 = vpop.f32.mrb[0].mxu0
        %v8050 = vadd.f32 0.0, %v8049
        %v8051 = vpop.f32.mrb[0].mxu0
        %8052 = vmatprep.mubr.f32.mxu0 0.0
        %8053 = vmatmul.mubr.f32.gmra.mrb[0].mxu0 %v3932
        %v8054 = vpop.f32.mrb[0].mxu0
        %v8055 = vadd.f32 0.0, %v8054
        %v8056 = vpop.f32.mrb[0].mxu0
        %8057 = vmatprep.mubr.f32.mxu0 0.0
        %8058 = vmatmul.mubr.f32.gmra.mrb[0].mxu0 %v3935
        %v8059 = vpop.f32.mrb[0].mxu0
        %v8060 = vadd.f32 0.0, %v8059
        %v8061 = vpop.f32.mrb[0].mxu0
        %8062 = vmatprep.mubr.f32.mxu0 0.0
        %8063 = vmatmul.mubr.f32.gmra.mrb[0].mxu0 %v3938
        %v8064 = vpop.f32.mrb[0].mxu0
        %v8065 = vadd.f32 0.0, %v8064
        %v8066 = vpop.f32.mrb[0].mxu0
        %8067 = vmatprep.mubr.f32.mxu0 0.0
        %8068 = vmatmul.mubr.f32.gmra.mrb[0].mxu0 %v3941
        %v8069 = vpop.f32.mrb[0].mxu0
        %v8070 = vadd.f32 0.0, %v8069
        %v8071 = vpop.f32.mrb[0].mxu0
        %8072 = vmatprep.mubr.f32.mxu0 0.0
        %8073 = vmatmul.mubr.f32.gmra.mrb[0].mxu0 %v3944
        %v8074 = vpop.f32.mrb[0].mxu0
        %v8075 = vadd.f32 0.0, %v8074
        %v8076 = vpop.f32.mrb[0].mxu0
        %8077 = vmatprep.mubr.f32.mxu0 0.0
        %8078 = vmatmul.mubr.f32.gmra.mrb[0].mxu0 %v3947
        %v8079 = vpop.f32.mrb[0].mxu0
        %v8080 = vadd.f32 0.0, %v8079
        %v8081 = vpop.f32.mrb[0].mxu0
        %8082 = vmatprep.mubr.f32.mxu0 0.0
        %8083 = vmatmul.mubr.f32.gmra.mrb[0].mxu0 %v3950
        %v8084 = vpop.f32.mrb[0].mxu0
        %v8085 = vadd.f32 0.0, %v8084
        %v8086 = vpop.f32.mrb[0].mxu0
        %8087 = vdwg.mxu0
        %8088 = vmatprep.subr.mxu0 0.0
        %8089 = vmatpush1.msra.mxu0 %v7635
        %8090 = vmatprep.subr.mxu0 0.0
        %8091 = vmatpush1.msra.mxu0 %v7640
        %8092 = vmatprep.subr.mxu0 0.0
        %8093 = vmatpush1.msra.mxu0 %v7645
        %8094 = vmatprep.subr.mxu0 0.0
        %8095 = vmatpush1.msra.mxu0 %v7650
        %8096 = vmatprep.subr.mxu0 0.0
        %8097 = vmatpush1.msra.mxu0 %v7655
        %8098 = vmatprep.subr.mxu0 0.0
        %8099 = vmatpush1.msra.mxu0 %v7660
        %8100 = vmatprep.subr.mxu0 0.0
        %8101 = vmatpush1.msra.mxu0 %v7665
        %8102 = vmatprep.subr.mxu0 0.0
        %8103 = vmatpush1.msra.mxu0 %v7670
        %8104 = vmatprep.subr.mxu0 0.0
        %8105 = vmatpush1.msra.mxu0 %v7675
        %8106 = vmatprep.subr.mxu0 0.0
        %8107 = vmatpush1.msra.mxu0 %v7680
        %8108 = vmatprep.subr.mxu0 0.0
        %8109 = vmatpush1.msra.mxu0 %v7685
        %8110 = vmatprep.subr.mxu0 0.0
        %8111 = vmatpush1.msra.mxu0 %v7690
        %8112 = vmatprep.subr.mxu0 0.0
        %8113 = vmatpush1.msra.mxu0 0.0
        %8114 = vmatprep.subr.mxu0 0.0
        %8115 = vmatpush1.msra.mxu0 0.0
        %8116 = vmatprep.subr.mxu0 0.0
        %8117 = vmatpush1.msra.mxu0 0.0
        %8118 = vmatprep.subr.mxu0 0.0
        %8119 = vmatpush1.msra.mxu0 0.0
        %8120 = vmatprep.subr.mxu0 0.0
        %8121 = vmatpush1.msra.mxu0 0.0
        %8122 = vmatprep.subr.mxu0 0.0
        %8123 = vmatpush1.msra.mxu0 0.0
        %8124 = vmatprep.subr.mxu0 0.0
        %8125 = vmatpush1.msra.mxu0 0.0
        %8126 = vmatprep.subr.mxu0 0.0
        %8127 = vmatpush1.msra.mxu0 0.0
        %8128 = vmatprep.subr.mxu0 0.0
        %8129 = vmatpush1.msra.mxu0 0.0
        %8130 = vmatprep.subr.mxu0 0.0
        %8131 = vmatpush1.msra.mxu0 0.0
        %8132 = vmatprep.subr.mxu0 0.0
        %8133 = vmatpush1.msra.mxu0 0.0
        %8134 = vmatprep.subr.mxu0 0.0
        %8135 = vmatpush1.msra.mxu0 0.0
        %8136 = vmatprep.subr.mxu0 0.0
        %8137 = vmatpush1.msra.mxu0 0.0
        %8138 = vmatprep.subr.mxu0 0.0
        %8139 = vmatpush1.msra.mxu0 0.0
        %8140 = vmatprep.subr.mxu0 0.0
        %8141 = vmatpush1.msra.mxu0 0.0
        %8142 = vmatprep.subr.mxu0 0.0
        %8143 = vmatpush1.msra.mxu0 0.0
        %8144 = vmatprep.subr.mxu0 0.0
        %8145 = vmatpush1.msra.mxu0 0.0
        %8146 = vmatprep.subr.mxu0 0.0
        %8147 = vmatpush1.msra.mxu0 0.0
        %8148 = vmatprep.subr.mxu0 0.0
        %8149 = vmatpush1.msra.mxu0 0.0
        %8150 = vmatprep.subr.mxu0 0.0
        %8151 = vmatpush1.msra.mxu0 0.0
        %8152 = vmatprep.mubr.f32.mxu0 0.0
        %8153 = vmatmul.mubr.f32.gmra.mrb[0].mxu0 %v4098
        %v8154 = vpop.f32.mrb[0].mxu0
        %v8155 = vadd.f32 %v8010, %v8154
        %v8156 = vpop.f32.mrb[0].mxu0
        %8157 = vmatprep.mubr.f32.mxu0 0.0
        %8158 = vmatmul.mubr.f32.gmra.mrb[0].mxu0 %v4101
        %v8159 = vpop.f32.mrb[0].mxu0
        %v8160 = vadd.f32 %v8015, %v8159
        %v8161 = vpop.f32.mrb[0].mxu0
        %8162 = vmatprep.mubr.f32.mxu0 0.0
        %8163 = vmatmul.mubr.f32.gmra.mrb[0].mxu0 %v4104
        %v8164 = vpop.f32.mrb[0].mxu0
        %v8165 = vadd.f32 %v8020, %v8164
        %v8166 = vpop.f32.mrb[0].mxu0
        %8167 = vmatprep.mubr.f32.mxu0 0.0
        %8168 = vmatmul.mubr.f32.gmra.mrb[0].mxu0 %v4107
        %v8169 = vpop.f32.mrb[0].mxu0
        %v8170 = vadd.f32 %v8025, %v8169
        %v8171 = vpop.f32.mrb[0].mxu0
        %8172 = vmatprep.mubr.f32.mxu0 0.0
        %8173 = vmatmul.mubr.f32.gmra.mrb[0].mxu0 %v4110
        %v8174 = vpop.f32.mrb[0].mxu0
        %v8175 = vadd.f32 %v8030, %v8174
        %v8176 = vpop.f32.mrb[0].mxu0
        %8177 = vmatprep.mubr.f32.mxu0 0.0
        %8178 = vmatmul.mubr.f32.gmra.mrb[0].mxu0 %v4113
        %v8179 = vpop.f32.mrb[0].mxu0
        %v8180 = vadd.f32 %v8035, %v8179
        %v8181 = vpop.f32.mrb[0].mxu0
        %8182 = vmatprep.mubr.f32.mxu0 0.0
        %8183 = vmatmul.mubr.f32.gmra.mrb[0].mxu0 %v4116
        %v8184 = vpop.f32.mrb[0].mxu0
        %v8185 = vadd.f32 %v8040, %v8184
        %v8186 = vpop.f32.mrb[0].mxu0
        %8187 = vmatprep.mubr.f32.mxu0 0.0
        %8188 = vmatmul.mubr.f32.gmra.mrb[0].mxu0 %v4119
        %v8189 = vpop.f32.mrb[0].mxu0
        %v8190 = vadd.f32 %v8045, %v8189
        %v8191 = vpop.f32.mrb[0].mxu0
        %8192 = vmatprep.mubr.f32.mxu0 0.0
        %8193 = vmatmul.mubr.f32.gmra.mrb[0].mxu0 %v4122
        %v8194 = vpop.f32.mrb[0].mxu0
        %v8195 = vadd.f32 %v8050, %v8194
        %v8196 = vpop.f32.mrb[0].mxu0
        %8197 = vmatprep.mubr.f32.mxu0 0.0
        %8198 = vmatmul.mubr.f32.gmra.mrb[0].mxu0 %v4125
        %v8199 = vpop.f32.mrb[0].mxu0
        %v8200 = vadd.f32 %v8055, %v8199
        %v8201 = vpop.f32.mrb[0].mxu0
        %8202 = vmatprep.mubr.f32.mxu0 0.0
        %8203 = vmatmul.mubr.f32.gmra.mrb[0].mxu0 %v4128
        %v8204 = vpop.f32.mrb[0].mxu0
        %v8205 = vadd.f32 %v8060, %v8204
        %v8206 = vpop.f32.mrb[0].mxu0
        %8207 = vmatprep.mubr.f32.mxu0 0.0
        %8208 = vmatmul.mubr.f32.gmra.mrb[0].mxu0 %v4131
        %v8209 = vpop.f32.mrb[0].mxu0
        %v8210 = vadd.f32 %v8065, %v8209
        %v8211 = vpop.f32.mrb[0].mxu0
        %8212 = vmatprep.mubr.f32.mxu0 0.0
        %8213 = vmatmul.mubr.f32.gmra.mrb[0].mxu0 %v4134
        %v8214 = vpop.f32.mrb[0].mxu0
        %v8215 = vadd.f32 %v8070, %v8214
        %v8216 = vpop.f32.mrb[0].mxu0
        %8217 = vmatprep.mubr.f32.mxu0 0.0
        %8218 = vmatmul.mubr.f32.gmra.mrb[0].mxu0 %v4137
        %v8219 = vpop.f32.mrb[0].mxu0
        %v8220 = vadd.f32 %v8075, %v8219
        %v8221 = vpop.f32.mrb[0].mxu0
        %8222 = vmatprep.mubr.f32.mxu0 0.0
        %8223 = vmatmul.mubr.f32.gmra.mrb[0].mxu0 %v4140
        %v8224 = vpop.f32.mrb[0].mxu0
        %v8225 = vadd.f32 %v8080, %v8224
        %v8226 = vpop.f32.mrb[0].mxu0
        %8227 = vmatprep.mubr.f32.mxu0 0.0
        %8228 = vmatmul.mubr.f32.gmra.mrb[0].mxu0 %v4143
        %v8229 = vpop.f32.mrb[0].mxu0
        %v8230 = vadd.f32 %v8085, %v8229
        %v8231 = vpop.f32.mrb[0].mxu0
        %8232 = vdwg.mxu0
        %v8233 = vadd.f32 %v5038, %v8155
        %v8234 = vadd.f32 %v5039, %v8160
        %v8235 = vadd.f32 %v5040, %v8165
        %v8236 = vadd.f32 %v5041, %v8170
        %v8237 = vadd.f32 %v5042, %v8175
        %v8238 = vadd.f32 %v5043, %v8180
        %v8239 = vadd.f32 %v5044, %v8185
        %v8240 = vadd.f32 %v5045, %v8190
        %v8241 = vadd.f32 %v5046, %v8195
        %v8242 = vadd.f32 %v5047, %v8200
        %v8243 = vadd.f32 %v5048, %v8205
        %v8244 = vadd.f32 %v5049, %v8210
        %v8245 = vadd.f32 %v5050, %v8215
        %v8246 = vadd.f32 %v5051, %v8220
        %v8247 = vadd.f32 %v5052, %v8225
        %v8248 = vadd.f32 %v5053, %v8230
        %v8249 = vld [vmem:[%s7 + $0x6] sm:$0x1]
        %v8250 = vld [vmem:[%s7 + $0x7] sm:$0x1]
        %v8251 = vsel %vm945, %v8233, 0.0
        %8252 = vadd.xlane.f32.xlu0 %v8251
        %v8253 = vpop.xlane.xlu0 %8252
        %v8254 = vsel %vm945, %v8234, 0.0
        %8255 = vadd.xlane.f32.xlu0 %v8254
        %v8256 = vpop.xlane.xlu0 %8255
        %v8257 = vsel %vm945, %v8235, 0.0
        %8258 = vadd.xlane.f32.xlu0 %v8257
        %v8259 = vpop.xlane.xlu0 %8258
        %v8260 = vsel %vm945, %v8236, 0.0
        %8261 = vadd.xlane.f32.xlu0 %v8260
        %v8262 = vpop.xlane.xlu0 %8261
        %v8263 = vsel %vm945, %v8237, 0.0
        %8264 = vadd.xlane.f32.xlu0 %v8263
        %v8265 = vpop.xlane.xlu0 %8264
        %v8266 = vsel %vm945, %v8238, 0.0
        %8267 = vadd.xlane.f32.xlu0 %v8266
        %v8268 = vpop.xlane.xlu0 %8267
        %v8269 = vsel %vm945, %v8239, 0.0
        %8270 = vadd.xlane.f32.xlu0 %v8269
        %v8271 = vpop.xlane.xlu0 %8270
        %v8272 = vsel %vm945, %v8240, 0.0
        %8273 = vadd.xlane.f32.xlu0 %v8272
        %v8274 = vpop.xlane.xlu0 %8273
        %v8275 = vsel %vm945, %v8241, 0.0
        %8276 = vadd.xlane.f32.xlu0 %v8275
        %v8277 = vpop.xlane.xlu0 %8276
        %v8278 = vsel %vm945, %v8242, 0.0
        %8279 = vadd.xlane.f32.xlu0 %v8278
        %v8280 = vpop.xlane.xlu0 %8279
        %v8281 = vsel %vm945, %v8243, 0.0
        %8282 = vadd.xlane.f32.xlu0 %v8281
        %v8283 = vpop.xlane.xlu0 %8282
        %v8284 = vsel %vm945, %v8244, 0.0
        %8285 = vadd.xlane.f32.xlu0 %v8284
        %v8286 = vpop.xlane.xlu0 %8285
        %v8287 = vsel %vm945, %v8245, 0.0
        %8288 = vadd.xlane.f32.xlu0 %v8287
        %v8289 = vpop.xlane.xlu0 %8288
        %v8290 = vsel %vm945, %v8246, 0.0
        %8291 = vadd.xlane.f32.xlu0 %v8290
        %v8292 = vpop.xlane.xlu0 %8291
        %v8293 = vsel %vm945, %v8247, 0.0
        %8294 = vadd.xlane.f32.xlu0 %v8293
        %v8295 = vpop.xlane.xlu0 %8294
        %v8296 = vsel %vm945, %v8248, 0.0
        %8297 = vadd.xlane.f32.xlu0 %v8296
        %v8298 = vpop.xlane.xlu0 %8297
        %v8299 = vmul.f32 %v8253, %v994
        %v8300 = vmul.f32 %v8256, %v994
        %v8301 = vmul.f32 %v8259, %v994
        %v8302 = vmul.f32 %v8262, %v994
        %v8303 = vmul.f32 %v8265, %v994
        %v8304 = vmul.f32 %v8268, %v994
        %v8305 = vmul.f32 %v8271, %v994
        %v8306 = vmul.f32 %v8274, %v994
        %v8307 = vmul.f32 %v8277, %v994
        %v8308 = vmul.f32 %v8280, %v994
        %v8309 = vmul.f32 %v8283, %v994
        %v8310 = vmul.f32 %v8286, %v994
        %v8311 = vmul.f32 %v8289, %v994
        %v8312 = vmul.f32 %v8292, %v994
        %v8313 = vmul.f32 %v8295, %v994
        %v8314 = vmul.f32 %v8298, %v994
        %v8315 = vsub.f32 %v8233, %v8299
        %v8316 = vsub.f32 %v8234, %v8300
        %v8317 = vsub.f32 %v8235, %v8301
        %v8318 = vsub.f32 %v8236, %v8302
        %v8319 = vsub.f32 %v8237, %v8303
        %v8320 = vsub.f32 %v8238, %v8304
        %v8321 = vsub.f32 %v8239, %v8305
        %v8322 = vsub.f32 %v8240, %v8306
        %v8323 = vsub.f32 %v8241, %v8307
        %v8324 = vsub.f32 %v8242, %v8308
        %v8325 = vsub.f32 %v8243, %v8309
        %v8326 = vsub.f32 %v8244, %v8310
        %v8327 = vsub.f32 %v8245, %v8311
        %v8328 = vsub.f32 %v8246, %v8312
        %v8329 = vsub.f32 %v8247, %v8313
        %v8330 = vsub.f32 %v8248, %v8314
        %v8331 = vmul.f32 %v8315, %v8315
        %v8332 = vmul.f32 %v8316, %v8316
        %v8333 = vmul.f32 %v8317, %v8317
        %v8334 = vmul.f32 %v8318, %v8318
        %v8335 = vmul.f32 %v8319, %v8319
        %v8336 = vmul.f32 %v8320, %v8320
        %v8337 = vmul.f32 %v8321, %v8321
        %v8338 = vmul.f32 %v8322, %v8322
        %v8339 = vmul.f32 %v8323, %v8323
        %v8340 = vmul.f32 %v8324, %v8324
        %v8341 = vmul.f32 %v8325, %v8325
        %v8342 = vmul.f32 %v8326, %v8326
        %v8343 = vmul.f32 %v8327, %v8327
        %v8344 = vmul.f32 %v8328, %v8328
        %v8345 = vmul.f32 %v8329, %v8329
        %v8346 = vmul.f32 %v8330, %v8330
        %v8347 = vsel %vm945, %v8331, 0.0
        %8348 = vadd.xlane.f32.xlu0 %v8347
        %v8349 = vpop.xlane.xlu0 %8348
        %v8350 = vsel %vm945, %v8332, 0.0
        %8351 = vadd.xlane.f32.xlu0 %v8350
        %v8352 = vpop.xlane.xlu0 %8351
        %v8353 = vsel %vm945, %v8333, 0.0
        %8354 = vadd.xlane.f32.xlu0 %v8353
        %v8355 = vpop.xlane.xlu0 %8354
        %v8356 = vsel %vm945, %v8334, 0.0
        %8357 = vadd.xlane.f32.xlu0 %v8356
        %v8358 = vpop.xlane.xlu0 %8357
        %v8359 = vsel %vm945, %v8335, 0.0
        %8360 = vadd.xlane.f32.xlu0 %v8359
        %v8361 = vpop.xlane.xlu0 %8360
        %v8362 = vsel %vm945, %v8336, 0.0
        %8363 = vadd.xlane.f32.xlu0 %v8362
        %v8364 = vpop.xlane.xlu0 %8363
        %v8365 = vsel %vm945, %v8337, 0.0
        %8366 = vadd.xlane.f32.xlu0 %v8365
        %v8367 = vpop.xlane.xlu0 %8366
        %v8368 = vsel %vm945, %v8338, 0.0
        %8369 = vadd.xlane.f32.xlu0 %v8368
        %v8370 = vpop.xlane.xlu0 %8369
        %v8371 = vsel %vm945, %v8339, 0.0
        %8372 = vadd.xlane.f32.xlu0 %v8371
        %v8373 = vpop.xlane.xlu0 %8372
        %v8374 = vsel %vm945, %v8340, 0.0
        %8375 = vadd.xlane.f32.xlu0 %v8374
        %v8376 = vpop.xlane.xlu0 %8375
        %v8377 = vsel %vm945, %v8341, 0.0
        %8378 = vadd.xlane.f32.xlu0 %v8377
        %v8379 = vpop.xlane.xlu0 %8378
        %v8380 = vsel %vm945, %v8342, 0.0
        %8381 = vadd.xlane.f32.xlu0 %v8380
        %v8382 = vpop.xlane.xlu0 %8381
        %v8383 = vsel %vm945, %v8343, 0.0
        %8384 = vadd.xlane.f32.xlu0 %v8383
        %v8385 = vpop.xlane.xlu0 %8384
        %v8386 = vsel %vm945, %v8344, 0.0
        %8387 = vadd.xlane.f32.xlu0 %v8386
        %v8388 = vpop.xlane.xlu0 %8387
        %v8389 = vsel %vm945, %v8345, 0.0
        %8390 = vadd.xlane.f32.xlu0 %v8389
        %v8391 = vpop.xlane.xlu0 %8390
        %v8392 = vsel %vm945, %v8346, 0.0
        %8393 = vadd.xlane.f32.xlu0 %v8392
        %v8394 = vpop.xlane.xlu0 %8393
        %v8395 = vmul.f32 %v8349, %v994
        %v8396 = vmul.f32 %v8352, %v994
        %v8397 = vmul.f32 %v8355, %v994
        %v8398 = vmul.f32 %v8358, %v994
        %v8399 = vmul.f32 %v8361, %v994
        %v8400 = vmul.f32 %v8364, %v994
        %v8401 = vmul.f32 %v8367, %v994
        %v8402 = vmul.f32 %v8370, %v994
        %v8403 = vmul.f32 %v8373, %v994
        %v8404 = vmul.f32 %v8376, %v994
        %v8405 = vmul.f32 %v8379, %v994
        %v8406 = vmul.f32 %v8382, %v994
        %v8407 = vmul.f32 %v8385, %v994
        %v8408 = vmul.f32 %v8388, %v994
        %v8409 = vmul.f32 %v8391, %v994
        %v8410 = vmul.f32 %v8394, %v994
        %v8411 = vadd.f32 %v8395, 1e-06
        %v8412 = vadd.f32 %v8396, 1e-06
        %v8413 = vadd.f32 %v8397, 1e-06
        %v8414 = vadd.f32 %v8398, 1e-06
        %v8415 = vadd.f32 %v8399, 1e-06
        %v8416 = vadd.f32 %v8400, 1e-06
        %v8417 = vadd.f32 %v8401, 1e-06
        %v8418 = vadd.f32 %v8402, 1e-06
        %v8419 = vadd.f32 %v8403, 1e-06
        %v8420 = vadd.f32 %v8404, 1e-06
        %v8421 = vadd.f32 %v8405, 1e-06
        %v8422 = vadd.f32 %v8406, 1e-06
        %v8423 = vadd.f32 %v8407, 1e-06
        %v8424 = vadd.f32 %v8408, 1e-06
        %v8425 = vadd.f32 %v8409, 1e-06
        %v8426 = vadd.f32 %v8410, 1e-06
        %v8427 = vrsqrt.pop %v8411
        %v8428 = vrsqrt.pop %v8412
        %v8429 = vrsqrt.pop %v8413
        %v8430 = vrsqrt.pop %v8414
        %v8431 = vrsqrt.pop %v8415
        %v8432 = vrsqrt.pop %v8416
        %v8433 = vrsqrt.pop %v8417
        %v8434 = vrsqrt.pop %v8418
        %v8435 = vrsqrt.pop %v8419
        %v8436 = vrsqrt.pop %v8420
        %v8437 = vrsqrt.pop %v8421
        %v8438 = vrsqrt.pop %v8422
        %v8439 = vrsqrt.pop %v8423
        %v8440 = vrsqrt.pop %v8424
        %v8441 = vrsqrt.pop %v8425
        %v8442 = vrsqrt.pop %v8426
        %v8443 = vmul.f32 %v8315, %v8427
        %v8444 = vmul.f32 %v8316, %v8428
        %v8445 = vmul.f32 %v8317, %v8429
        %v8446 = vmul.f32 %v8318, %v8430
        %v8447 = vmul.f32 %v8319, %v8431
        %v8448 = vmul.f32 %v8320, %v8432
        %v8449 = vmul.f32 %v8321, %v8433
        %v8450 = vmul.f32 %v8322, %v8434
        %v8451 = vmul.f32 %v8323, %v8435
        %v8452 = vmul.f32 %v8324, %v8436
        %v8453 = vmul.f32 %v8325, %v8437
        %v8454 = vmul.f32 %v8326, %v8438
        %v8455 = vmul.f32 %v8327, %v8439
        %v8456 = vmul.f32 %v8328, %v8440
        %v8457 = vmul.f32 %v8329, %v8441
        %v8458 = vmul.f32 %v8330, %v8442
        %v8459 = vlaneseq
        %v8460 = vshrl.u32 %v8459, 7
        %v8461 = vsub.s32 0, %v8460
        %v8462 = vrot.slane %v8249, %v8461
        %v8463 = vmul.f32 %v8443, %v8462
        %v8464 = vmul.f32 %v8444, %v8462
        %v8465 = vmul.f32 %v8445, %v8462
        %v8466 = vmul.f32 %v8446, %v8462
        %v8467 = vmul.f32 %v8447, %v8462
        %v8468 = vmul.f32 %v8448, %v8462
        %v8469 = vmul.f32 %v8449, %v8462
        %v8470 = vmul.f32 %v8450, %v8462
        %v8471 = vmul.f32 %v8451, %v8462
        %v8472 = vmul.f32 %v8452, %v8462
        %v8473 = vmul.f32 %v8453, %v8462
        %v8474 = vmul.f32 %v8454, %v8462
        %v8475 = vmul.f32 %v8455, %v8462
        %v8476 = vmul.f32 %v8456, %v8462
        %v8477 = vmul.f32 %v8457, %v8462
        %v8478 = vmul.f32 %v8458, %v8462
        %v8479 = vlaneseq
        %v8480 = vshrl.u32 %v8479, 7
        %v8481 = vsub.s32 0, %v8480
        %v8482 = vrot.slane %v8250, %v8481
        %v8483 = vadd.f32 %v8463, %v8482
        %v8484 = vadd.f32 %v8464, %v8482
        %v8485 = vadd.f32 %v8465, %v8482
        %v8486 = vadd.f32 %v8466, %v8482
        %v8487 = vadd.f32 %v8467, %v8482
        %v8488 = vadd.f32 %v8468, %v8482
        %v8489 = vadd.f32 %v8469, %v8482
        %v8490 = vadd.f32 %v8470, %v8482
        %v8491 = vadd.f32 %v8471, %v8482
        %v8492 = vadd.f32 %v8472, %v8482
        %v8493 = vadd.f32 %v8473, %v8482
        %v8494 = vadd.f32 %v8474, %v8482
        %v8495 = vadd.f32 %v8475, %v8482
        %v8496 = vadd.f32 %v8476, %v8482
        %v8497 = vadd.f32 %v8477, %v8482
        %v8498 = vadd.f32 %v8478, %v8482
        %v8499 = vld [vmem:[%s12 + $0x10] sm:$0xff]
        %v8500 = vld [vmem:[%s12 + $0x18] sm:$0xff]
        %v8501 = vld [vmem:[%s13 + $0x1] sm:$0x1]
        %v8502 = vlaneseq
        %v8503 = vshrl.u32 %v8502, 7
        %v8504 = vsub.s32 0, %v8503
        %v8505 = vrot.slane %v8501, %v8504
        %v8507 = vsel %vm945, %v8483, 0
        %v8510 = vsel %vm945, %v8484, 0
        %v8513 = vsel %vm945, %v8485, 0
        %v8516 = vsel %vm945, %v8486, 0
        %v8519 = vsel %vm945, %v8487, 0
        %v8522 = vsel %vm945, %v8488, 0
        %v8525 = vsel %vm945, %v8489, 0
        %v8528 = vsel %vm945, %v8490, 0
        %v8531 = vsel %vm945, %v8491, 0
        %v8534 = vsel %vm945, %v8492, 0
        %v8537 = vsel %vm945, %v8493, 0
        %v8540 = vsel %vm945, %v8494, 0
        %v8543 = vsel %vm945, %v8495, 0
        %v8546 = vsel %vm945, %v8496, 0
        %v8549 = vsel %vm945, %v8497, 0
        %v8552 = vsel %vm945, %v8498, 0
        %8554 = vmatprep.subr.mxu0 0.0
        %8555 = vmatpush1.msra.mxu0 %v8499
        %8556 = vmatprep.subr.mxu0 0.0
        %8557 = vmatpush1.msra.mxu0 %v8500
        %8558 = vmatprep.subr.mxu0 0.0
        %8559 = vmatpush1.msra.mxu0 0.0
        %8560 = vmatprep.subr.mxu0 0.0
        %8561 = vmatpush1.msra.mxu0 0.0
        %8562 = vmatprep.subr.mxu0 0.0
        %8563 = vmatpush1.msra.mxu0 0.0
        %8564 = vmatprep.subr.mxu0 0.0
        %8565 = vmatpush1.msra.mxu0 0.0
        %8566 = vmatprep.subr.mxu0 0.0
        %8567 = vmatpush1.msra.mxu0 0.0
        %8568 = vmatprep.subr.mxu0 0.0
        %8569 = vmatpush1.msra.mxu0 0.0
        %8570 = vmatprep.subr.mxu0 0.0
        %8571 = vmatpush1.msra.mxu0 0.0
        %8572 = vmatprep.subr.mxu0 0.0
        %8573 = vmatpush1.msra.mxu0 0.0
        %8574 = vmatprep.subr.mxu0 0.0
        %8575 = vmatpush1.msra.mxu0 0.0
        %8576 = vmatprep.subr.mxu0 0.0
        %8577 = vmatpush1.msra.mxu0 0.0
        %8578 = vmatprep.subr.mxu0 0.0
        %8579 = vmatpush1.msra.mxu0 0.0
        %8580 = vmatprep.subr.mxu0 0.0
        %8581 = vmatpush1.msra.mxu0 0.0
        %8582 = vmatprep.subr.mxu0 0.0
        %8583 = vmatpush1.msra.mxu0 0.0
        %8584 = vmatprep.subr.mxu0 0.0
        %8585 = vmatpush1.msra.mxu0 0.0
        %8586 = vmatprep.subr.mxu0 0.0
        %8587 = vmatpush1.msra.mxu0 0.0
        %8588 = vmatprep.subr.mxu0 0.0
        %8589 = vmatpush1.msra.mxu0 0.0
        %8590 = vmatprep.subr.mxu0 0.0
        %8591 = vmatpush1.msra.mxu0 0.0
        %8592 = vmatprep.subr.mxu0 0.0
        %8593 = vmatpush1.msra.mxu0 0.0
        %8594 = vmatprep.subr.mxu0 0.0
        %8595 = vmatpush1.msra.mxu0 0.0
        %8596 = vmatprep.subr.mxu0 0.0
        %8597 = vmatpush1.msra.mxu0 0.0
        %8598 = vmatprep.subr.mxu0 0.0
        %8599 = vmatpush1.msra.mxu0 0.0
        %8600 = vmatprep.subr.mxu0 0.0
        %8601 = vmatpush1.msra.mxu0 0.0
        %8602 = vmatprep.subr.mxu0 0.0
        %8603 = vmatpush1.msra.mxu0 0.0
        %8604 = vmatprep.subr.mxu0 0.0
        %8605 = vmatpush1.msra.mxu0 0.0
        %8606 = vmatprep.subr.mxu0 0.0
        %8607 = vmatpush1.msra.mxu0 0.0
        %8608 = vmatprep.subr.mxu0 0.0
        %8609 = vmatpush1.msra.mxu0 0.0
        %8610 = vmatprep.subr.mxu0 0.0
        %8611 = vmatpush1.msra.mxu0 0.0
        %8612 = vmatprep.subr.mxu0 0.0
        %8613 = vmatpush1.msra.mxu0 0.0
        %8614 = vmatprep.subr.mxu0 0.0
        %8615 = vmatpush1.msra.mxu0 0.0
        %8616 = vmatprep.subr.mxu0 0.0
        %8617 = vmatpush1.msra.mxu0 0.0
        %8618 = vmatprep.mubr.f32.mxu0 0.0
        %8619 = vmatmul.mubr.f32.gmra.mrb[0].mxu0 %v8507
        %v8620 = vpop.f32.mrb[0].mxu0
        %v8621 = vadd.f32 %v8505, %v8620
        %v8622 = vpop.f32.mrb[0].mxu0
        %8623 = vmatprep.mubr.f32.mxu0 0.0
        %8624 = vmatmul.mubr.f32.gmra.mrb[0].mxu0 %v8510
        %v8625 = vpop.f32.mrb[0].mxu0
        %v8626 = vadd.f32 %v8505, %v8625
        %v8627 = vpop.f32.mrb[0].mxu0
        %8628 = vmatprep.mubr.f32.mxu0 0.0
        %8629 = vmatmul.mubr.f32.gmra.mrb[0].mxu0 %v8513
        %v8630 = vpop.f32.mrb[0].mxu0
        %v8631 = vadd.f32 %v8505, %v8630
        %v8632 = vpop.f32.mrb[0].mxu0
        %8633 = vmatprep.mubr.f32.mxu0 0.0
        %8634 = vmatmul.mubr.f32.gmra.mrb[0].mxu0 %v8516
        %v8635 = vpop.f32.mrb[0].mxu0
        %v8636 = vadd.f32 %v8505, %v8635
        %v8637 = vpop.f32.mrb[0].mxu0
        %8638 = vmatprep.mubr.f32.mxu0 0.0
        %8639 = vmatmul.mubr.f32.gmra.mrb[0].mxu0 %v8519
        %v8640 = vpop.f32.mrb[0].mxu0
        %v8641 = vadd.f32 %v8505, %v8640
        %v8642 = vpop.f32.mrb[0].mxu0
        %8643 = vmatprep.mubr.f32.mxu0 0.0
        %8644 = vmatmul.mubr.f32.gmra.mrb[0].mxu0 %v8522
        %v8645 = vpop.f32.mrb[0].mxu0
        %v8646 = vadd.f32 %v8505, %v8645
        %v8647 = vpop.f32.mrb[0].mxu0
        %8648 = vmatprep.mubr.f32.mxu0 0.0
        %8649 = vmatmul.mubr.f32.gmra.mrb[0].mxu0 %v8525
        %v8650 = vpop.f32.mrb[0].mxu0
        %v8651 = vadd.f32 %v8505, %v8650
        %v8652 = vpop.f32.mrb[0].mxu0
        %8653 = vmatprep.mubr.f32.mxu0 0.0
        %8654 = vmatmul.mubr.f32.gmra.mrb[0].mxu0 %v8528
        %v8655 = vpop.f32.mrb[0].mxu0
        %v8656 = vadd.f32 %v8505, %v8655
        %v8657 = vpop.f32.mrb[0].mxu0
        %8658 = vmatprep.mubr.f32.mxu0 0.0
        %8659 = vmatmul.mubr.f32.gmra.mrb[0].mxu0 %v8531
        %v8660 = vpop.f32.mrb[0].mxu0
        %v8661 = vadd.f32 %v8505, %v8660
        %v8662 = vpop.f32.mrb[0].mxu0
        %8663 = vmatprep.mubr.f32.mxu0 0.0
        %8664 = vmatmul.mubr.f32.gmra.mrb[0].mxu0 %v8534
        %v8665 = vpop.f32.mrb[0].mxu0
        %v8666 = vadd.f32 %v8505, %v8665
        %v8667 = vpop.f32.mrb[0].mxu0
        %8668 = vmatprep.mubr.f32.mxu0 0.0
        %8669 = vmatmul.mubr.f32.gmra.mrb[0].mxu0 %v8537
        %v8670 = vpop.f32.mrb[0].mxu0
        %v8671 = vadd.f32 %v8505, %v8670
        %v8672 = vpop.f32.mrb[0].mxu0
        %8673 = vmatprep.mubr.f32.mxu0 0.0
        %8674 = vmatmul.mubr.f32.gmra.mrb[0].mxu0 %v8540
        %v8675 = vpop.f32.mrb[0].mxu0
        %v8676 = vadd.f32 %v8505, %v8675
        %v8677 = vpop.f32.mrb[0].mxu0
        %8678 = vmatprep.mubr.f32.mxu0 0.0
        %8679 = vmatmul.mubr.f32.gmra.mrb[0].mxu0 %v8543
        %v8680 = vpop.f32.mrb[0].mxu0
        %v8681 = vadd.f32 %v8505, %v8680
        %v8682 = vpop.f32.mrb[0].mxu0
        %8683 = vmatprep.mubr.f32.mxu0 0.0
        %8684 = vmatmul.mubr.f32.gmra.mrb[0].mxu0 %v8546
        %v8685 = vpop.f32.mrb[0].mxu0
        %v8686 = vadd.f32 %v8505, %v8685
        %v8687 = vpop.f32.mrb[0].mxu0
        %8688 = vmatprep.mubr.f32.mxu0 0.0
        %8689 = vmatmul.mubr.f32.gmra.mrb[0].mxu0 %v8549
        %v8690 = vpop.f32.mrb[0].mxu0
        %v8691 = vadd.f32 %v8505, %v8690
        %v8692 = vpop.f32.mrb[0].mxu0
        %8693 = vmatprep.mubr.f32.mxu0 0.0
        %8694 = vmatmul.mubr.f32.gmra.mrb[0].mxu0 %v8552
        %v8695 = vpop.f32.mrb[0].mxu0
        %v8696 = vadd.f32 %v8505, %v8695
        %v8697 = vpop.f32.mrb[0].mxu0
        %8698 = vdwg.mxu0
        %v8699 = vmul.f32 %v8621, 0.5
        %v8700 = vmul.f32 %v8626, 0.5
        %v8701 = vmul.f32 %v8631, 0.5
        %v8702 = vmul.f32 %v8636, 0.5
        %v8703 = vmul.f32 %v8641, 0.5
        %v8704 = vmul.f32 %v8646, 0.5
        %v8705 = vmul.f32 %v8651, 0.5
        %v8706 = vmul.f32 %v8656, 0.5
        %v8707 = vmul.f32 %v8661, 0.5
        %v8708 = vmul.f32 %v8666, 0.5
        %v8709 = vmul.f32 %v8671, 0.5
        %v8710 = vmul.f32 %v8676, 0.5
        %v8711 = vmul.f32 %v8681, 0.5
        %v8712 = vmul.f32 %v8686, 0.5
        %v8713 = vmul.f32 %v8691, 0.5
        %v8714 = vmul.f32 %v8696, 0.5
        %v8715 = vmul.f32 %v8621, 0.70710677
        %v8716 = vmul.f32 %v8626, 0.70710677
        %v8717 = vmul.f32 %v8631, 0.70710677
        %v8718 = vmul.f32 %v8636, 0.70710677
        %v8719 = vmul.f32 %v8641, 0.70710677
        %v8720 = vmul.f32 %v8646, 0.70710677
        %v8721 = vmul.f32 %v8651, 0.70710677
        %v8722 = vmul.f32 %v8656, 0.70710677
        %v8723 = vmul.f32 %v8661, 0.70710677
        %v8724 = vmul.f32 %v8666, 0.70710677
        %v8725 = vmul.f32 %v8671, 0.70710677
        %v8726 = vmul.f32 %v8676, 0.70710677
        %v8727 = vmul.f32 %v8681, 0.70710677
        %v8728 = vmul.f32 %v8686, 0.70710677
        %v8729 = vmul.f32 %v8691, 0.70710677
        %v8730 = vmul.f32 %v8696, 0.70710677
        %v8731 = verf.f32.pop %v8715
        %v8732 = verf.f32.pop %v8716
        %v8733 = verf.f32.pop %v8717
        %v8734 = verf.f32.pop %v8718
        %v8735 = verf.f32.pop %v8719
        %v8736 = verf.f32.pop %v8720
        %v8737 = verf.f32.pop %v8721
        %v8738 = verf.f32.pop %v8722
        %v8739 = verf.f32.pop %v8723
        %v8740 = verf.f32.pop %v8724
        %v8741 = verf.f32.pop %v8725
        %v8742 = verf.f32.pop %v8726
        %v8743 = verf.f32.pop %v8727
        %v8744 = verf.f32.pop %v8728
        %v8745 = verf.f32.pop %v8729
        %v8746 = verf.f32.pop %v8730
        %v8747 = vadd.f32 %v8731, 1.0
        %v8748 = vadd.f32 %v8732, 1.0
        %v8749 = vadd.f32 %v8733, 1.0
        %v8750 = vadd.f32 %v8734, 1.0
        %v8751 = vadd.f32 %v8735, 1.0
        %v8752 = vadd.f32 %v8736, 1.0
        %v8753 = vadd.f32 %v8737, 1.0
        %v8754 = vadd.f32 %v8738, 1.0
        %v8755 = vadd.f32 %v8739, 1.0
        %v8756 = vadd.f32 %v8740, 1.0
        %v8757 = vadd.f32 %v8741, 1.0
        %v8758 = vadd.f32 %v8742, 1.0
        %v8759 = vadd.f32 %v8743, 1.0
        %v8760 = vadd.f32 %v8744, 1.0
        %v8761 = vadd.f32 %v8745, 1.0
        %v8762 = vadd.f32 %v8746, 1.0
        %v8763 = vmul.f32 %v8699, %v8747
        %v8764 = vmul.f32 %v8700, %v8748
        %v8765 = vmul.f32 %v8701, %v8749
        %v8766 = vmul.f32 %v8702, %v8750
        %v8767 = vmul.f32 %v8703, %v8751
        %v8768 = vmul.f32 %v8704, %v8752
        %v8769 = vmul.f32 %v8705, %v8753
        %v8770 = vmul.f32 %v8706, %v8754
        %v8771 = vmul.f32 %v8707, %v8755
        %v8772 = vmul.f32 %v8708, %v8756
        %v8773 = vmul.f32 %v8709, %v8757
        %v8774 = vmul.f32 %v8710, %v8758
        %v8775 = vmul.f32 %v8711, %v8759
        %v8776 = vmul.f32 %v8712, %v8760
        %v8777 = vmul.f32 %v8713, %v8761
        %v8778 = vmul.f32 %v8714, %v8762
        %v8779 = vld [vmem:[%s14 + $0x20] sm:$0xff]
        %v8780 = vld [vmem:[%s14 + $0x28] sm:$0xff]
        %v8781 = vld [vmem:[%s14 + $0x30] sm:$0xff]
        %v8782 = vld [vmem:[%s14 + $0x38] sm:$0xff]
        %v8783 = vld [vmem:[%s15 + $0x1] sm:$0x1]
        %v8784 = vlaneseq
        %v8785 = vshrl.u32 %v8784, 7
        %v8786 = vsub.s32 0, %v8785
        %v8787 = vrot.slane %v8783, %v8786
        %v8789 = vsel %vm1480, %v8763, 0
        %v8792 = vsel %vm1480, %v8764, 0
        %v8795 = vsel %vm1480, %v8765, 0
        %v8798 = vsel %vm1480, %v8766, 0
        %v8801 = vsel %vm1480, %v8767, 0
        %v8804 = vsel %vm1480, %v8768, 0
        %v8807 = vsel %vm1480, %v8769, 0
        %v8810 = vsel %vm1480, %v8770, 0
        %v8813 = vsel %vm1480, %v8771, 0
        %v8816 = vsel %vm1480, %v8772, 0
        %v8819 = vsel %vm1480, %v8773, 0
        %v8822 = vsel %vm1480, %v8774, 0
        %v8825 = vsel %vm1480, %v8775, 0
        %v8828 = vsel %vm1480, %v8776, 0
        %v8831 = vsel %vm1480, %v8777, 0
        %v8834 = vsel %vm1480, %v8778, 0
        %8836 = vmatprep.subr.mxu0 0.0
        %8837 = vmatpush1.msra.mxu0 %v8779
        %8838 = vmatprep.subr.mxu0 0.0
        %8839 = vmatpush1.msra.mxu0 %v8780
        %8840 = vmatprep.subr.mxu0 0.0
        %8841 = vmatpush1.msra.mxu0 %v8781
        %8842 = vmatprep.subr.mxu0 0.0
        %8843 = vmatpush1.msra.mxu0 %v8782
        %8844 = vmatprep.subr.mxu0 0.0
        %8845 = vmatpush1.msra.mxu0 0.0
        %8846 = vmatprep.subr.mxu0 0.0
        %8847 = vmatpush1.msra.mxu0 0.0
        %8848 = vmatprep.subr.mxu0 0.0
        %8849 = vmatpush1.msra.mxu0 0.0
        %8850 = vmatprep.subr.mxu0 0.0
        %8851 = vmatpush1.msra.mxu0 0.0
        %8852 = vmatprep.subr.mxu0 0.0
        %8853 = vmatpush1.msra.mxu0 0.0
        %8854 = vmatprep.subr.mxu0 0.0
        %8855 = vmatpush1.msra.mxu0 0.0
        %8856 = vmatprep.subr.mxu0 0.0
        %8857 = vmatpush1.msra.mxu0 0.0
        %8858 = vmatprep.subr.mxu0 0.0
        %8859 = vmatpush1.msra.mxu0 0.0
        %8860 = vmatprep.subr.mxu0 0.0
        %8861 = vmatpush1.msra.mxu0 0.0
        %8862 = vmatprep.subr.mxu0 0.0
        %8863 = vmatpush1.msra.mxu0 0.0
        %8864 = vmatprep.subr.mxu0 0.0
        %8865 = vmatpush1.msra.mxu0 0.0
        %8866 = vmatprep.subr.mxu0 0.0
        %8867 = vmatpush1.msra.mxu0 0.0
        %8868 = vmatprep.subr.mxu0 0.0
        %8869 = vmatpush1.msra.mxu0 0.0
        %8870 = vmatprep.subr.mxu0 0.0
        %8871 = vmatpush1.msra.mxu0 0.0
        %8872 = vmatprep.subr.mxu0 0.0
        %8873 = vmatpush1.msra.mxu0 0.0
        %8874 = vmatprep.subr.mxu0 0.0
        %8875 = vmatpush1.msra.mxu0 0.0
        %8876 = vmatprep.subr.mxu0 0.0
        %8877 = vmatpush1.msra.mxu0 0.0
        %8878 = vmatprep.subr.mxu0 0.0
        %8879 = vmatpush1.msra.mxu0 0.0
        %8880 = vmatprep.subr.mxu0 0.0
        %8881 = vmatpush1.msra.mxu0 0.0
        %8882 = vmatprep.subr.mxu0 0.0
        %8883 = vmatpush1.msra.mxu0 0.0
        %8884 = vmatprep.subr.mxu0 0.0
        %8885 = vmatpush1.msra.mxu0 0.0
        %8886 = vmatprep.subr.mxu0 0.0
        %8887 = vmatpush1.msra.mxu0 0.0
        %8888 = vmatprep.subr.mxu0 0.0
        %8889 = vmatpush1.msra.mxu0 0.0
        %8890 = vmatprep.subr.mxu0 0.0
        %8891 = vmatpush1.msra.mxu0 0.0
        %8892 = vmatprep.subr.mxu0 0.0
        %8893 = vmatpush1.msra.mxu0 0.0
        %8894 = vmatprep.subr.mxu0 0.0
        %8895 = vmatpush1.msra.mxu0 0.0
        %8896 = vmatprep.subr.mxu0 0.0
        %8897 = vmatpush1.msra.mxu0 0.0
        %8898 = vmatprep.subr.mxu0 0.0
        %8899 = vmatpush1.msra.mxu0 0.0
        %8900 = vmatprep.mubr.f32.mxu0 0.0
        %8901 = vmatmul.mubr.f32.gmra.mrb[0].mxu0 %v8789
        %v8902 = vpop.f32.mrb[0].mxu0
        %v8903 = vadd.f32 %v8787, %v8902
        %v8904 = vpop.f32.mrb[0].mxu0
        %8905 = vmatprep.mubr.f32.mxu0 0.0
        %8906 = vmatmul.mubr.f32.gmra.mrb[0].mxu0 %v8792
        %v8907 = vpop.f32.mrb[0].mxu0
        %v8908 = vadd.f32 %v8787, %v8907
        %v8909 = vpop.f32.mrb[0].mxu0
        %8910 = vmatprep.mubr.f32.mxu0 0.0
        %8911 = vmatmul.mubr.f32.gmra.mrb[0].mxu0 %v8795
        %v8912 = vpop.f32.mrb[0].mxu0
        %v8913 = vadd.f32 %v8787, %v8912
        %v8914 = vpop.f32.mrb[0].mxu0
        %8915 = vmatprep.mubr.f32.mxu0 0.0
        %8916 = vmatmul.mubr.f32.gmra.mrb[0].mxu0 %v8798
        %v8917 = vpop.f32.mrb[0].mxu0
        %v8918 = vadd.f32 %v8787, %v8917
        %v8919 = vpop.f32.mrb[0].mxu0
        %8920 = vmatprep.mubr.f32.mxu0 0.0
        %8921 = vmatmul.mubr.f32.gmra.mrb[0].mxu0 %v8801
        %v8922 = vpop.f32.mrb[0].mxu0
        %v8923 = vadd.f32 %v8787, %v8922
        %v8924 = vpop.f32.mrb[0].mxu0
        %8925 = vmatprep.mubr.f32.mxu0 0.0
        %8926 = vmatmul.mubr.f32.gmra.mrb[0].mxu0 %v8804
        %v8927 = vpop.f32.mrb[0].mxu0
        %v8928 = vadd.f32 %v8787, %v8927
        %v8929 = vpop.f32.mrb[0].mxu0
        %8930 = vmatprep.mubr.f32.mxu0 0.0
        %8931 = vmatmul.mubr.f32.gmra.mrb[0].mxu0 %v8807
        %v8932 = vpop.f32.mrb[0].mxu0
        %v8933 = vadd.f32 %v8787, %v8932
        %v8934 = vpop.f32.mrb[0].mxu0
        %8935 = vmatprep.mubr.f32.mxu0 0.0
        %8936 = vmatmul.mubr.f32.gmra.mrb[0].mxu0 %v8810
        %v8937 = vpop.f32.mrb[0].mxu0
        %v8938 = vadd.f32 %v8787, %v8937
        %v8939 = vpop.f32.mrb[0].mxu0
        %8940 = vmatprep.mubr.f32.mxu0 0.0
        %8941 = vmatmul.mubr.f32.gmra.mrb[0].mxu0 %v8813
        %v8942 = vpop.f32.mrb[0].mxu0
        %v8943 = vadd.f32 %v8787, %v8942
        %v8944 = vpop.f32.mrb[0].mxu0
        %8945 = vmatprep.mubr.f32.mxu0 0.0
        %8946 = vmatmul.mubr.f32.gmra.mrb[0].mxu0 %v8816
        %v8947 = vpop.f32.mrb[0].mxu0
        %v8948 = vadd.f32 %v8787, %v8947
        %v8949 = vpop.f32.mrb[0].mxu0
        %8950 = vmatprep.mubr.f32.mxu0 0.0
        %8951 = vmatmul.mubr.f32.gmra.mrb[0].mxu0 %v8819
        %v8952 = vpop.f32.mrb[0].mxu0
        %v8953 = vadd.f32 %v8787, %v8952
        %v8954 = vpop.f32.mrb[0].mxu0
        %8955 = vmatprep.mubr.f32.mxu0 0.0
        %8956 = vmatmul.mubr.f32.gmra.mrb[0].mxu0 %v8822
        %v8957 = vpop.f32.mrb[0].mxu0
        %v8958 = vadd.f32 %v8787, %v8957
        %v8959 = vpop.f32.mrb[0].mxu0
        %8960 = vmatprep.mubr.f32.mxu0 0.0
        %8961 = vmatmul.mubr.f32.gmra.mrb[0].mxu0 %v8825
        %v8962 = vpop.f32.mrb[0].mxu0
        %v8963 = vadd.f32 %v8787, %v8962
        %v8964 = vpop.f32.mrb[0].mxu0
        %8965 = vmatprep.mubr.f32.mxu0 0.0
        %8966 = vmatmul.mubr.f32.gmra.mrb[0].mxu0 %v8828
        %v8967 = vpop.f32.mrb[0].mxu0
        %v8968 = vadd.f32 %v8787, %v8967
        %v8969 = vpop.f32.mrb[0].mxu0
        %8970 = vmatprep.mubr.f32.mxu0 0.0
        %8971 = vmatmul.mubr.f32.gmra.mrb[0].mxu0 %v8831
        %v8972 = vpop.f32.mrb[0].mxu0
        %v8973 = vadd.f32 %v8787, %v8972
        %v8974 = vpop.f32.mrb[0].mxu0
        %8975 = vmatprep.mubr.f32.mxu0 0.0
        %8976 = vmatmul.mubr.f32.gmra.mrb[0].mxu0 %v8834
        %v8977 = vpop.f32.mrb[0].mxu0
        %v8978 = vadd.f32 %v8787, %v8977
        %v8979 = vpop.f32.mrb[0].mxu0
        %8980 = vdwg.mxu0
        %v8981 = vadd.f32 %v8233, %v8903
        %v8982 = vadd.f32 %v8234, %v8908
        %v8983 = vadd.f32 %v8235, %v8913
        %v8984 = vadd.f32 %v8236, %v8918
        %v8985 = vadd.f32 %v8237, %v8923
        %v8986 = vadd.f32 %v8238, %v8928
        %v8987 = vadd.f32 %v8239, %v8933
        %v8988 = vadd.f32 %v8240, %v8938
        %v8989 = vadd.f32 %v8241, %v8943
        %v8990 = vadd.f32 %v8242, %v8948
        %v8991 = vadd.f32 %v8243, %v8953
        %v8992 = vadd.f32 %v8244, %v8958
        %v8993 = vadd.f32 %v8245, %v8963
        %v8994 = vadd.f32 %v8246, %v8968
        %v8995 = vadd.f32 %v8247, %v8973
        %v8996 = vadd.f32 %v8248, %v8978
        %v8997 = vld [vmem:[%s16] sm:$0x1]
        %v8998 = vld [vmem:[%s16 + $0x1] sm:$0x1]
        %v8999 = vsel %vm945, %v8981, 0.0
        %9000 = vadd.xlane.f32.xlu0 %v8999
        %v9001 = vpop.xlane.xlu0 %9000
        %v9002 = vsel %vm945, %v8982, 0.0
        %9003 = vadd.xlane.f32.xlu0 %v9002
        %v9004 = vpop.xlane.xlu0 %9003
        %v9005 = vsel %vm945, %v8983, 0.0
        %9006 = vadd.xlane.f32.xlu0 %v9005
        %v9007 = vpop.xlane.xlu0 %9006
        %v9008 = vsel %vm945, %v8984, 0.0
        %9009 = vadd.xlane.f32.xlu0 %v9008
        %v9010 = vpop.xlane.xlu0 %9009
        %v9011 = vsel %vm945, %v8985, 0.0
        %9012 = vadd.xlane.f32.xlu0 %v9011
        %v9013 = vpop.xlane.xlu0 %9012
        %v9014 = vsel %vm945, %v8986, 0.0
        %9015 = vadd.xlane.f32.xlu0 %v9014
        %v9016 = vpop.xlane.xlu0 %9015
        %v9017 = vsel %vm945, %v8987, 0.0
        %9018 = vadd.xlane.f32.xlu0 %v9017
        %v9019 = vpop.xlane.xlu0 %9018
        %v9020 = vsel %vm945, %v8988, 0.0
        %9021 = vadd.xlane.f32.xlu0 %v9020
        %v9022 = vpop.xlane.xlu0 %9021
        %v9023 = vsel %vm945, %v8989, 0.0
        %9024 = vadd.xlane.f32.xlu0 %v9023
        %v9025 = vpop.xlane.xlu0 %9024
        %v9026 = vsel %vm945, %v8990, 0.0
        %9027 = vadd.xlane.f32.xlu0 %v9026
        %v9028 = vpop.xlane.xlu0 %9027
        %v9029 = vsel %vm945, %v8991, 0.0
        %9030 = vadd.xlane.f32.xlu0 %v9029
        %v9031 = vpop.xlane.xlu0 %9030
        %v9032 = vsel %vm945, %v8992, 0.0
        %9033 = vadd.xlane.f32.xlu0 %v9032
        %v9034 = vpop.xlane.xlu0 %9033
        %v9035 = vsel %vm945, %v8993, 0.0
        %9036 = vadd.xlane.f32.xlu0 %v9035
        %v9037 = vpop.xlane.xlu0 %9036
        %v9038 = vsel %vm945, %v8994, 0.0
        %9039 = vadd.xlane.f32.xlu0 %v9038
        %v9040 = vpop.xlane.xlu0 %9039
        %v9041 = vsel %vm945, %v8995, 0.0
        %9042 = vadd.xlane.f32.xlu0 %v9041
        %v9043 = vpop.xlane.xlu0 %9042
        %v9044 = vsel %vm945, %v8996, 0.0
        %9045 = vadd.xlane.f32.xlu0 %v9044
        %v9046 = vpop.xlane.xlu0 %9045
        %v9047 = vmul.f32 %v9001, %v994
        %v9048 = vmul.f32 %v9004, %v994
        %v9049 = vmul.f32 %v9007, %v994
        %v9050 = vmul.f32 %v9010, %v994
        %v9051 = vmul.f32 %v9013, %v994
        %v9052 = vmul.f32 %v9016, %v994
        %v9053 = vmul.f32 %v9019, %v994
        %v9054 = vmul.f32 %v9022, %v994
        %v9055 = vmul.f32 %v9025, %v994
        %v9056 = vmul.f32 %v9028, %v994
        %v9057 = vmul.f32 %v9031, %v994
        %v9058 = vmul.f32 %v9034, %v994
        %v9059 = vmul.f32 %v9037, %v994
        %v9060 = vmul.f32 %v9040, %v994
        %v9061 = vmul.f32 %v9043, %v994
        %v9062 = vmul.f32 %v9046, %v994
        %v9063 = vsub.f32 %v8981, %v9047
        %v9064 = vsub.f32 %v8982, %v9048
        %v9065 = vsub.f32 %v8983, %v9049
        %v9066 = vsub.f32 %v8984, %v9050
        %v9067 = vsub.f32 %v8985, %v9051
        %v9068 = vsub.f32 %v8986, %v9052
        %v9069 = vsub.f32 %v8987, %v9053
        %v9070 = vsub.f32 %v8988, %v9054
        %v9071 = vsub.f32 %v8989, %v9055
        %v9072 = vsub.f32 %v8990, %v9056
        %v9073 = vsub.f32 %v8991, %v9057
        %v9074 = vsub.f32 %v8992, %v9058
        %v9075 = vsub.f32 %v8993, %v9059
        %v9076 = vsub.f32 %v8994, %v9060
        %v9077 = vsub.f32 %v8995, %v9061
        %v9078 = vsub.f32 %v8996, %v9062
        %v9079 = vmul.f32 %v9063, %v9063
        %v9080 = vmul.f32 %v9064, %v9064
        %v9081 = vmul.f32 %v9065, %v9065
        %v9082 = vmul.f32 %v9066, %v9066
        %v9083 = vmul.f32 %v9067, %v9067
        %v9084 = vmul.f32 %v9068, %v9068
        %v9085 = vmul.f32 %v9069, %v9069
        %v9086 = vmul.f32 %v9070, %v9070
        %v9087 = vmul.f32 %v9071, %v9071
        %v9088 = vmul.f32 %v9072, %v9072
        %v9089 = vmul.f32 %v9073, %v9073
        %v9090 = vmul.f32 %v9074, %v9074
        %v9091 = vmul.f32 %v9075, %v9075
        %v9092 = vmul.f32 %v9076, %v9076
        %v9093 = vmul.f32 %v9077, %v9077
        %v9094 = vmul.f32 %v9078, %v9078
        %v9095 = vsel %vm945, %v9079, 0.0
        %9096 = vadd.xlane.f32.xlu0 %v9095
        %v9097 = vpop.xlane.xlu0 %9096
        %v9098 = vsel %vm945, %v9080, 0.0
        %9099 = vadd.xlane.f32.xlu0 %v9098
        %v9100 = vpop.xlane.xlu0 %9099
        %v9101 = vsel %vm945, %v9081, 0.0
        %9102 = vadd.xlane.f32.xlu0 %v9101
        %v9103 = vpop.xlane.xlu0 %9102
        %v9104 = vsel %vm945, %v9082, 0.0
        %9105 = vadd.xlane.f32.xlu0 %v9104
        %v9106 = vpop.xlane.xlu0 %9105
        %v9107 = vsel %vm945, %v9083, 0.0
        %9108 = vadd.xlane.f32.xlu0 %v9107
        %v9109 = vpop.xlane.xlu0 %9108
        %v9110 = vsel %vm945, %v9084, 0.0
        %9111 = vadd.xlane.f32.xlu0 %v9110
        %v9112 = vpop.xlane.xlu0 %9111
        %v9113 = vsel %vm945, %v9085, 0.0
        %9114 = vadd.xlane.f32.xlu0 %v9113
        %v9115 = vpop.xlane.xlu0 %9114
        %v9116 = vsel %vm945, %v9086, 0.0
        %9117 = vadd.xlane.f32.xlu0 %v9116
        %v9118 = vpop.xlane.xlu0 %9117
        %v9119 = vsel %vm945, %v9087, 0.0
        %9120 = vadd.xlane.f32.xlu0 %v9119
        %v9121 = vpop.xlane.xlu0 %9120
        %v9122 = vsel %vm945, %v9088, 0.0
        %9123 = vadd.xlane.f32.xlu0 %v9122
        %v9124 = vpop.xlane.xlu0 %9123
        %v9125 = vsel %vm945, %v9089, 0.0
        %9126 = vadd.xlane.f32.xlu0 %v9125
        %v9127 = vpop.xlane.xlu0 %9126
        %v9128 = vsel %vm945, %v9090, 0.0
        %9129 = vadd.xlane.f32.xlu0 %v9128
        %v9130 = vpop.xlane.xlu0 %9129
        %v9131 = vsel %vm945, %v9091, 0.0
        %9132 = vadd.xlane.f32.xlu0 %v9131
        %v9133 = vpop.xlane.xlu0 %9132
        %v9134 = vsel %vm945, %v9092, 0.0
        %9135 = vadd.xlane.f32.xlu0 %v9134
        %v9136 = vpop.xlane.xlu0 %9135
        %v9137 = vsel %vm945, %v9093, 0.0
        %9138 = vadd.xlane.f32.xlu0 %v9137
        %v9139 = vpop.xlane.xlu0 %9138
        %v9140 = vsel %vm945, %v9094, 0.0
        %9141 = vadd.xlane.f32.xlu0 %v9140
        %v9142 = vpop.xlane.xlu0 %9141
        %v9143 = vmul.f32 %v9097, %v994
        %v9144 = vmul.f32 %v9100, %v994
        %v9145 = vmul.f32 %v9103, %v994
        %v9146 = vmul.f32 %v9106, %v994
        %v9147 = vmul.f32 %v9109, %v994
        %v9148 = vmul.f32 %v9112, %v994
        %v9149 = vmul.f32 %v9115, %v994
        %v9150 = vmul.f32 %v9118, %v994
        %v9151 = vmul.f32 %v9121, %v994
        %v9152 = vmul.f32 %v9124, %v994
        %v9153 = vmul.f32 %v9127, %v994
        %v9154 = vmul.f32 %v9130, %v994
        %v9155 = vmul.f32 %v9133, %v994
        %v9156 = vmul.f32 %v9136, %v994
        %v9157 = vmul.f32 %v9139, %v994
        %v9158 = vmul.f32 %v9142, %v994
        %v9159 = vadd.f32 %v9143, 1e-06
        %v9160 = vadd.f32 %v9144, 1e-06
        %v9161 = vadd.f32 %v9145, 1e-06
        %v9162 = vadd.f32 %v9146, 1e-06
        %v9163 = vadd.f32 %v9147, 1e-06
        %v9164 = vadd.f32 %v9148, 1e-06
        %v9165 = vadd.f32 %v9149, 1e-06
        %v9166 = vadd.f32 %v9150, 1e-06
        %v9167 = vadd.f32 %v9151, 1e-06
        %v9168 = vadd.f32 %v9152, 1e-06
        %v9169 = vadd.f32 %v9153, 1e-06
        %v9170 = vadd.f32 %v9154, 1e-06
        %v9171 = vadd.f32 %v9155, 1e-06
        %v9172 = vadd.f32 %v9156, 1e-06
        %v9173 = vadd.f32 %v9157, 1e-06
        %v9174 = vadd.f32 %v9158, 1e-06
        %v9175 = vrsqrt.pop %v9159
        %v9176 = vrsqrt.pop %v9160
        %v9177 = vrsqrt.pop %v9161
        %v9178 = vrsqrt.pop %v9162
        %v9179 = vrsqrt.pop %v9163
        %v9180 = vrsqrt.pop %v9164
        %v9181 = vrsqrt.pop %v9165
        %v9182 = vrsqrt.pop %v9166
        %v9183 = vrsqrt.pop %v9167
        %v9184 = vrsqrt.pop %v9168
        %v9185 = vrsqrt.pop %v9169
        %v9186 = vrsqrt.pop %v9170
        %v9187 = vrsqrt.pop %v9171
        %v9188 = vrsqrt.pop %v9172
        %v9189 = vrsqrt.pop %v9173
        %v9190 = vrsqrt.pop %v9174
        %v9191 = vmul.f32 %v9063, %v9175
        %v9192 = vmul.f32 %v9064, %v9176
        %v9193 = vmul.f32 %v9065, %v9177
        %v9194 = vmul.f32 %v9066, %v9178
        %v9195 = vmul.f32 %v9067, %v9179
        %v9196 = vmul.f32 %v9068, %v9180
        %v9197 = vmul.f32 %v9069, %v9181
        %v9198 = vmul.f32 %v9070, %v9182
        %v9199 = vmul.f32 %v9071, %v9183
        %v9200 = vmul.f32 %v9072, %v9184
        %v9201 = vmul.f32 %v9073, %v9185
        %v9202 = vmul.f32 %v9074, %v9186
        %v9203 = vmul.f32 %v9075, %v9187
        %v9204 = vmul.f32 %v9076, %v9188
        %v9205 = vmul.f32 %v9077, %v9189
        %v9206 = vmul.f32 %v9078, %v9190
        %v9207 = vlaneseq
        %v9208 = vshrl.u32 %v9207, 7
        %v9209 = vsub.s32 0, %v9208
        %v9210 = vrot.slane %v8997, %v9209
        %v9211 = vmul.f32 %v9191, %v9210
        %v9212 = vmul.f32 %v9192, %v9210
        %v9213 = vmul.f32 %v9193, %v9210
        %v9214 = vmul.f32 %v9194, %v9210
        %v9215 = vmul.f32 %v9195, %v9210
        %v9216 = vmul.f32 %v9196, %v9210
        %v9217 = vmul.f32 %v9197, %v9210
        %v9218 = vmul.f32 %v9198, %v9210
        %v9219 = vmul.f32 %v9199, %v9210
        %v9220 = vmul.f32 %v9200, %v9210
        %v9221 = vmul.f32 %v9201, %v9210
        %v9222 = vmul.f32 %v9202, %v9210
        %v9223 = vmul.f32 %v9203, %v9210
        %v9224 = vmul.f32 %v9204, %v9210
        %v9225 = vmul.f32 %v9205, %v9210
        %v9226 = vmul.f32 %v9206, %v9210
        %v9227 = vlaneseq
        %v9228 = vshrl.u32 %v9227, 7
        %v9229 = vsub.s32 0, %v9228
        %v9230 = vrot.slane %v8998, %v9229
        %v9231 = vadd.f32 %v9211, %v9230
        %v9232 = vadd.f32 %v9212, %v9230
        %v9233 = vadd.f32 %v9213, %v9230
        %v9234 = vadd.f32 %v9214, %v9230
        %v9235 = vadd.f32 %v9215, %v9230
        %v9236 = vadd.f32 %v9216, %v9230
        %v9237 = vadd.f32 %v9217, %v9230
        %v9238 = vadd.f32 %v9218, %v9230
        %v9239 = vadd.f32 %v9219, %v9230
        %v9240 = vadd.f32 %v9220, %v9230
        %v9241 = vadd.f32 %v9221, %v9230
        %v9242 = vadd.f32 %v9222, %v9230
        %v9243 = vadd.f32 %v9223, %v9230
        %v9244 = vadd.f32 %v9224, %v9230
        %v9245 = vadd.f32 %v9225, %v9230
        %v9246 = vadd.f32 %v9226, %v9230
        %v9247 = vld [vmem:[%s17] sm:$0xff]
        %v9248 = vld [vmem:[%s17 + $0x8] sm:$0xff]
        %v9249 = vld [vmem:[%s17 + $0x10] sm:$0xff]
        %v9250 = vld [vmem:[%s17 + $0x18] sm:$0xff]
        %v9251 = vld [vmem:[%s18] sm:$0xff]
        %v9252 = vld [vmem:[%s18 + $0x8] sm:$0xff]
        %v9253 = vld [vmem:[%s18 + $0x10] sm:$0xff]
        %v9254 = vld [vmem:[%s18 + $0x18] sm:$0xff]
        %9255 = vmatprep.subr.mxu0 0.0
        %9256 = vmatpush1.msra.mxu0 %v9231
        %9257 = vmatprep.subr.mxu0 0.0
        %9258 = vmatpush1.msra.mxu0 %v9232
        %9259 = vmatprep.subr.mxu0 0.0
        %9260 = vmatpush1.msra.mxu0 %v9233
        %9261 = vmatprep.subr.mxu0 0.0
        %9262 = vmatpush1.msra.mxu0 %v9234
        %9263 = vmatprep.subr.mxu0 0.0
        %9264 = vmatpush1.msra.mxu0 %v9235
        %9265 = vmatprep.subr.mxu0 0.0
        %9266 = vmatpush1.msra.mxu0 %v9236
        %9267 = vmatprep.subr.mxu0 0.0
        %9268 = vmatpush1.msra.mxu0 %v9237
        %9269 = vmatprep.subr.mxu0 0.0
        %9270 = vmatpush1.msra.mxu0 %v9238
        %9271 = vmatprep.subr.mxu0 0.0
        %9272 = vmatpush1.msra.mxu0 %v9239
        %9273 = vmatprep.subr.mxu0 0.0
        %9274 = vmatpush1.msra.mxu0 %v9240
        %9275 = vmatprep.subr.mxu0 0.0
        %9276 = vmatpush1.msra.mxu0 %v9241
        %9277 = vmatprep.subr.mxu0 0.0
        %9278 = vmatpush1.msra.mxu0 %v9242
        %9279 = vmatprep.subr.mxu0 0.0
        %9280 = vmatpush1.msra.mxu0 %v9243
        %9281 = vmatprep.subr.mxu0 0.0
        %9282 = vmatpush1.msra.mxu0 %v9244
        %9283 = vmatprep.subr.mxu0 0.0
        %9284 = vmatpush1.msra.mxu0 %v9245
        %9285 = vmatprep.subr.mxu0 0.0
        %9286 = vmatpush1.msra.mxu0 %v9246
        %9287 = vmatprep.subr.mxu0 0.0
        %9288 = vmatpush1.msra.mxu0 0.0
        %9289 = vmatprep.subr.mxu0 0.0
        %9290 = vmatpush1.msra.mxu0 0.0
        %9291 = vmatprep.subr.mxu0 0.0
        %9292 = vmatpush1.msra.mxu0 0.0
        %9293 = vmatprep.subr.mxu0 0.0
        %9294 = vmatpush1.msra.mxu0 0.0
        %9295 = vmatprep.subr.mxu0 0.0
        %9296 = vmatpush1.msra.mxu0 0.0
        %9297 = vmatprep.subr.mxu0 0.0
        %9298 = vmatpush1.msra.mxu0 0.0
        %9299 = vmatprep.subr.mxu0 0.0
        %9300 = vmatpush1.msra.mxu0 0.0
        %9301 = vmatprep.subr.mxu0 0.0
        %9302 = vmatpush1.msra.mxu0 0.0
        %9303 = vmatprep.subr.mxu0 0.0
        %9304 = vmatpush1.msra.mxu0 0.0
        %9305 = vmatprep.subr.mxu0 0.0
        %9306 = vmatpush1.msra.mxu0 0.0
        %9307 = vmatprep.subr.mxu0 0.0
        %9308 = vmatpush1.msra.mxu0 0.0
        %9309 = vmatprep.subr.mxu0 0.0
        %9310 = vmatpush1.msra.mxu0 0.0
        %9311 = vmatprep.subr.mxu0 0.0
        %9312 = vmatpush1.msra.mxu0 0.0
        %9313 = vmatprep.subr.mxu0 0.0
        %9314 = vmatpush1.msra.mxu0 0.0
        %9315 = vmatprep.subr.mxu0 0.0
        %9316 = vmatpush1.msra.mxu0 0.0
        %9317 = vmatprep.subr.mxu0 0.0
        %9318 = vmatpush1.msra.mxu0 0.0
        %9319 = vmatprep.mubr.f32.mxu0 0.0
        %9320 = vmatmul.mubr.f32.gmra.mrb[0].mxu0 %v9247
        %v9321 = vpop.f32.mrb[0].mxu0
        %v9322 = vadd.f32 %v9251, %v9321
        %v9323 = vpop.f32.mrb[0].mxu0
        %9324 = vmatprep.mubr.f32.mxu0 0.0
        %9325 = vmatmul.mubr.f32.gmra.mrb[0].mxu0 %v9248
        %v9326 = vpop.f32.mrb[0].mxu0
        %v9327 = vadd.f32 %v9252, %v9326
        %v9328 = vpop.f32.mrb[0].mxu0
        %9329 = vmatprep.mubr.f32.mxu0 0.0
        %9330 = vmatmul.mubr.f32.gmra.mrb[0].mxu0 %v9249
        %v9331 = vpop.f32.mrb[0].mxu0
        %v9332 = vadd.f32 %v9253, %v9331
        %v9333 = vpop.f32.mrb[0].mxu0
        %9334 = vmatprep.mubr.f32.mxu0 0.0
        %9335 = vmatmul.mubr.f32.gmra.mrb[0].mxu0 %v9250
        %v9336 = vpop.f32.mrb[0].mxu0
        %v9337 = vadd.f32 %v9254, %v9336
        %v9338 = vpop.f32.mrb[0].mxu0
        %9339 = vdwg.mxu0
        %v9340 = vld [vmem:[%s19] sm:$0xff]
        %v9341 = vld [vmem:[%s19 + $0x8] sm:$0xff]
        %v9342 = vld [vmem:[%s20] sm:$0x1]
        %v9344 = vlaneseq
        %v9345 = vshrl.u32 %v9344, 7
        %v9346 = vsub.s32 0, %v9345
        %v9347 = vrot.slane %v9342, %v9346
        %v9350 = vsel %vm945, %v9322, 0
        %v9353 = vsel %vm945, %v9327, 0
        %v9356 = vsel %vm945, %v9332, 0
        %v9359 = vsel %vm945, %v9337, 0
        %9361 = vmatprep.subr.mxu0 0.0
        %9362 = vmatpush1.msra.mxu0 %v9340
        %9363 = vmatprep.subr.mxu0 0.0
        %9364 = vmatpush1.msra.mxu0 %v9341
        %9365 = vmatprep.subr.mxu0 0.0
        %9366 = vmatpush1.msra.mxu0 0.0
        %9367 = vmatprep.subr.mxu0 0.0
        %9368 = vmatpush1.msra.mxu0 0.0
        %9369 = vmatprep.subr.mxu0 0.0
        %9370 = vmatpush1.msra.mxu0 0.0
        %9371 = vmatprep.subr.mxu0 0.0
        %9372 = vmatpush1.msra.mxu0 0.0
        %9373 = vmatprep.subr.mxu0 0.0
        %9374 = vmatpush1.msra.mxu0 0.0
        %9375 = vmatprep.subr.mxu0 0.0
        %9376 = vmatpush1.msra.mxu0 0.0
        %9377 = vmatprep.subr.mxu0 0.0
        %9378 = vmatpush1.msra.mxu0 0.0
        %9379 = vmatprep.subr.mxu0 0.0
        %9380 = vmatpush1.msra.mxu0 0.0
        %9381 = vmatprep.subr.mxu0 0.0
        %9382 = vmatpush1.msra.mxu0 0.0
        %9383 = vmatprep.subr.mxu0 0.0
        %9384 = vmatpush1.msra.mxu0 0.0
        %9385 = vmatprep.subr.mxu0 0.0
        %9386 = vmatpush1.msra.mxu0 0.0
        %9387 = vmatprep.subr.mxu0 0.0
        %9388 = vmatpush1.msra.mxu0 0.0
        %9389 = vmatprep.subr.mxu0 0.0
        %9390 = vmatpush1.msra.mxu0 0.0
        %9391 = vmatprep.subr.mxu0 0.0
        %9392 = vmatpush1.msra.mxu0 0.0
        %9393 = vmatprep.subr.mxu0 0.0
        %9394 = vmatpush1.msra.mxu0 0.0
        %9395 = vmatprep.subr.mxu0 0.0
        %9396 = vmatpush1.msra.mxu0 0.0
        %9397 = vmatprep.subr.mxu0 0.0
        %9398 = vmatpush1.msra.mxu0 0.0
        %9399 = vmatprep.subr.mxu0 0.0
        %9400 = vmatpush1.msra.mxu0 0.0
        %9401 = vmatprep.subr.mxu0 0.0
        %9402 = vmatpush1.msra.mxu0 0.0
        %9403 = vmatprep.subr.mxu0 0.0
        %9404 = vmatpush1.msra.mxu0 0.0
        %9405 = vmatprep.subr.mxu0 0.0
        %9406 = vmatpush1.msra.mxu0 0.0
        %9407 = vmatprep.subr.mxu0 0.0
        %9408 = vmatpush1.msra.mxu0 0.0
        %9409 = vmatprep.subr.mxu0 0.0
        %9410 = vmatpush1.msra.mxu0 0.0
        %9411 = vmatprep.subr.mxu0 0.0
        %9412 = vmatpush1.msra.mxu0 0.0
        %9413 = vmatprep.subr.mxu0 0.0
        %9414 = vmatpush1.msra.mxu0 0.0
        %9415 = vmatprep.subr.mxu0 0.0
        %9416 = vmatpush1.msra.mxu0 0.0
        %9417 = vmatprep.subr.mxu0 0.0
        %9418 = vmatpush1.msra.mxu0 0.0
        %9419 = vmatprep.subr.mxu0 0.0
        %9420 = vmatpush1.msra.mxu0 0.0
        %9421 = vmatprep.subr.mxu0 0.0
        %9422 = vmatpush1.msra.mxu0 0.0
        %9423 = vmatprep.subr.mxu0 0.0
        %9424 = vmatpush1.msra.mxu0 0.0
        %9425 = vmatprep.mubr.f32.mxu0 0.0
        %9426 = vmatmul.mubr.f32.gmra.mrb[0].mxu0 %v9350
        %v9427 = vpop.f32.mrb[0].mxu0
        %v9428 = vadd.f32 %v9347, %v9427
        %v9429 = vpop.f32.mrb[0].mxu0
        %9430 = vmatprep.mubr.f32.mxu0 0.0
        %9431 = vmatmul.mubr.f32.gmra.mrb[0].mxu0 %v9353
        %v9432 = vpop.f32.mrb[0].mxu0
        %v9433 = vadd.f32 %v9347, %v9432
        %v9434 = vpop.f32.mrb[0].mxu0
        %9435 = vmatprep.mubr.f32.mxu0 0.0
        %9436 = vmatmul.mubr.f32.gmra.mrb[0].mxu0 %v9356
        %v9437 = vpop.f32.mrb[0].mxu0
        %v9438 = vadd.f32 %v9347, %v9437
        %v9439 = vpop.f32.mrb[0].mxu0
        %9440 = vmatprep.mubr.f32.mxu0 0.0
        %9441 = vmatmul.mubr.f32.gmra.mrb[0].mxu0 %v9359
        %v9442 = vpop.f32.mrb[0].mxu0
        %v9443 = vadd.f32 %v9347, %v9442
        %v9444 = vpop.f32.mrb[0].mxu0
        %9445 = vdwg.mxu0
        %v9446 = vld [vmem:[%s22] sm:$0x1]
        %v9447 = vld [vmem:[%s21] sm:$0xf]
        %vm9448 = vcmask 31744
        %v9450 = vsel %vm9448, %v9428, 0
        %vm9452 = vcmask 1043456
        %v9454 = vsel %vm9452, %v9447, 0
        %9456 = vmatprep.subr.mxu0 0.0
        %9457 = vmatpush1.msra.mxu0 %v9454
        %9458 = vmatprep.subr.mxu0 0.0
        %9459 = vmatpush1.msra.mxu0 0.0
        %9460 = vmatprep.subr.mxu0 0.0
        %9461 = vmatpush1.msra.mxu0 0.0
        %9462 = vmatprep.subr.mxu0 0.0
        %9463 = vmatpush1.msra.mxu0 0.0
        %9464 = vmatprep.subr.mxu0 0.0
        %9465 = vmatpush1.msra.mxu0 0.0
        %9466 = vmatprep.subr.mxu0 0.0
        %9467 = vmatpush1.msra.mxu0 0.0
        %9468 = vmatprep.subr.mxu0 0.0
        %9469 = vmatpush1.msra.mxu0 0.0
        %9470 = vmatprep.subr.mxu0 0.0
        %9471 = vmatpush1.msra.mxu0 0.0
        %9472 = vmatprep.subr.mxu0 0.0
        %9473 = vmatpush1.msra.mxu0 0.0
        %9474 = vmatprep.subr.mxu0 0.0
        %9475 = vmatpush1.msra.mxu0 0.0
        %9476 = vmatprep.subr.mxu0 0.0
        %9477 = vmatpush1.msra.mxu0 0.0
        %9478 = vmatprep.subr.mxu0 0.0
        %9479 = vmatpush1.msra.mxu0 0.0
        %9480 = vmatprep.subr.mxu0 0.0
        %9481 = vmatpush1.msra.mxu0 0.0
        %9482 = vmatprep.subr.mxu0 0.0
        %9483 = vmatpush1.msra.mxu0 0.0
        %9484 = vmatprep.subr.mxu0 0.0
        %9485 = vmatpush1.msra.mxu0 0.0
        %9486 = vmatprep.subr.mxu0 0.0
        %9487 = vmatpush1.msra.mxu0 0.0
        %9488 = vmatprep.subr.mxu0 0.0
        %9489 = vmatpush1.msra.mxu0 0.0
        %9490 = vmatprep.subr.mxu0 0.0
        %9491 = vmatpush1.msra.mxu0 0.0
        %9492 = vmatprep.subr.mxu0 0.0
        %9493 = vmatpush1.msra.mxu0 0.0
        %9494 = vmatprep.subr.mxu0 0.0
        %9495 = vmatpush1.msra.mxu0 0.0
        %9496 = vmatprep.subr.mxu0 0.0
        %9497 = vmatpush1.msra.mxu0 0.0
        %9498 = vmatprep.subr.mxu0 0.0
        %9499 = vmatpush1.msra.mxu0 0.0
        %9500 = vmatprep.subr.mxu0 0.0
        %9501 = vmatpush1.msra.mxu0 0.0
        %9502 = vmatprep.subr.mxu0 0.0
        %9503 = vmatpush1.msra.mxu0 0.0
        %9504 = vmatprep.subr.mxu0 0.0
        %9505 = vmatpush1.msra.mxu0 0.0
        %9506 = vmatprep.subr.mxu0 0.0
        %9507 = vmatpush1.msra.mxu0 0.0
        %9508 = vmatprep.subr.mxu0 0.0
        %9509 = vmatpush1.msra.mxu0 0.0
        %9510 = vmatprep.subr.mxu0 0.0
        %9511 = vmatpush1.msra.mxu0 0.0
        %9512 = vmatprep.subr.mxu0 0.0
        %9513 = vmatpush1.msra.mxu0 0.0
        %9514 = vmatprep.subr.mxu0 0.0
        %9515 = vmatpush1.msra.mxu0 0.0
        %9516 = vmatprep.subr.mxu0 0.0
        %9517 = vmatpush1.msra.mxu0 0.0
        %9518 = vmatprep.subr.mxu0 0.0
        %9519 = vmatpush1.msra.mxu0 0.0
        %9520 = vmatprep.mubr.f32.mxu0 0.0
        %9521 = vmatmul.mubr.f32.gmra.mrb[0].mxu0 %v9450
        %v9522 = vpop.f32.mrb[0].mxu0
        %v9523 = vadd.f32 0.0, %v9522
        %v9524 = vpop.f32.mrb[0].mxu0
        %9525 = vdwg.mxu0
        %v9527 = vlaneseq
        %v9528 = vshrl.u32 %v9527, 7
        %v9529 = vsub.s32 0, %v9528
        %v9530 = vrot.slane %v9446, %v9529
        %v9532 = vadd.f32 %v9530, %v9523
        %v9533 = vld [vmem:[%s21 + $0x4] sm:$0xf]
        %v9535 = vsel %vm9448, %v9433, 0
        %v9538 = vsel %vm9452, %v9533, 0
        %9540 = vmatprep.subr.mxu0 0.0
        %9541 = vmatpush1.msra.mxu0 %v9538
        %9542 = vmatprep.subr.mxu0 0.0
        %9543 = vmatpush1.msra.mxu0 0.0
        %9544 = vmatprep.subr.mxu0 0.0
        %9545 = vmatpush1.msra.mxu0 0.0
        %9546 = vmatprep.subr.mxu0 0.0
        %9547 = vmatpush1.msra.mxu0 0.0
        %9548 = vmatprep.subr.mxu0 0.0
        %9549 = vmatpush1.msra.mxu0 0.0
        %9550 = vmatprep.subr.mxu0 0.0
        %9551 = vmatpush1.msra.mxu0 0.0
        %9552 = vmatprep.subr.mxu0 0.0
        %9553 = vmatpush1.msra.mxu0 0.0
        %9554 = vmatprep.subr.mxu0 0.0
        %9555 = vmatpush1.msra.mxu0 0.0
        %9556 = vmatprep.subr.mxu0 0.0
        %9557 = vmatpush1.msra.mxu0 0.0
        %9558 = vmatprep.subr.mxu0 0.0
        %9559 = vmatpush1.msra.mxu0 0.0
        %9560 = vmatprep.subr.mxu0 0.0
        %9561 = vmatpush1.msra.mxu0 0.0
        %9562 = vmatprep.subr.mxu0 0.0
        %9563 = vmatpush1.msra.mxu0 0.0
        %9564 = vmatprep.subr.mxu0 0.0
        %9565 = vmatpush1.msra.mxu0 0.0
        %9566 = vmatprep.subr.mxu0 0.0
        %9567 = vmatpush1.msra.mxu0 0.0
        %9568 = vmatprep.subr.mxu0 0.0
        %9569 = vmatpush1.msra.mxu0 0.0
        %9570 = vmatprep.subr.mxu0 0.0
        %9571 = vmatpush1.msra.mxu0 0.0
        %9572 = vmatprep.subr.mxu0 0.0
        %9573 = vmatpush1.msra.mxu0 0.0
        %9574 = vmatprep.subr.mxu0 0.0
        %9575 = vmatpush1.msra.mxu0 0.0
        %9576 = vmatprep.subr.mxu0 0.0
        %9577 = vmatpush1.msra.mxu0 0.0
        %9578 = vmatprep.subr.mxu0 0.0
        %9579 = vmatpush1.msra.mxu0 0.0
        %9580 = vmatprep.subr.mxu0 0.0
        %9581 = vmatpush1.msra.mxu0 0.0
        %9582 = vmatprep.subr.mxu0 0.0
        %9583 = vmatpush1.msra.mxu0 0.0
        %9584 = vmatprep.subr.mxu0 0.0
        %9585 = vmatpush1.msra.mxu0 0.0
        %9586 = vmatprep.subr.mxu0 0.0
        %9587 = vmatpush1.msra.mxu0 0.0
        %9588 = vmatprep.subr.mxu0 0.0
        %9589 = vmatpush1.msra.mxu0 0.0
        %9590 = vmatprep.subr.mxu0 0.0
        %9591 = vmatpush1.msra.mxu0 0.0
        %9592 = vmatprep.subr.mxu0 0.0
        %9593 = vmatpush1.msra.mxu0 0.0
        %9594 = vmatprep.subr.mxu0 0.0
        %9595 = vmatpush1.msra.mxu0 0.0
        %9596 = vmatprep.subr.mxu0 0.0
        %9597 = vmatpush1.msra.mxu0 0.0
        %9598 = vmatprep.subr.mxu0 0.0
        %9599 = vmatpush1.msra.mxu0 0.0
        %9600 = vmatprep.subr.mxu0 0.0
        %9601 = vmatpush1.msra.mxu0 0.0
        %9602 = vmatprep.subr.mxu0 0.0
        %9603 = vmatpush1.msra.mxu0 0.0
        %9604 = vmatprep.mubr.f32.mxu0 0.0
        %9605 = vmatmul.mubr.f32.gmra.mrb[0].mxu0 %v9535
        %v9606 = vpop.f32.mrb[0].mxu0
        %v9607 = vadd.f32 0.0, %v9606
        %v9608 = vpop.f32.mrb[0].mxu0
        %9609 = vdwg.mxu0
        %v9610 = vadd.f32 %v9532, %v9607
        %v9611 = vld [vmem:[%s21 + $0x8] sm:$0xf]
        %v9613 = vsel %vm9448, %v9438, 0
        %v9616 = vsel %vm9452, %v9611, 0
        %9618 = vmatprep.subr.mxu0 0.0
        %9619 = vmatpush1.msra.mxu0 %v9616
        %9620 = vmatprep.subr.mxu0 0.0
        %9621 = vmatpush1.msra.mxu0 0.0
        %9622 = vmatprep.subr.mxu0 0.0
        %9623 = vmatpush1.msra.mxu0 0.0
        %9624 = vmatprep.subr.mxu0 0.0
        %9625 = vmatpush1.msra.mxu0 0.0
        %9626 = vmatprep.subr.mxu0 0.0
        %9627 = vmatpush1.msra.mxu0 0.0
        %9628 = vmatprep.subr.mxu0 0.0
        %9629 = vmatpush1.msra.mxu0 0.0
        %9630 = vmatprep.subr.mxu0 0.0
        %9631 = vmatpush1.msra.mxu0 0.0
        %9632 = vmatprep.subr.mxu0 0.0
        %9633 = vmatpush1.msra.mxu0 0.0
        %9634 = vmatprep.subr.mxu0 0.0
        %9635 = vmatpush1.msra.mxu0 0.0
        %9636 = vmatprep.subr.mxu0 0.0
        %9637 = vmatpush1.msra.mxu0 0.0
        %9638 = vmatprep.subr.mxu0 0.0
        %9639 = vmatpush1.msra.mxu0 0.0
        %9640 = vmatprep.subr.mxu0 0.0
        %9641 = vmatpush1.msra.mxu0 0.0
        %9642 = vmatprep.subr.mxu0 0.0
        %9643 = vmatpush1.msra.mxu0 0.0
        %9644 = vmatprep.subr.mxu0 0.0
        %9645 = vmatpush1.msra.mxu0 0.0
        %9646 = vmatprep.subr.mxu0 0.0
        %9647 = vmatpush1.msra.mxu0 0.0
        %9648 = vmatprep.subr.mxu0 0.0
        %9649 = vmatpush1.msra.mxu0 0.0
        %9650 = vmatprep.subr.mxu0 0.0
        %9651 = vmatpush1.msra.mxu0 0.0
        %9652 = vmatprep.subr.mxu0 0.0
        %9653 = vmatpush1.msra.mxu0 0.0
        %9654 = vmatprep.subr.mxu0 0.0
        %9655 = vmatpush1.msra.mxu0 0.0
        %9656 = vmatprep.subr.mxu0 0.0
        %9657 = vmatpush1.msra.mxu0 0.0
        %9658 = vmatprep.subr.mxu0 0.0
        %9659 = vmatpush1.msra.mxu0 0.0
        %9660 = vmatprep.subr.mxu0 0.0
        %9661 = vmatpush1.msra.mxu0 0.0
        %9662 = vmatprep.subr.mxu0 0.0
        %9663 = vmatpush1.msra.mxu0 0.0
        %9664 = vmatprep.subr.mxu0 0.0
        %9665 = vmatpush1.msra.mxu0 0.0
        %9666 = vmatprep.subr.mxu0 0.0
        %9667 = vmatpush1.msra.mxu0 0.0
        %9668 = vmatprep.subr.mxu0 0.0
        %9669 = vmatpush1.msra.mxu0 0.0
        %9670 = vmatprep.subr.mxu0 0.0
        %9671 = vmatpush1.msra.mxu0 0.0
        %9672 = vmatprep.subr.mxu0 0.0
        %9673 = vmatpush1.msra.mxu0 0.0
        %9674 = vmatprep.subr.mxu0 0.0
        %9675 = vmatpush1.msra.mxu0 0.0
        %9676 = vmatprep.subr.mxu0 0.0
        %9677 = vmatpush1.msra.mxu0 0.0
        %9678 = vmatprep.subr.mxu0 0.0
        %9679 = vmatpush1.msra.mxu0 0.0
        %9680 = vmatprep.subr.mxu0 0.0
        %9681 = vmatpush1.msra.mxu0 0.0
        %9682 = vmatprep.mubr.f32.mxu0 0.0
        %9683 = vmatmul.mubr.f32.gmra.mrb[0].mxu0 %v9613
        %v9684 = vpop.f32.mrb[0].mxu0
        %v9685 = vadd.f32 0.0, %v9684
        %v9686 = vpop.f32.mrb[0].mxu0
        %9687 = vdwg.mxu0
        %v9688 = vadd.f32 %v9610, %v9685
        %v9689 = vld [vmem:[%s21 + $0xc] sm:$0xf]
        %v9691 = vsel %vm9448, %v9443, 0
        %v9694 = vsel %vm9452, %v9689, 0
        %9696 = vmatprep.subr.mxu0 0.0
        %9697 = vmatpush1.msra.mxu0 %v9694
        %9698 = vmatprep.subr.mxu0 0.0
        %9699 = vmatpush1.msra.mxu0 0.0
        %9700 = vmatprep.subr.mxu0 0.0
        %9701 = vmatpush1.msra.mxu0 0.0
        %9702 = vmatprep.subr.mxu0 0.0
        %9703 = vmatpush1.msra.mxu0 0.0
        %9704 = vmatprep.subr.mxu0 0.0
        %9705 = vmatpush1.msra.mxu0 0.0
        %9706 = vmatprep.subr.mxu0 0.0
        %9707 = vmatpush1.msra.mxu0 0.0
        %9708 = vmatprep.subr.mxu0 0.0
        %9709 = vmatpush1.msra.mxu0 0.0
        %9710 = vmatprep.subr.mxu0 0.0
        %9711 = vmatpush1.msra.mxu0 0.0
        %9712 = vmatprep.subr.mxu0 0.0
        %9713 = vmatpush1.msra.mxu0 0.0
        %9714 = vmatprep.subr.mxu0 0.0
        %9715 = vmatpush1.msra.mxu0 0.0
        %9716 = vmatprep.subr.mxu0 0.0
        %9717 = vmatpush1.msra.mxu0 0.0
        %9718 = vmatprep.subr.mxu0 0.0
        %9719 = vmatpush1.msra.mxu0 0.0
        %9720 = vmatprep.subr.mxu0 0.0
        %9721 = vmatpush1.msra.mxu0 0.0
        %9722 = vmatprep.subr.mxu0 0.0
        %9723 = vmatpush1.msra.mxu0 0.0
        %9724 = vmatprep.subr.mxu0 0.0
        %9725 = vmatpush1.msra.mxu0 0.0
        %9726 = vmatprep.subr.mxu0 0.0
        %9727 = vmatpush1.msra.mxu0 0.0
        %9728 = vmatprep.subr.mxu0 0.0
        %9729 = vmatpush1.msra.mxu0 0.0
        %9730 = vmatprep.subr.mxu0 0.0
        %9731 = vmatpush1.msra.mxu0 0.0
        %9732 = vmatprep.subr.mxu0 0.0
        %9733 = vmatpush1.msra.mxu0 0.0
        %9734 = vmatprep.subr.mxu0 0.0
        %9735 = vmatpush1.msra.mxu0 0.0
        %9736 = vmatprep.subr.mxu0 0.0
        %9737 = vmatpush1.msra.mxu0 0.0
        %9738 = vmatprep.subr.mxu0 0.0
        %9739 = vmatpush1.msra.mxu0 0.0
        %9740 = vmatprep.subr.mxu0 0.0
        %9741 = vmatpush1.msra.mxu0 0.0
        %9742 = vmatprep.subr.mxu0 0.0
        %9743 = vmatpush1.msra.mxu0 0.0
        %9744 = vmatprep.subr.mxu0 0.0
        %9745 = vmatpush1.msra.mxu0 0.0
        %9746 = vmatprep.subr.mxu0 0.0
        %9747 = vmatpush1.msra.mxu0 0.0
        %9748 = vmatprep.subr.mxu0 0.0
        %9749 = vmatpush1.msra.mxu0 0.0
        %9750 = vmatprep.subr.mxu0 0.0
        %9751 = vmatpush1.msra.mxu0 0.0
        %9752 = vmatprep.subr.mxu0 0.0
        %9753 = vmatpush1.msra.mxu0 0.0
        %9754 = vmatprep.subr.mxu0 0.0
        %9755 = vmatpush1.msra.mxu0 0.0
        %9756 = vmatprep.subr.mxu0 0.0
        %9757 = vmatpush1.msra.mxu0 0.0
        %9758 = vmatprep.subr.mxu0 0.0
        %9759 = vmatpush1.msra.mxu0 0.0
        %9760 = vmatprep.mubr.f32.mxu0 0.0
        %9761 = vmatmul.mubr.f32.gmra.mrb[0].mxu0 %v9691
        %v9762 = vpop.f32.mrb[0].mxu0
        %v9763 = vadd.f32 0.0, %v9762
        %v9764 = vpop.f32.mrb[0].mxu0
        %9765 = vdwg.mxu0
        %v9766 = vadd.f32 %v9688, %v9763
        %vm9767 = vcmask 80896
        %9768 = vst.msk [vmem:[%s704] sm:$0xff] %vm9767, %v9766
        %s9769 = sand.u32 %s533, 1
        %s9770 = scalar_lea.sflag [#allocation3], %s9769
        %s9771 = sand.u32 %s533, 1
        %s9772 = smul.addr %s9771, 8
        %s9773 = scalar_lea.vmem [#allocation2], %s9772
        // Predicated region
        $region113: #{vit_forward.1} parent=111 // pred_check
          %p9774 = pneg %p543
        $region114: #{vit_forward.1} parent=111 // pred_check_branch
          %9776 = sbr.rel (%p9774) target = $region116
        $region115: #{vit_forward.1} parent=111 // pred_region
          %s9778 = ssub.s32 128, 128
          %9779 = vsyncadd %s9770, %s9778
          %s9780 = smul.addr %s37, 128
          %s9781 = scalar_lea.hbm %s23, %s9780
          %s9783 = sshll.u32 %s9773, 4
          %s9784 = int_to_ptr.vmem [resolvable:$true] %s9783
          %9786 = dma.vmem_to_hbm [thread:$0]  %s9784, 128, %s9781, %s9770
        $region116: #{vit_forward.1} parent=111 // pred_fallthru
          _
      $region112: #{vit_forward.1} parent=5 // pred_fallthru
        _
      %p9787 = scmp.le.s32.totalorder 2, %s32
      // Predicated region
      $region117: #{vit_forward.1} parent=5 // pred_check
        %p9788 = pneg %p9787
      $region118: #{vit_forward.1} parent=5 // pred_check_branch
        %9790 = sbr.rel (%p9788) target = $region120
      $region119: #{vit_forward.1} parent=5 // pred_region
        %s9791 = ssub.s32 %s32, 2
        // Predicated region
        $region121: #{vit_forward.1} parent=119 // pred_check
          %p9792 = pneg %p549
        $region122: #{vit_forward.1} parent=119 // pred_check_branch
          %9794 = sbr.rel (%p9792) target = $region124
        $region123: #{vit_forward.1} parent=119 // pred_region
          %s9795 = sand.u32 %s534, 1
          %s9796 = scalar_lea.sflag [#allocation3], %s9795
          %s9797 = sand.u32 %s534, 1
          %s9798 = smul.addr %s9797, 8
          %s9799 = scalar_lea.vmem [#allocation2], %s9798
          %9800 = dma.done %s9796, 128
        $region124: #{vit_forward.1} parent=119 // pred_fallthru
          _
      $region120: #{vit_forward.1} parent=5 // pred_fallthru
        _
    $region6: #{vit_forward.1} parent=1 // loop_footer
      %s36 = sadd.s32 1, %s32
    $region7: #{vit_forward.1} parent=1 // loop_footer_branch
      %31 = sbr.rel target = $region3
    $region8: #{vit_forward.1} parent=1 // loop_exit
      _
    %9801 = vsyncpa [#allocation3], 1
    %s9802 = scalar_lea.sflag [#allocation3], 1
    %9803 = vsyncpa %s9802, 1

</llo_original>
